<compile_context>
chip_gen: v7x
topology: tpu7x:2x2x1
jax: 0.10.0
libtpu: 0.0.40
codegen_flags: <defaults>
</compile_context>

<pallas_src>
import functools

import jax
import jax.numpy as jnp
from jax.experimental import pallas as pl
from jax.experimental.pallas import tpu as pltpu


# ----------------------------------------------------------------------------
# Pallas kernels: Y = X @ W + b  (+ optional ReLU)  (+ optional scale/shift)
# X, W are bf16; accumulation and epilogue are f32.
# ----------------------------------------------------------------------------
def _mm_bias_act_kernel(x_ref, w_ref, b_ref, o_ref, *, relu):
    acc = jnp.dot(x_ref[...], w_ref[...], preferred_element_type=jnp.float32)
    acc = acc + b_ref[...]
    if relu:
        acc = jnp.maximum(acc, 0.0)
    o_ref[...] = acc


def _mm_relu_bn_kernel(x_ref, w_ref, b_ref, scale_ref, shift_ref, o_ref):
    acc = jnp.dot(x_ref[...], w_ref[...], preferred_element_type=jnp.float32)
    acc = jnp.maximum(acc + b_ref[...], 0.0)          # Conv -> ReLU
    o_ref[...] = acc * scale_ref[...] + shift_ref[...]  # -> BN (folded affine)


_TM_MAX = 512  # rows per block; (tm*K + K*N + tm*N) stays tiny for this net


def _m_tiles(m):
    if m <= _TM_MAX or (m % 8) != 0:
        return m, 1                      # single full block (always legal)
    return _TM_MAX, pl.cdiv(m, _TM_MAX)  # M-tiled, multiple-of-8 blocks


def pallas_matmul(x2d, p):
    """x2d: (M, K) f32/bf16, p: prepared layer dict -> (M, Cout) f32."""
    m, k = x2d.shape
    w = p["w"]
    cout = w.shape[1]
    assert w.shape[0] == k, (w.shape, x2d.shape)
    x2d = x2d.astype(jnp.bfloat16)

    tm, gm = _m_tiles(m)
    x_spec = pl.BlockSpec((tm, k), lambda i: (i, 0))
    w_spec = pl.BlockSpec((k, cout), lambda i: (0, 0))
    v_spec = pl.BlockSpec((1, cout), lambda i: (0, 0))
    o_spec = pl.BlockSpec((tm, cout), lambda i: (i, 0))
    cparams = pltpu.CompilerParams(dimension_semantics=("parallel",))

    if p["mode"] == "relu_bn":
        return pl.pallas_call(
            _mm_relu_bn_kernel,
            out_shape=jax.ShapeDtypeStruct((m, cout), jnp.float32),
            grid=(gm,),
            in_specs=[x_spec, w_spec, v_spec, v_spec, v_spec],
            out_specs=o_spec,
            compiler_params=cparams,
        )(x2d, w, p["b"], p["scale"], p["shift"])

    relu = p["mode"] == "bias_relu"
    return pl.pallas_call(
        functools.partial(_mm_bias_act_kernel, relu=relu),
        out_shape=jax.ShapeDtypeStruct((m, cout), jnp.float32),
        grid=(gm,),
        in_specs=[x_spec, w_spec, v_spec],
        out_specs=o_spec,
        compiler_params=cparams,
    )(x2d, w, p["b"])


# ----------------------------------------------------------------------------
# Conv2d in NHWC: slice/concat im2col along the channel axis + fused matmul.
# ----------------------------------------------------------------------------
def conv_nhwc(p, x, *, stride=(1, 1), pad=((0, 0), (0, 0))):
    n, _, _, cin = x.shape
    kh, kw = p["kh"], p["kw"]
    sh, sw = stride
    if any(pp != (0, 0) for pp in pad):
        x = jnp.pad(x, ((0, 0), pad[0], pad[1], (0, 0)))
    hp, wp = x.shape[1], x.shape[2]
    hout = (hp - kh) // sh + 1
    wout = (wp - kw) // sw + 1
    taps = []
    for dh in range(kh):
        for dw in range(kw):
            taps.append(
                x[:, dh:dh + sh * (hout - 1) + 1:sh,
                     dw:dw + sw * (wout - 1) + 1:sw, :])
    patches = taps[0] if len(taps) == 1 else jnp.concatenate(taps, axis=-1)
    x2d = patches.reshape(n * hout * wout, kh * kw * cin)
    y = pallas_matmul(x2d, p)
    return y.reshape(n, hout, wout, y.shape[1])


# ----------------------------------------------------------------------------
# Pooling glue (NHWC, compute-light relative to the matmuls).
# TODO(synk): the MaxPool2d that directly follows several convs is not fused
# into the kernel epilogue (pooling crosses im2col rows).
# ----------------------------------------------------------------------------
def maxpool_1x3_s2(x):
    # MaxPool2d(kernel=(1,3), stride=(1,2), padding=(0,1)); implicit pad = -inf
    w = x.shape[2]
    wout = (w + 2 - 3) // 2 + 1
    xp = jnp.pad(x, ((0, 0), (0, 0), (1, 1), (0, 0)), constant_values=-jnp.inf)
    out = None
    for i in range(3):
        s = xp[:, :, i:i + 2 * (wout - 1) + 1:2, :]
        out = s if out is None else jnp.maximum(out, s)
    return out


def maxpool_2x2_s1x2(x):
    # MaxPool2d(kernel=(2,2), stride=(1,2)), no padding
    _, h, w, _ = x.shape
    hout = h - 1
    wout = (w - 2) // 2 + 1
    out = None
    for dh in range(2):
        for dw in range(2):
            s = x[:, dh:dh + hout, dw:dw + 2 * (wout - 1) + 1:2, :]
            out = s if out is None else jnp.maximum(out, s)
    return out


def avgpool_w(x, k):
    # AvgPool2d(kernel=(1,k)), default stride = kernel
    if k == 1:
        return x
    n, h, w, c = x.shape
    wout = w // k
    return x[:, :, :wout * k, :].reshape(n, h, wout, k, c).mean(axis=3)


# ----------------------------------------------------------------------------
# Deterministic parameter init (PyTorch weight layout: (Cout, Cin, kh, kw)).
# ----------------------------------------------------------------------------
class KeyGen:
    def __init__(self, seed):
        self._key = jax.random.PRNGKey(seed)

    def __call__(self):
        self._key, sub = jax.random.split(self._key)
        return sub


def init_conv_bn(kg, cin, cout, kh, kw, with_bn=True):
    fan_in = cin * kh * kw
    w = jax.random.normal(kg(), (cout, cin, kh, kw), jnp.float32) * jnp.sqrt(2.0 / fan_in)
    b = 0.01 * jax.random.normal(kg(), (cout,), jnp.float32)
    if with_bn:
        gamma = 1.0 + 0.1 * jax.random.normal(kg(), (cout,), jnp.float32)
        beta = 0.1 * jax.random.normal(kg(), (cout,), jnp.float32)
        mean = 0.1 * jax.random.normal(kg(), (cout,), jnp.float32)
        var = 1.0 + 0.1 * jax.random.uniform(kg(), (cout,), jnp.float32)
        scale = gamma / jnp.sqrt(var + 1e-5)
        shift = beta - mean * scale
    else:
        scale = jnp.ones((cout,), jnp.float32)
        shift = jnp.zeros((cout,), jnp.float32)
    return dict(w=w, b=b, scale=scale, shift=shift)


def init_mcnet(seed, num_classes=10):
    kg = KeyGen(seed)
    params = dict(
        conv1=init_conv_bn(kg, 1, 64, 3, 3),
        conv2=init_conv_bn(kg, 64, 64, 3, 3),
        fea_conv=init_conv_bn(kg, 64, 64, 3, 7, with_bn=False),
        pre=dict(conv1=init_conv_bn(kg, 64, 32, 3, 1),
                 conv2=init_conv_bn(kg, 64, 32, 1, 3)),
        a=dict(skip=init_conv_bn(kg, 64, 128, 1, 1),
               conv=init_conv_bn(kg, 64, 32, 1, 1),
               conv1=init_conv_bn(kg, 32, 48, 3, 1),
               conv2=init_conv_bn(kg, 32, 48, 1, 3),
               conv3=init_conv_bn(kg, 32, 32, 1, 1)),
    )
    for name in ("b1", "b2", "b3", "b4"):
        params[name] = dict(conv=init_conv_bn(kg, 128, 32, 1, 1),
                            conv1=init_conv_bn(kg, 32, 48, 3, 1),
                            conv2=init_conv_bn(kg, 32, 48, 1, 3),
                            conv3=init_conv_bn(kg, 32, 32, 1, 1))
    params["c"] = dict(conv=init_conv_bn(kg, 128, 64, 1, 1),
                       conv1=init_conv_bn(kg, 64, 128, 3, 1),
                       conv2=init_conv_bn(kg, 64, 128, 1, 3),
                       conv3=init_conv_bn(kg, 64, 128, 1, 1))
    if num_classes > 0:
        params["fc_w"] = jax.random.normal(kg(), (num_classes, 1024), jnp.float32) / jnp.sqrt(1024.0)
        params["fc_b"] = 0.01 * jax.random.normal(kg(), (num_classes,), jnp.float32)
    return params


# ----------------------------------------------------------------------------
# One-time parameter preparation: im2col weight layout, BN folding, branch
# fusion, bf16 cast.  Run once OUTSIDE the jitted forward.
# ----------------------------------------------------------------------------
def _w2col(w):
    cout, cin, kh, kw = w.shape
    return kh, kw, jnp.transpose(w, (2, 3, 1, 0)).reshape(kh * kw * cin, cout)


def prep_relu_bn(p):
    # Conv -> ReLU -> BN : keep scale/shift epilogue (ReLU blocks folding).
    kh, kw, w2 = _w2col(p["w"])
    return dict(mode="relu_bn", kh=kh, kw=kw,
                w=w2.astype(jnp.bfloat16),
                b=p["b"].reshape(1, -1).astype(jnp.float32),
                scale=p["scale"].reshape(1, -1).astype(jnp.float32),
                shift=p["shift"].reshape(1, -1).astype(jnp.float32))


def prep_bn_relu(p):
    # Conv -> BN -> ReLU : fold BN affine into weights + bias.
    kh, kw, w2 = _w2col(p["w"])
    w2 = w2 * p["scale"][None, :]
    b = p["b"] * p["scale"] + p["shift"]
    return dict(mode="bias_relu", kh=kh, kw=kw,
                w=w2.astype(jnp.bfloat16),
                b=b.reshape(1, -1).astype(jnp.float32))


def prep_conv_relu(p):
    # Conv -> ReLU (no BN), e.g. the fea conv.
    kh, kw, w2 = _w2col(p["w"])
    return dict(mode="bias_relu", kh=kh, kw=kw,
                w=w2.astype(jnp.bfloat16),
                b=p["b"].reshape(1, -1).astype(jnp.float32))


def prep_fused_3x3_relu_bn(p1, p2, p3):
    # Fuse (3x1 'same') + (1x3, W-padded) + (1x1), all stride 1, all ReLU->BN,
    # into ONE 3x3 conv on the ((1,1),(1,1))-padded input, lane-dense Cout.
    c1, cin = p1["w"].shape[0], p1["w"].shape[1]
    c2, c3 = p2["w"].shape[0], p3["w"].shape[0]
    w = jnp.zeros((c1 + c2 + c3, cin, 3, 3), jnp.float32)
    w = w.at[:c1, :, :, 1].set(p1["w"][:, :, :, 0])          # 3x1 -> column 1
    w = w.at[c1:c1 + c2, :, 1, :].set(p2["w"][:, :, 0, :])    # 1x3 -> row 1
    w = w.at[c1 + c2:, :, 1, 1].set(p3["w"][:, :, 0, 0])      # 1x1 -> center
    b = jnp.concatenate([p1["b"], p2["b"], p3["b"]])
    scale = jnp.concatenate([p1["scale"], p2["scale"], p3["scale"]])
    shift = jnp.concatenate([p1["shift"], p2["shift"], p3["shift"]])
    return prep_relu_bn(dict(w=w, b=b, scale=scale, shift=shift))


def prep_fused_1x3(p2, p3, order):
    # Fuse (1x3, W-padded, stride (1,2)) + (1x1, stride (1,2)) into ONE 1x3
    # stride-(1,2) conv on the W-(1,1)-padded input (1x1 sits at the center tap).
    c2, cin = p2["w"].shape[0], p2["w"].shape[1]
    c3 = p3["w"].shape[0]
    w = jnp.zeros((c2 + c3, cin, 1, 3), jnp.float32)
    w = w.at[:c2].set(p2["w"])
    w = w.at[c2:, :, 0, 1].set(p3["w"][:, :, 0, 0])
    b = jnp.concatenate([p2["b"], p3["b"]])
    scale = jnp.concatenate([p2["scale"], p3["scale"]])
    shift = jnp.concatenate([p2["shift"], p3["shift"]])
    merged = dict(w=w, b=b, scale=scale, shift=shift)
    return prep_bn_relu(merged) if order == "bn_relu" else prep_relu_bn(merged)


def prepare_mcnet(params, num_classes):
    prep = dict(
        conv1=prep_relu_bn(params["conv1"]),
        conv2=prep_relu_bn(params["conv2"]),
        fea=prep_conv_relu(params["fea_conv"]),
        pre=dict(conv1=prep_relu_bn(params["pre"]["conv1"]),
                 conv2=prep_bn_relu(params["pre"]["conv2"])),
        a=dict(skip=prep_relu_bn(params["a"]["skip"]),
               conv=prep_bn_relu(params["a"]["conv"]),
               conv1=prep_relu_bn(params["a"]["conv1"]),
               conv23=prep_fused_1x3(params["a"]["conv2"], params["a"]["conv3"],
                                     order="bn_relu")),
        c=dict(conv=prep_relu_bn(params["c"]["conv"]),
               branches=prep_fused_3x3_relu_bn(params["c"]["conv1"],
                                               params["c"]["conv2"],
                                               params["c"]["conv3"])),
    )
    for name in ("b1", "b3"):                      # _M_BlockB(has_pooling=False)
        b = params[name]
        prep[name] = dict(conv=prep_bn_relu(b["conv"]),
                          branches=prep_fused_3x3_relu_bn(b["conv1"], b["conv2"],
                                                          b["conv3"]))
    for name in ("b2", "b4"):                      # _M_BlockB(has_pooling=True)
        b = params[name]
        prep[name] = dict(conv=prep_bn_relu(b["conv"]),
                          conv1=prep_relu_bn(b["conv1"]),
                          conv23=prep_fused_1x3(b["conv2"], b["conv3"],
                                                order="relu_bn"))
    if num_classes > 0:
        # Pre-permute fc weight so it consumes the NHWC flatten directly
        # (identical linear map to Linear on the NCHW flatten), pre-transposed.
        c, h, w = 512, 2, 1
        wfc = params["fc_w"].reshape(num_classes, c, h, w)
        wfc = jnp.transpose(wfc, (0, 2, 3, 1)).reshape(num_classes, h * w * c).T
        prep["fc"] = dict(mode="bias", kh=1, kw=1,
                          w=wfc.astype(jnp.bfloat16),
                          b=params["fc_b"].reshape(1, -1).astype(jnp.float32))
    return prep


# ----------------------------------------------------------------------------
# Blocks (NHWC), matching the PyTorch forward semantics.
# ----------------------------------------------------------------------------
def pre_block(p, x):
    x1 = conv_nhwc(p["conv1"], x, pad=((1, 1), (0, 0)))
    x1 = maxpool_1x3_s2(x1)
    x2 = conv_nhwc(p["conv2"], x, stride=(1, 2), pad=((0, 0), (1, 1)))
    return jnp.concatenate([x1, x2], axis=-1)


def block_a(p, x):
    sx = conv_nhwc(p["skip"], x, stride=(1, 2))
    sx = maxpool_1x3_s2(sx)
    xc = maxpool_1x3_s2(x)
    xc = conv_nhwc(p["conv"], xc)
    x1 = conv_nhwc(p["conv1"], xc, pad=((1, 1), (0, 0)))
    x1 = maxpool_1x3_s2(x1)
    x23 = conv_nhwc(p["conv23"], xc, stride=(1, 2), pad=((0, 0), (1, 1)))
    return sx + jnp.concatenate([x1, x23], axis=-1)


def _pad_w_even(x):
    if x.shape[2] % 2 != 0:
        x = jnp.pad(x, ((0, 0), (0, 0), (0, 1), (0, 0)))
    return x


def block_b_plain(p, x):
    x = _pad_w_even(x)
    xc = conv_nhwc(p["conv"], x)
    br = conv_nhwc(p["branches"], xc, pad=((1, 1), (1, 1)))  # fused conv1|conv2|conv3
    return x + br


def block_b_pool(p, x):
    x = _pad_w_even(x)
    xc = conv_nhwc(p["conv"], x)
    sx = jnp.pad(x, ((0, 0), (1, 0), (0, 0), (0, 0)))        # ZeroPad2d((0,0,1,0))
    sx = maxpool_2x2_s1x2(sx)
    x1 = conv_nhwc(p["conv1"], xc, pad=((1, 1), (0, 0)))
    x1 = maxpool_1x3_s2(x1)
    x23 = conv_nhwc(p["conv23"], xc, stride=(1, 2), pad=((0, 0), (1, 1)))
    return sx + jnp.concatenate([x1, x23], axis=-1)


def block_c(p, x):
    xc = conv_nhwc(p["conv"], x)
    br = conv_nhwc(p["branches"], xc, pad=((1, 1), (1, 1)))  # fused conv1|conv2|conv3
    return jnp.concatenate([x, br], axis=-1)


def mcnet_forward(prep, x_nchw, *, frame_length, num_classes):
    x = jnp.transpose(x_nchw, (0, 2, 3, 1))  # single NCHW -> NHWC transpose
    # stem: pad1 -> conv1 -> relu -> bn1 ; pad2 -> conv2 -> relu -> bn2
    x = conv_nhwc(prep["conv1"], x, stride=(1, 2), pad=((1, 1), (1, 1)))
    x = conv_nhwc(prep["conv2"], x, stride=(1, 2), pad=((1, 1), (1, 1)))
    # fea
    x = conv_nhwc(prep["fea"], x, stride=(1, 2), pad=((1, 1), (3, 3)))
    x = maxpool_1x3_s2(x)
    x = pre_block(prep["pre"], x)
    x = block_a(prep["a"], x)
    x = block_b_plain(prep["b1"], x)
    x = block_b_pool(prep["b2"], x)
    x = block_b_plain(prep["b3"], x)
    x = block_b_pool(prep["b4"], x)
    x = block_c(prep["c"], x)
    if num_classes > 0:
        x = avgpool_w(x, frame_length // 128)
        # TODO(synk): Dropout(0.5) train-mode RNG masking not reproduced; identity (eval).
        x = x.reshape(x.shape[0], -1)        # NHWC flatten; fc weight pre-permuted
        x = pallas_matmul(x, prep["fc"])
    return (x,)


# ----------------------------------------------------------------------------
if __name__ == "__main__":
    FRAME_LENGTH = 128   # smallest frame length consistent with the classifier head
    NUM_CLASSES = 10
    BATCH = 2

    params = init_mcnet(seed=42, num_classes=NUM_CLASSES)
    prep = prepare_mcnet(params, num_classes=NUM_CLASSES)   # one-time, outside jit

    key = jax.random.PRNGKey(0)
    x = jax.random.normal(key, (BATCH, 1, 2, FRAME_LENGTH), dtype=jnp.float32)

    fwd = jax.jit(functools.partial(mcnet_forward, prep,
                                    frame_length=FRAME_LENGTH,
                                    num_classes=NUM_CLASSES))
    (out,) = fwd(x)
    out = jax.block_until_ready(out)

    assert out.shape == (BATCH, NUM_CLASSES), out.shape
    assert bool(jnp.all(jnp.isfinite(out)))
    print("KERNEL_OK")
</pallas_src>

<mosaic_0001>
module attributes {stable_mosaic.version = 11 : i64} {
  func.func @_mm_relu_bn_kernel(%arg0: i32, %arg1: memref<256x9xbf16, #tpu.memory_space<vmem>>, %arg2: memref<9x64xbf16, #tpu.memory_space<vmem>>, %arg3: memref<1x64xf32, #tpu.memory_space<vmem>>, %arg4: memref<1x64xf32, #tpu.memory_space<vmem>>, %arg5: memref<1x64xf32, #tpu.memory_space<vmem>>, %arg6: memref<256x64xf32, #tpu.memory_space<vmem>>) attributes {dimension_semantics = [#tpu.dimension_semantics<parallel>], iteration_bounds = array<i64: 1>, scalar_prefetch = 0 : i64, scratch_operands = 0 : i64, tpu.core_type = #tpu.core_type<tc>, window_params = [{transform_indices = @transform_0, window_bounds = array<i64: 256, 9>}, {pipeline_mode = #tpu.pipeline_mode<synchronous>, transform_indices = @transform_1, window_bounds = array<i64: 9, 64>}, {pipeline_mode = #tpu.pipeline_mode<synchronous>, transform_indices = @transform_2, window_bounds = array<i64: 1, 64>}, {pipeline_mode = #tpu.pipeline_mode<synchronous>, transform_indices = @transform_3, window_bounds = array<i64: 1, 64>}, {pipeline_mode = #tpu.pipeline_mode<synchronous>, transform_indices = @transform_4, window_bounds = array<i64: 1, 64>}, {transform_indices = @transform_5, window_bounds = array<i64: 256, 64>}]} {
    %c0 = arith.constant 0 : index
    %c0_0 = arith.constant 0 : index
    %0 = vector.load %arg1[%c0, %c0_0] : memref<256x9xbf16, #tpu.memory_space<vmem>>, vector<256x9xbf16>
    %c0_1 = arith.constant 0 : index
    %c0_2 = arith.constant 0 : index
    %1 = vector.load %arg2[%c0_1, %c0_2] : memref<9x64xbf16, #tpu.memory_space<vmem>>, vector<9x64xbf16>
    %cst = arith.constant dense<0.000000e+00> : vector<256x64xf32>
    %2 = tpu.matmul %0, %1, %cst {dimension_numbers = #tpu.dot_dimension_numbers<[1], [0], [0], [1], [0, 0, 1, 1], [], []>} : vector<256x9xbf16>, vector<9x64xbf16>, vector<256x64xf32> -> vector<256x64xf32>
    %c0_3 = arith.constant 0 : index
    %c0_4 = arith.constant 0 : index
    %3 = vector.load %arg3[%c0_3, %c0_4] : memref<1x64xf32, #tpu.memory_space<vmem>>, vector<1x64xf32>
    %4 = vector.broadcast %3 : vector<1x64xf32> to vector<256x64xf32>
    %5 = arith.addf %2, %4 : vector<256x64xf32>
    %cst_5 = arith.constant 0.000000e+00 : f32
    %6 = vector.broadcast %cst_5 : f32 to vector<256x64xf32>
    %7 = arith.maximumf %5, %6 : vector<256x64xf32>
    %c0_6 = arith.constant 0 : index
    %c0_7 = arith.constant 0 : index
    %8 = vector.load %arg4[%c0_6, %c0_7] : memref<1x64xf32, #tpu.memory_space<vmem>>, vector<1x64xf32>
    %9 = vector.broadcast %8 : vector<1x64xf32> to vector<256x64xf32>
    %10 = arith.mulf %7, %9 : vector<256x64xf32>
    %c0_8 = arith.constant 0 : index
    %c0_9 = arith.constant 0 : index
    %11 = vector.load %arg5[%c0_8, %c0_9] : memref<1x64xf32, #tpu.memory_space<vmem>>, vector<1x64xf32>
    %12 = vector.broadcast %11 : vector<1x64xf32> to vector<256x64xf32>
    %13 = arith.addf %10, %12 : vector<256x64xf32>
    %c0_10 = arith.constant 0 : index
    %c0_11 = arith.constant 0 : index
    %14 = vector.load %arg6[%c0_10, %c0_11] : memref<256x64xf32, #tpu.memory_space<vmem>>, vector<256x64xf32>
    tpu.vector_store %arg6[%c0_10, %c0_11], %13 {strides = array<i32>} : memref<256x64xf32, #tpu.memory_space<vmem>>, vector<256x64xf32>,
    return
  }
  func.func @transform_0(%arg0: i32) -> (i32, i32) {
    %c0_i32 = arith.constant 0 : i32
    %c0_i32_0 = arith.constant 0 : i32
    return %arg0, %c0_i32 : i32, i32
  }
  func.func @transform_1(%arg0: i32) -> (i32, i32) {
    %c0_i32 = arith.constant 0 : i32
    %c0_i32_0 = arith.constant 0 : i32
    %c0_i32_1 = arith.constant 0 : i32
    return %c0_i32, %c0_i32_0 : i32, i32
  }
  func.func @transform_2(%arg0: i32) -> (i32, i32) {
    %c0_i32 = arith.constant 0 : i32
    %c0_i32_0 = arith.constant 0 : i32
    %c0_i32_1 = arith.constant 0 : i32
    return %c0_i32, %c0_i32_0 : i32, i32
  }
  func.func @transform_3(%arg0: i32) -> (i32, i32) {
    %c0_i32 = arith.constant 0 : i32
    %c0_i32_0 = arith.constant 0 : i32
    %c0_i32_1 = arith.constant 0 : i32
    return %c0_i32, %c0_i32_0 : i32, i32
  }
  func.func @transform_4(%arg0: i32) -> (i32, i32) {
    %c0_i32 = arith.constant 0 : i32
    %c0_i32_0 = arith.constant 0 : i32
    %c0_i32_1 = arith.constant 0 : i32
    return %c0_i32, %c0_i32_0 : i32, i32
  }
  func.func @transform_5(%arg0: i32) -> (i32, i32) {
    %c0_i32 = arith.constant 0 : i32
    %c0_i32_0 = arith.constant 0 : i32
    return %arg0, %c0_i32 : i32, i32
  }
}

module attributes {stable_mosaic.version = 11 : i64} {
  func.func @_mm_relu_bn_kernel(%arg0: i32, %arg1: memref<128x576xbf16, #tpu.memory_space<vmem>>, %arg2: memref<576x64xbf16, #tpu.memory_space<vmem>>, %arg3: memref<1x64xf32, #tpu.memory_space<vmem>>, %arg4: memref<1x64xf32, #tpu.memory_space<vmem>>, %arg5: memref<1x64xf32, #tpu.memory_space<vmem>>, %arg6: memref<128x64xf32, #tpu.memory_space<vmem>>) attributes {dimension_semantics = [#tpu.dimension_semantics<parallel>], iteration_bounds = array<i64: 1>, scalar_prefetch = 0 : i64, scratch_operands = 0 : i64, tpu.core_type = #tpu.core_type<tc>, window_params = [{transform_indices = @transform_0, window_bounds = array<i64: 128, 576>}, {pipeline_mode = #tpu.pipeline_mode<synchronous>, transform_indices = @transform_1, window_bounds = array<i64: 576, 64>}, {pipeline_mode = #tpu.pipeline_mode<synchronous>, transform_indices = @transform_2, window_bounds = array<i64: 1, 64>}, {pipeline_mode = #tpu.pipeline_mode<synchronous>, transform_indices = @transform_3, window_bounds = array<i64: 1, 64>}, {pipeline_mode = #tpu.pipeline_mode<synchronous>, transform_indices = @transform_4, window_bounds = array<i64: 1, 64>}, {transform_indices = @transform_5, window_bounds = array<i64: 128, 64>}]} {
    %c0 = arith.constant 0 : index
    %c0_0 = arith.constant 0 : index
    %0 = vector.load %arg1[%c0, %c0_0] : memref<128x576xbf16, #tpu.memory_space<vmem>>, vector<128x576xbf16>
    %c0_1 = arith.constant 0 : index
    %c0_2 = arith.constant 0 : index
    %1 = vector.load %arg2[%c0_1, %c0_2] : memref<576x64xbf16, #tpu.memory_space<vmem>>, vector<576x64xbf16>
    %cst = arith.constant dense<0.000000e+00> : vector<128x64xf32>
    %2 = tpu.matmul %0, %1, %cst {dimension_numbers = #tpu.dot_dimension_numbers<[1], [0], [0], [1], [0, 0, 1, 1], [], []>} : vector<128x576xbf16>, vector<576x64xbf16>, vector<128x64xf32> -> vector<128x64xf32>
    %c0_3 = arith.constant 0 : index
    %c0_4 = arith.constant 0 : index
    %3 = vector.load %arg3[%c0_3, %c0_4] : memref<1x64xf32, #tpu.memory_space<vmem>>, vector<1x64xf32>
    %4 = vector.broadcast %3 : vector<1x64xf32> to vector<128x64xf32>
    %5 = arith.addf %2, %4 : vector<128x64xf32>
    %cst_5 = arith.constant 0.000000e+00 : f32
    %6 = vector.broadcast %cst_5 : f32 to vector<128x64xf32>
    %7 = arith.maximumf %5, %6 : vector<128x64xf32>
    %c0_6 = arith.constant 0 : index
    %c0_7 = arith.constant 0 : index
    %8 = vector.load %arg4[%c0_6, %c0_7] : memref<1x64xf32, #tpu.memory_space<vmem>>, vector<1x64xf32>
    %9 = vector.broadcast %8 : vector<1x64xf32> to vector<128x64xf32>
    %10 = arith.mulf %7, %9 : vector<128x64xf32>
    %c0_8 = arith.constant 0 : index
    %c0_9 = arith.constant 0 : index
    %11 = vector.load %arg5[%c0_8, %c0_9] : memref<1x64xf32, #tpu.memory_space<vmem>>, vector<1x64xf32>
    %12 = vector.broadcast %11 : vector<1x64xf32> to vector<128x64xf32>
    %13 = arith.addf %10, %12 : vector<128x64xf32>
    %c0_10 = arith.constant 0 : index
    %c0_11 = arith.constant 0 : index
    %14 = vector.load %arg6[%c0_10, %c0_11] : memref<128x64xf32, #tpu.memory_space<vmem>>, vector<128x64xf32>
    tpu.vector_store %arg6[%c0_10, %c0_11], %13 {strides = array<i32>} : memref<128x64xf32, #tpu.memory_space<vmem>>, vector<128x64xf32>,
    return
  }
  func.func @transform_0(%arg0: i32) -> (i32, i32) {
    %c0_i32 = arith.constant 0 : i32
    %c0_i32_0 = arith.constant 0 : i32
    return %arg0, %c0_i32 : i32, i32
  }
  func.func @transform_1(%arg0: i32) -> (i32, i32) {
    %c0_i32 = arith.constant 0 : i32
    %c0_i32_0 = arith.constant 0 : i32
    %c0_i32_1 = arith.constant 0 : i32
    return %c0_i32, %c0_i32_0 : i32, i32
  }
  func.func @transform_2(%arg0: i32) -> (i32, i32) {
    %c0_i32 = arith.constant 0 : i32
    %c0_i32_0 = arith.constant 0 : i32
    %c0_i32_1 = arith.constant 0 : i32
    return %c0_i32, %c0_i32_0 : i32, i32
  }
  func.func @transform_3(%arg0: i32) -> (i32, i32) {
    %c0_i32 = arith.constant 0 : i32
    %c0_i32_0 = arith.constant 0 : i32
    %c0_i32_1 = arith.constant 0 : i32
    return %c0_i32, %c0_i32_0 : i32, i32
  }
  func.func @transform_4(%arg0: i32) -> (i32, i32) {
    %c0_i32 = arith.constant 0 : i32
    %c0_i32_0 = arith.constant 0 : i32
    %c0_i32_1 = arith.constant 0 : i32
    return %c0_i32, %c0_i32_0 : i32, i32
  }
  func.func @transform_5(%arg0: i32) -> (i32, i32) {
    %c0_i32 = arith.constant 0 : i32
    %c0_i32_0 = arith.constant 0 : i32
    return %arg0, %c0_i32 : i32, i32
  }
}

module attributes {stable_mosaic.version = 11 : i64} {
  func.func @_mm_bias_act_kernel(%arg0: i32, %arg1: memref<64x1344xbf16, #tpu.memory_space<vmem>>, %arg2: memref<1344x64xbf16, #tpu.memory_space<vmem>>, %arg3: memref<1x64xf32, #tpu.memory_space<vmem>>, %arg4: memref<64x64xf32, #tpu.memory_space<vmem>>) attributes {dimension_semantics = [#tpu.dimension_semantics<parallel>], iteration_bounds = array<i64: 1>, scalar_prefetch = 0 : i64, scratch_operands = 0 : i64, tpu.core_type = #tpu.core_type<tc>, window_params = [{transform_indices = @transform_0, window_bounds = array<i64: 64, 1344>}, {pipeline_mode = #tpu.pipeline_mode<synchronous>, transform_indices = @transform_1, window_bounds = array<i64: 1344, 64>}, {pipeline_mode = #tpu.pipeline_mode<synchronous>, transform_indices = @transform_2, window_bounds = array<i64: 1, 64>}, {transform_indices = @transform_3, window_bounds = array<i64: 64, 64>}]} {
    %c0 = arith.constant 0 : index
    %c0_0 = arith.constant 0 : index
    %0 = vector.load %arg1[%c0, %c0_0] : memref<64x1344xbf16, #tpu.memory_space<vmem>>, vector<64x1344xbf16>
    %c0_1 = arith.constant 0 : index
    %c0_2 = arith.constant 0 : index
    %1 = vector.load %arg2[%c0_1, %c0_2] : memref<1344x64xbf16, #tpu.memory_space<vmem>>, vector<1344x64xbf16>
    %cst = arith.constant dense<0.000000e+00> : vector<64x64xf32>
    %2 = tpu.matmul %0, %1, %cst {dimension_numbers = #tpu.dot_dimension_numbers<[1], [0], [0], [1], [0, 0, 1, 1], [], []>} : vector<64x1344xbf16>, vector<1344x64xbf16>, vector<64x64xf32> -> vector<64x64xf32>
    %c0_3 = arith.constant 0 : index
    %c0_4 = arith.constant 0 : index
    %3 = vector.load %arg3[%c0_3, %c0_4] : memref<1x64xf32, #tpu.memory_space<vmem>>, vector<1x64xf32>
    %4 = vector.broadcast %3 : vector<1x64xf32> to vector<64x64xf32>
    %5 = arith.addf %2, %4 : vector<64x64xf32>
    %cst_5 = arith.constant 0.000000e+00 : f32
    %6 = vector.broadcast %cst_5 : f32 to vector<64x64xf32>
    %7 = arith.maximumf %5, %6 : vector<64x64xf32>
    %c0_6 = arith.constant 0 : index
    %c0_7 = arith.constant 0 : index
    %8 = vector.load %arg4[%c0_6, %c0_7] : memref<64x64xf32, #tpu.memory_space<vmem>>, vector<64x64xf32>
    tpu.vector_store %arg4[%c0_6, %c0_7], %7 {strides = array<i32>} : memref<64x64xf32, #tpu.memory_space<vmem>>, vector<64x64xf32>,
    return
  }
  func.func @transform_0(%arg0: i32) -> (i32, i32) {
    %c0_i32 = arith.constant 0 : i32
    %c0_i32_0 = arith.constant 0 : i32
    return %arg0, %c0_i32 : i32, i32
  }
  func.func @transform_1(%arg0: i32) -> (i32, i32) {
    %c0_i32 = arith.constant 0 : i32
    %c0_i32_0 = arith.constant 0 : i32
    %c0_i32_1 = arith.constant 0 : i32
    return %c0_i32, %c0_i32_0 : i32, i32
  }
  func.func @transform_2(%arg0: i32) -> (i32, i32) {
    %c0_i32 = arith.constant 0 : i32
    %c0_i32_0 = arith.constant 0 : i32
    %c0_i32_1 = arith.constant 0 : i32
    return %c0_i32, %c0_i32_0 : i32, i32
  }
  func.func @transform_3(%arg0: i32) -> (i32, i32) {
    %c0_i32 = arith.constant 0 : i32
    %c0_i32_0 = arith.constant 0 : i32
    return %arg0, %c0_i32 : i32, i32
  }
}

module attributes {stable_mosaic.version = 11 : i64} {
  func.func @_mm_relu_bn_kernel(%arg0: i32, %arg1: memref<32x192xbf16, #tpu.memory_space<vmem>>, %arg2: memref<192x32xbf16, #tpu.memory_space<vmem>>, %arg3: memref<1x32xf32, #tpu.memory_space<vmem>>, %arg4: memref<1x32xf32, #tpu.memory_space<vmem>>, %arg5: memref<1x32xf32, #tpu.memory_space<vmem>>, %arg6: memref<32x32xf32, #tpu.memory_space<vmem>>) attributes {dimension_semantics = [#tpu.dimension_semantics<parallel>], iteration_bounds = array<i64: 1>, scalar_prefetch = 0 : i64, scratch_operands = 0 : i64, tpu.core_type = #tpu.core_type<tc>, window_params = [{transform_indices = @transform_0, window_bounds = array<i64: 32, 192>}, {pipeline_mode = #tpu.pipeline_mode<synchronous>, transform_indices = @transform_1, window_bounds = array<i64: 192, 32>}, {pipeline_mode = #tpu.pipeline_mode<synchronous>, transform_indices = @transform_2, window_bounds = array<i64: 1, 32>}, {pipeline_mode = #tpu.pipeline_mode<synchronous>, transform_indices = @transform_3, window_bounds = array<i64: 1, 32>}, {pipeline_mode = #tpu.pipeline_mode<synchronous>, transform_indices = @transform_4, window_bounds = array<i64: 1, 32>}, {transform_indices = @transform_5, window_bounds = array<i64: 32, 32>}]} {
    %c0 = arith.constant 0 : index
    %c0_0 = arith.constant 0 : index
    %0 = vector.load %arg1[%c0, %c0_0] : memref<32x192xbf16, #tpu.memory_space<vmem>>, vector<32x192xbf16>
    %c0_1 = arith.constant 0 : index
    %c0_2 = arith.constant 0 : index
    %1 = vector.load %arg2[%c0_1, %c0_2] : memref<192x32xbf16, #tpu.memory_space<vmem>>, vector<192x32xbf16>
    %cst = arith.constant dense<0.000000e+00> : vector<32x32xf32>
    %2 = tpu.matmul %0, %1, %cst {dimension_numbers = #tpu.dot_dimension_numbers<[1], [0], [0], [1], [0, 0, 1, 1], [], []>} : vector<32x192xbf16>, vector<192x32xbf16>, vector<32x32xf32> -> vector<32x32xf32>
    %c0_3 = arith.constant 0 : index
    %c0_4 = arith.constant 0 : index
    %3 = vector.load %arg3[%c0_3, %c0_4] : memref<1x32xf32, #tpu.memory_space<vmem>>, vector<1x32xf32>
    %4 = vector.broadcast %3 : vector<1x32xf32> to vector<32x32xf32>
    %5 = arith.addf %2, %4 : vector<32x32xf32>
    %cst_5 = arith.constant 0.000000e+00 : f32
    %6 = vector.broadcast %cst_5 : f32 to vector<32x32xf32>
    %7 = arith.maximumf %5, %6 : vector<32x32xf32>
    %c0_6 = arith.constant 0 : index
    %c0_7 = arith.constant 0 : index
    %8 = vector.load %arg4[%c0_6, %c0_7] : memref<1x32xf32, #tpu.memory_space<vmem>>, vector<1x32xf32>
    %9 = vector.broadcast %8 : vector<1x32xf32> to vector<32x32xf32>
    %10 = arith.mulf %7, %9 : vector<32x32xf32>
    %c0_8 = arith.constant 0 : index
    %c0_9 = arith.constant 0 : index
    %11 = vector.load %arg5[%c0_8, %c0_9] : memref<1x32xf32, #tpu.memory_space<vmem>>, vector<1x32xf32>
    %12 = vector.broadcast %11 : vector<1x32xf32> to vector<32x32xf32>
    %13 = arith.addf %10, %12 : vector<32x32xf32>
    %c0_10 = arith.constant 0 : index
    %c0_11 = arith.constant 0 : index
    %14 = vector.load %arg6[%c0_10, %c0_11] : memref<32x32xf32, #tpu.memory_space<vmem>>, vector<32x32xf32>
    tpu.vector_store %arg6[%c0_10, %c0_11], %13 {strides = array<i32>} : memref<32x32xf32, #tpu.memory_space<vmem>>, vector<32x32xf32>,
    return
  }
  func.func @transform_0(%arg0: i32) -> (i32, i32) {
    %c0_i32 = arith.constant 0 : i32
    %c0_i32_0 = arith.constant 0 : i32
    return %arg0, %c0_i32 : i32, i32
  }
  func.func @transform_1(%arg0: i32) -> (i32, i32) {
    %c0_i32 = arith.constant 0 : i32
    %c0_i32_0 = arith.constant 0 : i32
    %c0_i32_1 = arith.constant 0 : i32
    return %c0_i32, %c0_i32_0 : i32, i32
  }
  func.func @transform_2(%arg0: i32) -> (i32, i32) {
    %c0_i32 = arith.constant 0 : i32
    %c0_i32_0 = arith.constant 0 : i32
    %c0_i32_1 = arith.constant 0 : i32
    return %c0_i32, %c0_i32_0 : i32, i32
  }
  func.func @transform_3(%arg0: i32) -> (i32, i32) {
    %c0_i32 = arith.constant 0 : i32
    %c0_i32_0 = arith.constant 0 : i32
    %c0_i32_1 = arith.constant 0 : i32
    return %c0_i32, %c0_i32_0 : i32, i32
  }
  func.func @transform_4(%arg0: i32) -> (i32, i32) {
    %c0_i32 = arith.constant 0 : i32
    %c0_i32_0 = arith.constant 0 : i32
    %c0_i32_1 = arith.constant 0 : i32
    return %c0_i32, %c0_i32_0 : i32, i32
  }
  func.func @transform_5(%arg0: i32) -> (i32, i32) {
    %c0_i32 = arith.constant 0 : i32
    %c0_i32_0 = arith.constant 0 : i32
    return %arg0, %c0_i32 : i32, i32
  }
}

module attributes {stable_mosaic.version = 11 : i64} {
  func.func @_mm_bias_act_kernel(%arg0: i32, %arg1: memref<16x192xbf16, #tpu.memory_space<vmem>>, %arg2: memref<192x32xbf16, #tpu.memory_space<vmem>>, %arg3: memref<1x32xf32, #tpu.memory_space<vmem>>, %arg4: memref<16x32xf32, #tpu.memory_space<vmem>>) attributes {dimension_semantics = [#tpu.dimension_semantics<parallel>], iteration_bounds = array<i64: 1>, scalar_prefetch = 0 : i64, scratch_operands = 0 : i64, tpu.core_type = #tpu.core_type<tc>, window_params = [{transform_indices = @transform_0, window_bounds = array<i64: 16, 192>}, {pipeline_mode = #tpu.pipeline_mode<synchronous>, transform_indices = @transform_1, window_bounds = array<i64: 192, 32>}, {pipeline_mode = #tpu.pipeline_mode<synchronous>, transform_indices = @transform_2, window_bounds = array<i64: 1, 32>}, {transform_indices = @transform_3, window_bounds = array<i64: 16, 32>}]} {
    %c0 = arith.constant 0 : index
    %c0_0 = arith.constant 0 : index
    %0 = vector.load %arg1[%c0, %c0_0] : memref<16x192xbf16, #tpu.memory_space<vmem>>, vector<16x192xbf16>
    %c0_1 = arith.constant 0 : index
    %c0_2 = arith.constant 0 : index
    %1 = vector.load %arg2[%c0_1, %c0_2] : memref<192x32xbf16, #tpu.memory_space<vmem>>, vector<192x32xbf16>
    %cst = arith.constant dense<0.000000e+00> : vector<16x32xf32>
    %2 = tpu.matmul %0, %1, %cst {dimension_numbers = #tpu.dot_dimension_numbers<[1], [0], [0], [1], [0, 0, 1, 1], [], []>} : vector<16x192xbf16>, vector<192x32xbf16>, vector<16x32xf32> -> vector<16x32xf32>
    %c0_3 = arith.constant 0 : index
    %c0_4 = arith.constant 0 : index
    %3 = vector.load %arg3[%c0_3, %c0_4] : memref<1x32xf32, #tpu.memory_space<vmem>>, vector<1x32xf32>
    %4 = vector.broadcast %3 : vector<1x32xf32> to vector<16x32xf32>
    %5 = arith.addf %2, %4 : vector<16x32xf32>
    %cst_5 = arith.constant 0.000000e+00 : f32
    %6 = vector.broadcast %cst_5 : f32 to vector<16x32xf32>
    %7 = arith.maximumf %5, %6 : vector<16x32xf32>
    %c0_6 = arith.constant 0 : index
    %c0_7 = arith.constant 0 : index
    %8 = vector.load %arg4[%c0_6, %c0_7] : memref<16x32xf32, #tpu.memory_space<vmem>>, vector<16x32xf32>
    tpu.vector_store %arg4[%c0_6, %c0_7], %7 {strides = array<i32>} : memref<16x32xf32, #tpu.memory_space<vmem>>, vector<16x32xf32>,
    return
  }
  func.func @transform_0(%arg0: i32) -> (i32, i32) {
    %c0_i32 = arith.constant 0 : i32
    %c0_i32_0 = arith.constant 0 : i32
    return %arg0, %c0_i32 : i32, i32
  }
  func.func @transform_1(%arg0: i32) -> (i32, i32) {
    %c0_i32 = arith.constant 0 : i32
    %c0_i32_0 = arith.constant 0 : i32
    %c0_i32_1 = arith.constant 0 : i32
    return %c0_i32, %c0_i32_0 : i32, i32
  }
  func.func @transform_2(%arg0: i32) -> (i32, i32) {
    %c0_i32 = arith.constant 0 : i32
    %c0_i32_0 = arith.constant 0 : i32
    %c0_i32_1 = arith.constant 0 : i32
    return %c0_i32, %c0_i32_0 : i32, i32
  }
  func.func @transform_3(%arg0: i32) -> (i32, i32) {
    %c0_i32 = arith.constant 0 : i32
    %c0_i32_0 = arith.constant 0 : i32
    return %arg0, %c0_i32 : i32, i32
  }
}

module attributes {stable_mosaic.version = 11 : i64} {
  func.func @_mm_bias_act_kernel(%arg0: i32, %arg1: memref<8x64xbf16, #tpu.memory_space<vmem>>, %arg2: memref<64x32xbf16, #tpu.memory_space<vmem>>, %arg3: memref<1x32xf32, #tpu.memory_space<vmem>>, %arg4: memref<8x32xf32, #tpu.memory_space<vmem>>) attributes {dimension_semantics = [#tpu.dimension_semantics<parallel>], iteration_bounds = array<i64: 1>, scalar_prefetch = 0 : i64, scratch_operands = 0 : i64, tpu.core_type = #tpu.core_type<tc>, window_params = [{transform_indices = @transform_0, window_bounds = array<i64: 8, 64>}, {pipeline_mode = #tpu.pipeline_mode<synchronous>, transform_indices = @transform_1, window_bounds = array<i64: 64, 32>}, {pipeline_mode = #tpu.pipeline_mode<synchronous>, transform_indices = @transform_2, window_bounds = array<i64: 1, 32>}, {transform_indices = @transform_3, window_bounds = array<i64: 8, 32>}]} {
    %c0 = arith.constant 0 : index
    %c0_0 = arith.constant 0 : index
    %0 = vector.load %arg1[%c0, %c0_0] : memref<8x64xbf16, #tpu.memory_space<vmem>>, vector<8x64xbf16>
    %c0_1 = arith.constant 0 : index
    %c0_2 = arith.constant 0 : index
    %1 = vector.load %arg2[%c0_1, %c0_2] : memref<64x32xbf16, #tpu.memory_space<vmem>>, vector<64x32xbf16>
    %cst = arith.constant dense<0.000000e+00> : vector<8x32xf32>
    %2 = tpu.matmul %0, %1, %cst {dimension_numbers = #tpu.dot_dimension_numbers<[1], [0], [0], [1], [0, 0, 1, 1], [], []>} : vector<8x64xbf16>, vector<64x32xbf16>, vector<8x32xf32> -> vector<8x32xf32>
    %c0_3 = arith.constant 0 : index
    %c0_4 = arith.constant 0 : index
    %3 = vector.load %arg3[%c0_3, %c0_4] : memref<1x32xf32, #tpu.memory_space<vmem>>, vector<1x32xf32>
    %4 = vector.broadcast %3 : vector<1x32xf32> to vector<8x32xf32>
    %5 = arith.addf %2, %4 : vector<8x32xf32>
    %cst_5 = arith.constant 0.000000e+00 : f32
    %6 = vector.broadcast %cst_5 : f32 to vector<8x32xf32>
    %7 = arith.maximumf %5, %6 : vector<8x32xf32>
    %c0_6 = arith.constant 0 : index
    %c0_7 = arith.constant 0 : index
    %8 = vector.load %arg4[%c0_6, %c0_7] : memref<8x32xf32, #tpu.memory_space<vmem>>, vector<8x32xf32>
    tpu.vector_store %arg4[%c0_6, %c0_7], %7 {strides = array<i32>} : memref<8x32xf32, #tpu.memory_space<vmem>>, vector<8x32xf32>,
    return
  }
  func.func @transform_0(%arg0: i32) -> (i32, i32) {
    %c0_i32 = arith.constant 0 : i32
    %c0_i32_0 = arith.constant 0 : i32
    return %arg0, %c0_i32 : i32, i32
  }
  func.func @transform_1(%arg0: i32) -> (i32, i32) {
    %c0_i32 = arith.constant 0 : i32
    %c0_i32_0 = arith.constant 0 : i32
    %c0_i32_1 = arith.constant 0 : i32
    return %c0_i32, %c0_i32_0 : i32, i32
  }
  func.func @transform_2(%arg0: i32) -> (i32, i32) {
    %c0_i32 = arith.constant 0 : i32
    %c0_i32_0 = arith.constant 0 : i32
    %c0_i32_1 = arith.constant 0 : i32
    return %c0_i32, %c0_i32_0 : i32, i32
  }
  func.func @transform_3(%arg0: i32) -> (i32, i32) {
    %c0_i32 = arith.constant 0 : i32
    %c0_i32_0 = arith.constant 0 : i32
    return %arg0, %c0_i32 : i32, i32
  }
}

module attributes {stable_mosaic.version = 11 : i64} {
  func.func @_mm_relu_bn_kernel(%arg0: i32, %arg1: memref<8x96xbf16, #tpu.memory_space<vmem>>, %arg2: memref<96x48xbf16, #tpu.memory_space<vmem>>, %arg3: memref<1x48xf32, #tpu.memory_space<vmem>>, %arg4: memref<1x48xf32, #tpu.memory_space<vmem>>, %arg5: memref<1x48xf32, #tpu.memory_space<vmem>>, %arg6: memref<8x48xf32, #tpu.memory_space<vmem>>) attributes {dimension_semantics = [#tpu.dimension_semantics<parallel>], iteration_bounds = array<i64: 1>, scalar_prefetch = 0 : i64, scratch_operands = 0 : i64, tpu.core_type = #tpu.core_type<tc>, window_params = [{transform_indices = @transform_0, window_bounds = array<i64: 8, 96>}, {pipeline_mode = #tpu.pipeline_mode<synchronous>, transform_indices = @transform_1, window_bounds = array<i64: 96, 48>}, {pipeline_mode = #tpu.pipeline_mode<synchronous>, transform_indices = @transform_2, window_bounds = array<i64: 1, 48>}, {pipeline_mode = #tpu.pipeline_mode<synchronous>, transform_indices = @transform_3, window_bounds = array<i64: 1, 48>}, {pipeline_mode = #tpu.pipeline_mode<synchronous>, transform_indices = @transform_4, window_bounds = array<i64: 1, 48>}, {transform_indices = @transform_5, window_bounds = array<i64: 8, 48>}]} {
    %c0 = arith.constant 0 : index
    %c0_0 = arith.constant 0 : index
    %0 = vector.load %arg1[%c0, %c0_0] : memref<8x96xbf16, #tpu.memory_space<vmem>>, vector<8x96xbf16>
    %c0_1 = arith.constant 0 : index
    %c0_2 = arith.constant 0 : index
    %1 = vector.load %arg2[%c0_1, %c0_2] : memref<96x48xbf16, #tpu.memory_space<vmem>>, vector<96x48xbf16>
    %cst = arith.constant dense<0.000000e+00> : vector<8x48xf32>
    %2 = tpu.matmul %0, %1, %cst {dimension_numbers = #tpu.dot_dimension_numbers<[1], [0], [0], [1], [0, 0, 1, 1], [], []>} : vector<8x96xbf16>, vector<96x48xbf16>, vector<8x48xf32> -> vector<8x48xf32>
    %c0_3 = arith.constant 0 : index
    %c0_4 = arith.constant 0 : index
    %3 = vector.load %arg3[%c0_3, %c0_4] : memref<1x48xf32, #tpu.memory_space<vmem>>, vector<1x48xf32>
    %4 = vector.broadcast %3 : vector<1x48xf32> to vector<8x48xf32>
    %5 = arith.addf %2, %4 : vector<8x48xf32>
    %cst_5 = arith.constant 0.000000e+00 : f32
    %6 = vector.broadcast %cst_5 : f32 to vector<8x48xf32>
    %7 = arith.maximumf %5, %6 : vector<8x48xf32>
    %c0_6 = arith.constant 0 : index
    %c0_7 = arith.constant 0 : index
    %8 = vector.load %arg4[%c0_6, %c0_7] : memref<1x48xf32, #tpu.memory_space<vmem>>, vector<1x48xf32>
    %9 = vector.broadcast %8 : vector<1x48xf32> to vector<8x48xf32>
    %10 = arith.mulf %7, %9 : vector<8x48xf32>
    %c0_8 = arith.constant 0 : index
    %c0_9 = arith.constant 0 : index
    %11 = vector.load %arg5[%c0_8, %c0_9] : memref<1x48xf32, #tpu.memory_space<vmem>>, vector<1x48xf32>
    %12 = vector.broadcast %11 : vector<1x48xf32> to vector<8x48xf32>
    %13 = arith.addf %10, %12 : vector<8x48xf32>
    %c0_10 = arith.constant 0 : index
    %c0_11 = arith.constant 0 : index
    %14 = vector.load %arg6[%c0_10, %c0_11] : memref<8x48xf32, #tpu.memory_space<vmem>>, vector<8x48xf32>
    tpu.vector_store %arg6[%c0_10, %c0_11], %13 {strides = array<i32>} : memref<8x48xf32, #tpu.memory_space<vmem>>, vector<8x48xf32>,
    return
  }
  func.func @transform_0(%arg0: i32) -> (i32, i32) {
    %c0_i32 = arith.constant 0 : i32
    %c0_i32_0 = arith.constant 0 : i32
    return %arg0, %c0_i32 : i32, i32
  }
  func.func @transform_1(%arg0: i32) -> (i32, i32) {
    %c0_i32 = arith.constant 0 : i32
    %c0_i32_0 = arith.constant 0 : i32
    %c0_i32_1 = arith.constant 0 : i32
    return %c0_i32, %c0_i32_0 : i32, i32
  }
  func.func @transform_2(%arg0: i32) -> (i32, i32) {
    %c0_i32 = arith.constant 0 : i32
    %c0_i32_0 = arith.constant 0 : i32
    %c0_i32_1 = arith.constant 0 : i32
    return %c0_i32, %c0_i32_0 : i32, i32
  }
  func.func @transform_3(%arg0: i32) -> (i32, i32) {
    %c0_i32 = arith.constant 0 : i32
    %c0_i32_0 = arith.constant 0 : i32
    %c0_i32_1 = arith.constant 0 : i32
    return %c0_i32, %c0_i32_0 : i32, i32
  }
  func.func @transform_4(%arg0: i32) -> (i32, i32) {
    %c0_i32 = arith.constant 0 : i32
    %c0_i32_0 = arith.constant 0 : i32
    %c0_i32_1 = arith.constant 0 : i32
    return %c0_i32, %c0_i32_0 : i32, i32
  }
  func.func @transform_5(%arg0: i32) -> (i32, i32) {
    %c0_i32 = arith.constant 0 : i32
    %c0_i32_0 = arith.constant 0 : i32
    return %arg0, %c0_i32 : i32, i32
  }
}

module attributes {stable_mosaic.version = 11 : i64} {
  func.func @_mm_bias_act_kernel(%arg0: i32, %arg1: memref<4x96xbf16, #tpu.memory_space<vmem>>, %arg2: memref<96x80xbf16, #tpu.memory_space<vmem>>, %arg3: memref<1x80xf32, #tpu.memory_space<vmem>>, %arg4: memref<4x80xf32, #tpu.memory_space<vmem>>) attributes {dimension_semantics = [#tpu.dimension_semantics<parallel>], iteration_bounds = array<i64: 1>, scalar_prefetch = 0 : i64, scratch_operands = 0 : i64, tpu.core_type = #tpu.core_type<tc>, window_params = [{transform_indices = @transform_0, window_bounds = array<i64: 4, 96>}, {pipeline_mode = #tpu.pipeline_mode<synchronous>, transform_indices = @transform_1, window_bounds = array<i64: 96, 80>}, {pipeline_mode = #tpu.pipeline_mode<synchronous>, transform_indices = @transform_2, window_bounds = array<i64: 1, 80>}, {transform_indices = @transform_3, window_bounds = array<i64: 4, 80>}]} {
    %c0 = arith.constant 0 : index
    %c0_0 = arith.constant 0 : index
    %0 = vector.load %arg1[%c0, %c0_0] : memref<4x96xbf16, #tpu.memory_space<vmem>>, vector<4x96xbf16>
    %c0_1 = arith.constant 0 : index
    %c0_2 = arith.constant 0 : index
    %1 = vector.load %arg2[%c0_1, %c0_2] : memref<96x80xbf16, #tpu.memory_space<vmem>>, vector<96x80xbf16>
    %cst = arith.constant dense<0.000000e+00> : vector<4x80xf32>
    %2 = tpu.matmul %0, %1, %cst {dimension_numbers = #tpu.dot_dimension_numbers<[1], [0], [0], [1], [0, 0, 1, 1], [], []>} : vector<4x96xbf16>, vector<96x80xbf16>, vector<4x80xf32> -> vector<4x80xf32>
    %c0_3 = arith.constant 0 : index
    %c0_4 = arith.constant 0 : index
    %3 = vector.load %arg3[%c0_3, %c0_4] : memref<1x80xf32, #tpu.memory_space<vmem>>, vector<1x80xf32>
    %4 = vector.broadcast %3 : vector<1x80xf32> to vector<4x80xf32>
    %5 = arith.addf %2, %4 : vector<4x80xf32>
    %cst_5 = arith.constant 0.000000e+00 : f32
    %6 = vector.broadcast %cst_5 : f32 to vector<4x80xf32>
    %7 = arith.maximumf %5, %6 : vector<4x80xf32>
    %c0_6 = arith.constant 0 : index
    %c0_7 = arith.constant 0 : index
    %8 = vector.load %arg4[%c0_6, %c0_7] : memref<4x80xf32, #tpu.memory_space<vmem>>, vector<4x80xf32>
    tpu.vector_store %arg4[%c0_6, %c0_7], %7 {strides = array<i32>} : memref<4x80xf32, #tpu.memory_space<vmem>>, vector<4x80xf32>,
    return
  }
  func.func @transform_0(%arg0: i32) -> (i32, i32) {
    %c0_i32 = arith.constant 0 : i32
    %c0_i32_0 = arith.constant 0 : i32
    return %arg0, %c0_i32 : i32, i32
  }
  func.func @transform_1(%arg0: i32) -> (i32, i32) {
    %c0_i32 = arith.constant 0 : i32
    %c0_i32_0 = arith.constant 0 : i32
    %c0_i32_1 = arith.constant 0 : i32
    return %c0_i32, %c0_i32_0 : i32, i32
  }
  func.func @transform_2(%arg0: i32) -> (i32, i32) {
    %c0_i32 = arith.constant 0 : i32
    %c0_i32_0 = arith.constant 0 : i32
    %c0_i32_1 = arith.constant 0 : i32
    return %c0_i32, %c0_i32_0 : i32, i32
  }
  func.func @transform_3(%arg0: i32) -> (i32, i32) {
    %c0_i32 = arith.constant 0 : i32
    %c0_i32_0 = arith.constant 0 : i32
    return %arg0, %c0_i32 : i32, i32
  }
}

module attributes {stable_mosaic.version = 11 : i64} {
  func.func @_mm_relu_bn_kernel(%arg0: i32, %arg1: memref<8x64xbf16, #tpu.memory_space<vmem>>, %arg2: memref<64x128xbf16, #tpu.memory_space<vmem>>, %arg3: memref<1x128xf32, #tpu.memory_space<vmem>>, %arg4: memref<1x128xf32, #tpu.memory_space<vmem>>, %arg5: memref<1x128xf32, #tpu.memory_space<vmem>>, %arg6: memref<8x128xf32, #tpu.memory_space<vmem>>) attributes {dimension_semantics = [#tpu.dimension_semantics<parallel>], iteration_bounds = array<i64: 1>, scalar_prefetch = 0 : i64, scratch_operands = 0 : i64, tpu.core_type = #tpu.core_type<tc>, window_params = [{transform_indices = @transform_0, window_bounds = array<i64: 8, 64>}, {pipeline_mode = #tpu.pipeline_mode<synchronous>, transform_indices = @transform_1, window_bounds = array<i64: 64, 128>}, {pipeline_mode = #tpu.pipeline_mode<synchronous>, transform_indices = @transform_2, window_bounds = array<i64: 1, 128>}, {pipeline_mode = #tpu.pipeline_mode<synchronous>, transform_indices = @transform_3, window_bounds = array<i64: 1, 128>}, {pipeline_mode = #tpu.pipeline_mode<synchronous>, transform_indices = @transform_4, window_bounds = array<i64: 1, 128>}, {transform_indices = @transform_5, window_bounds = array<i64: 8, 128>}]} {
    %c0 = arith.constant 0 : index
    %c0_0 = arith.constant 0 : index
    %0 = vector.load %arg1[%c0, %c0_0] : memref<8x64xbf16, #tpu.memory_space<vmem>>, vector<8x64xbf16>
    %c0_1 = arith.constant 0 : index
    %c0_2 = arith.constant 0 : index
    %1 = vector.load %arg2[%c0_1, %c0_2] : memref<64x128xbf16, #tpu.memory_space<vmem>>, vector<64x128xbf16>
    %cst = arith.constant dense<0.000000e+00> : vector<8x128xf32>
    %2 = tpu.matmul %0, %1, %cst {dimension_numbers = #tpu.dot_dimension_numbers<[1], [0], [0], [1], [0, 0, 1, 1], [], []>} : vector<8x64xbf16>, vector<64x128xbf16>, vector<8x128xf32> -> vector<8x128xf32>
    %c0_3 = arith.constant 0 : index
    %c0_4 = arith.constant 0 : index
    %3 = vector.load %arg3[%c0_3, %c0_4] : memref<1x128xf32, #tpu.memory_space<vmem>>, vector<1x128xf32>
    %4 = vector.broadcast %3 : vector<1x128xf32> to vector<8x128xf32>
    %5 = arith.addf %2, %4 : vector<8x128xf32>
    %cst_5 = arith.constant 0.000000e+00 : f32
    %6 = vector.broadcast %cst_5 : f32 to vector<8x128xf32>
    %7 = arith.maximumf %5, %6 : vector<8x128xf32>
    %c0_6 = arith.constant 0 : index
    %c0_7 = arith.constant 0 : index
    %8 = vector.load %arg4[%c0_6, %c0_7] : memref<1x128xf32, #tpu.memory_space<vmem>>, vector<1x128xf32>
    %9 = vector.broadcast %8 : vector<1x128xf32> to vector<8x128xf32>
    %10 = arith.mulf %7, %9 : vector<8x128xf32>
    %c0_8 = arith.constant 0 : index
    %c0_9 = arith.constant 0 : index
    %11 = vector.load %arg5[%c0_8, %c0_9] : memref<1x128xf32, #tpu.memory_space<vmem>>, vector<1x128xf32>
    %12 = vector.broadcast %11 : vector<1x128xf32> to vector<8x128xf32>
    %13 = arith.addf %10, %12 : vector<8x128xf32>
    %c0_10 = arith.constant 0 : index
    %c0_11 = arith.constant 0 : index
    %14 = vector.load %arg6[%c0_10, %c0_11] : memref<8x128xf32, #tpu.memory_space<vmem>>, vector<8x128xf32>
    tpu.vector_store %arg6[%c0_10, %c0_11], %13 {strides = array<i32>} : memref<8x128xf32, #tpu.memory_space<vmem>>, vector<8x128xf32>,
    return
  }
  func.func @transform_0(%arg0: i32) -> (i32, i32) {
    %c0_i32 = arith.constant 0 : i32
    %c0_i32_0 = arith.constant 0 : i32
    return %arg0, %c0_i32 : i32, i32
  }
  func.func @transform_1(%arg0: i32) -> (i32, i32) {
    %c0_i32 = arith.constant 0 : i32
    %c0_i32_0 = arith.constant 0 : i32
    %c0_i32_1 = arith.constant 0 : i32
    return %c0_i32, %c0_i32_0 : i32, i32
  }
  func.func @transform_2(%arg0: i32) -> (i32, i32) {
    %c0_i32 = arith.constant 0 : i32
    %c0_i32_0 = arith.constant 0 : i32
    %c0_i32_1 = arith.constant 0 : i32
    return %c0_i32, %c0_i32_0 : i32, i32
  }
  func.func @transform_3(%arg0: i32) -> (i32, i32) {
    %c0_i32 = arith.constant 0 : i32
    %c0_i32_0 = arith.constant 0 : i32
    %c0_i32_1 = arith.constant 0 : i32
    return %c0_i32, %c0_i32_0 : i32, i32
  }
  func.func @transform_4(%arg0: i32) -> (i32, i32) {
    %c0_i32 = arith.constant 0 : i32
    %c0_i32_0 = arith.constant 0 : i32
    %c0_i32_1 = arith.constant 0 : i32
    return %c0_i32, %c0_i32_0 : i32, i32
  }
  func.func @transform_5(%arg0: i32) -> (i32, i32) {
    %c0_i32 = arith.constant 0 : i32
    %c0_i32_0 = arith.constant 0 : i32
    return %arg0, %c0_i32 : i32, i32
  }
}

module attributes {stable_mosaic.version = 11 : i64} {
  func.func @_mm_bias_act_kernel(%arg0: i32, %arg1: memref<8x128xbf16, #tpu.memory_space<vmem>>, %arg2: memref<128x32xbf16, #tpu.memory_space<vmem>>, %arg3: memref<1x32xf32, #tpu.memory_space<vmem>>, %arg4: memref<8x32xf32, #tpu.memory_space<vmem>>) attributes {dimension_semantics = [#tpu.dimension_semantics<parallel>], iteration_bounds = array<i64: 1>, scalar_prefetch = 0 : i64, scratch_operands = 0 : i64, tpu.core_type = #tpu.core_type<tc>, window_params = [{transform_indices = @transform_0, window_bounds = array<i64: 8, 128>}, {pipeline_mode = #tpu.pipeline_mode<synchronous>, transform_indices = @transform_1, window_bounds = array<i64: 128, 32>}, {pipeline_mode = #tpu.pipeline_mode<synchronous>, transform_indices = @transform_2, window_bounds = array<i64: 1, 32>}, {transform_indices = @transform_3, window_bounds = array<i64: 8, 32>}]} {
    %c0 = arith.constant 0 : index
    %c0_0 = arith.constant 0 : index
    %0 = vector.load %arg1[%c0, %c0_0] : memref<8x128xbf16, #tpu.memory_space<vmem>>, vector<8x128xbf16>
    %c0_1 = arith.constant 0 : index
    %c0_2 = arith.constant 0 : index
    %1 = vector.load %arg2[%c0_1, %c0_2] : memref<128x32xbf16, #tpu.memory_space<vmem>>, vector<128x32xbf16>
    %cst = arith.constant dense<0.000000e+00> : vector<8x32xf32>
    %2 = tpu.matmul %0, %1, %cst {dimension_numbers = #tpu.dot_dimension_numbers<[1], [0], [0], [1], [0, 0, 1, 1], [], []>} : vector<8x128xbf16>, vector<128x32xbf16>, vector<8x32xf32> -> vector<8x32xf32>
    %c0_3 = arith.constant 0 : index
    %c0_4 = arith.constant 0 : index
    %3 = vector.load %arg3[%c0_3, %c0_4] : memref<1x32xf32, #tpu.memory_space<vmem>>, vector<1x32xf32>
    %4 = vector.broadcast %3 : vector<1x32xf32> to vector<8x32xf32>
    %5 = arith.addf %2, %4 : vector<8x32xf32>
    %cst_5 = arith.constant 0.000000e+00 : f32
    %6 = vector.broadcast %cst_5 : f32 to vector<8x32xf32>
    %7 = arith.maximumf %5, %6 : vector<8x32xf32>
    %c0_6 = arith.constant 0 : index
    %c0_7 = arith.constant 0 : index
    %8 = vector.load %arg4[%c0_6, %c0_7] : memref<8x32xf32, #tpu.memory_space<vmem>>, vector<8x32xf32>
    tpu.vector_store %arg4[%c0_6, %c0_7], %7 {strides = array<i32>} : memref<8x32xf32, #tpu.memory_space<vmem>>, vector<8x32xf32>,
    return
  }
  func.func @transform_0(%arg0: i32) -> (i32, i32) {
    %c0_i32 = arith.constant 0 : i32
    %c0_i32_0 = arith.constant 0 : i32
    return %arg0, %c0_i32 : i32, i32
  }
  func.func @transform_1(%arg0: i32) -> (i32, i32) {
    %c0_i32 = arith.constant 0 : i32
    %c0_i32_0 = arith.constant 0 : i32
    %c0_i32_1 = arith.constant 0 : i32
    return %c0_i32, %c0_i32_0 : i32, i32
  }
  func.func @transform_2(%arg0: i32) -> (i32, i32) {
    %c0_i32 = arith.constant 0 : i32
    %c0_i32_0 = arith.constant 0 : i32
    %c0_i32_1 = arith.constant 0 : i32
    return %c0_i32, %c0_i32_0 : i32, i32
  }
  func.func @transform_3(%arg0: i32) -> (i32, i32) {
    %c0_i32 = arith.constant 0 : i32
    %c0_i32_0 = arith.constant 0 : i32
    return %arg0, %c0_i32 : i32, i32
  }
}

module attributes {stable_mosaic.version = 11 : i64} {
  func.func @_mm_relu_bn_kernel(%arg0: i32, %arg1: memref<8x288xbf16, #tpu.memory_space<vmem>>, %arg2: memref<288x128xbf16, #tpu.memory_space<vmem>>, %arg3: memref<1x128xf32, #tpu.memory_space<vmem>>, %arg4: memref<1x128xf32, #tpu.memory_space<vmem>>, %arg5: memref<1x128xf32, #tpu.memory_space<vmem>>, %arg6: memref<8x128xf32, #tpu.memory_space<vmem>>) attributes {dimension_semantics = [#tpu.dimension_semantics<parallel>], iteration_bounds = array<i64: 1>, scalar_prefetch = 0 : i64, scratch_operands = 0 : i64, tpu.core_type = #tpu.core_type<tc>, window_params = [{transform_indices = @transform_0, window_bounds = array<i64: 8, 288>}, {pipeline_mode = #tpu.pipeline_mode<synchronous>, transform_indices = @transform_1, window_bounds = array<i64: 288, 128>}, {pipeline_mode = #tpu.pipeline_mode<synchronous>, transform_indices = @transform_2, window_bounds = array<i64: 1, 128>}, {pipeline_mode = #tpu.pipeline_mode<synchronous>, transform_indices = @transform_3, window_bounds = array<i64: 1, 128>}, {pipeline_mode = #tpu.pipeline_mode<synchronous>, transform_indices = @transform_4, window_bounds = array<i64: 1, 128>}, {transform_indices = @transform_5, window_bounds = array<i64: 8, 128>}]} {
    %c0 = arith.constant 0 : index
    %c0_0 = arith.constant 0 : index
    %0 = vector.load %arg1[%c0, %c0_0] : memref<8x288xbf16, #tpu.memory_space<vmem>>, vector<8x288xbf16>
    %c0_1 = arith.constant 0 : index
    %c0_2 = arith.constant 0 : index
    %1 = vector.load %arg2[%c0_1, %c0_2] : memref<288x128xbf16, #tpu.memory_space<vmem>>, vector<288x128xbf16>
    %cst = arith.constant dense<0.000000e+00> : vector<8x128xf32>
    %2 = tpu.matmul %0, %1, %cst {dimension_numbers = #tpu.dot_dimension_numbers<[1], [0], [0], [1], [0, 0, 1, 1], [], []>} : vector<8x288xbf16>, vector<288x128xbf16>, vector<8x128xf32> -> vector<8x128xf32>
    %c0_3 = arith.constant 0 : index
    %c0_4 = arith.constant 0 : index
    %3 = vector.load %arg3[%c0_3, %c0_4] : memref<1x128xf32, #tpu.memory_space<vmem>>, vector<1x128xf32>
    %4 = vector.broadcast %3 : vector<1x128xf32> to vector<8x128xf32>
    %5 = arith.addf %2, %4 : vector<8x128xf32>
    %cst_5 = arith.constant 0.000000e+00 : f32
    %6 = vector.broadcast %cst_5 : f32 to vector<8x128xf32>
    %7 = arith.maximumf %5, %6 : vector<8x128xf32>
    %c0_6 = arith.constant 0 : index
    %c0_7 = arith.constant 0 : index
    %8 = vector.load %arg4[%c0_6, %c0_7] : memref<1x128xf32, #tpu.memory_space<vmem>>, vector<1x128xf32>
    %9 = vector.broadcast %8 : vector<1x128xf32> to vector<8x128xf32>
    %10 = arith.mulf %7, %9 : vector<8x128xf32>
    %c0_8 = arith.constant 0 : index
    %c0_9 = arith.constant 0 : index
    %11 = vector.load %arg5[%c0_8, %c0_9] : memref<1x128xf32, #tpu.memory_space<vmem>>, vector<1x128xf32>
    %12 = vector.broadcast %11 : vector<1x128xf32> to vector<8x128xf32>
    %13 = arith.addf %10, %12 : vector<8x128xf32>
    %c0_10 = arith.constant 0 : index
    %c0_11 = arith.constant 0 : index
    %14 = vector.load %arg6[%c0_10, %c0_11] : memref<8x128xf32, #tpu.memory_space<vmem>>, vector<8x128xf32>
    tpu.vector_store %arg6[%c0_10, %c0_11], %13 {strides = array<i32>} : memref<8x128xf32, #tpu.memory_space<vmem>>, vector<8x128xf32>,
    return
  }
  func.func @transform_0(%arg0: i32) -> (i32, i32) {
    %c0_i32 = arith.constant 0 : i32
    %c0_i32_0 = arith.constant 0 : i32
    return %arg0, %c0_i32 : i32, i32
  }
  func.func @transform_1(%arg0: i32) -> (i32, i32) {
    %c0_i32 = arith.constant 0 : i32
    %c0_i32_0 = arith.constant 0 : i32
    %c0_i32_1 = arith.constant 0 : i32
    return %c0_i32, %c0_i32_0 : i32, i32
  }
  func.func @transform_2(%arg0: i32) -> (i32, i32) {
    %c0_i32 = arith.constant 0 : i32
    %c0_i32_0 = arith.constant 0 : i32
    %c0_i32_1 = arith.constant 0 : i32
    return %c0_i32, %c0_i32_0 : i32, i32
  }
  func.func @transform_3(%arg0: i32) -> (i32, i32) {
    %c0_i32 = arith.constant 0 : i32
    %c0_i32_0 = arith.constant 0 : i32
    %c0_i32_1 = arith.constant 0 : i32
    return %c0_i32, %c0_i32_0 : i32, i32
  }
  func.func @transform_4(%arg0: i32) -> (i32, i32) {
    %c0_i32 = arith.constant 0 : i32
    %c0_i32_0 = arith.constant 0 : i32
    %c0_i32_1 = arith.constant 0 : i32
    return %c0_i32, %c0_i32_0 : i32, i32
  }
  func.func @transform_5(%arg0: i32) -> (i32, i32) {
    %c0_i32 = arith.constant 0 : i32
    %c0_i32_0 = arith.constant 0 : i32
    return %arg0, %c0_i32 : i32, i32
  }
}

module attributes {stable_mosaic.version = 11 : i64} {
  func.func @_mm_relu_bn_kernel(%arg0: i32, %arg1: memref<4x96xbf16, #tpu.memory_space<vmem>>, %arg2: memref<96x80xbf16, #tpu.memory_space<vmem>>, %arg3: memref<1x80xf32, #tpu.memory_space<vmem>>, %arg4: memref<1x80xf32, #tpu.memory_space<vmem>>, %arg5: memref<1x80xf32, #tpu.memory_space<vmem>>, %arg6: memref<4x80xf32, #tpu.memory_space<vmem>>) attributes {dimension_semantics = [#tpu.dimension_semantics<parallel>], iteration_bounds = array<i64: 1>, scalar_prefetch = 0 : i64, scratch_operands = 0 : i64, tpu.core_type = #tpu.core_type<tc>, window_params = [{transform_indices = @transform_0, window_bounds = array<i64: 4, 96>}, {pipeline_mode = #tpu.pipeline_mode<synchronous>, transform_indices = @transform_1, window_bounds = array<i64: 96, 80>}, {pipeline_mode = #tpu.pipeline_mode<synchronous>, transform_indices = @transform_2, window_bounds = array<i64: 1, 80>}, {pipeline_mode = #tpu.pipeline_mode<synchronous>, transform_indices = @transform_3, window_bounds = array<i64: 1, 80>}, {pipeline_mode = #tpu.pipeline_mode<synchronous>, transform_indices = @transform_4, window_bounds = array<i64: 1, 80>}, {transform_indices = @transform_5, window_bounds = array<i64: 4, 80>}]} {
    %c0 = arith.constant 0 : index
    %c0_0 = arith.constant 0 : index
    %0 = vector.load %arg1[%c0, %c0_0] : memref<4x96xbf16, #tpu.memory_space<vmem>>, vector<4x96xbf16>
    %c0_1 = arith.constant 0 : index
    %c0_2 = arith.constant 0 : index
    %1 = vector.load %arg2[%c0_1, %c0_2] : memref<96x80xbf16, #tpu.memory_space<vmem>>, vector<96x80xbf16>
    %cst = arith.constant dense<0.000000e+00> : vector<4x80xf32>
    %2 = tpu.matmul %0, %1, %cst {dimension_numbers = #tpu.dot_dimension_numbers<[1], [0], [0], [1], [0, 0, 1, 1], [], []>} : vector<4x96xbf16>, vector<96x80xbf16>, vector<4x80xf32> -> vector<4x80xf32>
    %c0_3 = arith.constant 0 : index
    %c0_4 = arith.constant 0 : index
    %3 = vector.load %arg3[%c0_3, %c0_4] : memref<1x80xf32, #tpu.memory_space<vmem>>, vector<1x80xf32>
    %4 = vector.broadcast %3 : vector<1x80xf32> to vector<4x80xf32>
    %5 = arith.addf %2, %4 : vector<4x80xf32>
    %cst_5 = arith.constant 0.000000e+00 : f32
    %6 = vector.broadcast %cst_5 : f32 to vector<4x80xf32>
    %7 = arith.maximumf %5, %6 : vector<4x80xf32>
    %c0_6 = arith.constant 0 : index
    %c0_7 = arith.constant 0 : index
    %8 = vector.load %arg4[%c0_6, %c0_7] : memref<1x80xf32, #tpu.memory_space<vmem>>, vector<1x80xf32>
    %9 = vector.broadcast %8 : vector<1x80xf32> to vector<4x80xf32>
    %10 = arith.mulf %7, %9 : vector<4x80xf32>
    %c0_8 = arith.constant 0 : index
    %c0_9 = arith.constant 0 : index
    %11 = vector.load %arg5[%c0_8, %c0_9] : memref<1x80xf32, #tpu.memory_space<vmem>>, vector<1x80xf32>
    %12 = vector.broadcast %11 : vector<1x80xf32> to vector<4x80xf32>
    %13 = arith.addf %10, %12 : vector<4x80xf32>
    %c0_10 = arith.constant 0 : index
    %c0_11 = arith.constant 0 : index
    %14 = vector.load %arg6[%c0_10, %c0_11] : memref<4x80xf32, #tpu.memory_space<vmem>>, vector<4x80xf32>
    tpu.vector_store %arg6[%c0_10, %c0_11], %13 {strides = array<i32>} : memref<4x80xf32, #tpu.memory_space<vmem>>, vector<4x80xf32>,
    return
  }
  func.func @transform_0(%arg0: i32) -> (i32, i32) {
    %c0_i32 = arith.constant 0 : i32
    %c0_i32_0 = arith.constant 0 : i32
    return %arg0, %c0_i32 : i32, i32
  }
  func.func @transform_1(%arg0: i32) -> (i32, i32) {
    %c0_i32 = arith.constant 0 : i32
    %c0_i32_0 = arith.constant 0 : i32
    %c0_i32_1 = arith.constant 0 : i32
    return %c0_i32, %c0_i32_0 : i32, i32
  }
  func.func @transform_2(%arg0: i32) -> (i32, i32) {
    %c0_i32 = arith.constant 0 : i32
    %c0_i32_0 = arith.constant 0 : i32
    %c0_i32_1 = arith.constant 0 : i32
    return %c0_i32, %c0_i32_0 : i32, i32
  }
  func.func @transform_3(%arg0: i32) -> (i32, i32) {
    %c0_i32 = arith.constant 0 : i32
    %c0_i32_0 = arith.constant 0 : i32
    %c0_i32_1 = arith.constant 0 : i32
    return %c0_i32, %c0_i32_0 : i32, i32
  }
  func.func @transform_4(%arg0: i32) -> (i32, i32) {
    %c0_i32 = arith.constant 0 : i32
    %c0_i32_0 = arith.constant 0 : i32
    %c0_i32_1 = arith.constant 0 : i32
    return %c0_i32, %c0_i32_0 : i32, i32
  }
  func.func @transform_5(%arg0: i32) -> (i32, i32) {
    %c0_i32 = arith.constant 0 : i32
    %c0_i32_0 = arith.constant 0 : i32
    return %arg0, %c0_i32 : i32, i32
  }
}

module attributes {stable_mosaic.version = 11 : i64} {
  func.func @_mm_relu_bn_kernel(%arg0: i32, %arg1: memref<4x128xbf16, #tpu.memory_space<vmem>>, %arg2: memref<128x64xbf16, #tpu.memory_space<vmem>>, %arg3: memref<1x64xf32, #tpu.memory_space<vmem>>, %arg4: memref<1x64xf32, #tpu.memory_space<vmem>>, %arg5: memref<1x64xf32, #tpu.memory_space<vmem>>, %arg6: memref<4x64xf32, #tpu.memory_space<vmem>>) attributes {dimension_semantics = [#tpu.dimension_semantics<parallel>], iteration_bounds = array<i64: 1>, scalar_prefetch = 0 : i64, scratch_operands = 0 : i64, tpu.core_type = #tpu.core_type<tc>, window_params = [{transform_indices = @transform_0, window_bounds = array<i64: 4, 128>}, {pipeline_mode = #tpu.pipeline_mode<synchronous>, transform_indices = @transform_1, window_bounds = array<i64: 128, 64>}, {pipeline_mode = #tpu.pipeline_mode<synchronous>, transform_indices = @transform_2, window_bounds = array<i64: 1, 64>}, {pipeline_mode = #tpu.pipeline_mode<synchronous>, transform_indices = @transform_3, window_bounds = array<i64: 1, 64>}, {pipeline_mode = #tpu.pipeline_mode<synchronous>, transform_indices = @transform_4, window_bounds = array<i64: 1, 64>}, {transform_indices = @transform_5, window_bounds = array<i64: 4, 64>}]} {
    %c0 = arith.constant 0 : index
    %c0_0 = arith.constant 0 : index
    %0 = vector.load %arg1[%c0, %c0_0] : memref<4x128xbf16, #tpu.memory_space<vmem>>, vector<4x128xbf16>
    %c0_1 = arith.constant 0 : index
    %c0_2 = arith.constant 0 : index
    %1 = vector.load %arg2[%c0_1, %c0_2] : memref<128x64xbf16, #tpu.memory_space<vmem>>, vector<128x64xbf16>
    %cst = arith.constant dense<0.000000e+00> : vector<4x64xf32>
    %2 = tpu.matmul %0, %1, %cst {dimension_numbers = #tpu.dot_dimension_numbers<[1], [0], [0], [1], [0, 0, 1, 1], [], []>} : vector<4x128xbf16>, vector<128x64xbf16>, vector<4x64xf32> -> vector<4x64xf32>
    %c0_3 = arith.constant 0 : index
    %c0_4 = arith.constant 0 : index
    %3 = vector.load %arg3[%c0_3, %c0_4] : memref<1x64xf32, #tpu.memory_space<vmem>>, vector<1x64xf32>
    %4 = vector.broadcast %3 : vector<1x64xf32> to vector<4x64xf32>
    %5 = arith.addf %2, %4 : vector<4x64xf32>
    %cst_5 = arith.constant 0.000000e+00 : f32
    %6 = vector.broadcast %cst_5 : f32 to vector<4x64xf32>
    %7 = arith.maximumf %5, %6 : vector<4x64xf32>
    %c0_6 = arith.constant 0 : index
    %c0_7 = arith.constant 0 : index
    %8 = vector.load %arg4[%c0_6, %c0_7] : memref<1x64xf32, #tpu.memory_space<vmem>>, vector<1x64xf32>
    %9 = vector.broadcast %8 : vector<1x64xf32> to vector<4x64xf32>
    %10 = arith.mulf %7, %9 : vector<4x64xf32>
    %c0_8 = arith.constant 0 : index
    %c0_9 = arith.constant 0 : index
    %11 = vector.load %arg5[%c0_8, %c0_9] : memref<1x64xf32, #tpu.memory_space<vmem>>, vector<1x64xf32>
    %12 = vector.broadcast %11 : vector<1x64xf32> to vector<4x64xf32>
    %13 = arith.addf %10, %12 : vector<4x64xf32>
    %c0_10 = arith.constant 0 : index
    %c0_11 = arith.constant 0 : index
    %14 = vector.load %arg6[%c0_10, %c0_11] : memref<4x64xf32, #tpu.memory_space<vmem>>, vector<4x64xf32>
    tpu.vector_store %arg6[%c0_10, %c0_11], %13 {strides = array<i32>} : memref<4x64xf32, #tpu.memory_space<vmem>>, vector<4x64xf32>,
    return
  }
  func.func @transform_0(%arg0: i32) -> (i32, i32) {
    %c0_i32 = arith.constant 0 : i32
    %c0_i32_0 = arith.constant 0 : i32
    return %arg0, %c0_i32 : i32, i32
  }
  func.func @transform_1(%arg0: i32) -> (i32, i32) {
    %c0_i32 = arith.constant 0 : i32
    %c0_i32_0 = arith.constant 0 : i32
    %c0_i32_1 = arith.constant 0 : i32
    return %c0_i32, %c0_i32_0 : i32, i32
  }
  func.func @transform_2(%arg0: i32) -> (i32, i32) {
    %c0_i32 = arith.constant 0 : i32
    %c0_i32_0 = arith.constant 0 : i32
    %c0_i32_1 = arith.constant 0 : i32
    return %c0_i32, %c0_i32_0 : i32, i32
  }
  func.func @transform_3(%arg0: i32) -> (i32, i32) {
    %c0_i32 = arith.constant 0 : i32
    %c0_i32_0 = arith.constant 0 : i32
    %c0_i32_1 = arith.constant 0 : i32
    return %c0_i32, %c0_i32_0 : i32, i32
  }
  func.func @transform_4(%arg0: i32) -> (i32, i32) {
    %c0_i32 = arith.constant 0 : i32
    %c0_i32_0 = arith.constant 0 : i32
    %c0_i32_1 = arith.constant 0 : i32
    return %c0_i32, %c0_i32_0 : i32, i32
  }
  func.func @transform_5(%arg0: i32) -> (i32, i32) {
    %c0_i32 = arith.constant 0 : i32
    %c0_i32_0 = arith.constant 0 : i32
    return %arg0, %c0_i32 : i32, i32
  }
}

module attributes {stable_mosaic.version = 11 : i64} {
  func.func @_mm_relu_bn_kernel(%arg0: i32, %arg1: memref<4x576xbf16, #tpu.memory_space<vmem>>, %arg2: memref<576x384xbf16, #tpu.memory_space<vmem>>, %arg3: memref<1x384xf32, #tpu.memory_space<vmem>>, %arg4: memref<1x384xf32, #tpu.memory_space<vmem>>, %arg5: memref<1x384xf32, #tpu.memory_space<vmem>>, %arg6: memref<4x384xf32, #tpu.memory_space<vmem>>) attributes {dimension_semantics = [#tpu.dimension_semantics<parallel>], iteration_bounds = array<i64: 1>, scalar_prefetch = 0 : i64, scratch_operands = 0 : i64, tpu.core_type = #tpu.core_type<tc>, window_params = [{transform_indices = @transform_0, window_bounds = array<i64: 4, 576>}, {pipeline_mode = #tpu.pipeline_mode<synchronous>, transform_indices = @transform_1, window_bounds = array<i64: 576, 384>}, {pipeline_mode = #tpu.pipeline_mode<synchronous>, transform_indices = @transform_2, window_bounds = array<i64: 1, 384>}, {pipeline_mode = #tpu.pipeline_mode<synchronous>, transform_indices = @transform_3, window_bounds = array<i64: 1, 384>}, {pipeline_mode = #tpu.pipeline_mode<synchronous>, transform_indices = @transform_4, window_bounds = array<i64: 1, 384>}, {transform_indices = @transform_5, window_bounds = array<i64: 4, 384>}]} {
    %c0 = arith.constant 0 : index
    %c0_0 = arith.constant 0 : index
    %0 = vector.load %arg1[%c0, %c0_0] : memref<4x576xbf16, #tpu.memory_space<vmem>>, vector<4x576xbf16>
    %c0_1 = arith.constant 0 : index
    %c0_2 = arith.constant 0 : index
    %1 = vector.load %arg2[%c0_1, %c0_2] : memref<576x384xbf16, #tpu.memory_space<vmem>>, vector<576x384xbf16>
    %cst = arith.constant dense<0.000000e+00> : vector<4x384xf32>
    %2 = tpu.matmul %0, %1, %cst {dimension_numbers = #tpu.dot_dimension_numbers<[1], [0], [0], [1], [0, 0, 1, 1], [], []>} : vector<4x576xbf16>, vector<576x384xbf16>, vector<4x384xf32> -> vector<4x384xf32>
    %c0_3 = arith.constant 0 : index
    %c0_4 = arith.constant 0 : index
    %3 = vector.load %arg3[%c0_3, %c0_4] : memref<1x384xf32, #tpu.memory_space<vmem>>, vector<1x384xf32>
    %4 = vector.broadcast %3 : vector<1x384xf32> to vector<4x384xf32>
    %5 = arith.addf %2, %4 : vector<4x384xf32>
    %cst_5 = arith.constant 0.000000e+00 : f32
    %6 = vector.broadcast %cst_5 : f32 to vector<4x384xf32>
    %7 = arith.maximumf %5, %6 : vector<4x384xf32>
    %c0_6 = arith.constant 0 : index
    %c0_7 = arith.constant 0 : index
    %8 = vector.load %arg4[%c0_6, %c0_7] : memref<1x384xf32, #tpu.memory_space<vmem>>, vector<1x384xf32>
    %9 = vector.broadcast %8 : vector<1x384xf32> to vector<4x384xf32>
    %10 = arith.mulf %7, %9 : vector<4x384xf32>
    %c0_8 = arith.constant 0 : index
    %c0_9 = arith.constant 0 : index
    %11 = vector.load %arg5[%c0_8, %c0_9] : memref<1x384xf32, #tpu.memory_space<vmem>>, vector<1x384xf32>
    %12 = vector.broadcast %11 : vector<1x384xf32> to vector<4x384xf32>
    %13 = arith.addf %10, %12 : vector<4x384xf32>
    %c0_10 = arith.constant 0 : index
    %c0_11 = arith.constant 0 : index
    %14 = vector.load %arg6[%c0_10, %c0_11] : memref<4x384xf32, #tpu.memory_space<vmem>>, vector<4x384xf32>
    tpu.vector_store %arg6[%c0_10, %c0_11], %13 {strides = array<i32>} : memref<4x384xf32, #tpu.memory_space<vmem>>, vector<4x384xf32>,
    return
  }
  func.func @transform_0(%arg0: i32) -> (i32, i32) {
    %c0_i32 = arith.constant 0 : i32
    %c0_i32_0 = arith.constant 0 : i32
    return %arg0, %c0_i32 : i32, i32
  }
  func.func @transform_1(%arg0: i32) -> (i32, i32) {
    %c0_i32 = arith.constant 0 : i32
    %c0_i32_0 = arith.constant 0 : i32
    %c0_i32_1 = arith.constant 0 : i32
    return %c0_i32, %c0_i32_0 : i32, i32
  }
  func.func @transform_2(%arg0: i32) -> (i32, i32) {
    %c0_i32 = arith.constant 0 : i32
    %c0_i32_0 = arith.constant 0 : i32
    %c0_i32_1 = arith.constant 0 : i32
    return %c0_i32, %c0_i32_0 : i32, i32
  }
  func.func @transform_3(%arg0: i32) -> (i32, i32) {
    %c0_i32 = arith.constant 0 : i32
    %c0_i32_0 = arith.constant 0 : i32
    %c0_i32_1 = arith.constant 0 : i32
    return %c0_i32, %c0_i32_0 : i32, i32
  }
  func.func @transform_4(%arg0: i32) -> (i32, i32) {
    %c0_i32 = arith.constant 0 : i32
    %c0_i32_0 = arith.constant 0 : i32
    %c0_i32_1 = arith.constant 0 : i32
    return %c0_i32, %c0_i32_0 : i32, i32
  }
  func.func @transform_5(%arg0: i32) -> (i32, i32) {
    %c0_i32 = arith.constant 0 : i32
    %c0_i32_0 = arith.constant 0 : i32
    return %arg0, %c0_i32 : i32, i32
  }
}

module attributes {stable_mosaic.version = 11 : i64} {
  func.func @_mm_bias_act_kernel(%arg0: i32, %arg1: memref<2x1024xbf16, #tpu.memory_space<vmem>>, %arg2: memref<1024x10xbf16, #tpu.memory_space<vmem>>, %arg3: memref<1x10xf32, #tpu.memory_space<vmem>>, %arg4: memref<2x10xf32, #tpu.memory_space<vmem>>) attributes {dimension_semantics = [#tpu.dimension_semantics<parallel>], iteration_bounds = array<i64: 1>, scalar_prefetch = 0 : i64, scratch_operands = 0 : i64, tpu.core_type = #tpu.core_type<tc>, window_params = [{transform_indices = @transform_0, window_bounds = array<i64: 2, 1024>}, {pipeline_mode = #tpu.pipeline_mode<synchronous>, transform_indices = @transform_1, window_bounds = array<i64: 1024, 10>}, {pipeline_mode = #tpu.pipeline_mode<synchronous>, transform_indices = @transform_2, window_bounds = array<i64: 1, 10>}, {transform_indices = @transform_3, window_bounds = array<i64: 2, 10>}]} {
    %c0 = arith.constant 0 : index
    %c0_0 = arith.constant 0 : index
    %0 = vector.load %arg1[%c0, %c0_0] : memref<2x1024xbf16, #tpu.memory_space<vmem>>, vector<2x1024xbf16>
    %c0_1 = arith.constant 0 : index
    %c0_2 = arith.constant 0 : index
    %1 = vector.load %arg2[%c0_1, %c0_2] : memref<1024x10xbf16, #tpu.memory_space<vmem>>, vector<1024x10xbf16>
    %cst = arith.constant dense<0.000000e+00> : vector<2x10xf32>
    %2 = tpu.matmul %0, %1, %cst {dimension_numbers = #tpu.dot_dimension_numbers<[1], [0], [0], [1], [0, 0, 1, 1], [], []>} : vector<2x1024xbf16>, vector<1024x10xbf16>, vector<2x10xf32> -> vector<2x10xf32>
    %c0_3 = arith.constant 0 : index
    %c0_4 = arith.constant 0 : index
    %3 = vector.load %arg3[%c0_3, %c0_4] : memref<1x10xf32, #tpu.memory_space<vmem>>, vector<1x10xf32>
    %4 = vector.broadcast %3 : vector<1x10xf32> to vector<2x10xf32>
    %5 = arith.addf %2, %4 : vector<2x10xf32>
    %c0_5 = arith.constant 0 : index
    %c0_6 = arith.constant 0 : index
    %6 = vector.load %arg4[%c0_5, %c0_6] : memref<2x10xf32, #tpu.memory_space<vmem>>, vector<2x10xf32>
    tpu.vector_store %arg4[%c0_5, %c0_6], %5 {strides = array<i32>} : memref<2x10xf32, #tpu.memory_space<vmem>>, vector<2x10xf32>,
    return
  }
  func.func @transform_0(%arg0: i32) -> (i32, i32) {
    %c0_i32 = arith.constant 0 : i32
    %c0_i32_0 = arith.constant 0 : i32
    return %arg0, %c0_i32 : i32, i32
  }
  func.func @transform_1(%arg0: i32) -> (i32, i32) {
    %c0_i32 = arith.constant 0 : i32
    %c0_i32_0 = arith.constant 0 : i32
    %c0_i32_1 = arith.constant 0 : i32
    return %c0_i32, %c0_i32_0 : i32, i32
  }
  func.func @transform_2(%arg0: i32) -> (i32, i32) {
    %c0_i32 = arith.constant 0 : i32
    %c0_i32_0 = arith.constant 0 : i32
    %c0_i32_1 = arith.constant 0 : i32
    return %c0_i32, %c0_i32_0 : i32, i32
  }
  func.func @transform_3(%arg0: i32) -> (i32, i32) {
    %c0_i32 = arith.constant 0 : i32
    %c0_i32_0 = arith.constant 0 : i32
    return %arg0, %c0_i32 : i32, i32
  }
}

</mosaic_0001>

<llo_original>
// kernel: mcnet_forward.22
$region0: #{mcnet_forward.22}
  #allocation0 [shape = 'u32[]', space=smem, size = 0x4, offset = 0x4, fixed_abs, tag = 'smem constant byte address 0x4 - core index']
  #allocation1 [shape = 'u32[144,128]{1,0:T(1,128)}', space=vmem, size = 0x12000, scoped, tag = 'internal scratch']
  %s0 = inlined_call_operand.vmem [shape: bf16[256,9], index: 0, kind: input, shape index: {}]
  %s1 = inlined_call_operand.vmem [shape: bf16[9,64], index: 1, kind: input, shape index: {}]
  %s2 = inlined_call_operand.vmem [shape: f32[1,64], index: 2, kind: input, shape index: {}]
  %s3 = inlined_call_operand.vmem [shape: f32[1,64], index: 3, kind: input, shape index: {}]
  %s4 = inlined_call_operand.vmem [shape: f32[1,64], index: 4, kind: input, shape index: {}]
  %s5 = inlined_call_operand.vmem [shape: f32[256,64], index: 5, kind: output, shape index: {}]
  %s6 = sld [smem:[#allocation0]]
  $region30: #{mcnet_forward.22} parent=0
    _
  %s8 = ssub.s32 1, %s6
  %s9 = scalar_select 0, %s8, %s6
  // Predicated region
  $region2: #{mcnet_forward.22} parent=0 // pred_check
    _
  $region3: #{mcnet_forward.22} parent=0 // pred_check_branch
    %11 = sbr.rel (0) target = $region5
  $region4: #{mcnet_forward.22} parent=0 // pred_region
    _
  $region5: #{mcnet_forward.22} parent=0 // pred_fallthru
    _
  // Predicated region
  $region6: #{mcnet_forward.22} parent=0 // pred_check
    _
  $region7: #{mcnet_forward.22} parent=0 // pred_check_branch
    %13 = sbr.rel (0) target = $region9
  $region8: #{mcnet_forward.22} parent=0 // pred_region
    _
  $region9: #{mcnet_forward.22} parent=0 // pred_fallthru
    _
  // Predicated region
  $region10: #{mcnet_forward.22} parent=0 // pred_check
    _
  $region11: #{mcnet_forward.22} parent=0 // pred_check_branch
    %15 = sbr.rel (0) target = $region13
  $region12: #{mcnet_forward.22} parent=0 // pred_region
    _
  $region13: #{mcnet_forward.22} parent=0 // pred_fallthru
    _
  // Predicated region
  $region14: #{mcnet_forward.22} parent=0 // pred_check
    _
  $region15: #{mcnet_forward.22} parent=0 // pred_check_branch
    %17 = sbr.rel (0) target = $region17
  $region16: #{mcnet_forward.22} parent=0 // pred_region
    _
  $region17: #{mcnet_forward.22} parent=0 // pred_fallthru
    _
  // Predicated region
  $region18: #{mcnet_forward.22} parent=0 // pred_check
    _
  $region19: #{mcnet_forward.22} parent=0 // pred_check_branch
    %19 = sbr.rel (0) target = $region21
  $region20: #{mcnet_forward.22} parent=0 // pred_region
    _
  $region21: #{mcnet_forward.22} parent=0 // pred_fallthru
    _
  %v21 = vld [vmem:[%s0] sm:$0xf]
  %v22 = vld [vmem:[%s0 + $0x4] sm:$0xf]
  %v23 = vld [vmem:[%s0 + $0x8] sm:$0xf]
  %v24 = vld [vmem:[%s0 + $0xc] sm:$0xf]
  %v25 = vld [vmem:[%s0 + $0x10] sm:$0xf]
  %v26 = vld [vmem:[%s0 + $0x14] sm:$0xf]
  %v27 = vld [vmem:[%s0 + $0x18] sm:$0xf]
  %v28 = vld [vmem:[%s0 + $0x1c] sm:$0xf]
  %v29 = vld [vmem:[%s0 + $0x20] sm:$0xf]
  %v30 = vld [vmem:[%s0 + $0x24] sm:$0xf]
  %v31 = vld [vmem:[%s0 + $0x28] sm:$0xf]
  %v32 = vld [vmem:[%s0 + $0x2c] sm:$0xf]
  %v33 = vld [vmem:[%s0 + $0x30] sm:$0xf]
  %v34 = vld [vmem:[%s0 + $0x34] sm:$0xf]
  %v35 = vld [vmem:[%s0 + $0x38] sm:$0xf]
  %v36 = vld [vmem:[%s0 + $0x3c] sm:$0xf]
  %v37 = vld [vmem:[%s0 + $0x40] sm:$0xf]
  %v38 = vld [vmem:[%s0 + $0x44] sm:$0xf]
  %v39 = vld [vmem:[%s0 + $0x48] sm:$0xf]
  %v40 = vld [vmem:[%s0 + $0x4c] sm:$0xf]
  %v41 = vld [vmem:[%s0 + $0x50] sm:$0xf]
  %v42 = vld [vmem:[%s0 + $0x54] sm:$0xf]
  %v43 = vld [vmem:[%s0 + $0x58] sm:$0xf]
  %v44 = vld [vmem:[%s0 + $0x5c] sm:$0xf]
  %v45 = vld [vmem:[%s0 + $0x60] sm:$0xf]
  %v46 = vld [vmem:[%s0 + $0x64] sm:$0xf]
  %v47 = vld [vmem:[%s0 + $0x68] sm:$0xf]
  %v48 = vld [vmem:[%s0 + $0x6c] sm:$0xf]
  %v49 = vld [vmem:[%s0 + $0x70] sm:$0xf]
  %v50 = vld [vmem:[%s0 + $0x74] sm:$0xf]
  %v51 = vld [vmem:[%s0 + $0x78] sm:$0xf]
  %v52 = vld [vmem:[%s0 + $0x7c] sm:$0xf]
  %v53 = vld [vmem:[%s1] sm:$0xf]
  %v54 = vld [vmem:[%s1 + $0x4] sm:$0x1]
  %v55 = vld [vmem:[%s2] sm:$0x1]
  %v57 = vlaneseq
  %v58 = vshrl.u32 %v57, 7
  %v59 = vsub.s32 0, %v58
  %v60 = vrot.slane %v55, %v59
  %v94 = vunpack.c.l.b16 %v21
  %v95 = vunpack.c.l.b16 %v22
  %v96 = vunpack.c.l.b16 %v23
  %v97 = vunpack.c.l.b16 %v24
  %v98 = vunpack.c.l.b16 %v25
  %v99 = vunpack.c.l.b16 %v26
  %v100 = vunpack.c.l.b16 %v27
  %v101 = vunpack.c.l.b16 %v28
  %v102 = vunpack.c.l.b16 %v29
  %v103 = vunpack.c.l.b16 %v30
  %v104 = vunpack.c.l.b16 %v31
  %v105 = vunpack.c.l.b16 %v32
  %v106 = vunpack.c.l.b16 %v33
  %v107 = vunpack.c.l.b16 %v34
  %v108 = vunpack.c.l.b16 %v35
  %v109 = vunpack.c.l.b16 %v36
  %v110 = vunpack.c.l.b16 %v37
  %v111 = vunpack.c.l.b16 %v38
  %v112 = vunpack.c.l.b16 %v39
  %v113 = vunpack.c.l.b16 %v40
  %v114 = vunpack.c.l.b16 %v41
  %v115 = vunpack.c.l.b16 %v42
  %v116 = vunpack.c.l.b16 %v43
  %v117 = vunpack.c.l.b16 %v44
  %v118 = vunpack.c.l.b16 %v45
  %v119 = vunpack.c.l.b16 %v46
  %v120 = vunpack.c.l.b16 %v47
  %v121 = vunpack.c.l.b16 %v48
  %v122 = vunpack.c.l.b16 %v49
  %v123 = vunpack.c.l.b16 %v50
  %v124 = vunpack.c.l.b16 %v51
  %v125 = vunpack.c.l.b16 %v52
  %v126 = vpack.c.b16 %v95, %v94
  %v127 = vpack.c.b16 %v97, %v96
  %v128 = vpack.c.b16 %v99, %v98
  %v129 = vpack.c.b16 %v101, %v100
  %v130 = vpack.c.b16 %v103, %v102
  %v131 = vpack.c.b16 %v105, %v104
  %v132 = vpack.c.b16 %v107, %v106
  %v133 = vpack.c.b16 %v109, %v108
  %v134 = vpack.c.b16 %v111, %v110
  %v135 = vpack.c.b16 %v113, %v112
  %v136 = vpack.c.b16 %v115, %v114
  %v137 = vpack.c.b16 %v117, %v116
  %v138 = vpack.c.b16 %v119, %v118
  %v139 = vpack.c.b16 %v121, %v120
  %v140 = vpack.c.b16 %v123, %v122
  %v141 = vpack.c.b16 %v125, %v124
  %v144 = vunpack.c.l.b16 %v53
  %v145 = vunpack.c.l.b16 %v54
  %v146 = vpack.c.b16 %v145, %v144
  %vm147 = vcmask 72704
  %v149 = vsel %vm147, %v126, 0
  %v152 = vsel %vm147, %v127, 0
  %v155 = vsel %vm147, %v128, 0
  %v158 = vsel %vm147, %v129, 0
  %v161 = vsel %vm147, %v130, 0
  %v164 = vsel %vm147, %v131, 0
  %v167 = vsel %vm147, %v132, 0
  %v170 = vsel %vm147, %v133, 0
  %v173 = vsel %vm147, %v134, 0
  %v176 = vsel %vm147, %v135, 0
  %v179 = vsel %vm147, %v136, 0
  %v182 = vsel %vm147, %v137, 0
  %v185 = vsel %vm147, %v138, 0
  %v188 = vsel %vm147, %v139, 0
  %v191 = vsel %vm147, %v140, 0
  %v194 = vsel %vm147, %v141, 0
  %vm196 = vcmask 1043456
  %vm197 = vcmask 1044480
  %v198 = vsel %vm196, 4294967295, 65535
  %v199 = vsel %vm197, %v198, 0
  %v201 = vand.u32 %v146, %v199
  %203 = vmatprep.subr.bf16.mxu0 0
  %204 = vmatpush1.bf16.msra.mxu0 %v201
  %205 = vmatprep.subr.bf16.mxu0 0
  %206 = vmatpush1.bf16.msra.mxu0 0
  %207 = vmatprep.subr.bf16.mxu0 0
  %208 = vmatpush1.bf16.msra.mxu0 0
  %209 = vmatprep.subr.bf16.mxu0 0
  %210 = vmatpush1.bf16.msra.mxu0 0
  %211 = vmatprep.subr.bf16.mxu0 0
  %212 = vmatpush1.bf16.msra.mxu0 0
  %213 = vmatprep.subr.bf16.mxu0 0
  %214 = vmatpush1.bf16.msra.mxu0 0
  %215 = vmatprep.subr.bf16.mxu0 0
  %216 = vmatpush1.bf16.msra.mxu0 0
  %217 = vmatprep.subr.bf16.mxu0 0
  %218 = vmatpush1.bf16.msra.mxu0 0
  %219 = vmatprep.subr.bf16.mxu0 0
  %220 = vmatpush1.bf16.msra.mxu0 0
  %221 = vmatprep.subr.bf16.mxu0 0
  %222 = vmatpush1.bf16.msra.mxu0 0
  %223 = vmatprep.subr.bf16.mxu0 0
  %224 = vmatpush1.bf16.msra.mxu0 0
  %225 = vmatprep.subr.bf16.mxu0 0
  %226 = vmatpush1.bf16.msra.mxu0 0
  %227 = vmatprep.subr.bf16.mxu0 0
  %228 = vmatpush1.bf16.msra.mxu0 0
  %229 = vmatprep.subr.bf16.mxu0 0
  %230 = vmatpush1.bf16.msra.mxu0 0
  %231 = vmatprep.subr.bf16.mxu0 0
  %232 = vmatpush1.bf16.msra.mxu0 0
  %233 = vmatprep.subr.bf16.mxu0 0
  %234 = vmatpush1.bf16.msra.mxu0 0
  %235 = vmatprep.mubr.bf16.mxu0 0
  %236 = vmatmul.mubr.bf16.gmra.mrb[0].mxu0 %v149
  %v237 = vpop.f32.mrb[0].mxu0
  %v238 = vadd.f32 %v60, %v237
  %v239 = vpop.f32.mrb[0].mxu0
  %v240 = vpop.f32.mrb[0].mxu0
  %v241 = vadd.f32 %v60, %v240
  %v242 = vpop.f32.mrb[0].mxu0
  %243 = vmatprep.mubr.bf16.mxu0 0
  %244 = vmatmul.mubr.bf16.gmra.mrb[0].mxu0 %v152
  %v245 = vpop.f32.mrb[0].mxu0
  %v246 = vadd.f32 %v60, %v245
  %v247 = vpop.f32.mrb[0].mxu0
  %v248 = vpop.f32.mrb[0].mxu0
  %v249 = vadd.f32 %v60, %v248
  %v250 = vpop.f32.mrb[0].mxu0
  %251 = vmatprep.mubr.bf16.mxu0 0
  %252 = vmatmul.mubr.bf16.gmra.mrb[0].mxu0 %v155
  %v253 = vpop.f32.mrb[0].mxu0
  %v254 = vadd.f32 %v60, %v253
  %v255 = vpop.f32.mrb[0].mxu0
  %v256 = vpop.f32.mrb[0].mxu0
  %v257 = vadd.f32 %v60, %v256
  %v258 = vpop.f32.mrb[0].mxu0
  %259 = vmatprep.mubr.bf16.mxu0 0
  %260 = vmatmul.mubr.bf16.gmra.mrb[0].mxu0 %v158
  %v261 = vpop.f32.mrb[0].mxu0
  %v262 = vadd.f32 %v60, %v261
  %v263 = vpop.f32.mrb[0].mxu0
  %v264 = vpop.f32.mrb[0].mxu0
  %v265 = vadd.f32 %v60, %v264
  %v266 = vpop.f32.mrb[0].mxu0
  %267 = vmatprep.mubr.bf16.mxu0 0
  %268 = vmatmul.mubr.bf16.gmra.mrb[0].mxu0 %v161
  %v269 = vpop.f32.mrb[0].mxu0
  %v270 = vadd.f32 %v60, %v269
  %v271 = vpop.f32.mrb[0].mxu0
  %v272 = vpop.f32.mrb[0].mxu0
  %v273 = vadd.f32 %v60, %v272
  %v274 = vpop.f32.mrb[0].mxu0
  %275 = vmatprep.mubr.bf16.mxu0 0
  %276 = vmatmul.mubr.bf16.gmra.mrb[0].mxu0 %v164
  %v277 = vpop.f32.mrb[0].mxu0
  %v278 = vadd.f32 %v60, %v277
  %v279 = vpop.f32.mrb[0].mxu0
  %v280 = vpop.f32.mrb[0].mxu0
  %v281 = vadd.f32 %v60, %v280
  %v282 = vpop.f32.mrb[0].mxu0
  %283 = vmatprep.mubr.bf16.mxu0 0
  %284 = vmatmul.mubr.bf16.gmra.mrb[0].mxu0 %v167
  %v285 = vpop.f32.mrb[0].mxu0
  %v286 = vadd.f32 %v60, %v285
  %v287 = vpop.f32.mrb[0].mxu0
  %v288 = vpop.f32.mrb[0].mxu0
  %v289 = vadd.f32 %v60, %v288
  %v290 = vpop.f32.mrb[0].mxu0
  %291 = vmatprep.mubr.bf16.mxu0 0
  %292 = vmatmul.mubr.bf16.gmra.mrb[0].mxu0 %v170
  %v293 = vpop.f32.mrb[0].mxu0
  %v294 = vadd.f32 %v60, %v293
  %v295 = vpop.f32.mrb[0].mxu0
  %v296 = vpop.f32.mrb[0].mxu0
  %v297 = vadd.f32 %v60, %v296
  %v298 = vpop.f32.mrb[0].mxu0
  %299 = vmatprep.mubr.bf16.mxu0 0
  %300 = vmatmul.mubr.bf16.gmra.mrb[0].mxu0 %v173
  %v301 = vpop.f32.mrb[0].mxu0
  %v302 = vadd.f32 %v60, %v301
  %v303 = vpop.f32.mrb[0].mxu0
  %v304 = vpop.f32.mrb[0].mxu0
  %v305 = vadd.f32 %v60, %v304
  %v306 = vpop.f32.mrb[0].mxu0
  %307 = vmatprep.mubr.bf16.mxu0 0
  %308 = vmatmul.mubr.bf16.gmra.mrb[0].mxu0 %v176
  %v309 = vpop.f32.mrb[0].mxu0
  %v310 = vadd.f32 %v60, %v309
  %v311 = vpop.f32.mrb[0].mxu0
  %v312 = vpop.f32.mrb[0].mxu0
  %v313 = vadd.f32 %v60, %v312
  %v314 = vpop.f32.mrb[0].mxu0
  %315 = vmatprep.mubr.bf16.mxu0 0
  %316 = vmatmul.mubr.bf16.gmra.mrb[0].mxu0 %v179
  %v317 = vpop.f32.mrb[0].mxu0
  %v318 = vadd.f32 %v60, %v317
  %v319 = vpop.f32.mrb[0].mxu0
  %v320 = vpop.f32.mrb[0].mxu0
  %v321 = vadd.f32 %v60, %v320
  %v322 = vpop.f32.mrb[0].mxu0
  %323 = vmatprep.mubr.bf16.mxu0 0
  %324 = vmatmul.mubr.bf16.gmra.mrb[0].mxu0 %v182
  %v325 = vpop.f32.mrb[0].mxu0
  %v326 = vadd.f32 %v60, %v325
  %v327 = vpop.f32.mrb[0].mxu0
  %v328 = vpop.f32.mrb[0].mxu0
  %v329 = vadd.f32 %v60, %v328
  %v330 = vpop.f32.mrb[0].mxu0
  %331 = vmatprep.mubr.bf16.mxu0 0
  %332 = vmatmul.mubr.bf16.gmra.mrb[0].mxu0 %v185
  %v333 = vpop.f32.mrb[0].mxu0
  %v334 = vadd.f32 %v60, %v333
  %v335 = vpop.f32.mrb[0].mxu0
  %v336 = vpop.f32.mrb[0].mxu0
  %v337 = vadd.f32 %v60, %v336
  %v338 = vpop.f32.mrb[0].mxu0
  %339 = vmatprep.mubr.bf16.mxu0 0
  %340 = vmatmul.mubr.bf16.gmra.mrb[0].mxu0 %v188
  %v341 = vpop.f32.mrb[0].mxu0
  %v342 = vadd.f32 %v60, %v341
  %v343 = vpop.f32.mrb[0].mxu0
  %v344 = vpop.f32.mrb[0].mxu0
  %v345 = vadd.f32 %v60, %v344
  %v346 = vpop.f32.mrb[0].mxu0
  %347 = vmatprep.mubr.bf16.mxu0 0
  %348 = vmatmul.mubr.bf16.gmra.mrb[0].mxu0 %v191
  %v349 = vpop.f32.mrb[0].mxu0
  %v350 = vadd.f32 %v60, %v349
  %v351 = vpop.f32.mrb[0].mxu0
  %v352 = vpop.f32.mrb[0].mxu0
  %v353 = vadd.f32 %v60, %v352
  %v354 = vpop.f32.mrb[0].mxu0
  %355 = vmatprep.mubr.bf16.mxu0 0
  %356 = vmatmul.mubr.bf16.gmra.mrb[0].mxu0 %v194
  %v357 = vpop.f32.mrb[0].mxu0
  %v358 = vadd.f32 %v60, %v357
  %v359 = vpop.f32.mrb[0].mxu0
  %v360 = vpop.f32.mrb[0].mxu0
  %v361 = vadd.f32 %v60, %v360
  %v362 = vpop.f32.mrb[0].mxu0
  %363 = vdwg.mxu0
  %v364 = vmax.f32 %v238, 0.0
  %v365 = vmax.f32 %v241, 0.0
  %v366 = vmax.f32 %v246, 0.0
  %v367 = vmax.f32 %v249, 0.0
  %v368 = vmax.f32 %v254, 0.0
  %v369 = vmax.f32 %v257, 0.0
  %v370 = vmax.f32 %v262, 0.0
  %v371 = vmax.f32 %v265, 0.0
  %v372 = vmax.f32 %v270, 0.0
  %v373 = vmax.f32 %v273, 0.0
  %v374 = vmax.f32 %v278, 0.0
  %v375 = vmax.f32 %v281, 0.0
  %v376 = vmax.f32 %v286, 0.0
  %v377 = vmax.f32 %v289, 0.0
  %v378 = vmax.f32 %v294, 0.0
  %v379 = vmax.f32 %v297, 0.0
  %v380 = vmax.f32 %v302, 0.0
  %v381 = vmax.f32 %v305, 0.0
  %v382 = vmax.f32 %v310, 0.0
  %v383 = vmax.f32 %v313, 0.0
  %v384 = vmax.f32 %v318, 0.0
  %v385 = vmax.f32 %v321, 0.0
  %v386 = vmax.f32 %v326, 0.0
  %v387 = vmax.f32 %v329, 0.0
  %v388 = vmax.f32 %v334, 0.0
  %v389 = vmax.f32 %v337, 0.0
  %v390 = vmax.f32 %v342, 0.0
  %v391 = vmax.f32 %v345, 0.0
  %v392 = vmax.f32 %v350, 0.0
  %v393 = vmax.f32 %v353, 0.0
  %v394 = vmax.f32 %v358, 0.0
  %v395 = vmax.f32 %v361, 0.0
  %v396 = vld [vmem:[%s3] sm:$0x1]
  %v398 = vlaneseq
  %v399 = vshrl.u32 %v398, 7
  %v400 = vsub.s32 0, %v399
  %v401 = vrot.slane %v396, %v400
  %v403 = vmul.f32 %v364, %v401
  %v404 = vmul.f32 %v365, %v401
  %v405 = vmul.f32 %v366, %v401
  %v406 = vmul.f32 %v367, %v401
  %v407 = vmul.f32 %v368, %v401
  %v408 = vmul.f32 %v369, %v401
  %v409 = vmul.f32 %v370, %v401
  %v410 = vmul.f32 %v371, %v401
  %v411 = vmul.f32 %v372, %v401
  %v412 = vmul.f32 %v373, %v401
  %v413 = vmul.f32 %v374, %v401
  %v414 = vmul.f32 %v375, %v401
  %v415 = vmul.f32 %v376, %v401
  %v416 = vmul.f32 %v377, %v401
  %v417 = vmul.f32 %v378, %v401
  %v418 = vmul.f32 %v379, %v401
  %v419 = vmul.f32 %v380, %v401
  %v420 = vmul.f32 %v381, %v401
  %v421 = vmul.f32 %v382, %v401
  %v422 = vmul.f32 %v383, %v401
  %v423 = vmul.f32 %v384, %v401
  %v424 = vmul.f32 %v385, %v401
  %v425 = vmul.f32 %v386, %v401
  %v426 = vmul.f32 %v387, %v401
  %v427 = vmul.f32 %v388, %v401
  %v428 = vmul.f32 %v389, %v401
  %v429 = vmul.f32 %v390, %v401
  %v430 = vmul.f32 %v391, %v401
  %v431 = vmul.f32 %v392, %v401
  %v432 = vmul.f32 %v393, %v401
  %v433 = vmul.f32 %v394, %v401
  %v434 = vmul.f32 %v395, %v401
  %v435 = vld [vmem:[%s4] sm:$0x1]
  %v437 = vlaneseq
  %v438 = vshrl.u32 %v437, 7
  %v439 = vsub.s32 0, %v438
  %v440 = vrot.slane %v435, %v439
  %v442 = vadd.f32 %v403, %v440
  %v443 = vadd.f32 %v404, %v440
  %v444 = vadd.f32 %v405, %v440
  %v445 = vadd.f32 %v406, %v440
  %v446 = vadd.f32 %v407, %v440
  %v447 = vadd.f32 %v408, %v440
  %v448 = vadd.f32 %v409, %v440
  %v449 = vadd.f32 %v410, %v440
  %v450 = vadd.f32 %v411, %v440
  %v451 = vadd.f32 %v412, %v440
  %v452 = vadd.f32 %v413, %v440
  %v453 = vadd.f32 %v414, %v440
  %v454 = vadd.f32 %v415, %v440
  %v455 = vadd.f32 %v416, %v440
  %v456 = vadd.f32 %v417, %v440
  %v457 = vadd.f32 %v418, %v440
  %v458 = vadd.f32 %v419, %v440
  %v459 = vadd.f32 %v420, %v440
  %v460 = vadd.f32 %v421, %v440
  %v461 = vadd.f32 %v422, %v440
  %v462 = vadd.f32 %v423, %v440
  %v463 = vadd.f32 %v424, %v440
  %v464 = vadd.f32 %v425, %v440
  %v465 = vadd.f32 %v426, %v440
  %v466 = vadd.f32 %v427, %v440
  %v467 = vadd.f32 %v428, %v440
  %v468 = vadd.f32 %v429, %v440
  %v469 = vadd.f32 %v430, %v440
  %v470 = vadd.f32 %v431, %v440
  %v471 = vadd.f32 %v432, %v440
  %v472 = vadd.f32 %v433, %v440
  %v473 = vadd.f32 %v434, %v440
  %vm474 = vcmask 523264
  %475 = vst.msk [vmem:[%s5] sm:$0xff] %vm474, %v442
  %476 = vst.msk [vmem:[%s5 + $0x8] sm:$0xff] %vm474, %v443
  %477 = vst.msk [vmem:[%s5 + $0x10] sm:$0xff] %vm474, %v444
  %478 = vst.msk [vmem:[%s5 + $0x18] sm:$0xff] %vm474, %v445
  %479 = vst.msk [vmem:[%s5 + $0x20] sm:$0xff] %vm474, %v446
  %480 = vst.msk [vmem:[%s5 + $0x28] sm:$0xff] %vm474, %v447
  %481 = vst.msk [vmem:[%s5 + $0x30] sm:$0xff] %vm474, %v448
  %482 = vst.msk [vmem:[%s5 + $0x38] sm:$0xff] %vm474, %v449
  %483 = vst.msk [vmem:[%s5 + $0x40] sm:$0xff] %vm474, %v450
  %484 = vst.msk [vmem:[%s5 + $0x48] sm:$0xff] %vm474, %v451
  %485 = vst.msk [vmem:[%s5 + $0x50] sm:$0xff] %vm474, %v452
  %486 = vst.msk [vmem:[%s5 + $0x58] sm:$0xff] %vm474, %v453
  %487 = vst.msk [vmem:[%s5 + $0x60] sm:$0xff] %vm474, %v454
  %488 = vst.msk [vmem:[%s5 + $0x68] sm:$0xff] %vm474, %v455
  %489 = vst.msk [vmem:[%s5 + $0x70] sm:$0xff] %vm474, %v456
  %490 = vst.msk [vmem:[%s5 + $0x78] sm:$0xff] %vm474, %v457
  %491 = vst.msk [vmem:[%s5 + $0x80] sm:$0xff] %vm474, %v458
  %492 = vst.msk [vmem:[%s5 + $0x88] sm:$0xff] %vm474, %v459
  %493 = vst.msk [vmem:[%s5 + $0x90] sm:$0xff] %vm474, %v460
  %494 = vst.msk [vmem:[%s5 + $0x98] sm:$0xff] %vm474, %v461
  %495 = vst.msk [vmem:[%s5 + $0xa0] sm:$0xff] %vm474, %v462
  %496 = vst.msk [vmem:[%s5 + $0xa8] sm:$0xff] %vm474, %v463
  %497 = vst.msk [vmem:[%s5 + $0xb0] sm:$0xff] %vm474, %v464
  %498 = vst.msk [vmem:[%s5 + $0xb8] sm:$0xff] %vm474, %v465
  %499 = vst.msk [vmem:[%s5 + $0xc0] sm:$0xff] %vm474, %v466
  %500 = vst.msk [vmem:[%s5 + $0xc8] sm:$0xff] %vm474, %v467
  %501 = vst.msk [vmem:[%s5 + $0xd0] sm:$0xff] %vm474, %v468
  %502 = vst.msk [vmem:[%s5 + $0xd8] sm:$0xff] %vm474, %v469
  %503 = vst.msk [vmem:[%s5 + $0xe0] sm:$0xff] %vm474, %v470
  %504 = vst.msk [vmem:[%s5 + $0xe8] sm:$0xff] %vm474, %v471
  %505 = vst.msk [vmem:[%s5 + $0xf0] sm:$0xff] %vm474, %v472
  %506 = vst.msk [vmem:[%s5 + $0xf8] sm:$0xff] %vm474, %v473
  // Predicated region
  $region22: #{mcnet_forward.22} parent=0 // pred_check
    _
  $region23: #{mcnet_forward.22} parent=0 // pred_check_branch
    %508 = sbr.rel (0) target = $region25
  $region24: #{mcnet_forward.22} parent=0 // pred_region
    _
  $region25: #{mcnet_forward.22} parent=0 // pred_fallthru
    _
  // Predicated region
  $region26: #{mcnet_forward.22} parent=0 // pred_check
    _
  $region27: #{mcnet_forward.22} parent=0 // pred_check_branch
    %510 = sbr.rel (0) target = $region29
  $region28: #{mcnet_forward.22} parent=0 // pred_region
    _
  $region29: #{mcnet_forward.22} parent=0 // pred_fallthru
    _

// kernel: mcnet_forward.23
$region0: #{mcnet_forward.23}
  #allocation0 [shape = 'u32[]', space=smem, size = 0x4, offset = 0x4, fixed_abs, tag = 'smem constant byte address 0x4 - core index']
  #allocation1 [shape = 'u32[144,128]{1,0:T(1,128)}', space=vmem, size = 0x12000, scoped, tag = 'internal scratch']
  %s0 = inlined_call_operand.vmem [shape: bf16[128,576], index: 0, kind: input, shape index: {}]
  %s1 = inlined_call_operand.vmem [shape: bf16[576,64], index: 1, kind: input, shape index: {}]
  %s2 = inlined_call_operand.vmem [shape: f32[1,64], index: 2, kind: input, shape index: {}]
  %s3 = inlined_call_operand.vmem [shape: f32[1,64], index: 3, kind: input, shape index: {}]
  %s4 = inlined_call_operand.vmem [shape: f32[1,64], index: 4, kind: input, shape index: {}]
  %s5 = inlined_call_operand.vmem [shape: f32[128,64], index: 5, kind: output, shape index: {}]
  %s6 = sld [smem:[#allocation0]]
  $region30: #{mcnet_forward.23} parent=0
    _
  %s8 = ssub.s32 1, %s6
  %s9 = scalar_select 0, %s8, %s6
  // Predicated region
  $region2: #{mcnet_forward.23} parent=0 // pred_check
    _
  $region3: #{mcnet_forward.23} parent=0 // pred_check_branch
    %11 = sbr.rel (0) target = $region5
  $region4: #{mcnet_forward.23} parent=0 // pred_region
    _
  $region5: #{mcnet_forward.23} parent=0 // pred_fallthru
    _
  // Predicated region
  $region6: #{mcnet_forward.23} parent=0 // pred_check
    _
  $region7: #{mcnet_forward.23} parent=0 // pred_check_branch
    %13 = sbr.rel (0) target = $region9
  $region8: #{mcnet_forward.23} parent=0 // pred_region
    _
  $region9: #{mcnet_forward.23} parent=0 // pred_fallthru
    _
  // Predicated region
  $region10: #{mcnet_forward.23} parent=0 // pred_check
    _
  $region11: #{mcnet_forward.23} parent=0 // pred_check_branch
    %15 = sbr.rel (0) target = $region13
  $region12: #{mcnet_forward.23} parent=0 // pred_region
    _
  $region13: #{mcnet_forward.23} parent=0 // pred_fallthru
    _
  // Predicated region
  $region14: #{mcnet_forward.23} parent=0 // pred_check
    _
  $region15: #{mcnet_forward.23} parent=0 // pred_check_branch
    %17 = sbr.rel (0) target = $region17
  $region16: #{mcnet_forward.23} parent=0 // pred_region
    _
  $region17: #{mcnet_forward.23} parent=0 // pred_fallthru
    _
  // Predicated region
  $region18: #{mcnet_forward.23} parent=0 // pred_check
    _
  $region19: #{mcnet_forward.23} parent=0 // pred_check_branch
    %19 = sbr.rel (0) target = $region21
  $region20: #{mcnet_forward.23} parent=0 // pred_region
    _
  $region21: #{mcnet_forward.23} parent=0 // pred_fallthru
    _
  %v21 = vld [vmem:[%s0] sm:$0xff]
  %v22 = vld [vmem:[%s0 + $0x8] sm:$0xff]
  %v23 = vld [vmem:[%s0 + $0x10] sm:$0xf]
  %v24 = vld [vmem:[%s0 + $0x14] sm:$0xff]
  %v25 = vld [vmem:[%s0 + $0x1c] sm:$0xff]
  %v26 = vld [vmem:[%s0 + $0x24] sm:$0xf]
  %v27 = vld [vmem:[%s0 + $0x28] sm:$0xff]
  %v28 = vld [vmem:[%s0 + $0x30] sm:$0xff]
  %v29 = vld [vmem:[%s0 + $0x38] sm:$0xf]
  %v30 = vld [vmem:[%s0 + $0x3c] sm:$0xff]
  %v31 = vld [vmem:[%s0 + $0x44] sm:$0xff]
  %v32 = vld [vmem:[%s0 + $0x4c] sm:$0xf]
  %v33 = vld [vmem:[%s0 + $0x50] sm:$0xff]
  %v34 = vld [vmem:[%s0 + $0x58] sm:$0xff]
  %v35 = vld [vmem:[%s0 + $0x60] sm:$0xf]
  %v36 = vld [vmem:[%s0 + $0x64] sm:$0xff]
  %v37 = vld [vmem:[%s0 + $0x6c] sm:$0xff]
  %v38 = vld [vmem:[%s0 + $0x74] sm:$0xf]
  %v39 = vld [vmem:[%s0 + $0x78] sm:$0xff]
  %v40 = vld [vmem:[%s0 + $0x80] sm:$0xff]
  %v41 = vld [vmem:[%s0 + $0x88] sm:$0xf]
  %v42 = vld [vmem:[%s0 + $0x8c] sm:$0xff]
  %v43 = vld [vmem:[%s0 + $0x94] sm:$0xff]
  %v44 = vld [vmem:[%s0 + $0x9c] sm:$0xf]
  %v45 = vld [vmem:[%s0 + $0xa0] sm:$0xff]
  %v46 = vld [vmem:[%s0 + $0xa8] sm:$0xff]
  %v47 = vld [vmem:[%s0 + $0xb0] sm:$0xf]
  %v48 = vld [vmem:[%s0 + $0xb4] sm:$0xff]
  %v49 = vld [vmem:[%s0 + $0xbc] sm:$0xff]
  %v50 = vld [vmem:[%s0 + $0xc4] sm:$0xf]
  %v51 = vld [vmem:[%s0 + $0xc8] sm:$0xff]
  %v52 = vld [vmem:[%s0 + $0xd0] sm:$0xff]
  %v53 = vld [vmem:[%s0 + $0xd8] sm:$0xf]
  %v54 = vld [vmem:[%s0 + $0xdc] sm:$0xff]
  %v55 = vld [vmem:[%s0 + $0xe4] sm:$0xff]
  %v56 = vld [vmem:[%s0 + $0xec] sm:$0xf]
  %v57 = vld [vmem:[%s0 + $0xf0] sm:$0xff]
  %v58 = vld [vmem:[%s0 + $0xf8] sm:$0xff]
  %v59 = vld [vmem:[%s0 + $0x100] sm:$0xf]
  %v60 = vld [vmem:[%s0 + $0x104] sm:$0xff]
  %v61 = vld [vmem:[%s0 + $0x10c] sm:$0xff]
  %v62 = vld [vmem:[%s0 + $0x114] sm:$0xf]
  %v63 = vld [vmem:[%s0 + $0x118] sm:$0xff]
  %v64 = vld [vmem:[%s0 + $0x120] sm:$0xff]
  %v65 = vld [vmem:[%s0 + $0x128] sm:$0xf]
  %v66 = vld [vmem:[%s0 + $0x12c] sm:$0xff]
  %v67 = vld [vmem:[%s0 + $0x134] sm:$0xff]
  %v68 = vld [vmem:[%s0 + $0x13c] sm:$0xf]
  %v69 = vld [vmem:[%s1] sm:$0xf]
  %v70 = vld [vmem:[%s1 + $0x4] sm:$0xf]
  %v71 = vld [vmem:[%s1 + $0x8] sm:$0xf]
  %v72 = vld [vmem:[%s1 + $0xc] sm:$0xf]
  %v73 = vld [vmem:[%s1 + $0x10] sm:$0xf]
  %v74 = vld [vmem:[%s1 + $0x14] sm:$0xf]
  %v75 = vld [vmem:[%s1 + $0x18] sm:$0xf]
  %v76 = vld [vmem:[%s1 + $0x1c] sm:$0xf]
  %v77 = vld [vmem:[%s1 + $0x20] sm:$0xf]
  %v78 = vld [vmem:[%s1 + $0x24] sm:$0xf]
  %v79 = vld [vmem:[%s1 + $0x28] sm:$0xf]
  %v80 = vld [vmem:[%s1 + $0x2c] sm:$0xf]
  %v81 = vld [vmem:[%s1 + $0x30] sm:$0xf]
  %v82 = vld [vmem:[%s1 + $0x34] sm:$0xf]
  %v83 = vld [vmem:[%s1 + $0x38] sm:$0xf]
  %v84 = vld [vmem:[%s1 + $0x3c] sm:$0xf]
  %v85 = vld [vmem:[%s1 + $0x40] sm:$0xf]
  %v86 = vld [vmem:[%s1 + $0x44] sm:$0xf]
  %v87 = vld [vmem:[%s1 + $0x48] sm:$0xf]
  %v88 = vld [vmem:[%s1 + $0x4c] sm:$0xf]
  %v89 = vld [vmem:[%s1 + $0x50] sm:$0xf]
  %v90 = vld [vmem:[%s1 + $0x54] sm:$0xf]
  %v91 = vld [vmem:[%s1 + $0x58] sm:$0xf]
  %v92 = vld [vmem:[%s1 + $0x5c] sm:$0xf]
  %v93 = vld [vmem:[%s1 + $0x60] sm:$0xf]
  %v94 = vld [vmem:[%s1 + $0x64] sm:$0xf]
  %v95 = vld [vmem:[%s1 + $0x68] sm:$0xf]
  %v96 = vld [vmem:[%s1 + $0x6c] sm:$0xf]
  %v97 = vld [vmem:[%s1 + $0x70] sm:$0xf]
  %v98 = vld [vmem:[%s1 + $0x74] sm:$0xf]
  %v99 = vld [vmem:[%s1 + $0x78] sm:$0xf]
  %v100 = vld [vmem:[%s1 + $0x7c] sm:$0xf]
  %v101 = vld [vmem:[%s1 + $0x80] sm:$0xf]
  %v102 = vld [vmem:[%s1 + $0x84] sm:$0xf]
  %v103 = vld [vmem:[%s1 + $0x88] sm:$0xf]
  %v104 = vld [vmem:[%s1 + $0x8c] sm:$0xf]
  %v105 = vld [vmem:[%s1 + $0x90] sm:$0xf]
  %v106 = vld [vmem:[%s1 + $0x94] sm:$0xf]
  %v107 = vld [vmem:[%s1 + $0x98] sm:$0xf]
  %v108 = vld [vmem:[%s1 + $0x9c] sm:$0xf]
  %v109 = vld [vmem:[%s1 + $0xa0] sm:$0xf]
  %v110 = vld [vmem:[%s1 + $0xa4] sm:$0xf]
  %v111 = vld [vmem:[%s1 + $0xa8] sm:$0xf]
  %v112 = vld [vmem:[%s1 + $0xac] sm:$0xf]
  %v113 = vld [vmem:[%s1 + $0xb0] sm:$0xf]
  %v114 = vld [vmem:[%s1 + $0xb4] sm:$0xf]
  %v115 = vld [vmem:[%s1 + $0xb8] sm:$0xf]
  %v116 = vld [vmem:[%s1 + $0xbc] sm:$0xf]
  %v117 = vld [vmem:[%s1 + $0xc0] sm:$0xf]
  %v118 = vld [vmem:[%s1 + $0xc4] sm:$0xf]
  %v119 = vld [vmem:[%s1 + $0xc8] sm:$0xf]
  %v120 = vld [vmem:[%s1 + $0xcc] sm:$0xf]
  %v121 = vld [vmem:[%s1 + $0xd0] sm:$0xf]
  %v122 = vld [vmem:[%s1 + $0xd4] sm:$0xf]
  %v123 = vld [vmem:[%s1 + $0xd8] sm:$0xf]
  %v124 = vld [vmem:[%s1 + $0xdc] sm:$0xf]
  %v125 = vld [vmem:[%s1 + $0xe0] sm:$0xf]
  %v126 = vld [vmem:[%s1 + $0xe4] sm:$0xf]
  %v127 = vld [vmem:[%s1 + $0xe8] sm:$0xf]
  %v128 = vld [vmem:[%s1 + $0xec] sm:$0xf]
  %v129 = vld [vmem:[%s1 + $0xf0] sm:$0xf]
  %v130 = vld [vmem:[%s1 + $0xf4] sm:$0xf]
  %v131 = vld [vmem:[%s1 + $0xf8] sm:$0xf]
  %v132 = vld [vmem:[%s1 + $0xfc] sm:$0xf]
  %v133 = vld [vmem:[%s1 + $0x100] sm:$0xf]
  %v134 = vld [vmem:[%s1 + $0x104] sm:$0xf]
  %v135 = vld [vmem:[%s1 + $0x108] sm:$0xf]
  %v136 = vld [vmem:[%s1 + $0x10c] sm:$0xf]
  %v137 = vld [vmem:[%s1 + $0x110] sm:$0xf]
  %v138 = vld [vmem:[%s1 + $0x114] sm:$0xf]
  %v139 = vld [vmem:[%s1 + $0x118] sm:$0xf]
  %v140 = vld [vmem:[%s1 + $0x11c] sm:$0xf]
  %v141 = vld [vmem:[%s2] sm:$0x1]
  %v143 = vlaneseq
  %v144 = vshrl.u32 %v143, 7
  %v145 = vsub.s32 0, %v144
  %v146 = vrot.slane %v141, %v145
  %v196 = vunpack.c.l.b16 %v21
  %v197 = vunpack.c.h.b16 %v21
  %v198 = vunpack.c.l.b16 %v22
  %v199 = vunpack.c.h.b16 %v22
  %v200 = vunpack.c.l.b16 %v23
  %v201 = vunpack.c.l.b16 %v24
  %v202 = vunpack.c.h.b16 %v24
  %v203 = vunpack.c.l.b16 %v25
  %v204 = vunpack.c.h.b16 %v25
  %v205 = vunpack.c.l.b16 %v26
  %v206 = vunpack.c.l.b16 %v27
  %v207 = vunpack.c.h.b16 %v27
  %v208 = vunpack.c.l.b16 %v28
  %v209 = vunpack.c.h.b16 %v28
  %v210 = vunpack.c.l.b16 %v29
  %v211 = vunpack.c.l.b16 %v30
  %v212 = vunpack.c.h.b16 %v30
  %v213 = vunpack.c.l.b16 %v31
  %v214 = vunpack.c.h.b16 %v31
  %v215 = vunpack.c.l.b16 %v32
  %v216 = vunpack.c.l.b16 %v33
  %v217 = vunpack.c.h.b16 %v33
  %v218 = vunpack.c.l.b16 %v34
  %v219 = vunpack.c.h.b16 %v34
  %v220 = vunpack.c.l.b16 %v35
  %v221 = vunpack.c.l.b16 %v36
  %v222 = vunpack.c.h.b16 %v36
  %v223 = vunpack.c.l.b16 %v37
  %v224 = vunpack.c.h.b16 %v37
  %v225 = vunpack.c.l.b16 %v38
  %v226 = vunpack.c.l.b16 %v39
  %v227 = vunpack.c.h.b16 %v39
  %v228 = vunpack.c.l.b16 %v40
  %v229 = vunpack.c.h.b16 %v40
  %v230 = vunpack.c.l.b16 %v41
  %v231 = vunpack.c.l.b16 %v42
  %v232 = vunpack.c.h.b16 %v42
  %v233 = vunpack.c.l.b16 %v43
  %v234 = vunpack.c.h.b16 %v43
  %v235 = vunpack.c.l.b16 %v44
  %v236 = vunpack.c.l.b16 %v45
  %v237 = vunpack.c.h.b16 %v45
  %v238 = vunpack.c.l.b16 %v46
  %v239 = vunpack.c.h.b16 %v46
  %v240 = vunpack.c.l.b16 %v47
  %v241 = vunpack.c.l.b16 %v48
  %v242 = vunpack.c.h.b16 %v48
  %v243 = vunpack.c.l.b16 %v49
  %v244 = vunpack.c.h.b16 %v49
  %v245 = vunpack.c.l.b16 %v50
  %v246 = vunpack.c.l.b16 %v51
  %v247 = vunpack.c.h.b16 %v51
  %v248 = vunpack.c.l.b16 %v52
  %v249 = vunpack.c.h.b16 %v52
  %v250 = vunpack.c.l.b16 %v53
  %v251 = vunpack.c.l.b16 %v54
  %v252 = vunpack.c.h.b16 %v54
  %v253 = vunpack.c.l.b16 %v55
  %v254 = vunpack.c.h.b16 %v55
  %v255 = vunpack.c.l.b16 %v56
  %v256 = vunpack.c.l.b16 %v57
  %v257 = vunpack.c.h.b16 %v57
  %v258 = vunpack.c.l.b16 %v58
  %v259 = vunpack.c.h.b16 %v58
  %v260 = vunpack.c.l.b16 %v59
  %v261 = vunpack.c.l.b16 %v60
  %v262 = vunpack.c.h.b16 %v60
  %v263 = vunpack.c.l.b16 %v61
  %v264 = vunpack.c.h.b16 %v61
  %v265 = vunpack.c.l.b16 %v62
  %v266 = vunpack.c.l.b16 %v63
  %v267 = vunpack.c.h.b16 %v63
  %v268 = vunpack.c.l.b16 %v64
  %v269 = vunpack.c.h.b16 %v64
  %v270 = vunpack.c.l.b16 %v65
  %v271 = vunpack.c.l.b16 %v66
  %v272 = vunpack.c.h.b16 %v66
  %v273 = vunpack.c.l.b16 %v67
  %v274 = vunpack.c.h.b16 %v67
  %v275 = vunpack.c.l.b16 %v68
  %v276 = vpack.c.b16 %v201, %v196
  %v277 = vpack.c.b16 %v202, %v197
  %v278 = vpack.c.b16 %v203, %v198
  %v279 = vpack.c.b16 %v204, %v199
  %v280 = vpack.c.b16 %v205, %v200
  %v281 = vpack.c.b16 %v211, %v206
  %v282 = vpack.c.b16 %v212, %v207
  %v283 = vpack.c.b16 %v213, %v208
  %v284 = vpack.c.b16 %v214, %v209
  %v285 = vpack.c.b16 %v215, %v210
  %v286 = vpack.c.b16 %v221, %v216
  %v287 = vpack.c.b16 %v222, %v217
  %v288 = vpack.c.b16 %v223, %v218
  %v289 = vpack.c.b16 %v224, %v219
  %v290 = vpack.c.b16 %v225, %v220
  %v291 = vpack.c.b16 %v231, %v226
  %v292 = vpack.c.b16 %v232, %v227
  %v293 = vpack.c.b16 %v233, %v228
  %v294 = vpack.c.b16 %v234, %v229
  %v295 = vpack.c.b16 %v235, %v230
  %v296 = vpack.c.b16 %v241, %v236
  %v297 = vpack.c.b16 %v242, %v237
  %v298 = vpack.c.b16 %v243, %v238
  %v299 = vpack.c.b16 %v244, %v239
  %v300 = vpack.c.b16 %v245, %v240
  %v301 = vpack.c.b16 %v251, %v246
  %v302 = vpack.c.b16 %v252, %v247
  %v303 = vpack.c.b16 %v253, %v248
  %v304 = vpack.c.b16 %v254, %v249
  %v305 = vpack.c.b16 %v255, %v250
  %v306 = vpack.c.b16 %v261, %v256
  %v307 = vpack.c.b16 %v262, %v257
  %v308 = vpack.c.b16 %v263, %v258
  %v309 = vpack.c.b16 %v264, %v259
  %v310 = vpack.c.b16 %v265, %v260
  %v311 = vpack.c.b16 %v271, %v266
  %v312 = vpack.c.b16 %v272, %v267
  %v313 = vpack.c.b16 %v273, %v268
  %v314 = vpack.c.b16 %v274, %v269
  %v315 = vpack.c.b16 %v275, %v270
  %v420 = vunpack.c.l.b16 %v69
  %v421 = vunpack.c.l.b16 %v70
  %v422 = vunpack.c.l.b16 %v71
  %v423 = vunpack.c.l.b16 %v72
  %v424 = vunpack.c.l.b16 %v73
  %v425 = vunpack.c.l.b16 %v74
  %v426 = vunpack.c.l.b16 %v75
  %v427 = vunpack.c.l.b16 %v76
  %v428 = vunpack.c.l.b16 %v77
  %v429 = vunpack.c.l.b16 %v78
  %v430 = vunpack.c.l.b16 %v79
  %v431 = vunpack.c.l.b16 %v80
  %v432 = vunpack.c.l.b16 %v81
  %v433 = vunpack.c.l.b16 %v82
  %v434 = vunpack.c.l.b16 %v83
  %v435 = vunpack.c.l.b16 %v84
  %v436 = vunpack.c.l.b16 %v85
  %v437 = vunpack.c.l.b16 %v86
  %v438 = vunpack.c.l.b16 %v87
  %v439 = vunpack.c.l.b16 %v88
  %v440 = vunpack.c.l.b16 %v89
  %v441 = vunpack.c.l.b16 %v90
  %v442 = vunpack.c.l.b16 %v91
  %v443 = vunpack.c.l.b16 %v92
  %v444 = vunpack.c.l.b16 %v93
  %v445 = vunpack.c.l.b16 %v94
  %v446 = vunpack.c.l.b16 %v95
  %v447 = vunpack.c.l.b16 %v96
  %v448 = vunpack.c.l.b16 %v97
  %v449 = vunpack.c.l.b16 %v98
  %v450 = vunpack.c.l.b16 %v99
  %v451 = vunpack.c.l.b16 %v100
  %v452 = vunpack.c.l.b16 %v101
  %v453 = vunpack.c.l.b16 %v102
  %v454 = vunpack.c.l.b16 %v103
  %v455 = vunpack.c.l.b16 %v104
  %v456 = vunpack.c.l.b16 %v105
  %v457 = vunpack.c.l.b16 %v106
  %v458 = vunpack.c.l.b16 %v107
  %v459 = vunpack.c.l.b16 %v108
  %v460 = vunpack.c.l.b16 %v109
  %v461 = vunpack.c.l.b16 %v110
  %v462 = vunpack.c.l.b16 %v111
  %v463 = vunpack.c.l.b16 %v112
  %v464 = vunpack.c.l.b16 %v113
  %v465 = vunpack.c.l.b16 %v114
  %v466 = vunpack.c.l.b16 %v115
  %v467 = vunpack.c.l.b16 %v116
  %v468 = vunpack.c.l.b16 %v117
  %v469 = vunpack.c.l.b16 %v118
  %v470 = vunpack.c.l.b16 %v119
  %v471 = vunpack.c.l.b16 %v120
  %v472 = vunpack.c.l.b16 %v121
  %v473 = vunpack.c.l.b16 %v122
  %v474 = vunpack.c.l.b16 %v123
  %v475 = vunpack.c.l.b16 %v124
  %v476 = vunpack.c.l.b16 %v125
  %v477 = vunpack.c.l.b16 %v126
  %v478 = vunpack.c.l.b16 %v127
  %v479 = vunpack.c.l.b16 %v128
  %v480 = vunpack.c.l.b16 %v129
  %v481 = vunpack.c.l.b16 %v130
  %v482 = vunpack.c.l.b16 %v131
  %v483 = vunpack.c.l.b16 %v132
  %v484 = vunpack.c.l.b16 %v133
  %v485 = vunpack.c.l.b16 %v134
  %v486 = vunpack.c.l.b16 %v135
  %v487 = vunpack.c.l.b16 %v136
  %v488 = vunpack.c.l.b16 %v137
  %v489 = vunpack.c.l.b16 %v138
  %v490 = vunpack.c.l.b16 %v139
  %v491 = vunpack.c.l.b16 %v140
  %v492 = vpack.c.b16 %v421, %v420
  %v493 = vpack.c.b16 %v423, %v422
  %v494 = vpack.c.b16 %v425, %v424
  %v495 = vpack.c.b16 %v427, %v426
  %v496 = vpack.c.b16 %v429, %v428
  %v497 = vpack.c.b16 %v431, %v430
  %v498 = vpack.c.b16 %v433, %v432
  %v499 = vpack.c.b16 %v435, %v434
  %v500 = vpack.c.b16 %v437, %v436
  %v501 = vpack.c.b16 %v439, %v438
  %v502 = vpack.c.b16 %v441, %v440
  %v503 = vpack.c.b16 %v443, %v442
  %v504 = vpack.c.b16 %v445, %v444
  %v505 = vpack.c.b16 %v447, %v446
  %v506 = vpack.c.b16 %v449, %v448
  %v507 = vpack.c.b16 %v451, %v450
  %v508 = vpack.c.b16 %v453, %v452
  %v509 = vpack.c.b16 %v455, %v454
  %v510 = vpack.c.b16 %v457, %v456
  %v511 = vpack.c.b16 %v459, %v458
  %v512 = vpack.c.b16 %v461, %v460
  %v513 = vpack.c.b16 %v463, %v462
  %v514 = vpack.c.b16 %v465, %v464
  %v515 = vpack.c.b16 %v467, %v466
  %v516 = vpack.c.b16 %v469, %v468
  %v517 = vpack.c.b16 %v471, %v470
  %v518 = vpack.c.b16 %v473, %v472
  %v519 = vpack.c.b16 %v475, %v474
  %v520 = vpack.c.b16 %v477, %v476
  %v521 = vpack.c.b16 %v479, %v478
  %v522 = vpack.c.b16 %v481, %v480
  %v523 = vpack.c.b16 %v483, %v482
  %v524 = vpack.c.b16 %v485, %v484
  %v525 = vpack.c.b16 %v487, %v486
  %v526 = vpack.c.b16 %v489, %v488
  %v527 = vpack.c.b16 %v491, %v490
  %vm564 = vcmask 523264
  %v566 = vsel %vm564, %v280, 0
  %v569 = vsel %vm564, %v285, 0
  %v572 = vsel %vm564, %v290, 0
  %v575 = vsel %vm564, %v295, 0
  %v578 = vsel %vm564, %v300, 0
  %v581 = vsel %vm564, %v305, 0
  %v584 = vsel %vm564, %v310, 0
  %v587 = vsel %vm564, %v315, 0
  %589 = vmatprep.subr.bf16.mxu0 0
  %590 = vmatpush1.bf16.msra.mxu0 %v492
  %591 = vmatprep.subr.bf16.mxu0 0
  %592 = vmatpush1.bf16.msra.mxu0 %v493
  %593 = vmatprep.subr.bf16.mxu0 0
  %594 = vmatpush1.bf16.msra.mxu0 %v494
  %595 = vmatprep.subr.bf16.mxu0 0
  %596 = vmatpush1.bf16.msra.mxu0 %v495
  %597 = vmatprep.subr.bf16.mxu0 0
  %598 = vmatpush1.bf16.msra.mxu0 %v496
  %599 = vmatprep.subr.bf16.mxu0 0
  %600 = vmatpush1.bf16.msra.mxu0 %v497
  %601 = vmatprep.subr.bf16.mxu0 0
  %602 = vmatpush1.bf16.msra.mxu0 %v498
  %603 = vmatprep.subr.bf16.mxu0 0
  %604 = vmatpush1.bf16.msra.mxu0 %v499
  %605 = vmatprep.subr.bf16.mxu0 0
  %606 = vmatpush1.bf16.msra.mxu0 %v500
  %607 = vmatprep.subr.bf16.mxu0 0
  %608 = vmatpush1.bf16.msra.mxu0 %v501
  %609 = vmatprep.subr.bf16.mxu0 0
  %610 = vmatpush1.bf16.msra.mxu0 %v502
  %611 = vmatprep.subr.bf16.mxu0 0
  %612 = vmatpush1.bf16.msra.mxu0 %v503
  %613 = vmatprep.subr.bf16.mxu0 0
  %614 = vmatpush1.bf16.msra.mxu0 %v504
  %615 = vmatprep.subr.bf16.mxu0 0
  %616 = vmatpush1.bf16.msra.mxu0 %v505
  %617 = vmatprep.subr.bf16.mxu0 0
  %618 = vmatpush1.bf16.msra.mxu0 %v506
  %619 = vmatprep.subr.bf16.mxu0 0
  %620 = vmatpush1.bf16.msra.mxu0 %v507
  %621 = vmatprep.mubr.bf16.mxu0 %v277
  %622 = vmatmul.mubr.bf16.gmra.mrb[0].mxu0 %v276
  %v623 = vpop.f32.mrb[0].mxu0
  %v624 = vadd.f32 %v146, %v623
  %v625 = vpop.f32.mrb[0].mxu0
  %v626 = vpop.f32.mrb[0].mxu0
  %v627 = vadd.f32 %v146, %v626
  %v628 = vpop.f32.mrb[0].mxu0
  %629 = vmatprep.mubr.bf16.mxu0 %v282
  %630 = vmatmul.mubr.bf16.gmra.mrb[0].mxu0 %v281
  %v631 = vpop.f32.mrb[0].mxu0
  %v632 = vadd.f32 %v146, %v631
  %v633 = vpop.f32.mrb[0].mxu0
  %v634 = vpop.f32.mrb[0].mxu0
  %v635 = vadd.f32 %v146, %v634
  %v636 = vpop.f32.mrb[0].mxu0
  %637 = vmatprep.mubr.bf16.mxu0 %v287
  %638 = vmatmul.mubr.bf16.gmra.mrb[0].mxu0 %v286
  %v639 = vpop.f32.mrb[0].mxu0
  %v640 = vadd.f32 %v146, %v639
  %v641 = vpop.f32.mrb[0].mxu0
  %v642 = vpop.f32.mrb[0].mxu0
  %v643 = vadd.f32 %v146, %v642
  %v644 = vpop.f32.mrb[0].mxu0
  %645 = vmatprep.mubr.bf16.mxu0 %v292
  %646 = vmatmul.mubr.bf16.gmra.mrb[0].mxu0 %v291
  %v647 = vpop.f32.mrb[0].mxu0
  %v648 = vadd.f32 %v146, %v647
  %v649 = vpop.f32.mrb[0].mxu0
  %v650 = vpop.f32.mrb[0].mxu0
  %v651 = vadd.f32 %v146, %v650
  %v652 = vpop.f32.mrb[0].mxu0
  %653 = vmatprep.mubr.bf16.mxu0 %v297
  %654 = vmatmul.mubr.bf16.gmra.mrb[0].mxu0 %v296
  %v655 = vpop.f32.mrb[0].mxu0
  %v656 = vadd.f32 %v146, %v655
  %v657 = vpop.f32.mrb[0].mxu0
  %v658 = vpop.f32.mrb[0].mxu0
  %v659 = vadd.f32 %v146, %v658
  %v660 = vpop.f32.mrb[0].mxu0
  %661 = vmatprep.mubr.bf16.mxu0 %v302
  %662 = vmatmul.mubr.bf16.gmra.mrb[0].mxu0 %v301
  %v663 = vpop.f32.mrb[0].mxu0
  %v664 = vadd.f32 %v146, %v663
  %v665 = vpop.f32.mrb[0].mxu0
  %v666 = vpop.f32.mrb[0].mxu0
  %v667 = vadd.f32 %v146, %v666
  %v668 = vpop.f32.mrb[0].mxu0
  %669 = vmatprep.mubr.bf16.mxu0 %v307
  %670 = vmatmul.mubr.bf16.gmra.mrb[0].mxu0 %v306
  %v671 = vpop.f32.mrb[0].mxu0
  %v672 = vadd.f32 %v146, %v671
  %v673 = vpop.f32.mrb[0].mxu0
  %v674 = vpop.f32.mrb[0].mxu0
  %v675 = vadd.f32 %v146, %v674
  %v676 = vpop.f32.mrb[0].mxu0
  %677 = vmatprep.mubr.bf16.mxu0 %v312
  %678 = vmatmul.mubr.bf16.gmra.mrb[0].mxu0 %v311
  %v679 = vpop.f32.mrb[0].mxu0
  %v680 = vadd.f32 %v146, %v679
  %v681 = vpop.f32.mrb[0].mxu0
  %v682 = vpop.f32.mrb[0].mxu0
  %v683 = vadd.f32 %v146, %v682
  %v684 = vpop.f32.mrb[0].mxu0
  %685 = vdwg.mxu0
  %686 = vmatprep.subr.bf16.mxu0 0
  %687 = vmatpush1.bf16.msra.mxu0 %v508
  %688 = vmatprep.subr.bf16.mxu0 0
  %689 = vmatpush1.bf16.msra.mxu0 %v509
  %690 = vmatprep.subr.bf16.mxu0 0
  %691 = vmatpush1.bf16.msra.mxu0 %v510
  %692 = vmatprep.subr.bf16.mxu0 0
  %693 = vmatpush1.bf16.msra.mxu0 %v511
  %694 = vmatprep.subr.bf16.mxu0 0
  %695 = vmatpush1.bf16.msra.mxu0 %v512
  %696 = vmatprep.subr.bf16.mxu0 0
  %697 = vmatpush1.bf16.msra.mxu0 %v513
  %698 = vmatprep.subr.bf16.mxu0 0
  %699 = vmatpush1.bf16.msra.mxu0 %v514
  %700 = vmatprep.subr.bf16.mxu0 0
  %701 = vmatpush1.bf16.msra.mxu0 %v515
  %702 = vmatprep.subr.bf16.mxu0 0
  %703 = vmatpush1.bf16.msra.mxu0 %v516
  %704 = vmatprep.subr.bf16.mxu0 0
  %705 = vmatpush1.bf16.msra.mxu0 %v517
  %706 = vmatprep.subr.bf16.mxu0 0
  %707 = vmatpush1.bf16.msra.mxu0 %v518
  %708 = vmatprep.subr.bf16.mxu0 0
  %709 = vmatpush1.bf16.msra.mxu0 %v519
  %710 = vmatprep.subr.bf16.mxu0 0
  %711 = vmatpush1.bf16.msra.mxu0 %v520
  %712 = vmatprep.subr.bf16.mxu0 0
  %713 = vmatpush1.bf16.msra.mxu0 %v521
  %714 = vmatprep.subr.bf16.mxu0 0
  %715 = vmatpush1.bf16.msra.mxu0 %v522
  %716 = vmatprep.subr.bf16.mxu0 0
  %717 = vmatpush1.bf16.msra.mxu0 %v523
  %718 = vmatprep.mubr.bf16.mxu0 %v279
  %719 = vmatmul.mubr.bf16.gmra.mrb[0].mxu0 %v278
  %v720 = vpop.f32.mrb[0].mxu0
  %v721 = vadd.f32 %v624, %v720
  %v722 = vpop.f32.mrb[0].mxu0
  %v723 = vpop.f32.mrb[0].mxu0
  %v724 = vadd.f32 %v627, %v723
  %v725 = vpop.f32.mrb[0].mxu0
  %726 = vmatprep.mubr.bf16.mxu0 %v284
  %727 = vmatmul.mubr.bf16.gmra.mrb[0].mxu0 %v283
  %v728 = vpop.f32.mrb[0].mxu0
  %v729 = vadd.f32 %v632, %v728
  %v730 = vpop.f32.mrb[0].mxu0
  %v731 = vpop.f32.mrb[0].mxu0
  %v732 = vadd.f32 %v635, %v731
  %v733 = vpop.f32.mrb[0].mxu0
  %734 = vmatprep.mubr.bf16.mxu0 %v289
  %735 = vmatmul.mubr.bf16.gmra.mrb[0].mxu0 %v288
  %v736 = vpop.f32.mrb[0].mxu0
  %v737 = vadd.f32 %v640, %v736
  %v738 = vpop.f32.mrb[0].mxu0
  %v739 = vpop.f32.mrb[0].mxu0
  %v740 = vadd.f32 %v643, %v739
  %v741 = vpop.f32.mrb[0].mxu0
  %742 = vmatprep.mubr.bf16.mxu0 %v294
  %743 = vmatmul.mubr.bf16.gmra.mrb[0].mxu0 %v293
  %v744 = vpop.f32.mrb[0].mxu0
  %v745 = vadd.f32 %v648, %v744
  %v746 = vpop.f32.mrb[0].mxu0
  %v747 = vpop.f32.mrb[0].mxu0
  %v748 = vadd.f32 %v651, %v747
  %v749 = vpop.f32.mrb[0].mxu0
  %750 = vmatprep.mubr.bf16.mxu0 %v299
  %751 = vmatmul.mubr.bf16.gmra.mrb[0].mxu0 %v298
  %v752 = vpop.f32.mrb[0].mxu0
  %v753 = vadd.f32 %v656, %v752
  %v754 = vpop.f32.mrb[0].mxu0
  %v755 = vpop.f32.mrb[0].mxu0
  %v756 = vadd.f32 %v659, %v755
  %v757 = vpop.f32.mrb[0].mxu0
  %758 = vmatprep.mubr.bf16.mxu0 %v304
  %759 = vmatmul.mubr.bf16.gmra.mrb[0].mxu0 %v303
  %v760 = vpop.f32.mrb[0].mxu0
  %v761 = vadd.f32 %v664, %v760
  %v762 = vpop.f32.mrb[0].mxu0
  %v763 = vpop.f32.mrb[0].mxu0
  %v764 = vadd.f32 %v667, %v763
  %v765 = vpop.f32.mrb[0].mxu0
  %766 = vmatprep.mubr.bf16.mxu0 %v309
  %767 = vmatmul.mubr.bf16.gmra.mrb[0].mxu0 %v308
  %v768 = vpop.f32.mrb[0].mxu0
  %v769 = vadd.f32 %v672, %v768
  %v770 = vpop.f32.mrb[0].mxu0
  %v771 = vpop.f32.mrb[0].mxu0
  %v772 = vadd.f32 %v675, %v771
  %v773 = vpop.f32.mrb[0].mxu0
  %774 = vmatprep.mubr.bf16.mxu0 %v314
  %775 = vmatmul.mubr.bf16.gmra.mrb[0].mxu0 %v313
  %v776 = vpop.f32.mrb[0].mxu0
  %v777 = vadd.f32 %v680, %v776
  %v778 = vpop.f32.mrb[0].mxu0
  %v779 = vpop.f32.mrb[0].mxu0
  %v780 = vadd.f32 %v683, %v779
  %v781 = vpop.f32.mrb[0].mxu0
  %782 = vdwg.mxu0
  %783 = vmatprep.subr.bf16.mxu0 0
  %784 = vmatpush1.bf16.msra.mxu0 %v524
  %785 = vmatprep.subr.bf16.mxu0 0
  %786 = vmatpush1.bf16.msra.mxu0 %v525
  %787 = vmatprep.subr.bf16.mxu0 0
  %788 = vmatpush1.bf16.msra.mxu0 %v526
  %789 = vmatprep.subr.bf16.mxu0 0
  %790 = vmatpush1.bf16.msra.mxu0 %v527
  %791 = vmatprep.subr.bf16.mxu0 0
  %792 = vmatpush1.bf16.msra.mxu0 0
  %793 = vmatprep.subr.bf16.mxu0 0
  %794 = vmatpush1.bf16.msra.mxu0 0
  %795 = vmatprep.subr.bf16.mxu0 0
  %796 = vmatpush1.bf16.msra.mxu0 0
  %797 = vmatprep.subr.bf16.mxu0 0
  %798 = vmatpush1.bf16.msra.mxu0 0
  %799 = vmatprep.subr.bf16.mxu0 0
  %800 = vmatpush1.bf16.msra.mxu0 0
  %801 = vmatprep.subr.bf16.mxu0 0
  %802 = vmatpush1.bf16.msra.mxu0 0
  %803 = vmatprep.subr.bf16.mxu0 0
  %804 = vmatpush1.bf16.msra.mxu0 0
  %805 = vmatprep.subr.bf16.mxu0 0
  %806 = vmatpush1.bf16.msra.mxu0 0
  %807 = vmatprep.subr.bf16.mxu0 0
  %808 = vmatpush1.bf16.msra.mxu0 0
  %809 = vmatprep.subr.bf16.mxu0 0
  %810 = vmatpush1.bf16.msra.mxu0 0
  %811 = vmatprep.subr.bf16.mxu0 0
  %812 = vmatpush1.bf16.msra.mxu0 0
  %813 = vmatprep.subr.bf16.mxu0 0
  %814 = vmatpush1.bf16.msra.mxu0 0
  %815 = vmatprep.mubr.bf16.mxu0 0
  %816 = vmatmul.mubr.bf16.gmra.mrb[0].mxu0 %v566
  %v817 = vpop.f32.mrb[0].mxu0
  %v818 = vadd.f32 %v721, %v817
  %v819 = vpop.f32.mrb[0].mxu0
  %v820 = vpop.f32.mrb[0].mxu0
  %v821 = vadd.f32 %v724, %v820
  %v822 = vpop.f32.mrb[0].mxu0
  %823 = vmatprep.mubr.bf16.mxu0 0
  %824 = vmatmul.mubr.bf16.gmra.mrb[0].mxu0 %v569
  %v825 = vpop.f32.mrb[0].mxu0
  %v826 = vadd.f32 %v729, %v825
  %v827 = vpop.f32.mrb[0].mxu0
  %v828 = vpop.f32.mrb[0].mxu0
  %v829 = vadd.f32 %v732, %v828
  %v830 = vpop.f32.mrb[0].mxu0
  %831 = vmatprep.mubr.bf16.mxu0 0
  %832 = vmatmul.mubr.bf16.gmra.mrb[0].mxu0 %v572
  %v833 = vpop.f32.mrb[0].mxu0
  %v834 = vadd.f32 %v737, %v833
  %v835 = vpop.f32.mrb[0].mxu0
  %v836 = vpop.f32.mrb[0].mxu0
  %v837 = vadd.f32 %v740, %v836
  %v838 = vpop.f32.mrb[0].mxu0
  %839 = vmatprep.mubr.bf16.mxu0 0
  %840 = vmatmul.mubr.bf16.gmra.mrb[0].mxu0 %v575
  %v841 = vpop.f32.mrb[0].mxu0
  %v842 = vadd.f32 %v745, %v841
  %v843 = vpop.f32.mrb[0].mxu0
  %v844 = vpop.f32.mrb[0].mxu0
  %v845 = vadd.f32 %v748, %v844
  %v846 = vpop.f32.mrb[0].mxu0
  %847 = vmatprep.mubr.bf16.mxu0 0
  %848 = vmatmul.mubr.bf16.gmra.mrb[0].mxu0 %v578
  %v849 = vpop.f32.mrb[0].mxu0
  %v850 = vadd.f32 %v753, %v849
  %v851 = vpop.f32.mrb[0].mxu0
  %v852 = vpop.f32.mrb[0].mxu0
  %v853 = vadd.f32 %v756, %v852
  %v854 = vpop.f32.mrb[0].mxu0
  %855 = vmatprep.mubr.bf16.mxu0 0
  %856 = vmatmul.mubr.bf16.gmra.mrb[0].mxu0 %v581
  %v857 = vpop.f32.mrb[0].mxu0
  %v858 = vadd.f32 %v761, %v857
  %v859 = vpop.f32.mrb[0].mxu0
  %v860 = vpop.f32.mrb[0].mxu0
  %v861 = vadd.f32 %v764, %v860
  %v862 = vpop.f32.mrb[0].mxu0
  %863 = vmatprep.mubr.bf16.mxu0 0
  %864 = vmatmul.mubr.bf16.gmra.mrb[0].mxu0 %v584
  %v865 = vpop.f32.mrb[0].mxu0
  %v866 = vadd.f32 %v769, %v865
  %v867 = vpop.f32.mrb[0].mxu0
  %v868 = vpop.f32.mrb[0].mxu0
  %v869 = vadd.f32 %v772, %v868
  %v870 = vpop.f32.mrb[0].mxu0
  %871 = vmatprep.mubr.bf16.mxu0 0
  %872 = vmatmul.mubr.bf16.gmra.mrb[0].mxu0 %v587
  %v873 = vpop.f32.mrb[0].mxu0
  %v874 = vadd.f32 %v777, %v873
  %v875 = vpop.f32.mrb[0].mxu0
  %v876 = vpop.f32.mrb[0].mxu0
  %v877 = vadd.f32 %v780, %v876
  %v878 = vpop.f32.mrb[0].mxu0
  %879 = vdwg.mxu0
  %v880 = vmax.f32 %v818, 0.0
  %v881 = vmax.f32 %v821, 0.0
  %v882 = vmax.f32 %v826, 0.0
  %v883 = vmax.f32 %v829, 0.0
  %v884 = vmax.f32 %v834, 0.0
  %v885 = vmax.f32 %v837, 0.0
  %v886 = vmax.f32 %v842, 0.0
  %v887 = vmax.f32 %v845, 0.0
  %v888 = vmax.f32 %v850, 0.0
  %v889 = vmax.f32 %v853, 0.0
  %v890 = vmax.f32 %v858, 0.0
  %v891 = vmax.f32 %v861, 0.0
  %v892 = vmax.f32 %v866, 0.0
  %v893 = vmax.f32 %v869, 0.0
  %v894 = vmax.f32 %v874, 0.0
  %v895 = vmax.f32 %v877, 0.0
  %v896 = vld [vmem:[%s3] sm:$0x1]
  %v898 = vlaneseq
  %v899 = vshrl.u32 %v898, 7
  %v900 = vsub.s32 0, %v899
  %v901 = vrot.slane %v896, %v900
  %v903 = vmul.f32 %v880, %v901
  %v904 = vmul.f32 %v881, %v901
  %v905 = vmul.f32 %v882, %v901
  %v906 = vmul.f32 %v883, %v901
  %v907 = vmul.f32 %v884, %v901
  %v908 = vmul.f32 %v885, %v901
  %v909 = vmul.f32 %v886, %v901
  %v910 = vmul.f32 %v887, %v901
  %v911 = vmul.f32 %v888, %v901
  %v912 = vmul.f32 %v889, %v901
  %v913 = vmul.f32 %v890, %v901
  %v914 = vmul.f32 %v891, %v901
  %v915 = vmul.f32 %v892, %v901
  %v916 = vmul.f32 %v893, %v901
  %v917 = vmul.f32 %v894, %v901
  %v918 = vmul.f32 %v895, %v901
  %v919 = vld [vmem:[%s4] sm:$0x1]
  %v921 = vlaneseq
  %v922 = vshrl.u32 %v921, 7
  %v923 = vsub.s32 0, %v922
  %v924 = vrot.slane %v919, %v923
  %v926 = vadd.f32 %v903, %v924
  %v927 = vadd.f32 %v904, %v924
  %v928 = vadd.f32 %v905, %v924
  %v929 = vadd.f32 %v906, %v924
  %v930 = vadd.f32 %v907, %v924
  %v931 = vadd.f32 %v908, %v924
  %v932 = vadd.f32 %v909, %v924
  %v933 = vadd.f32 %v910, %v924
  %v934 = vadd.f32 %v911, %v924
  %v935 = vadd.f32 %v912, %v924
  %v936 = vadd.f32 %v913, %v924
  %v937 = vadd.f32 %v914, %v924
  %v938 = vadd.f32 %v915, %v924
  %v939 = vadd.f32 %v916, %v924
  %v940 = vadd.f32 %v917, %v924
  %v941 = vadd.f32 %v918, %v924
  %942 = vst.msk [vmem:[%s5] sm:$0xff] %vm564, %v926
  %943 = vst.msk [vmem:[%s5 + $0x8] sm:$0xff] %vm564, %v927
  %944 = vst.msk [vmem:[%s5 + $0x10] sm:$0xff] %vm564, %v928
  %945 = vst.msk [vmem:[%s5 + $0x18] sm:$0xff] %vm564, %v929
  %946 = vst.msk [vmem:[%s5 + $0x20] sm:$0xff] %vm564, %v930
  %947 = vst.msk [vmem:[%s5 + $0x28] sm:$0xff] %vm564, %v931
  %948 = vst.msk [vmem:[%s5 + $0x30] sm:$0xff] %vm564, %v932
  %949 = vst.msk [vmem:[%s5 + $0x38] sm:$0xff] %vm564, %v933
  %950 = vst.msk [vmem:[%s5 + $0x40] sm:$0xff] %vm564, %v934
  %951 = vst.msk [vmem:[%s5 + $0x48] sm:$0xff] %vm564, %v935
  %952 = vst.msk [vmem:[%s5 + $0x50] sm:$0xff] %vm564, %v936
  %953 = vst.msk [vmem:[%s5 + $0x58] sm:$0xff] %vm564, %v937
  %954 = vst.msk [vmem:[%s5 + $0x60] sm:$0xff] %vm564, %v938
  %955 = vst.msk [vmem:[%s5 + $0x68] sm:$0xff] %vm564, %v939
  %956 = vst.msk [vmem:[%s5 + $0x70] sm:$0xff] %vm564, %v940
  %957 = vst.msk [vmem:[%s5 + $0x78] sm:$0xff] %vm564, %v941
  // Predicated region
  $region22: #{mcnet_forward.23} parent=0 // pred_check
    _
  $region23: #{mcnet_forward.23} parent=0 // pred_check_branch
    %959 = sbr.rel (0) target = $region25
  $region24: #{mcnet_forward.23} parent=0 // pred_region
    _
  $region25: #{mcnet_forward.23} parent=0 // pred_fallthru
    _
  // Predicated region
  $region26: #{mcnet_forward.23} parent=0 // pred_check
    _
  $region27: #{mcnet_forward.23} parent=0 // pred_check_branch
    %961 = sbr.rel (0) target = $region29
  $region28: #{mcnet_forward.23} parent=0 // pred_region
    _
  $region29: #{mcnet_forward.23} parent=0 // pred_fallthru
    _

// kernel: mcnet_forward.24
$region0: #{mcnet_forward.24}
  #allocation0 [shape = 'u32[]', space=smem, size = 0x4, offset = 0x4, fixed_abs, tag = 'smem constant byte address 0x4 - core index']
  #allocation1 [shape = 'u32[144,128]{1,0:T(1,128)}', space=vmem, size = 0x12000, scoped, tag = 'internal scratch']
  %s0 = inlined_call_operand.vmem [shape: bf16[64,1344], index: 0, kind: input, shape index: {}]
  %s1 = inlined_call_operand.vmem [shape: bf16[1344,64], index: 1, kind: input, shape index: {}]
  %s2 = inlined_call_operand.vmem [shape: f32[1,64], index: 2, kind: input, shape index: {}]
  %s3 = inlined_call_operand.vmem [shape: f32[64,64], index: 3, kind: output, shape index: {}]
  %s4 = sld [smem:[#allocation0]]
  $region22: #{mcnet_forward.24} parent=0
    _
  %s6 = ssub.s32 1, %s4
  %s7 = scalar_select 0, %s6, %s4
  // Predicated region
  $region2: #{mcnet_forward.24} parent=0 // pred_check
    _
  $region3: #{mcnet_forward.24} parent=0 // pred_check_branch
    %9 = sbr.rel (0) target = $region5
  $region4: #{mcnet_forward.24} parent=0 // pred_region
    _
  $region5: #{mcnet_forward.24} parent=0 // pred_fallthru
    _
  // Predicated region
  $region6: #{mcnet_forward.24} parent=0 // pred_check
    _
  $region7: #{mcnet_forward.24} parent=0 // pred_check_branch
    %11 = sbr.rel (0) target = $region9
  $region8: #{mcnet_forward.24} parent=0 // pred_region
    _
  $region9: #{mcnet_forward.24} parent=0 // pred_fallthru
    _
  // Predicated region
  $region10: #{mcnet_forward.24} parent=0 // pred_check
    _
  $region11: #{mcnet_forward.24} parent=0 // pred_check_branch
    %13 = sbr.rel (0) target = $region13
  $region12: #{mcnet_forward.24} parent=0 // pred_region
    _
  $region13: #{mcnet_forward.24} parent=0 // pred_fallthru
    _
  %v15 = vld [vmem:[%s0] sm:$0xff]
  %v16 = vld [vmem:[%s0 + $0x8] sm:$0xff]
  %v17 = vld [vmem:[%s0 + $0x10] sm:$0xff]
  %v18 = vld [vmem:[%s0 + $0x18] sm:$0xff]
  %v19 = vld [vmem:[%s0 + $0x20] sm:$0xff]
  %v20 = vld [vmem:[%s0 + $0x28] sm:$0xf]
  %v21 = vld [vmem:[%s0 + $0x2c] sm:$0xff]
  %v22 = vld [vmem:[%s0 + $0x34] sm:$0xff]
  %v23 = vld [vmem:[%s0 + $0x3c] sm:$0xff]
  %v24 = vld [vmem:[%s0 + $0x44] sm:$0xff]
  %v25 = vld [vmem:[%s0 + $0x4c] sm:$0xff]
  %v26 = vld [vmem:[%s0 + $0x54] sm:$0xf]
  %v27 = vld [vmem:[%s0 + $0x58] sm:$0xff]
  %v28 = vld [vmem:[%s0 + $0x60] sm:$0xff]
  %v29 = vld [vmem:[%s0 + $0x68] sm:$0xff]
  %v30 = vld [vmem:[%s0 + $0x70] sm:$0xff]
  %v31 = vld [vmem:[%s0 + $0x78] sm:$0xff]
  %v32 = vld [vmem:[%s0 + $0x80] sm:$0xf]
  %v33 = vld [vmem:[%s0 + $0x84] sm:$0xff]
  %v34 = vld [vmem:[%s0 + $0x8c] sm:$0xff]
  %v35 = vld [vmem:[%s0 + $0x94] sm:$0xff]
  %v36 = vld [vmem:[%s0 + $0x9c] sm:$0xff]
  %v37 = vld [vmem:[%s0 + $0xa4] sm:$0xff]
  %v38 = vld [vmem:[%s0 + $0xac] sm:$0xf]
  %v39 = vld [vmem:[%s0 + $0xb0] sm:$0xff]
  %v40 = vld [vmem:[%s0 + $0xb8] sm:$0xff]
  %v41 = vld [vmem:[%s0 + $0xc0] sm:$0xff]
  %v42 = vld [vmem:[%s0 + $0xc8] sm:$0xff]
  %v43 = vld [vmem:[%s0 + $0xd0] sm:$0xff]
  %v44 = vld [vmem:[%s0 + $0xd8] sm:$0xf]
  %v45 = vld [vmem:[%s0 + $0xdc] sm:$0xff]
  %v46 = vld [vmem:[%s0 + $0xe4] sm:$0xff]
  %v47 = vld [vmem:[%s0 + $0xec] sm:$0xff]
  %v48 = vld [vmem:[%s0 + $0xf4] sm:$0xff]
  %v49 = vld [vmem:[%s0 + $0xfc] sm:$0xff]
  %v50 = vld [vmem:[%s0 + $0x104] sm:$0xf]
  %v51 = vld [vmem:[%s0 + $0x108] sm:$0xff]
  %v52 = vld [vmem:[%s0 + $0x110] sm:$0xff]
  %v53 = vld [vmem:[%s0 + $0x118] sm:$0xff]
  %v54 = vld [vmem:[%s0 + $0x120] sm:$0xff]
  %v55 = vld [vmem:[%s0 + $0x128] sm:$0xff]
  %v56 = vld [vmem:[%s0 + $0x130] sm:$0xf]
  %v57 = vld [vmem:[%s0 + $0x134] sm:$0xff]
  %v58 = vld [vmem:[%s0 + $0x13c] sm:$0xff]
  %v59 = vld [vmem:[%s0 + $0x144] sm:$0xff]
  %v60 = vld [vmem:[%s0 + $0x14c] sm:$0xff]
  %v61 = vld [vmem:[%s0 + $0x154] sm:$0xff]
  %v62 = vld [vmem:[%s0 + $0x15c] sm:$0xf]
  %v63 = vld [vmem:[%s1] sm:$0xf]
  %v64 = vld [vmem:[%s1 + $0x4] sm:$0xf]
  %v65 = vld [vmem:[%s1 + $0x8] sm:$0xf]
  %v66 = vld [vmem:[%s1 + $0xc] sm:$0xf]
  %v67 = vld [vmem:[%s1 + $0x10] sm:$0xf]
  %v68 = vld [vmem:[%s1 + $0x14] sm:$0xf]
  %v69 = vld [vmem:[%s1 + $0x18] sm:$0xf]
  %v70 = vld [vmem:[%s1 + $0x1c] sm:$0xf]
  %v71 = vld [vmem:[%s1 + $0x20] sm:$0xf]
  %v72 = vld [vmem:[%s1 + $0x24] sm:$0xf]
  %v73 = vld [vmem:[%s1 + $0x28] sm:$0xf]
  %v74 = vld [vmem:[%s1 + $0x2c] sm:$0xf]
  %v75 = vld [vmem:[%s1 + $0x30] sm:$0xf]
  %v76 = vld [vmem:[%s1 + $0x34] sm:$0xf]
  %v77 = vld [vmem:[%s1 + $0x38] sm:$0xf]
  %v78 = vld [vmem:[%s1 + $0x3c] sm:$0xf]
  %v79 = vld [vmem:[%s1 + $0x40] sm:$0xf]
  %v80 = vld [vmem:[%s1 + $0x44] sm:$0xf]
  %v81 = vld [vmem:[%s1 + $0x48] sm:$0xf]
  %v82 = vld [vmem:[%s1 + $0x4c] sm:$0xf]
  %v83 = vld [vmem:[%s1 + $0x50] sm:$0xf]
  %v84 = vld [vmem:[%s1 + $0x54] sm:$0xf]
  %v85 = vld [vmem:[%s1 + $0x58] sm:$0xf]
  %v86 = vld [vmem:[%s1 + $0x5c] sm:$0xf]
  %v87 = vld [vmem:[%s1 + $0x60] sm:$0xf]
  %v88 = vld [vmem:[%s1 + $0x64] sm:$0xf]
  %v89 = vld [vmem:[%s1 + $0x68] sm:$0xf]
  %v90 = vld [vmem:[%s1 + $0x6c] sm:$0xf]
  %v91 = vld [vmem:[%s1 + $0x70] sm:$0xf]
  %v92 = vld [vmem:[%s1 + $0x74] sm:$0xf]
  %v93 = vld [vmem:[%s1 + $0x78] sm:$0xf]
  %v94 = vld [vmem:[%s1 + $0x7c] sm:$0xf]
  %v95 = vld [vmem:[%s1 + $0x80] sm:$0xf]
  %v96 = vld [vmem:[%s1 + $0x84] sm:$0xf]
  %v97 = vld [vmem:[%s1 + $0x88] sm:$0xf]
  %v98 = vld [vmem:[%s1 + $0x8c] sm:$0xf]
  %v99 = vld [vmem:[%s1 + $0x90] sm:$0xf]
  %v100 = vld [vmem:[%s1 + $0x94] sm:$0xf]
  %v101 = vld [vmem:[%s1 + $0x98] sm:$0xf]
  %v102 = vld [vmem:[%s1 + $0x9c] sm:$0xf]
  %v103 = vld [vmem:[%s1 + $0xa0] sm:$0xf]
  %v104 = vld [vmem:[%s1 + $0xa4] sm:$0xf]
  %v105 = vld [vmem:[%s1 + $0xa8] sm:$0xf]
  %v106 = vld [vmem:[%s1 + $0xac] sm:$0xf]
  %v107 = vld [vmem:[%s1 + $0xb0] sm:$0xf]
  %v108 = vld [vmem:[%s1 + $0xb4] sm:$0xf]
  %v109 = vld [vmem:[%s1 + $0xb8] sm:$0xf]
  %v110 = vld [vmem:[%s1 + $0xbc] sm:$0xf]
  %v111 = vld [vmem:[%s1 + $0xc0] sm:$0xf]
  %v112 = vld [vmem:[%s1 + $0xc4] sm:$0xf]
  %v113 = vld [vmem:[%s1 + $0xc8] sm:$0xf]
  %v114 = vld [vmem:[%s1 + $0xcc] sm:$0xf]
  %v115 = vld [vmem:[%s1 + $0xd0] sm:$0xf]
  %v116 = vld [vmem:[%s1 + $0xd4] sm:$0xf]
  %v117 = vld [vmem:[%s1 + $0xd8] sm:$0xf]
  %v118 = vld [vmem:[%s1 + $0xdc] sm:$0xf]
  %v119 = vld [vmem:[%s1 + $0xe0] sm:$0xf]
  %v120 = vld [vmem:[%s1 + $0xe4] sm:$0xf]
  %v121 = vld [vmem:[%s1 + $0xe8] sm:$0xf]
  %v122 = vld [vmem:[%s1 + $0xec] sm:$0xf]
  %v123 = vld [vmem:[%s1 + $0xf0] sm:$0xf]
  %v124 = vld [vmem:[%s1 + $0xf4] sm:$0xf]
  %v125 = vld [vmem:[%s1 + $0xf8] sm:$0xf]
  %v126 = vld [vmem:[%s1 + $0xfc] sm:$0xf]
  %v127 = vld [vmem:[%s1 + $0x100] sm:$0xf]
  %v128 = vld [vmem:[%s1 + $0x104] sm:$0xf]
  %v129 = vld [vmem:[%s1 + $0x108] sm:$0xf]
  %v130 = vld [vmem:[%s1 + $0x10c] sm:$0xf]
  %v131 = vld [vmem:[%s1 + $0x110] sm:$0xf]
  %v132 = vld [vmem:[%s1 + $0x114] sm:$0xf]
  %v133 = vld [vmem:[%s1 + $0x118] sm:$0xf]
  %v134 = vld [vmem:[%s1 + $0x11c] sm:$0xf]
  %v135 = vld [vmem:[%s1 + $0x120] sm:$0xf]
  %v136 = vld [vmem:[%s1 + $0x124] sm:$0xf]
  %v137 = vld [vmem:[%s1 + $0x128] sm:$0xf]
  %v138 = vld [vmem:[%s1 + $0x12c] sm:$0xf]
  %v139 = vld [vmem:[%s1 + $0x130] sm:$0xf]
  %v140 = vld [vmem:[%s1 + $0x134] sm:$0xf]
  %v141 = vld [vmem:[%s1 + $0x138] sm:$0xf]
  %v142 = vld [vmem:[%s1 + $0x13c] sm:$0xf]
  %v143 = vld [vmem:[%s1 + $0x140] sm:$0xf]
  %v144 = vld [vmem:[%s1 + $0x144] sm:$0xf]
  %v145 = vld [vmem:[%s1 + $0x148] sm:$0xf]
  %v146 = vld [vmem:[%s1 + $0x14c] sm:$0xf]
  %v147 = vld [vmem:[%s1 + $0x150] sm:$0xf]
  %v148 = vld [vmem:[%s1 + $0x154] sm:$0xf]
  %v149 = vld [vmem:[%s1 + $0x158] sm:$0xf]
  %v150 = vld [vmem:[%s1 + $0x15c] sm:$0xf]
  %v151 = vld [vmem:[%s1 + $0x160] sm:$0xf]
  %v152 = vld [vmem:[%s1 + $0x164] sm:$0xf]
  %v153 = vld [vmem:[%s1 + $0x168] sm:$0xf]
  %v154 = vld [vmem:[%s1 + $0x16c] sm:$0xf]
  %v155 = vld [vmem:[%s1 + $0x170] sm:$0xf]
  %v156 = vld [vmem:[%s1 + $0x174] sm:$0xf]
  %v157 = vld [vmem:[%s1 + $0x178] sm:$0xf]
  %v158 = vld [vmem:[%s1 + $0x17c] sm:$0xf]
  %v159 = vld [vmem:[%s1 + $0x180] sm:$0xf]
  %v160 = vld [vmem:[%s1 + $0x184] sm:$0xf]
  %v161 = vld [vmem:[%s1 + $0x188] sm:$0xf]
  %v162 = vld [vmem:[%s1 + $0x18c] sm:$0xf]
  %v163 = vld [vmem:[%s1 + $0x190] sm:$0xf]
  %v164 = vld [vmem:[%s1 + $0x194] sm:$0xf]
  %v165 = vld [vmem:[%s1 + $0x198] sm:$0xf]
  %v166 = vld [vmem:[%s1 + $0x19c] sm:$0xf]
  %v167 = vld [vmem:[%s1 + $0x1a0] sm:$0xf]
  %v168 = vld [vmem:[%s1 + $0x1a4] sm:$0xf]
  %v169 = vld [vmem:[%s1 + $0x1a8] sm:$0xf]
  %v170 = vld [vmem:[%s1 + $0x1ac] sm:$0xf]
  %v171 = vld [vmem:[%s1 + $0x1b0] sm:$0xf]
  %v172 = vld [vmem:[%s1 + $0x1b4] sm:$0xf]
  %v173 = vld [vmem:[%s1 + $0x1b8] sm:$0xf]
  %v174 = vld [vmem:[%s1 + $0x1bc] sm:$0xf]
  %v175 = vld [vmem:[%s1 + $0x1c0] sm:$0xf]
  %v176 = vld [vmem:[%s1 + $0x1c4] sm:$0xf]
  %v177 = vld [vmem:[%s1 + $0x1c8] sm:$0xf]
  %v178 = vld [vmem:[%s1 + $0x1cc] sm:$0xf]
  %v179 = vld [vmem:[%s1 + $0x1d0] sm:$0xf]
  %v180 = vld [vmem:[%s1 + $0x1d4] sm:$0xf]
  %v181 = vld [vmem:[%s1 + $0x1d8] sm:$0xf]
  %v182 = vld [vmem:[%s1 + $0x1dc] sm:$0xf]
  %v183 = vld [vmem:[%s1 + $0x1e0] sm:$0xf]
  %v184 = vld [vmem:[%s1 + $0x1e4] sm:$0xf]
  %v185 = vld [vmem:[%s1 + $0x1e8] sm:$0xf]
  %v186 = vld [vmem:[%s1 + $0x1ec] sm:$0xf]
  %v187 = vld [vmem:[%s1 + $0x1f0] sm:$0xf]
  %v188 = vld [vmem:[%s1 + $0x1f4] sm:$0xf]
  %v189 = vld [vmem:[%s1 + $0x1f8] sm:$0xf]
  %v190 = vld [vmem:[%s1 + $0x1fc] sm:$0xf]
  %v191 = vld [vmem:[%s1 + $0x200] sm:$0xf]
  %v192 = vld [vmem:[%s1 + $0x204] sm:$0xf]
  %v193 = vld [vmem:[%s1 + $0x208] sm:$0xf]
  %v194 = vld [vmem:[%s1 + $0x20c] sm:$0xf]
  %v195 = vld [vmem:[%s1 + $0x210] sm:$0xf]
  %v196 = vld [vmem:[%s1 + $0x214] sm:$0xf]
  %v197 = vld [vmem:[%s1 + $0x218] sm:$0xf]
  %v198 = vld [vmem:[%s1 + $0x21c] sm:$0xf]
  %v199 = vld [vmem:[%s1 + $0x220] sm:$0xf]
  %v200 = vld [vmem:[%s1 + $0x224] sm:$0xf]
  %v201 = vld [vmem:[%s1 + $0x228] sm:$0xf]
  %v202 = vld [vmem:[%s1 + $0x22c] sm:$0xf]
  %v203 = vld [vmem:[%s1 + $0x230] sm:$0xf]
  %v204 = vld [vmem:[%s1 + $0x234] sm:$0xf]
  %v205 = vld [vmem:[%s1 + $0x238] sm:$0xf]
  %v206 = vld [vmem:[%s1 + $0x23c] sm:$0xf]
  %v207 = vld [vmem:[%s1 + $0x240] sm:$0xf]
  %v208 = vld [vmem:[%s1 + $0x244] sm:$0xf]
  %v209 = vld [vmem:[%s1 + $0x248] sm:$0xf]
  %v210 = vld [vmem:[%s1 + $0x24c] sm:$0xf]
  %v211 = vld [vmem:[%s1 + $0x250] sm:$0xf]
  %v212 = vld [vmem:[%s1 + $0x254] sm:$0xf]
  %v213 = vld [vmem:[%s1 + $0x258] sm:$0xf]
  %v214 = vld [vmem:[%s1 + $0x25c] sm:$0xf]
  %v215 = vld [vmem:[%s1 + $0x260] sm:$0xf]
  %v216 = vld [vmem:[%s1 + $0x264] sm:$0xf]
  %v217 = vld [vmem:[%s1 + $0x268] sm:$0xf]
  %v218 = vld [vmem:[%s1 + $0x26c] sm:$0xf]
  %v219 = vld [vmem:[%s1 + $0x270] sm:$0xf]
  %v220 = vld [vmem:[%s1 + $0x274] sm:$0xf]
  %v221 = vld [vmem:[%s1 + $0x278] sm:$0xf]
  %v222 = vld [vmem:[%s1 + $0x27c] sm:$0xf]
  %v223 = vld [vmem:[%s1 + $0x280] sm:$0xf]
  %v224 = vld [vmem:[%s1 + $0x284] sm:$0xf]
  %v225 = vld [vmem:[%s1 + $0x288] sm:$0xf]
  %v226 = vld [vmem:[%s1 + $0x28c] sm:$0xf]
  %v227 = vld [vmem:[%s1 + $0x290] sm:$0xf]
  %v228 = vld [vmem:[%s1 + $0x294] sm:$0xf]
  %v229 = vld [vmem:[%s1 + $0x298] sm:$0xf]
  %v230 = vld [vmem:[%s1 + $0x29c] sm:$0xf]
  %v231 = vld [vmem:[%s2] sm:$0x1]
  %v233 = vlaneseq
  %v234 = vshrl.u32 %v233, 7
  %v235 = vsub.s32 0, %v234
  %v236 = vrot.slane %v231, %v235
  %v286 = vunpack.c.l.b16 %v15
  %v287 = vunpack.c.h.b16 %v15
  %v288 = vunpack.c.l.b16 %v16
  %v289 = vunpack.c.h.b16 %v16
  %v290 = vunpack.c.l.b16 %v17
  %v291 = vunpack.c.h.b16 %v17
  %v292 = vunpack.c.l.b16 %v18
  %v293 = vunpack.c.h.b16 %v18
  %v294 = vunpack.c.l.b16 %v19
  %v295 = vunpack.c.h.b16 %v19
  %v296 = vunpack.c.l.b16 %v20
  %v297 = vunpack.c.l.b16 %v21
  %v298 = vunpack.c.h.b16 %v21
  %v299 = vunpack.c.l.b16 %v22
  %v300 = vunpack.c.h.b16 %v22
  %v301 = vunpack.c.l.b16 %v23
  %v302 = vunpack.c.h.b16 %v23
  %v303 = vunpack.c.l.b16 %v24
  %v304 = vunpack.c.h.b16 %v24
  %v305 = vunpack.c.l.b16 %v25
  %v306 = vunpack.c.h.b16 %v25
  %v307 = vunpack.c.l.b16 %v26
  %v308 = vunpack.c.l.b16 %v27
  %v309 = vunpack.c.h.b16 %v27
  %v310 = vunpack.c.l.b16 %v28
  %v311 = vunpack.c.h.b16 %v28
  %v312 = vunpack.c.l.b16 %v29
  %v313 = vunpack.c.h.b16 %v29
  %v314 = vunpack.c.l.b16 %v30
  %v315 = vunpack.c.h.b16 %v30
  %v316 = vunpack.c.l.b16 %v31
  %v317 = vunpack.c.h.b16 %v31
  %v318 = vunpack.c.l.b16 %v32
  %v319 = vunpack.c.l.b16 %v33
  %v320 = vunpack.c.h.b16 %v33
  %v321 = vunpack.c.l.b16 %v34
  %v322 = vunpack.c.h.b16 %v34
  %v323 = vunpack.c.l.b16 %v35
  %v324 = vunpack.c.h.b16 %v35
  %v325 = vunpack.c.l.b16 %v36
  %v326 = vunpack.c.h.b16 %v36
  %v327 = vunpack.c.l.b16 %v37
  %v328 = vunpack.c.h.b16 %v37
  %v329 = vunpack.c.l.b16 %v38
  %v330 = vunpack.c.l.b16 %v39
  %v331 = vunpack.c.h.b16 %v39
  %v332 = vunpack.c.l.b16 %v40
  %v333 = vunpack.c.h.b16 %v40
  %v334 = vunpack.c.l.b16 %v41
  %v335 = vunpack.c.h.b16 %v41
  %v336 = vunpack.c.l.b16 %v42
  %v337 = vunpack.c.h.b16 %v42
  %v338 = vunpack.c.l.b16 %v43
  %v339 = vunpack.c.h.b16 %v43
  %v340 = vunpack.c.l.b16 %v44
  %v341 = vunpack.c.l.b16 %v45
  %v342 = vunpack.c.h.b16 %v45
  %v343 = vunpack.c.l.b16 %v46
  %v344 = vunpack.c.h.b16 %v46
  %v345 = vunpack.c.l.b16 %v47
  %v346 = vunpack.c.h.b16 %v47
  %v347 = vunpack.c.l.b16 %v48
  %v348 = vunpack.c.h.b16 %v48
  %v349 = vunpack.c.l.b16 %v49
  %v350 = vunpack.c.h.b16 %v49
  %v351 = vunpack.c.l.b16 %v50
  %v352 = vunpack.c.l.b16 %v51
  %v353 = vunpack.c.h.b16 %v51
  %v354 = vunpack.c.l.b16 %v52
  %v355 = vunpack.c.h.b16 %v52
  %v356 = vunpack.c.l.b16 %v53
  %v357 = vunpack.c.h.b16 %v53
  %v358 = vunpack.c.l.b16 %v54
  %v359 = vunpack.c.h.b16 %v54
  %v360 = vunpack.c.l.b16 %v55
  %v361 = vunpack.c.h.b16 %v55
  %v362 = vunpack.c.l.b16 %v56
  %v363 = vunpack.c.l.b16 %v57
  %v364 = vunpack.c.h.b16 %v57
  %v365 = vunpack.c.l.b16 %v58
  %v366 = vunpack.c.h.b16 %v58
  %v367 = vunpack.c.l.b16 %v59
  %v368 = vunpack.c.h.b16 %v59
  %v369 = vunpack.c.l.b16 %v60
  %v370 = vunpack.c.h.b16 %v60
  %v371 = vunpack.c.l.b16 %v61
  %v372 = vunpack.c.h.b16 %v61
  %v373 = vunpack.c.l.b16 %v62
  %v374 = vpack.c.b16 %v297, %v286
  %v375 = vpack.c.b16 %v298, %v287
  %v376 = vpack.c.b16 %v299, %v288
  %v377 = vpack.c.b16 %v300, %v289
  %v378 = vpack.c.b16 %v301, %v290
  %v379 = vpack.c.b16 %v302, %v291
  %v380 = vpack.c.b16 %v303, %v292
  %v381 = vpack.c.b16 %v304, %v293
  %v382 = vpack.c.b16 %v305, %v294
  %v383 = vpack.c.b16 %v306, %v295
  %v384 = vpack.c.b16 %v307, %v296
  %v385 = vpack.c.b16 %v319, %v308
  %v386 = vpack.c.b16 %v320, %v309
  %v387 = vpack.c.b16 %v321, %v310
  %v388 = vpack.c.b16 %v322, %v311
  %v389 = vpack.c.b16 %v323, %v312
  %v390 = vpack.c.b16 %v324, %v313
  %v391 = vpack.c.b16 %v325, %v314
  %v392 = vpack.c.b16 %v326, %v315
  %v393 = vpack.c.b16 %v327, %v316
  %v394 = vpack.c.b16 %v328, %v317
  %v395 = vpack.c.b16 %v329, %v318
  %v396 = vpack.c.b16 %v341, %v330
  %v397 = vpack.c.b16 %v342, %v331
  %v398 = vpack.c.b16 %v343, %v332
  %v399 = vpack.c.b16 %v344, %v333
  %v400 = vpack.c.b16 %v345, %v334
  %v401 = vpack.c.b16 %v346, %v335
  %v402 = vpack.c.b16 %v347, %v336
  %v403 = vpack.c.b16 %v348, %v337
  %v404 = vpack.c.b16 %v349, %v338
  %v405 = vpack.c.b16 %v350, %v339
  %v406 = vpack.c.b16 %v351, %v340
  %v407 = vpack.c.b16 %v363, %v352
  %v408 = vpack.c.b16 %v364, %v353
  %v409 = vpack.c.b16 %v365, %v354
  %v410 = vpack.c.b16 %v366, %v355
  %v411 = vpack.c.b16 %v367, %v356
  %v412 = vpack.c.b16 %v368, %v357
  %v413 = vpack.c.b16 %v369, %v358
  %v414 = vpack.c.b16 %v370, %v359
  %v415 = vpack.c.b16 %v371, %v360
  %v416 = vpack.c.b16 %v372, %v361
  %v417 = vpack.c.b16 %v373, %v362
  %v626 = vunpack.c.l.b16 %v63
  %v627 = vunpack.c.l.b16 %v64
  %v628 = vunpack.c.l.b16 %v65
  %v629 = vunpack.c.l.b16 %v66
  %v630 = vunpack.c.l.b16 %v67
  %v631 = vunpack.c.l.b16 %v68
  %v632 = vunpack.c.l.b16 %v69
  %v633 = vunpack.c.l.b16 %v70
  %v634 = vunpack.c.l.b16 %v71
  %v635 = vunpack.c.l.b16 %v72
  %v636 = vunpack.c.l.b16 %v73
  %v637 = vunpack.c.l.b16 %v74
  %v638 = vunpack.c.l.b16 %v75
  %v639 = vunpack.c.l.b16 %v76
  %v640 = vunpack.c.l.b16 %v77
  %v641 = vunpack.c.l.b16 %v78
  %v642 = vunpack.c.l.b16 %v79
  %v643 = vunpack.c.l.b16 %v80
  %v644 = vunpack.c.l.b16 %v81
  %v645 = vunpack.c.l.b16 %v82
  %v646 = vunpack.c.l.b16 %v83
  %v647 = vunpack.c.l.b16 %v84
  %v648 = vunpack.c.l.b16 %v85
  %v649 = vunpack.c.l.b16 %v86
  %v650 = vunpack.c.l.b16 %v87
  %v651 = vunpack.c.l.b16 %v88
  %v652 = vunpack.c.l.b16 %v89
  %v653 = vunpack.c.l.b16 %v90
  %v654 = vunpack.c.l.b16 %v91
  %v655 = vunpack.c.l.b16 %v92
  %v656 = vunpack.c.l.b16 %v93
  %v657 = vunpack.c.l.b16 %v94
  %v658 = vunpack.c.l.b16 %v95
  %v659 = vunpack.c.l.b16 %v96
  %v660 = vunpack.c.l.b16 %v97
  %v661 = vunpack.c.l.b16 %v98
  %v662 = vunpack.c.l.b16 %v99
  %v663 = vunpack.c.l.b16 %v100
  %v664 = vunpack.c.l.b16 %v101
  %v665 = vunpack.c.l.b16 %v102
  %v666 = vunpack.c.l.b16 %v103
  %v667 = vunpack.c.l.b16 %v104
  %v668 = vunpack.c.l.b16 %v105
  %v669 = vunpack.c.l.b16 %v106
  %v670 = vunpack.c.l.b16 %v107
  %v671 = vunpack.c.l.b16 %v108
  %v672 = vunpack.c.l.b16 %v109
  %v673 = vunpack.c.l.b16 %v110
  %v674 = vunpack.c.l.b16 %v111
  %v675 = vunpack.c.l.b16 %v112
  %v676 = vunpack.c.l.b16 %v113
  %v677 = vunpack.c.l.b16 %v114
  %v678 = vunpack.c.l.b16 %v115
  %v679 = vunpack.c.l.b16 %v116
  %v680 = vunpack.c.l.b16 %v117
  %v681 = vunpack.c.l.b16 %v118
  %v682 = vunpack.c.l.b16 %v119
  %v683 = vunpack.c.l.b16 %v120
  %v684 = vunpack.c.l.b16 %v121
  %v685 = vunpack.c.l.b16 %v122
  %v686 = vunpack.c.l.b16 %v123
  %v687 = vunpack.c.l.b16 %v124
  %v688 = vunpack.c.l.b16 %v125
  %v689 = vunpack.c.l.b16 %v126
  %v690 = vunpack.c.l.b16 %v127
  %v691 = vunpack.c.l.b16 %v128
  %v692 = vunpack.c.l.b16 %v129
  %v693 = vunpack.c.l.b16 %v130
  %v694 = vunpack.c.l.b16 %v131
  %v695 = vunpack.c.l.b16 %v132
  %v696 = vunpack.c.l.b16 %v133
  %v697 = vunpack.c.l.b16 %v134
  %v698 = vunpack.c.l.b16 %v135
  %v699 = vunpack.c.l.b16 %v136
  %v700 = vunpack.c.l.b16 %v137
  %v701 = vunpack.c.l.b16 %v138
  %v702 = vunpack.c.l.b16 %v139
  %v703 = vunpack.c.l.b16 %v140
  %v704 = vunpack.c.l.b16 %v141
  %v705 = vunpack.c.l.b16 %v142
  %v706 = vunpack.c.l.b16 %v143
  %v707 = vunpack.c.l.b16 %v144
  %v708 = vunpack.c.l.b16 %v145
  %v709 = vunpack.c.l.b16 %v146
  %v710 = vunpack.c.l.b16 %v147
  %v711 = vunpack.c.l.b16 %v148
  %v712 = vunpack.c.l.b16 %v149
  %v713 = vunpack.c.l.b16 %v150
  %v714 = vunpack.c.l.b16 %v151
  %v715 = vunpack.c.l.b16 %v152
  %v716 = vunpack.c.l.b16 %v153
  %v717 = vunpack.c.l.b16 %v154
  %v718 = vunpack.c.l.b16 %v155
  %v719 = vunpack.c.l.b16 %v156
  %v720 = vunpack.c.l.b16 %v157
  %v721 = vunpack.c.l.b16 %v158
  %v722 = vunpack.c.l.b16 %v159
  %v723 = vunpack.c.l.b16 %v160
  %v724 = vunpack.c.l.b16 %v161
  %v725 = vunpack.c.l.b16 %v162
  %v726 = vunpack.c.l.b16 %v163
  %v727 = vunpack.c.l.b16 %v164
  %v728 = vunpack.c.l.b16 %v165
  %v729 = vunpack.c.l.b16 %v166
  %v730 = vunpack.c.l.b16 %v167
  %v731 = vunpack.c.l.b16 %v168
  %v732 = vunpack.c.l.b16 %v169
  %v733 = vunpack.c.l.b16 %v170
  %v734 = vunpack.c.l.b16 %v171
  %v735 = vunpack.c.l.b16 %v172
  %v736 = vunpack.c.l.b16 %v173
  %v737 = vunpack.c.l.b16 %v174
  %v738 = vunpack.c.l.b16 %v175
  %v739 = vunpack.c.l.b16 %v176
  %v740 = vunpack.c.l.b16 %v177
  %v741 = vunpack.c.l.b16 %v178
  %v742 = vunpack.c.l.b16 %v179
  %v743 = vunpack.c.l.b16 %v180
  %v744 = vunpack.c.l.b16 %v181
  %v745 = vunpack.c.l.b16 %v182
  %v746 = vunpack.c.l.b16 %v183
  %v747 = vunpack.c.l.b16 %v184
  %v748 = vunpack.c.l.b16 %v185
  %v749 = vunpack.c.l.b16 %v186
  %v750 = vunpack.c.l.b16 %v187
  %v751 = vunpack.c.l.b16 %v188
  %v752 = vunpack.c.l.b16 %v189
  %v753 = vunpack.c.l.b16 %v190
  %v754 = vunpack.c.l.b16 %v191
  %v755 = vunpack.c.l.b16 %v192
  %v756 = vunpack.c.l.b16 %v193
  %v757 = vunpack.c.l.b16 %v194
  %v758 = vunpack.c.l.b16 %v195
  %v759 = vunpack.c.l.b16 %v196
  %v760 = vunpack.c.l.b16 %v197
  %v761 = vunpack.c.l.b16 %v198
  %v762 = vunpack.c.l.b16 %v199
  %v763 = vunpack.c.l.b16 %v200
  %v764 = vunpack.c.l.b16 %v201
  %v765 = vunpack.c.l.b16 %v202
  %v766 = vunpack.c.l.b16 %v203
  %v767 = vunpack.c.l.b16 %v204
  %v768 = vunpack.c.l.b16 %v205
  %v769 = vunpack.c.l.b16 %v206
  %v770 = vunpack.c.l.b16 %v207
  %v771 = vunpack.c.l.b16 %v208
  %v772 = vunpack.c.l.b16 %v209
  %v773 = vunpack.c.l.b16 %v210
  %v774 = vunpack.c.l.b16 %v211
  %v775 = vunpack.c.l.b16 %v212
  %v776 = vunpack.c.l.b16 %v213
  %v777 = vunpack.c.l.b16 %v214
  %v778 = vunpack.c.l.b16 %v215
  %v779 = vunpack.c.l.b16 %v216
  %v780 = vunpack.c.l.b16 %v217
  %v781 = vunpack.c.l.b16 %v218
  %v782 = vunpack.c.l.b16 %v219
  %v783 = vunpack.c.l.b16 %v220
  %v784 = vunpack.c.l.b16 %v221
  %v785 = vunpack.c.l.b16 %v222
  %v786 = vunpack.c.l.b16 %v223
  %v787 = vunpack.c.l.b16 %v224
  %v788 = vunpack.c.l.b16 %v225
  %v789 = vunpack.c.l.b16 %v226
  %v790 = vunpack.c.l.b16 %v227
  %v791 = vunpack.c.l.b16 %v228
  %v792 = vunpack.c.l.b16 %v229
  %v793 = vunpack.c.l.b16 %v230
  %v794 = vpack.c.b16 %v627, %v626
  %v795 = vpack.c.b16 %v629, %v628
  %v796 = vpack.c.b16 %v631, %v630
  %v797 = vpack.c.b16 %v633, %v632
  %v798 = vpack.c.b16 %v635, %v634
  %v799 = vpack.c.b16 %v637, %v636
  %v800 = vpack.c.b16 %v639, %v638
  %v801 = vpack.c.b16 %v641, %v640
  %v802 = vpack.c.b16 %v643, %v642
  %v803 = vpack.c.b16 %v645, %v644
  %v804 = vpack.c.b16 %v647, %v646
  %v805 = vpack.c.b16 %v649, %v648
  %v806 = vpack.c.b16 %v651, %v650
  %v807 = vpack.c.b16 %v653, %v652
  %v808 = vpack.c.b16 %v655, %v654
  %v809 = vpack.c.b16 %v657, %v656
  %v810 = vpack.c.b16 %v659, %v658
  %v811 = vpack.c.b16 %v661, %v660
  %v812 = vpack.c.b16 %v663, %v662
  %v813 = vpack.c.b16 %v665, %v664
  %v814 = vpack.c.b16 %v667, %v666
  %v815 = vpack.c.b16 %v669, %v668
  %v816 = vpack.c.b16 %v671, %v670
  %v817 = vpack.c.b16 %v673, %v672
  %v818 = vpack.c.b16 %v675, %v674
  %v819 = vpack.c.b16 %v677, %v676
  %v820 = vpack.c.b16 %v679, %v678
  %v821 = vpack.c.b16 %v681, %v680
  %v822 = vpack.c.b16 %v683, %v682
  %v823 = vpack.c.b16 %v685, %v684
  %v824 = vpack.c.b16 %v687, %v686
  %v825 = vpack.c.b16 %v689, %v688
  %v826 = vpack.c.b16 %v691, %v690
  %v827 = vpack.c.b16 %v693, %v692
  %v828 = vpack.c.b16 %v695, %v694
  %v829 = vpack.c.b16 %v697, %v696
  %v830 = vpack.c.b16 %v699, %v698
  %v831 = vpack.c.b16 %v701, %v700
  %v832 = vpack.c.b16 %v703, %v702
  %v833 = vpack.c.b16 %v705, %v704
  %v834 = vpack.c.b16 %v707, %v706
  %v835 = vpack.c.b16 %v709, %v708
  %v836 = vpack.c.b16 %v711, %v710
  %v837 = vpack.c.b16 %v713, %v712
  %v838 = vpack.c.b16 %v715, %v714
  %v839 = vpack.c.b16 %v717, %v716
  %v840 = vpack.c.b16 %v719, %v718
  %v841 = vpack.c.b16 %v721, %v720
  %v842 = vpack.c.b16 %v723, %v722
  %v843 = vpack.c.b16 %v725, %v724
  %v844 = vpack.c.b16 %v727, %v726
  %v845 = vpack.c.b16 %v729, %v728
  %v846 = vpack.c.b16 %v731, %v730
  %v847 = vpack.c.b16 %v733, %v732
  %v848 = vpack.c.b16 %v735, %v734
  %v849 = vpack.c.b16 %v737, %v736
  %v850 = vpack.c.b16 %v739, %v738
  %v851 = vpack.c.b16 %v741, %v740
  %v852 = vpack.c.b16 %v743, %v742
  %v853 = vpack.c.b16 %v745, %v744
  %v854 = vpack.c.b16 %v747, %v746
  %v855 = vpack.c.b16 %v749, %v748
  %v856 = vpack.c.b16 %v751, %v750
  %v857 = vpack.c.b16 %v753, %v752
  %v858 = vpack.c.b16 %v755, %v754
  %v859 = vpack.c.b16 %v757, %v756
  %v860 = vpack.c.b16 %v759, %v758
  %v861 = vpack.c.b16 %v761, %v760
  %v862 = vpack.c.b16 %v763, %v762
  %v863 = vpack.c.b16 %v765, %v764
  %v864 = vpack.c.b16 %v767, %v766
  %v865 = vpack.c.b16 %v769, %v768
  %v866 = vpack.c.b16 %v771, %v770
  %v867 = vpack.c.b16 %v773, %v772
  %v868 = vpack.c.b16 %v775, %v774
  %v869 = vpack.c.b16 %v777, %v776
  %v870 = vpack.c.b16 %v779, %v778
  %v871 = vpack.c.b16 %v781, %v780
  %v872 = vpack.c.b16 %v783, %v782
  %v873 = vpack.c.b16 %v785, %v784
  %v874 = vpack.c.b16 %v787, %v786
  %v875 = vpack.c.b16 %v789, %v788
  %v876 = vpack.c.b16 %v791, %v790
  %v877 = vpack.c.b16 %v793, %v792
  %vm962 = vcmask 523264
  %v964 = vsel %vm962, %v384, 0
  %v967 = vsel %vm962, %v395, 0
  %v970 = vsel %vm962, %v406, 0
  %v973 = vsel %vm962, %v417, 0
  %975 = vmatprep.subr.bf16.mxu0 0
  %976 = vmatpush1.bf16.msra.mxu0 %v794
  %977 = vmatprep.subr.bf16.mxu0 0
  %978 = vmatpush1.bf16.msra.mxu0 %v795
  %979 = vmatprep.subr.bf16.mxu0 0
  %980 = vmatpush1.bf16.msra.mxu0 %v796
  %981 = vmatprep.subr.bf16.mxu0 0
  %982 = vmatpush1.bf16.msra.mxu0 %v797
  %983 = vmatprep.subr.bf16.mxu0 0
  %984 = vmatpush1.bf16.msra.mxu0 %v798
  %985 = vmatprep.subr.bf16.mxu0 0
  %986 = vmatpush1.bf16.msra.mxu0 %v799
  %987 = vmatprep.subr.bf16.mxu0 0
  %988 = vmatpush1.bf16.msra.mxu0 %v800
  %989 = vmatprep.subr.bf16.mxu0 0
  %990 = vmatpush1.bf16.msra.mxu0 %v801
  %991 = vmatprep.subr.bf16.mxu0 0
  %992 = vmatpush1.bf16.msra.mxu0 %v802
  %993 = vmatprep.subr.bf16.mxu0 0
  %994 = vmatpush1.bf16.msra.mxu0 %v803
  %995 = vmatprep.subr.bf16.mxu0 0
  %996 = vmatpush1.bf16.msra.mxu0 %v804
  %997 = vmatprep.subr.bf16.mxu0 0
  %998 = vmatpush1.bf16.msra.mxu0 %v805
  %999 = vmatprep.subr.bf16.mxu0 0
  %1000 = vmatpush1.bf16.msra.mxu0 %v806
  %1001 = vmatprep.subr.bf16.mxu0 0
  %1002 = vmatpush1.bf16.msra.mxu0 %v807
  %1003 = vmatprep.subr.bf16.mxu0 0
  %1004 = vmatpush1.bf16.msra.mxu0 %v808
  %1005 = vmatprep.subr.bf16.mxu0 0
  %1006 = vmatpush1.bf16.msra.mxu0 %v809
  %1007 = vmatprep.mubr.bf16.mxu0 %v375
  %1008 = vmatmul.mubr.bf16.gmra.mrb[0].mxu0 %v374
  %v1009 = vpop.f32.mrb[0].mxu0
  %v1010 = vadd.f32 %v236, %v1009
  %v1011 = vpop.f32.mrb[0].mxu0
  %v1012 = vpop.f32.mrb[0].mxu0
  %v1013 = vadd.f32 %v236, %v1012
  %v1014 = vpop.f32.mrb[0].mxu0
  %1015 = vmatprep.mubr.bf16.mxu0 %v386
  %1016 = vmatmul.mubr.bf16.gmra.mrb[0].mxu0 %v385
  %v1017 = vpop.f32.mrb[0].mxu0
  %v1018 = vadd.f32 %v236, %v1017
  %v1019 = vpop.f32.mrb[0].mxu0
  %v1020 = vpop.f32.mrb[0].mxu0
  %v1021 = vadd.f32 %v236, %v1020
  %v1022 = vpop.f32.mrb[0].mxu0
  %1023 = vmatprep.mubr.bf16.mxu0 %v397
  %1024 = vmatmul.mubr.bf16.gmra.mrb[0].mxu0 %v396
  %v1025 = vpop.f32.mrb[0].mxu0
  %v1026 = vadd.f32 %v236, %v1025
  %v1027 = vpop.f32.mrb[0].mxu0
  %v1028 = vpop.f32.mrb[0].mxu0
  %v1029 = vadd.f32 %v236, %v1028
  %v1030 = vpop.f32.mrb[0].mxu0
  %1031 = vmatprep.mubr.bf16.mxu0 %v408
  %1032 = vmatmul.mubr.bf16.gmra.mrb[0].mxu0 %v407
  %v1033 = vpop.f32.mrb[0].mxu0
  %v1034 = vadd.f32 %v236, %v1033
  %v1035 = vpop.f32.mrb[0].mxu0
  %v1036 = vpop.f32.mrb[0].mxu0
  %v1037 = vadd.f32 %v236, %v1036
  %v1038 = vpop.f32.mrb[0].mxu0
  %1039 = vdwg.mxu0
  %1040 = vmatprep.subr.bf16.mxu0 0
  %1041 = vmatpush1.bf16.msra.mxu0 %v810
  %1042 = vmatprep.subr.bf16.mxu0 0
  %1043 = vmatpush1.bf16.msra.mxu0 %v811
  %1044 = vmatprep.subr.bf16.mxu0 0
  %1045 = vmatpush1.bf16.msra.mxu0 %v812
  %1046 = vmatprep.subr.bf16.mxu0 0
  %1047 = vmatpush1.bf16.msra.mxu0 %v813
  %1048 = vmatprep.subr.bf16.mxu0 0
  %1049 = vmatpush1.bf16.msra.mxu0 %v814
  %1050 = vmatprep.subr.bf16.mxu0 0
  %1051 = vmatpush1.bf16.msra.mxu0 %v815
  %1052 = vmatprep.subr.bf16.mxu0 0
  %1053 = vmatpush1.bf16.msra.mxu0 %v816
  %1054 = vmatprep.subr.bf16.mxu0 0
  %1055 = vmatpush1.bf16.msra.mxu0 %v817
  %1056 = vmatprep.subr.bf16.mxu0 0
  %1057 = vmatpush1.bf16.msra.mxu0 %v818
  %1058 = vmatprep.subr.bf16.mxu0 0
  %1059 = vmatpush1.bf16.msra.mxu0 %v819
  %1060 = vmatprep.subr.bf16.mxu0 0
  %1061 = vmatpush1.bf16.msra.mxu0 %v820
  %1062 = vmatprep.subr.bf16.mxu0 0
  %1063 = vmatpush1.bf16.msra.mxu0 %v821
  %1064 = vmatprep.subr.bf16.mxu0 0
  %1065 = vmatpush1.bf16.msra.mxu0 %v822
  %1066 = vmatprep.subr.bf16.mxu0 0
  %1067 = vmatpush1.bf16.msra.mxu0 %v823
  %1068 = vmatprep.subr.bf16.mxu0 0
  %1069 = vmatpush1.bf16.msra.mxu0 %v824
  %1070 = vmatprep.subr.bf16.mxu0 0
  %1071 = vmatpush1.bf16.msra.mxu0 %v825
  %1072 = vmatprep.mubr.bf16.mxu0 %v377
  %1073 = vmatmul.mubr.bf16.gmra.mrb[0].mxu0 %v376
  %v1074 = vpop.f32.mrb[0].mxu0
  %v1075 = vadd.f32 %v1010, %v1074
  %v1076 = vpop.f32.mrb[0].mxu0
  %v1077 = vpop.f32.mrb[0].mxu0
  %v1078 = vadd.f32 %v1013, %v1077
  %v1079 = vpop.f32.mrb[0].mxu0
  %1080 = vmatprep.mubr.bf16.mxu0 %v388
  %1081 = vmatmul.mubr.bf16.gmra.mrb[0].mxu0 %v387
  %v1082 = vpop.f32.mrb[0].mxu0
  %v1083 = vadd.f32 %v1018, %v1082
  %v1084 = vpop.f32.mrb[0].mxu0
  %v1085 = vpop.f32.mrb[0].mxu0
  %v1086 = vadd.f32 %v1021, %v1085
  %v1087 = vpop.f32.mrb[0].mxu0
  %1088 = vmatprep.mubr.bf16.mxu0 %v399
  %1089 = vmatmul.mubr.bf16.gmra.mrb[0].mxu0 %v398
  %v1090 = vpop.f32.mrb[0].mxu0
  %v1091 = vadd.f32 %v1026, %v1090
  %v1092 = vpop.f32.mrb[0].mxu0
  %v1093 = vpop.f32.mrb[0].mxu0
  %v1094 = vadd.f32 %v1029, %v1093
  %v1095 = vpop.f32.mrb[0].mxu0
  %1096 = vmatprep.mubr.bf16.mxu0 %v410
  %1097 = vmatmul.mubr.bf16.gmra.mrb[0].mxu0 %v409
  %v1098 = vpop.f32.mrb[0].mxu0
  %v1099 = vadd.f32 %v1034, %v1098
  %v1100 = vpop.f32.mrb[0].mxu0
  %v1101 = vpop.f32.mrb[0].mxu0
  %v1102 = vadd.f32 %v1037, %v1101
  %v1103 = vpop.f32.mrb[0].mxu0
  %1104 = vdwg.mxu0
  %1105 = vmatprep.subr.bf16.mxu0 0
  %1106 = vmatpush1.bf16.msra.mxu0 %v826
  %1107 = vmatprep.subr.bf16.mxu0 0
  %1108 = vmatpush1.bf16.msra.mxu0 %v827
  %1109 = vmatprep.subr.bf16.mxu0 0
  %1110 = vmatpush1.bf16.msra.mxu0 %v828
  %1111 = vmatprep.subr.bf16.mxu0 0
  %1112 = vmatpush1.bf16.msra.mxu0 %v829
  %1113 = vmatprep.subr.bf16.mxu0 0
  %1114 = vmatpush1.bf16.msra.mxu0 %v830
  %1115 = vmatprep.subr.bf16.mxu0 0
  %1116 = vmatpush1.bf16.msra.mxu0 %v831
  %1117 = vmatprep.subr.bf16.mxu0 0
  %1118 = vmatpush1.bf16.msra.mxu0 %v832
  %1119 = vmatprep.subr.bf16.mxu0 0
  %1120 = vmatpush1.bf16.msra.mxu0 %v833
  %1121 = vmatprep.subr.bf16.mxu0 0
  %1122 = vmatpush1.bf16.msra.mxu0 %v834
  %1123 = vmatprep.subr.bf16.mxu0 0
  %1124 = vmatpush1.bf16.msra.mxu0 %v835
  %1125 = vmatprep.subr.bf16.mxu0 0
  %1126 = vmatpush1.bf16.msra.mxu0 %v836
  %1127 = vmatprep.subr.bf16.mxu0 0
  %1128 = vmatpush1.bf16.msra.mxu0 %v837
  %1129 = vmatprep.subr.bf16.mxu0 0
  %1130 = vmatpush1.bf16.msra.mxu0 %v838
  %1131 = vmatprep.subr.bf16.mxu0 0
  %1132 = vmatpush1.bf16.msra.mxu0 %v839
  %1133 = vmatprep.subr.bf16.mxu0 0
  %1134 = vmatpush1.bf16.msra.mxu0 %v840
  %1135 = vmatprep.subr.bf16.mxu0 0
  %1136 = vmatpush1.bf16.msra.mxu0 %v841
  %1137 = vmatprep.mubr.bf16.mxu0 %v379
  %1138 = vmatmul.mubr.bf16.gmra.mrb[0].mxu0 %v378
  %v1139 = vpop.f32.mrb[0].mxu0
  %v1140 = vadd.f32 %v1075, %v1139
  %v1141 = vpop.f32.mrb[0].mxu0
  %v1142 = vpop.f32.mrb[0].mxu0
  %v1143 = vadd.f32 %v1078, %v1142
  %v1144 = vpop.f32.mrb[0].mxu0
  %1145 = vmatprep.mubr.bf16.mxu0 %v390
  %1146 = vmatmul.mubr.bf16.gmra.mrb[0].mxu0 %v389
  %v1147 = vpop.f32.mrb[0].mxu0
  %v1148 = vadd.f32 %v1083, %v1147
  %v1149 = vpop.f32.mrb[0].mxu0
  %v1150 = vpop.f32.mrb[0].mxu0
  %v1151 = vadd.f32 %v1086, %v1150
  %v1152 = vpop.f32.mrb[0].mxu0
  %1153 = vmatprep.mubr.bf16.mxu0 %v401
  %1154 = vmatmul.mubr.bf16.gmra.mrb[0].mxu0 %v400
  %v1155 = vpop.f32.mrb[0].mxu0
  %v1156 = vadd.f32 %v1091, %v1155
  %v1157 = vpop.f32.mrb[0].mxu0
  %v1158 = vpop.f32.mrb[0].mxu0
  %v1159 = vadd.f32 %v1094, %v1158
  %v1160 = vpop.f32.mrb[0].mxu0
  %1161 = vmatprep.mubr.bf16.mxu0 %v412
  %1162 = vmatmul.mubr.bf16.gmra.mrb[0].mxu0 %v411
  %v1163 = vpop.f32.mrb[0].mxu0
  %v1164 = vadd.f32 %v1099, %v1163
  %v1165 = vpop.f32.mrb[0].mxu0
  %v1166 = vpop.f32.mrb[0].mxu0
  %v1167 = vadd.f32 %v1102, %v1166
  %v1168 = vpop.f32.mrb[0].mxu0
  %1169 = vdwg.mxu0
  %1170 = vmatprep.subr.bf16.mxu0 0
  %1171 = vmatpush1.bf16.msra.mxu0 %v842
  %1172 = vmatprep.subr.bf16.mxu0 0
  %1173 = vmatpush1.bf16.msra.mxu0 %v843
  %1174 = vmatprep.subr.bf16.mxu0 0
  %1175 = vmatpush1.bf16.msra.mxu0 %v844
  %1176 = vmatprep.subr.bf16.mxu0 0
  %1177 = vmatpush1.bf16.msra.mxu0 %v845
  %1178 = vmatprep.subr.bf16.mxu0 0
  %1179 = vmatpush1.bf16.msra.mxu0 %v846
  %1180 = vmatprep.subr.bf16.mxu0 0
  %1181 = vmatpush1.bf16.msra.mxu0 %v847
  %1182 = vmatprep.subr.bf16.mxu0 0
  %1183 = vmatpush1.bf16.msra.mxu0 %v848
  %1184 = vmatprep.subr.bf16.mxu0 0
  %1185 = vmatpush1.bf16.msra.mxu0 %v849
  %1186 = vmatprep.subr.bf16.mxu0 0
  %1187 = vmatpush1.bf16.msra.mxu0 %v850
  %1188 = vmatprep.subr.bf16.mxu0 0
  %1189 = vmatpush1.bf16.msra.mxu0 %v851
  %1190 = vmatprep.subr.bf16.mxu0 0
  %1191 = vmatpush1.bf16.msra.mxu0 %v852
  %1192 = vmatprep.subr.bf16.mxu0 0
  %1193 = vmatpush1.bf16.msra.mxu0 %v853
  %1194 = vmatprep.subr.bf16.mxu0 0
  %1195 = vmatpush1.bf16.msra.mxu0 %v854
  %1196 = vmatprep.subr.bf16.mxu0 0
  %1197 = vmatpush1.bf16.msra.mxu0 %v855
  %1198 = vmatprep.subr.bf16.mxu0 0
  %1199 = vmatpush1.bf16.msra.mxu0 %v856
  %1200 = vmatprep.subr.bf16.mxu0 0
  %1201 = vmatpush1.bf16.msra.mxu0 %v857
  %1202 = vmatprep.mubr.bf16.mxu0 %v381
  %1203 = vmatmul.mubr.bf16.gmra.mrb[0].mxu0 %v380
  %v1204 = vpop.f32.mrb[0].mxu0
  %v1205 = vadd.f32 %v1140, %v1204
  %v1206 = vpop.f32.mrb[0].mxu0
  %v1207 = vpop.f32.mrb[0].mxu0
  %v1208 = vadd.f32 %v1143, %v1207
  %v1209 = vpop.f32.mrb[0].mxu0
  %1210 = vmatprep.mubr.bf16.mxu0 %v392
  %1211 = vmatmul.mubr.bf16.gmra.mrb[0].mxu0 %v391
  %v1212 = vpop.f32.mrb[0].mxu0
  %v1213 = vadd.f32 %v1148, %v1212
  %v1214 = vpop.f32.mrb[0].mxu0
  %v1215 = vpop.f32.mrb[0].mxu0
  %v1216 = vadd.f32 %v1151, %v1215
  %v1217 = vpop.f32.mrb[0].mxu0
  %1218 = vmatprep.mubr.bf16.mxu0 %v403
  %1219 = vmatmul.mubr.bf16.gmra.mrb[0].mxu0 %v402
  %v1220 = vpop.f32.mrb[0].mxu0
  %v1221 = vadd.f32 %v1156, %v1220
  %v1222 = vpop.f32.mrb[0].mxu0
  %v1223 = vpop.f32.mrb[0].mxu0
  %v1224 = vadd.f32 %v1159, %v1223
  %v1225 = vpop.f32.mrb[0].mxu0
  %1226 = vmatprep.mubr.bf16.mxu0 %v414
  %1227 = vmatmul.mubr.bf16.gmra.mrb[0].mxu0 %v413
  %v1228 = vpop.f32.mrb[0].mxu0
  %v1229 = vadd.f32 %v1164, %v1228
  %v1230 = vpop.f32.mrb[0].mxu0
  %v1231 = vpop.f32.mrb[0].mxu0
  %v1232 = vadd.f32 %v1167, %v1231
  %v1233 = vpop.f32.mrb[0].mxu0
  %1234 = vdwg.mxu0
  %1235 = vmatprep.subr.bf16.mxu0 0
  %1236 = vmatpush1.bf16.msra.mxu0 %v858
  %1237 = vmatprep.subr.bf16.mxu0 0
  %1238 = vmatpush1.bf16.msra.mxu0 %v859
  %1239 = vmatprep.subr.bf16.mxu0 0
  %1240 = vmatpush1.bf16.msra.mxu0 %v860
  %1241 = vmatprep.subr.bf16.mxu0 0
  %1242 = vmatpush1.bf16.msra.mxu0 %v861
  %1243 = vmatprep.subr.bf16.mxu0 0
  %1244 = vmatpush1.bf16.msra.mxu0 %v862
  %1245 = vmatprep.subr.bf16.mxu0 0
  %1246 = vmatpush1.bf16.msra.mxu0 %v863
  %1247 = vmatprep.subr.bf16.mxu0 0
  %1248 = vmatpush1.bf16.msra.mxu0 %v864
  %1249 = vmatprep.subr.bf16.mxu0 0
  %1250 = vmatpush1.bf16.msra.mxu0 %v865
  %1251 = vmatprep.subr.bf16.mxu0 0
  %1252 = vmatpush1.bf16.msra.mxu0 %v866
  %1253 = vmatprep.subr.bf16.mxu0 0
  %1254 = vmatpush1.bf16.msra.mxu0 %v867
  %1255 = vmatprep.subr.bf16.mxu0 0
  %1256 = vmatpush1.bf16.msra.mxu0 %v868
  %1257 = vmatprep.subr.bf16.mxu0 0
  %1258 = vmatpush1.bf16.msra.mxu0 %v869
  %1259 = vmatprep.subr.bf16.mxu0 0
  %1260 = vmatpush1.bf16.msra.mxu0 %v870
  %1261 = vmatprep.subr.bf16.mxu0 0
  %1262 = vmatpush1.bf16.msra.mxu0 %v871
  %1263 = vmatprep.subr.bf16.mxu0 0
  %1264 = vmatpush1.bf16.msra.mxu0 %v872
  %1265 = vmatprep.subr.bf16.mxu0 0
  %1266 = vmatpush1.bf16.msra.mxu0 %v873
  %1267 = vmatprep.mubr.bf16.mxu0 %v383
  %1268 = vmatmul.mubr.bf16.gmra.mrb[0].mxu0 %v382
  %v1269 = vpop.f32.mrb[0].mxu0
  %v1270 = vadd.f32 %v1205, %v1269
  %v1271 = vpop.f32.mrb[0].mxu0
  %v1272 = vpop.f32.mrb[0].mxu0
  %v1273 = vadd.f32 %v1208, %v1272
  %v1274 = vpop.f32.mrb[0].mxu0
  %1275 = vmatprep.mubr.bf16.mxu0 %v394
  %1276 = vmatmul.mubr.bf16.gmra.mrb[0].mxu0 %v393
  %v1277 = vpop.f32.mrb[0].mxu0
  %v1278 = vadd.f32 %v1213, %v1277
  %v1279 = vpop.f32.mrb[0].mxu0
  %v1280 = vpop.f32.mrb[0].mxu0
  %v1281 = vadd.f32 %v1216, %v1280
  %v1282 = vpop.f32.mrb[0].mxu0
  %1283 = vmatprep.mubr.bf16.mxu0 %v405
  %1284 = vmatmul.mubr.bf16.gmra.mrb[0].mxu0 %v404
  %v1285 = vpop.f32.mrb[0].mxu0
  %v1286 = vadd.f32 %v1221, %v1285
  %v1287 = vpop.f32.mrb[0].mxu0
  %v1288 = vpop.f32.mrb[0].mxu0
  %v1289 = vadd.f32 %v1224, %v1288
  %v1290 = vpop.f32.mrb[0].mxu0
  %1291 = vmatprep.mubr.bf16.mxu0 %v416
  %1292 = vmatmul.mubr.bf16.gmra.mrb[0].mxu0 %v415
  %v1293 = vpop.f32.mrb[0].mxu0
  %v1294 = vadd.f32 %v1229, %v1293
  %v1295 = vpop.f32.mrb[0].mxu0
  %v1296 = vpop.f32.mrb[0].mxu0
  %v1297 = vadd.f32 %v1232, %v1296
  %v1298 = vpop.f32.mrb[0].mxu0
  %1299 = vdwg.mxu0
  %1300 = vmatprep.subr.bf16.mxu0 0
  %1301 = vmatpush1.bf16.msra.mxu0 %v874
  %1302 = vmatprep.subr.bf16.mxu0 0
  %1303 = vmatpush1.bf16.msra.mxu0 %v875
  %1304 = vmatprep.subr.bf16.mxu0 0
  %1305 = vmatpush1.bf16.msra.mxu0 %v876
  %1306 = vmatprep.subr.bf16.mxu0 0
  %1307 = vmatpush1.bf16.msra.mxu0 %v877
  %1308 = vmatprep.subr.bf16.mxu0 0
  %1309 = vmatpush1.bf16.msra.mxu0 0
  %1310 = vmatprep.subr.bf16.mxu0 0
  %1311 = vmatpush1.bf16.msra.mxu0 0
  %1312 = vmatprep.subr.bf16.mxu0 0
  %1313 = vmatpush1.bf16.msra.mxu0 0
  %1314 = vmatprep.subr.bf16.mxu0 0
  %1315 = vmatpush1.bf16.msra.mxu0 0
  %1316 = vmatprep.subr.bf16.mxu0 0
  %1317 = vmatpush1.bf16.msra.mxu0 0
  %1318 = vmatprep.subr.bf16.mxu0 0
  %1319 = vmatpush1.bf16.msra.mxu0 0
  %1320 = vmatprep.subr.bf16.mxu0 0
  %1321 = vmatpush1.bf16.msra.mxu0 0
  %1322 = vmatprep.subr.bf16.mxu0 0
  %1323 = vmatpush1.bf16.msra.mxu0 0
  %1324 = vmatprep.subr.bf16.mxu0 0
  %1325 = vmatpush1.bf16.msra.mxu0 0
  %1326 = vmatprep.subr.bf16.mxu0 0
  %1327 = vmatpush1.bf16.msra.mxu0 0
  %1328 = vmatprep.subr.bf16.mxu0 0
  %1329 = vmatpush1.bf16.msra.mxu0 0
  %1330 = vmatprep.subr.bf16.mxu0 0
  %1331 = vmatpush1.bf16.msra.mxu0 0
  %1332 = vmatprep.mubr.bf16.mxu0 0
  %1333 = vmatmul.mubr.bf16.gmra.mrb[0].mxu0 %v964
  %v1334 = vpop.f32.mrb[0].mxu0
  %v1335 = vadd.f32 %v1270, %v1334
  %v1336 = vpop.f32.mrb[0].mxu0
  %v1337 = vpop.f32.mrb[0].mxu0
  %v1338 = vadd.f32 %v1273, %v1337
  %v1339 = vpop.f32.mrb[0].mxu0
  %1340 = vmatprep.mubr.bf16.mxu0 0
  %1341 = vmatmul.mubr.bf16.gmra.mrb[0].mxu0 %v967
  %v1342 = vpop.f32.mrb[0].mxu0
  %v1343 = vadd.f32 %v1278, %v1342
  %v1344 = vpop.f32.mrb[0].mxu0
  %v1345 = vpop.f32.mrb[0].mxu0
  %v1346 = vadd.f32 %v1281, %v1345
  %v1347 = vpop.f32.mrb[0].mxu0
  %1348 = vmatprep.mubr.bf16.mxu0 0
  %1349 = vmatmul.mubr.bf16.gmra.mrb[0].mxu0 %v970
  %v1350 = vpop.f32.mrb[0].mxu0
  %v1351 = vadd.f32 %v1286, %v1350
  %v1352 = vpop.f32.mrb[0].mxu0
  %v1353 = vpop.f32.mrb[0].mxu0
  %v1354 = vadd.f32 %v1289, %v1353
  %v1355 = vpop.f32.mrb[0].mxu0
  %1356 = vmatprep.mubr.bf16.mxu0 0
  %1357 = vmatmul.mubr.bf16.gmra.mrb[0].mxu0 %v973
  %v1358 = vpop.f32.mrb[0].mxu0
  %v1359 = vadd.f32 %v1294, %v1358
  %v1360 = vpop.f32.mrb[0].mxu0
  %v1361 = vpop.f32.mrb[0].mxu0
  %v1362 = vadd.f32 %v1297, %v1361
  %v1363 = vpop.f32.mrb[0].mxu0
  %1364 = vdwg.mxu0
  %v1365 = vmax.f32 %v1335, 0.0
  %v1366 = vmax.f32 %v1338, 0.0
  %v1367 = vmax.f32 %v1343, 0.0
  %v1368 = vmax.f32 %v1346, 0.0
  %v1369 = vmax.f32 %v1351, 0.0
  %v1370 = vmax.f32 %v1354, 0.0
  %v1371 = vmax.f32 %v1359, 0.0
  %v1372 = vmax.f32 %v1362, 0.0
  %1373 = vst.msk [vmem:[%s3] sm:$0xff] %vm962, %v1365
  %1374 = vst.msk [vmem:[%s3 + $0x8] sm:$0xff] %vm962, %v1366
  %1375 = vst.msk [vmem:[%s3 + $0x10] sm:$0xff] %vm962, %v1367
  %1376 = vst.msk [vmem:[%s3 + $0x18] sm:$0xff] %vm962, %v1368
  %1377 = vst.msk [vmem:[%s3 + $0x20] sm:$0xff] %vm962, %v1369
  %1378 = vst.msk [vmem:[%s3 + $0x28] sm:$0xff] %vm962, %v1370
  %1379 = vst.msk [vmem:[%s3 + $0x30] sm:$0xff] %vm962, %v1371
  %1380 = vst.msk [vmem:[%s3 + $0x38] sm:$0xff] %vm962, %v1372
  // Predicated region
  $region14: #{mcnet_forward.24} parent=0 // pred_check
    _
  $region15: #{mcnet_forward.24} parent=0 // pred_check_branch
    %1382 = sbr.rel (0) target = $region17
  $region16: #{mcnet_forward.24} parent=0 // pred_region
    _
  $region17: #{mcnet_forward.24} parent=0 // pred_fallthru
    _
  // Predicated region
  $region18: #{mcnet_forward.24} parent=0 // pred_check
    _
  $region19: #{mcnet_forward.24} parent=0 // pred_check_branch
    %1384 = sbr.rel (0) target = $region21
  $region20: #{mcnet_forward.24} parent=0 // pred_region
    _
  $region21: #{mcnet_forward.24} parent=0 // pred_fallthru
    _

// kernel: mcnet_forward.25
$region0: #{mcnet_forward.25}
  #allocation0 [shape = 'u32[]', space=smem, size = 0x4, offset = 0x4, fixed_abs, tag = 'smem constant byte address 0x4 - core index']
  #allocation1 [shape = 'u32[144,128]{1,0:T(1,128)}', space=vmem, size = 0x12000, scoped, tag = 'internal scratch']
  %s0 = inlined_call_operand.vmem [shape: bf16[32,192], index: 0, kind: input, shape index: {}]
  %s1 = inlined_call_operand.vmem [shape: bf16[192,32], index: 1, kind: input, shape index: {}]
  %s2 = inlined_call_operand.vmem [shape: f32[1,32], index: 2, kind: input, shape index: {}]
  %s3 = inlined_call_operand.vmem [shape: f32[1,32], index: 3, kind: input, shape index: {}]
  %s4 = inlined_call_operand.vmem [shape: f32[1,32], index: 4, kind: input, shape index: {}]
  %s5 = inlined_call_operand.vmem [shape: f32[32,32], index: 5, kind: output, shape index: {}]
  %s6 = sld [smem:[#allocation0]]
  $region30: #{mcnet_forward.25} parent=0
    _
  %s8 = ssub.s32 1, %s6
  %s9 = scalar_select 0, %s8, %s6
  // Predicated region
  $region2: #{mcnet_forward.25} parent=0 // pred_check
    _
  $region3: #{mcnet_forward.25} parent=0 // pred_check_branch
    %11 = sbr.rel (0) target = $region5
  $region4: #{mcnet_forward.25} parent=0 // pred_region
    _
  $region5: #{mcnet_forward.25} parent=0 // pred_fallthru
    _
  // Predicated region
  $region6: #{mcnet_forward.25} parent=0 // pred_check
    _
  $region7: #{mcnet_forward.25} parent=0 // pred_check_branch
    %13 = sbr.rel (0) target = $region9
  $region8: #{mcnet_forward.25} parent=0 // pred_region
    _
  $region9: #{mcnet_forward.25} parent=0 // pred_fallthru
    _
  // Predicated region
  $region10: #{mcnet_forward.25} parent=0 // pred_check
    _
  $region11: #{mcnet_forward.25} parent=0 // pred_check_branch
    %15 = sbr.rel (0) target = $region13
  $region12: #{mcnet_forward.25} parent=0 // pred_region
    _
  $region13: #{mcnet_forward.25} parent=0 // pred_fallthru
    _
  // Predicated region
  $region14: #{mcnet_forward.25} parent=0 // pred_check
    _
  $region15: #{mcnet_forward.25} parent=0 // pred_check_branch
    %17 = sbr.rel (0) target = $region17
  $region16: #{mcnet_forward.25} parent=0 // pred_region
    _
  $region17: #{mcnet_forward.25} parent=0 // pred_fallthru
    _
  // Predicated region
  $region18: #{mcnet_forward.25} parent=0 // pred_check
    _
  $region19: #{mcnet_forward.25} parent=0 // pred_check_branch
    %19 = sbr.rel (0) target = $region21
  $region20: #{mcnet_forward.25} parent=0 // pred_region
    _
  $region21: #{mcnet_forward.25} parent=0 // pred_fallthru
    _
  %v21 = vld [vmem:[%s0] sm:$0xff]
  %v22 = vld [vmem:[%s0 + $0x8] sm:$0xff]
  %v23 = vld [vmem:[%s0 + $0x10] sm:$0xff]
  %v24 = vld [vmem:[%s0 + $0x18] sm:$0xff]
  %v25 = vld [vmem:[%s1] sm:$0xf]
  %v26 = vld [vmem:[%s1 + $0x4] sm:$0xf]
  %v27 = vld [vmem:[%s1 + $0x8] sm:$0xf]
  %v28 = vld [vmem:[%s1 + $0xc] sm:$0xf]
  %v29 = vld [vmem:[%s1 + $0x10] sm:$0xf]
  %v30 = vld [vmem:[%s1 + $0x14] sm:$0xf]
  %v31 = vld [vmem:[%s1 + $0x18] sm:$0xf]
  %v32 = vld [vmem:[%s1 + $0x1c] sm:$0xf]
  %v33 = vld [vmem:[%s1 + $0x20] sm:$0xf]
  %v34 = vld [vmem:[%s1 + $0x24] sm:$0xf]
  %v35 = vld [vmem:[%s1 + $0x28] sm:$0xf]
  %v36 = vld [vmem:[%s1 + $0x2c] sm:$0xf]
  %v37 = vld [vmem:[%s1 + $0x30] sm:$0xf]
  %v38 = vld [vmem:[%s1 + $0x34] sm:$0xf]
  %v39 = vld [vmem:[%s1 + $0x38] sm:$0xf]
  %v40 = vld [vmem:[%s1 + $0x3c] sm:$0xf]
  %v41 = vld [vmem:[%s1 + $0x40] sm:$0xf]
  %v42 = vld [vmem:[%s1 + $0x44] sm:$0xf]
  %v43 = vld [vmem:[%s1 + $0x48] sm:$0xf]
  %v44 = vld [vmem:[%s1 + $0x4c] sm:$0xf]
  %v45 = vld [vmem:[%s1 + $0x50] sm:$0xf]
  %v46 = vld [vmem:[%s1 + $0x54] sm:$0xf]
  %v47 = vld [vmem:[%s1 + $0x58] sm:$0xf]
  %v48 = vld [vmem:[%s1 + $0x5c] sm:$0xf]
  %v49 = vld [vmem:[%s2] sm:$0x1]
  %v51 = vlaneseq
  %v52 = vshrl.u32 %v51, 7
  %v53 = vsub.s32 0, %v52
  %v54 = vrot.slane %v49, %v53
  %v60 = vunpack.c.l.b16 %v21
  %v61 = vunpack.c.h.b16 %v21
  %v62 = vunpack.c.l.b16 %v22
  %v63 = vunpack.c.h.b16 %v22
  %v64 = vunpack.c.l.b16 %v23
  %v65 = vunpack.c.h.b16 %v23
  %v66 = vunpack.c.l.b16 %v24
  %v67 = vunpack.c.h.b16 %v24
  %v68 = vpack.c.b16 %v62, %v60
  %v69 = vpack.c.b16 %v63, %v61
  %v70 = vpack.c.b16 %v66, %v64
  %v71 = vpack.c.b16 %v67, %v65
  %v98 = vunpack.c.l.b16 %v25
  %v99 = vunpack.c.l.b16 %v26
  %v100 = vunpack.c.l.b16 %v27
  %v101 = vunpack.c.l.b16 %v28
  %v102 = vunpack.c.l.b16 %v29
  %v103 = vunpack.c.l.b16 %v30
  %v104 = vunpack.c.l.b16 %v31
  %v105 = vunpack.c.l.b16 %v32
  %v106 = vunpack.c.l.b16 %v33
  %v107 = vunpack.c.l.b16 %v34
  %v108 = vunpack.c.l.b16 %v35
  %v109 = vunpack.c.l.b16 %v36
  %v110 = vunpack.c.l.b16 %v37
  %v111 = vunpack.c.l.b16 %v38
  %v112 = vunpack.c.l.b16 %v39
  %v113 = vunpack.c.l.b16 %v40
  %v114 = vunpack.c.l.b16 %v41
  %v115 = vunpack.c.l.b16 %v42
  %v116 = vunpack.c.l.b16 %v43
  %v117 = vunpack.c.l.b16 %v44
  %v118 = vunpack.c.l.b16 %v45
  %v119 = vunpack.c.l.b16 %v46
  %v120 = vunpack.c.l.b16 %v47
  %v121 = vunpack.c.l.b16 %v48
  %v122 = vpack.c.b16 %v99, %v98
  %v123 = vpack.c.b16 %v101, %v100
  %v124 = vpack.c.b16 %v103, %v102
  %v125 = vpack.c.b16 %v105, %v104
  %v126 = vpack.c.b16 %v107, %v106
  %v127 = vpack.c.b16 %v109, %v108
  %v128 = vpack.c.b16 %v111, %v110
  %v129 = vpack.c.b16 %v113, %v112
  %v130 = vpack.c.b16 %v115, %v114
  %v131 = vpack.c.b16 %v117, %v116
  %v132 = vpack.c.b16 %v119, %v118
  %v133 = vpack.c.b16 %v121, %v120
  %vm146 = vcmask 523264
  %v148 = vsel %vm146, %v69, 0
  %v151 = vsel %vm146, %v71, 0
  %153 = vmatprep.subr.bf16.mxu0 0
  %154 = vmatpush1.bf16.msra.mxu0 %v122
  %155 = vmatprep.subr.bf16.mxu0 0
  %156 = vmatpush1.bf16.msra.mxu0 %v123
  %157 = vmatprep.subr.bf16.mxu0 0
  %158 = vmatpush1.bf16.msra.mxu0 %v124
  %159 = vmatprep.subr.bf16.mxu0 0
  %160 = vmatpush1.bf16.msra.mxu0 %v125
  %161 = vmatprep.subr.bf16.mxu0 0
  %162 = vmatpush1.bf16.msra.mxu0 %v126
  %163 = vmatprep.subr.bf16.mxu0 0
  %164 = vmatpush1.bf16.msra.mxu0 %v127
  %165 = vmatprep.subr.bf16.mxu0 0
  %166 = vmatpush1.bf16.msra.mxu0 %v128
  %167 = vmatprep.subr.bf16.mxu0 0
  %168 = vmatpush1.bf16.msra.mxu0 %v129
  %169 = vmatprep.subr.bf16.mxu0 0
  %170 = vmatpush1.bf16.msra.mxu0 %v130
  %171 = vmatprep.subr.bf16.mxu0 0
  %172 = vmatpush1.bf16.msra.mxu0 %v131
  %173 = vmatprep.subr.bf16.mxu0 0
  %174 = vmatpush1.bf16.msra.mxu0 %v132
  %175 = vmatprep.subr.bf16.mxu0 0
  %176 = vmatpush1.bf16.msra.mxu0 %v133
  %177 = vmatprep.subr.bf16.mxu0 0
  %178 = vmatpush1.bf16.msra.mxu0 0
  %179 = vmatprep.subr.bf16.mxu0 0
  %180 = vmatpush1.bf16.msra.mxu0 0
  %181 = vmatprep.subr.bf16.mxu0 0
  %182 = vmatpush1.bf16.msra.mxu0 0
  %183 = vmatprep.subr.bf16.mxu0 0
  %184 = vmatpush1.bf16.msra.mxu0 0
  %185 = vmatprep.mubr.bf16.mxu0 %v148
  %186 = vmatmul.mubr.bf16.gmra.mrb[0].mxu0 %v68
  %v187 = vpop.f32.mrb[0].mxu0
  %v188 = vadd.f32 %v54, %v187
  %v189 = vpop.f32.mrb[0].mxu0
  %v190 = vpop.f32.mrb[0].mxu0
  %v191 = vadd.f32 %v54, %v190
  %v192 = vpop.f32.mrb[0].mxu0
  %193 = vmatprep.mubr.bf16.mxu0 %v151
  %194 = vmatmul.mubr.bf16.gmra.mrb[0].mxu0 %v70
  %v195 = vpop.f32.mrb[0].mxu0
  %v196 = vadd.f32 %v54, %v195
  %v197 = vpop.f32.mrb[0].mxu0
  %v198 = vpop.f32.mrb[0].mxu0
  %v199 = vadd.f32 %v54, %v198
  %v200 = vpop.f32.mrb[0].mxu0
  %201 = vdwg.mxu0
  %v202 = vmax.f32 %v188, 0.0
  %v203 = vmax.f32 %v191, 0.0
  %v204 = vmax.f32 %v196, 0.0
  %v205 = vmax.f32 %v199, 0.0
  %v206 = vld [vmem:[%s3] sm:$0x1]
  %v208 = vlaneseq
  %v209 = vshrl.u32 %v208, 7
  %v210 = vsub.s32 0, %v209
  %v211 = vrot.slane %v206, %v210
  %v213 = vmul.f32 %v202, %v211
  %v214 = vmul.f32 %v203, %v211
  %v215 = vmul.f32 %v204, %v211
  %v216 = vmul.f32 %v205, %v211
  %v217 = vld [vmem:[%s4] sm:$0x1]
  %v219 = vlaneseq
  %v220 = vshrl.u32 %v219, 7
  %v221 = vsub.s32 0, %v220
  %v222 = vrot.slane %v217, %v221
  %v224 = vadd.f32 %v213, %v222
  %v225 = vadd.f32 %v214, %v222
  %v226 = vadd.f32 %v215, %v222
  %v227 = vadd.f32 %v216, %v222
  %vm228 = vcmask 261120
  %229 = vst.msk [vmem:[%s5] sm:$0xff] %vm228, %v224
  %230 = vst.msk [vmem:[%s5 + $0x8] sm:$0xff] %vm228, %v225
  %231 = vst.msk [vmem:[%s5 + $0x10] sm:$0xff] %vm228, %v226
  %232 = vst.msk [vmem:[%s5 + $0x18] sm:$0xff] %vm228, %v227
  // Predicated region
  $region22: #{mcnet_forward.25} parent=0 // pred_check
    _
  $region23: #{mcnet_forward.25} parent=0 // pred_check_branch
    %234 = sbr.rel (0) target = $region25
  $region24: #{mcnet_forward.25} parent=0 // pred_region
    _
  $region25: #{mcnet_forward.25} parent=0 // pred_fallthru
    _
  // Predicated region
  $region26: #{mcnet_forward.25} parent=0 // pred_check
    _
  $region27: #{mcnet_forward.25} parent=0 // pred_check_branch
    %236 = sbr.rel (0) target = $region29
  $region28: #{mcnet_forward.25} parent=0 // pred_region
    _
  $region29: #{mcnet_forward.25} parent=0 // pred_fallthru
    _

// kernel: mcnet_forward.26
$region0: #{mcnet_forward.26}
  #allocation0 [shape = 'u32[]', space=smem, size = 0x4, offset = 0x4, fixed_abs, tag = 'smem constant byte address 0x4 - core index']
  #allocation1 [shape = 'u32[144,128]{1,0:T(1,128)}', space=vmem, size = 0x12000, scoped, tag = 'internal scratch']
  %s0 = inlined_call_operand.vmem [shape: bf16[16,192], index: 0, kind: input, shape index: {}]
  %s1 = inlined_call_operand.vmem [shape: bf16[192,32], index: 1, kind: input, shape index: {}]
  %s2 = inlined_call_operand.vmem [shape: f32[1,32], index: 2, kind: input, shape index: {}]
  %s3 = inlined_call_operand.vmem [shape: f32[16,32], index: 3, kind: output, shape index: {}]
  %s4 = sld [smem:[#allocation0]]
  $region22: #{mcnet_forward.26} parent=0
    _
  %s6 = ssub.s32 1, %s4
  %s7 = scalar_select 0, %s6, %s4
  // Predicated region
  $region2: #{mcnet_forward.26} parent=0 // pred_check
    _
  $region3: #{mcnet_forward.26} parent=0 // pred_check_branch
    %9 = sbr.rel (0) target = $region5
  $region4: #{mcnet_forward.26} parent=0 // pred_region
    _
  $region5: #{mcnet_forward.26} parent=0 // pred_fallthru
    _
  // Predicated region
  $region6: #{mcnet_forward.26} parent=0 // pred_check
    _
  $region7: #{mcnet_forward.26} parent=0 // pred_check_branch
    %11 = sbr.rel (0) target = $region9
  $region8: #{mcnet_forward.26} parent=0 // pred_region
    _
  $region9: #{mcnet_forward.26} parent=0 // pred_fallthru
    _
  // Predicated region
  $region10: #{mcnet_forward.26} parent=0 // pred_check
    _
  $region11: #{mcnet_forward.26} parent=0 // pred_check_branch
    %13 = sbr.rel (0) target = $region13
  $region12: #{mcnet_forward.26} parent=0 // pred_region
    _
  $region13: #{mcnet_forward.26} parent=0 // pred_fallthru
    _
  %v15 = vld [vmem:[%s0] sm:$0xff]
  %v16 = vld [vmem:[%s0 + $0x8] sm:$0xff]
  %v17 = vld [vmem:[%s1] sm:$0xf]
  %v18 = vld [vmem:[%s1 + $0x4] sm:$0xf]
  %v19 = vld [vmem:[%s1 + $0x8] sm:$0xf]
  %v20 = vld [vmem:[%s1 + $0xc] sm:$0xf]
  %v21 = vld [vmem:[%s1 + $0x10] sm:$0xf]
  %v22 = vld [vmem:[%s1 + $0x14] sm:$0xf]
  %v23 = vld [vmem:[%s1 + $0x18] sm:$0xf]
  %v24 = vld [vmem:[%s1 + $0x1c] sm:$0xf]
  %v25 = vld [vmem:[%s1 + $0x20] sm:$0xf]
  %v26 = vld [vmem:[%s1 + $0x24] sm:$0xf]
  %v27 = vld [vmem:[%s1 + $0x28] sm:$0xf]
  %v28 = vld [vmem:[%s1 + $0x2c] sm:$0xf]
  %v29 = vld [vmem:[%s1 + $0x30] sm:$0xf]
  %v30 = vld [vmem:[%s1 + $0x34] sm:$0xf]
  %v31 = vld [vmem:[%s1 + $0x38] sm:$0xf]
  %v32 = vld [vmem:[%s1 + $0x3c] sm:$0xf]
  %v33 = vld [vmem:[%s1 + $0x40] sm:$0xf]
  %v34 = vld [vmem:[%s1 + $0x44] sm:$0xf]
  %v35 = vld [vmem:[%s1 + $0x48] sm:$0xf]
  %v36 = vld [vmem:[%s1 + $0x4c] sm:$0xf]
  %v37 = vld [vmem:[%s1 + $0x50] sm:$0xf]
  %v38 = vld [vmem:[%s1 + $0x54] sm:$0xf]
  %v39 = vld [vmem:[%s1 + $0x58] sm:$0xf]
  %v40 = vld [vmem:[%s1 + $0x5c] sm:$0xf]
  %v41 = vld [vmem:[%s2] sm:$0x1]
  %v43 = vlaneseq
  %v44 = vshrl.u32 %v43, 7
  %v45 = vsub.s32 0, %v44
  %v46 = vrot.slane %v41, %v45
  %v50 = vunpack.c.l.b16 %v15
  %v51 = vunpack.c.h.b16 %v15
  %v52 = vunpack.c.l.b16 %v16
  %v53 = vunpack.c.h.b16 %v16
  %v54 = vpack.c.b16 %v52, %v50
  %v55 = vpack.c.b16 %v53, %v51
  %v81 = vunpack.c.l.b16 %v17
  %v82 = vunpack.c.l.b16 %v18
  %v83 = vunpack.c.l.b16 %v19
  %v84 = vunpack.c.l.b16 %v20
  %v85 = vunpack.c.l.b16 %v21
  %v86 = vunpack.c.l.b16 %v22
  %v87 = vunpack.c.l.b16 %v23
  %v88 = vunpack.c.l.b16 %v24
  %v89 = vunpack.c.l.b16 %v25
  %v90 = vunpack.c.l.b16 %v26
  %v91 = vunpack.c.l.b16 %v27
  %v92 = vunpack.c.l.b16 %v28
  %v93 = vunpack.c.l.b16 %v29
  %v94 = vunpack.c.l.b16 %v30
  %v95 = vunpack.c.l.b16 %v31
  %v96 = vunpack.c.l.b16 %v32
  %v97 = vunpack.c.l.b16 %v33
  %v98 = vunpack.c.l.b16 %v34
  %v99 = vunpack.c.l.b16 %v35
  %v100 = vunpack.c.l.b16 %v36
  %v101 = vunpack.c.l.b16 %v37
  %v102 = vunpack.c.l.b16 %v38
  %v103 = vunpack.c.l.b16 %v39
  %v104 = vunpack.c.l.b16 %v40
  %v105 = vpack.c.b16 %v82, %v81
  %v106 = vpack.c.b16 %v84, %v83
  %v107 = vpack.c.b16 %v86, %v85
  %v108 = vpack.c.b16 %v88, %v87
  %v109 = vpack.c.b16 %v90, %v89
  %v110 = vpack.c.b16 %v92, %v91
  %v111 = vpack.c.b16 %v94, %v93
  %v112 = vpack.c.b16 %v96, %v95
  %v113 = vpack.c.b16 %v98, %v97
  %v114 = vpack.c.b16 %v100, %v99
  %v115 = vpack.c.b16 %v102, %v101
  %v116 = vpack.c.b16 %v104, %v103
  %vm129 = vcmask 523264
  %v131 = vsel %vm129, %v55, 0
  %133 = vmatprep.subr.bf16.mxu0 0
  %134 = vmatpush1.bf16.msra.mxu0 %v105
  %135 = vmatprep.subr.bf16.mxu0 0
  %136 = vmatpush1.bf16.msra.mxu0 %v106
  %137 = vmatprep.subr.bf16.mxu0 0
  %138 = vmatpush1.bf16.msra.mxu0 %v107
  %139 = vmatprep.subr.bf16.mxu0 0
  %140 = vmatpush1.bf16.msra.mxu0 %v108
  %141 = vmatprep.subr.bf16.mxu0 0
  %142 = vmatpush1.bf16.msra.mxu0 %v109
  %143 = vmatprep.subr.bf16.mxu0 0
  %144 = vmatpush1.bf16.msra.mxu0 %v110
  %145 = vmatprep.subr.bf16.mxu0 0
  %146 = vmatpush1.bf16.msra.mxu0 %v111
  %147 = vmatprep.subr.bf16.mxu0 0
  %148 = vmatpush1.bf16.msra.mxu0 %v112
  %149 = vmatprep.subr.bf16.mxu0 0
  %150 = vmatpush1.bf16.msra.mxu0 %v113
  %151 = vmatprep.subr.bf16.mxu0 0
  %152 = vmatpush1.bf16.msra.mxu0 %v114
  %153 = vmatprep.subr.bf16.mxu0 0
  %154 = vmatpush1.bf16.msra.mxu0 %v115
  %155 = vmatprep.subr.bf16.mxu0 0
  %156 = vmatpush1.bf16.msra.mxu0 %v116
  %157 = vmatprep.subr.bf16.mxu0 0
  %158 = vmatpush1.bf16.msra.mxu0 0
  %159 = vmatprep.subr.bf16.mxu0 0
  %160 = vmatpush1.bf16.msra.mxu0 0
  %161 = vmatprep.subr.bf16.mxu0 0
  %162 = vmatpush1.bf16.msra.mxu0 0
  %163 = vmatprep.subr.bf16.mxu0 0
  %164 = vmatpush1.bf16.msra.mxu0 0
  %165 = vmatprep.mubr.bf16.mxu0 %v131
  %166 = vmatmul.mubr.bf16.gmra.mrb[0].mxu0 %v54
  %v167 = vpop.f32.mrb[0].mxu0
  %v168 = vadd.f32 %v46, %v167
  %v169 = vpop.f32.mrb[0].mxu0
  %v170 = vpop.f32.mrb[0].mxu0
  %v171 = vadd.f32 %v46, %v170
  %v172 = vpop.f32.mrb[0].mxu0
  %173 = vdwg.mxu0
  %v174 = vmax.f32 %v168, 0.0
  %v175 = vmax.f32 %v171, 0.0
  %vm176 = vcmask 261120
  %177 = vst.msk [vmem:[%s3] sm:$0xff] %vm176, %v174
  %178 = vst.msk [vmem:[%s3 + $0x8] sm:$0xff] %vm176, %v175
  // Predicated region
  $region14: #{mcnet_forward.26} parent=0 // pred_check
    _
  $region15: #{mcnet_forward.26} parent=0 // pred_check_branch
    %180 = sbr.rel (0) target = $region17
  $region16: #{mcnet_forward.26} parent=0 // pred_region
    _
  $region17: #{mcnet_forward.26} parent=0 // pred_fallthru
    _
  // Predicated region
  $region18: #{mcnet_forward.26} parent=0 // pred_check
    _
  $region19: #{mcnet_forward.26} parent=0 // pred_check_branch
    %182 = sbr.rel (0) target = $region21
  $region20: #{mcnet_forward.26} parent=0 // pred_region
    _
  $region21: #{mcnet_forward.26} parent=0 // pred_fallthru
    _

// kernel: mcnet_forward.28
$region0: #{mcnet_forward.28}
  #allocation0 [shape = 'u32[]', space=smem, size = 0x4, offset = 0x4, fixed_abs, tag = 'smem constant byte address 0x4 - core index']
  #allocation1 [shape = 'u32[144,128]{1,0:T(1,128)}', space=vmem, size = 0x12000, scoped, tag = 'internal scratch']
  %s0 = inlined_call_operand.vmem [shape: bf16[8,64], index: 0, kind: input, shape index: {}]
  %s1 = inlined_call_operand.vmem [shape: bf16[64,32], index: 1, kind: input, shape index: {}]
  %s2 = inlined_call_operand.vmem [shape: f32[1,32], index: 2, kind: input, shape index: {}]
  %s3 = inlined_call_operand.vmem [shape: f32[8,32], index: 3, kind: output, shape index: {}]
  %s4 = sld [smem:[#allocation0]]
  $region22: #{mcnet_forward.28} parent=0
    _
  %s6 = ssub.s32 1, %s4
  %s7 = scalar_select 0, %s6, %s4
  // Predicated region
  $region2: #{mcnet_forward.28} parent=0 // pred_check
    _
  $region3: #{mcnet_forward.28} parent=0 // pred_check_branch
    %9 = sbr.rel (0) target = $region5
  $region4: #{mcnet_forward.28} parent=0 // pred_region
    _
  $region5: #{mcnet_forward.28} parent=0 // pred_fallthru
    _
  // Predicated region
  $region6: #{mcnet_forward.28} parent=0 // pred_check
    _
  $region7: #{mcnet_forward.28} parent=0 // pred_check_branch
    %11 = sbr.rel (0) target = $region9
  $region8: #{mcnet_forward.28} parent=0 // pred_region
    _
  $region9: #{mcnet_forward.28} parent=0 // pred_fallthru
    _
  // Predicated region
  $region10: #{mcnet_forward.28} parent=0 // pred_check
    _
  $region11: #{mcnet_forward.28} parent=0 // pred_check_branch
    %13 = sbr.rel (0) target = $region13
  $region12: #{mcnet_forward.28} parent=0 // pred_region
    _
  $region13: #{mcnet_forward.28} parent=0 // pred_fallthru
    _
  %v15 = vld [vmem:[%s0] sm:$0xf]
  %v16 = vld [vmem:[%s1] sm:$0xf]
  %v17 = vld [vmem:[%s1 + $0x4] sm:$0xf]
  %v18 = vld [vmem:[%s1 + $0x8] sm:$0xf]
  %v19 = vld [vmem:[%s1 + $0xc] sm:$0xf]
  %v20 = vld [vmem:[%s1 + $0x10] sm:$0xf]
  %v21 = vld [vmem:[%s1 + $0x14] sm:$0xf]
  %v22 = vld [vmem:[%s1 + $0x18] sm:$0xf]
  %v23 = vld [vmem:[%s1 + $0x1c] sm:$0xf]
  %v24 = vld [vmem:[%s2] sm:$0x1]
  %v26 = vlaneseq
  %v27 = vshrl.u32 %v26, 7
  %v28 = vsub.s32 0, %v27
  %v29 = vrot.slane %v24, %v28
  %v39 = vunpack.c.l.b16 %v16
  %v40 = vunpack.c.l.b16 %v17
  %v41 = vunpack.c.l.b16 %v18
  %v42 = vunpack.c.l.b16 %v19
  %v43 = vunpack.c.l.b16 %v20
  %v44 = vunpack.c.l.b16 %v21
  %v45 = vunpack.c.l.b16 %v22
  %v46 = vunpack.c.l.b16 %v23
  %v47 = vpack.c.b16 %v40, %v39
  %v48 = vpack.c.b16 %v42, %v41
  %v49 = vpack.c.b16 %v44, %v43
  %v50 = vpack.c.b16 %v46, %v45
  %vm55 = vcmask 523264
  %v57 = vsel %vm55, %v15, 0
  %59 = vmatprep.subr.bf16.mxu0 0
  %60 = vmatpush1.bf16.msra.mxu0 %v47
  %61 = vmatprep.subr.bf16.mxu0 0
  %62 = vmatpush1.bf16.msra.mxu0 %v48
  %63 = vmatprep.subr.bf16.mxu0 0
  %64 = vmatpush1.bf16.msra.mxu0 %v49
  %65 = vmatprep.subr.bf16.mxu0 0
  %66 = vmatpush1.bf16.msra.mxu0 %v50
  %67 = vmatprep.subr.bf16.mxu0 0
  %68 = vmatpush1.bf16.msra.mxu0 0
  %69 = vmatprep.subr.bf16.mxu0 0
  %70 = vmatpush1.bf16.msra.mxu0 0
  %71 = vmatprep.subr.bf16.mxu0 0
  %72 = vmatpush1.bf16.msra.mxu0 0
  %73 = vmatprep.subr.bf16.mxu0 0
  %74 = vmatpush1.bf16.msra.mxu0 0
  %75 = vmatprep.subr.bf16.mxu0 0
  %76 = vmatpush1.bf16.msra.mxu0 0
  %77 = vmatprep.subr.bf16.mxu0 0
  %78 = vmatpush1.bf16.msra.mxu0 0
  %79 = vmatprep.subr.bf16.mxu0 0
  %80 = vmatpush1.bf16.msra.mxu0 0
  %81 = vmatprep.subr.bf16.mxu0 0
  %82 = vmatpush1.bf16.msra.mxu0 0
  %83 = vmatprep.subr.bf16.mxu0 0
  %84 = vmatpush1.bf16.msra.mxu0 0
  %85 = vmatprep.subr.bf16.mxu0 0
  %86 = vmatpush1.bf16.msra.mxu0 0
  %87 = vmatprep.subr.bf16.mxu0 0
  %88 = vmatpush1.bf16.msra.mxu0 0
  %89 = vmatprep.subr.bf16.mxu0 0
  %90 = vmatpush1.bf16.msra.mxu0 0
  %91 = vmatprep.mubr.bf16.mxu0 0
  %92 = vmatmul.mubr.bf16.gmra.mrb[0].mxu0 %v57
  %v93 = vpop.f32.mrb[0].mxu0
  %v94 = vadd.f32 %v29, %v93
  %v95 = vpop.f32.mrb[0].mxu0
  %v96 = vpop.f32.mrb[0].mxu0
  %v97 = vpop.f32.mrb[0].mxu0
  %98 = vdwg.mxu0
  %v99 = vmax.f32 %v94, 0.0
  %vm100 = vcmask 261120
  %101 = vst.msk [vmem:[%s3] sm:$0xff] %vm100, %v99
  // Predicated region
  $region14: #{mcnet_forward.28} parent=0 // pred_check
    _
  $region15: #{mcnet_forward.28} parent=0 // pred_check_branch
    %103 = sbr.rel (0) target = $region17
  $region16: #{mcnet_forward.28} parent=0 // pred_region
    _
  $region17: #{mcnet_forward.28} parent=0 // pred_fallthru
    _
  // Predicated region
  $region18: #{mcnet_forward.28} parent=0 // pred_check
    _
  $region19: #{mcnet_forward.28} parent=0 // pred_check_branch
    %105 = sbr.rel (0) target = $region21
  $region20: #{mcnet_forward.28} parent=0 // pred_region
    _
  $region21: #{mcnet_forward.28} parent=0 // pred_fallthru
    _

// kernel: mcnet_forward.29
$region0: #{mcnet_forward.29}
  #allocation0 [shape = 'u32[]', space=smem, size = 0x4, offset = 0x4, fixed_abs, tag = 'smem constant byte address 0x4 - core index']
  #allocation1 [shape = 'u32[144,128]{1,0:T(1,128)}', space=vmem, size = 0x12000, scoped, tag = 'internal scratch']
  %s0 = inlined_call_operand.vmem [shape: bf16[8,96], index: 0, kind: input, shape index: {}]
  %s1 = inlined_call_operand.vmem [shape: bf16[96,48], index: 1, kind: input, shape index: {}]
  %s2 = inlined_call_operand.vmem [shape: f32[1,48], index: 2, kind: input, shape index: {}]
  %s3 = inlined_call_operand.vmem [shape: f32[1,48], index: 3, kind: input, shape index: {}]
  %s4 = inlined_call_operand.vmem [shape: f32[1,48], index: 4, kind: input, shape index: {}]
  %s5 = inlined_call_operand.vmem [shape: f32[8,48], index: 5, kind: output, shape index: {}]
  %s6 = sld [smem:[#allocation0]]
  $region30: #{mcnet_forward.29} parent=0
    _
  %s8 = ssub.s32 1, %s6
  %s9 = scalar_select 0, %s8, %s6
  // Predicated region
  $region2: #{mcnet_forward.29} parent=0 // pred_check
    _
  $region3: #{mcnet_forward.29} parent=0 // pred_check_branch
    %11 = sbr.rel (0) target = $region5
  $region4: #{mcnet_forward.29} parent=0 // pred_region
    _
  $region5: #{mcnet_forward.29} parent=0 // pred_fallthru
    _
  // Predicated region
  $region6: #{mcnet_forward.29} parent=0 // pred_check
    _
  $region7: #{mcnet_forward.29} parent=0 // pred_check_branch
    %13 = sbr.rel (0) target = $region9
  $region8: #{mcnet_forward.29} parent=0 // pred_region
    _
  $region9: #{mcnet_forward.29} parent=0 // pred_fallthru
    _
  // Predicated region
  $region10: #{mcnet_forward.29} parent=0 // pred_check
    _
  $region11: #{mcnet_forward.29} parent=0 // pred_check_branch
    %15 = sbr.rel (0) target = $region13
  $region12: #{mcnet_forward.29} parent=0 // pred_region
    _
  $region13: #{mcnet_forward.29} parent=0 // pred_fallthru
    _
  // Predicated region
  $region14: #{mcnet_forward.29} parent=0 // pred_check
    _
  $region15: #{mcnet_forward.29} parent=0 // pred_check_branch
    %17 = sbr.rel (0) target = $region17
  $region16: #{mcnet_forward.29} parent=0 // pred_region
    _
  $region17: #{mcnet_forward.29} parent=0 // pred_fallthru
    _
  // Predicated region
  $region18: #{mcnet_forward.29} parent=0 // pred_check
    _
  $region19: #{mcnet_forward.29} parent=0 // pred_check_branch
    %19 = sbr.rel (0) target = $region21
  $region20: #{mcnet_forward.29} parent=0 // pred_region
    _
  $region21: #{mcnet_forward.29} parent=0 // pred_fallthru
    _
  %v21 = vld [vmem:[%s0] sm:$0xf]
  %v22 = vld [vmem:[%s1] sm:$0xf]
  %v23 = vld [vmem:[%s1 + $0x4] sm:$0xf]
  %v24 = vld [vmem:[%s1 + $0x8] sm:$0xf]
  %v25 = vld [vmem:[%s1 + $0xc] sm:$0xf]
  %v26 = vld [vmem:[%s1 + $0x10] sm:$0xf]
  %v27 = vld [vmem:[%s1 + $0x14] sm:$0xf]
  %v28 = vld [vmem:[%s1 + $0x18] sm:$0xf]
  %v29 = vld [vmem:[%s1 + $0x1c] sm:$0xf]
  %v30 = vld [vmem:[%s1 + $0x20] sm:$0xf]
  %v31 = vld [vmem:[%s1 + $0x24] sm:$0xf]
  %v32 = vld [vmem:[%s1 + $0x28] sm:$0xf]
  %v33 = vld [vmem:[%s1 + $0x2c] sm:$0xf]
  %v34 = vld [vmem:[%s2] sm:$0x1]
  %v36 = vlaneseq
  %v37 = vshrl.u32 %v36, 7
  %v38 = vsub.s32 0, %v37
  %v39 = vrot.slane %v34, %v38
  %v53 = vunpack.c.l.b16 %v22
  %v54 = vunpack.c.l.b16 %v23
  %v55 = vunpack.c.l.b16 %v24
  %v56 = vunpack.c.l.b16 %v25
  %v57 = vunpack.c.l.b16 %v26
  %v58 = vunpack.c.l.b16 %v27
  %v59 = vunpack.c.l.b16 %v28
  %v60 = vunpack.c.l.b16 %v29
  %v61 = vunpack.c.l.b16 %v30
  %v62 = vunpack.c.l.b16 %v31
  %v63 = vunpack.c.l.b16 %v32
  %v64 = vunpack.c.l.b16 %v33
  %v65 = vpack.c.b16 %v54, %v53
  %v66 = vpack.c.b16 %v56, %v55
  %v67 = vpack.c.b16 %v58, %v57
  %v68 = vpack.c.b16 %v60, %v59
  %v69 = vpack.c.b16 %v62, %v61
  %v70 = vpack.c.b16 %v64, %v63
  %vm77 = vcmask 785408
  %v79 = vsel %vm77, %v21, 0
  %81 = vmatprep.subr.bf16.mxu0 0
  %82 = vmatpush1.bf16.msra.mxu0 %v65
  %83 = vmatprep.subr.bf16.mxu0 0
  %84 = vmatpush1.bf16.msra.mxu0 %v66
  %85 = vmatprep.subr.bf16.mxu0 0
  %86 = vmatpush1.bf16.msra.mxu0 %v67
  %87 = vmatprep.subr.bf16.mxu0 0
  %88 = vmatpush1.bf16.msra.mxu0 %v68
  %89 = vmatprep.subr.bf16.mxu0 0
  %90 = vmatpush1.bf16.msra.mxu0 %v69
  %91 = vmatprep.subr.bf16.mxu0 0
  %92 = vmatpush1.bf16.msra.mxu0 %v70
  %93 = vmatprep.subr.bf16.mxu0 0
  %94 = vmatpush1.bf16.msra.mxu0 0
  %95 = vmatprep.subr.bf16.mxu0 0
  %96 = vmatpush1.bf16.msra.mxu0 0
  %97 = vmatprep.subr.bf16.mxu0 0
  %98 = vmatpush1.bf16.msra.mxu0 0
  %99 = vmatprep.subr.bf16.mxu0 0
  %100 = vmatpush1.bf16.msra.mxu0 0
  %101 = vmatprep.subr.bf16.mxu0 0
  %102 = vmatpush1.bf16.msra.mxu0 0
  %103 = vmatprep.subr.bf16.mxu0 0
  %104 = vmatpush1.bf16.msra.mxu0 0
  %105 = vmatprep.subr.bf16.mxu0 0
  %106 = vmatpush1.bf16.msra.mxu0 0
  %107 = vmatprep.subr.bf16.mxu0 0
  %108 = vmatpush1.bf16.msra.mxu0 0
  %109 = vmatprep.subr.bf16.mxu0 0
  %110 = vmatpush1.bf16.msra.mxu0 0
  %111 = vmatprep.subr.bf16.mxu0 0
  %112 = vmatpush1.bf16.msra.mxu0 0
  %113 = vmatprep.mubr.bf16.mxu0 0
  %114 = vmatmul.mubr.bf16.gmra.mrb[0].mxu0 %v79
  %v115 = vpop.f32.mrb[0].mxu0
  %v116 = vadd.f32 %v39, %v115
  %v117 = vpop.f32.mrb[0].mxu0
  %v118 = vpop.f32.mrb[0].mxu0
  %v119 = vpop.f32.mrb[0].mxu0
  %120 = vdwg.mxu0
  %v121 = vmax.f32 %v116, 0.0
  %v122 = vld [vmem:[%s3] sm:$0x1]
  %v124 = vlaneseq
  %v125 = vshrl.u32 %v124, 7
  %v126 = vsub.s32 0, %v125
  %v127 = vrot.slane %v122, %v126
  %v129 = vmul.f32 %v121, %v127
  %v130 = vld [vmem:[%s4] sm:$0x1]
  %v132 = vlaneseq
  %v133 = vshrl.u32 %v132, 7
  %v134 = vsub.s32 0, %v133
  %v135 = vrot.slane %v130, %v134
  %v137 = vadd.f32 %v129, %v135
  %vm138 = vcmask 392192
  %139 = vst.msk [vmem:[%s5] sm:$0xff] %vm138, %v137
  // Predicated region
  $region22: #{mcnet_forward.29} parent=0 // pred_check
    _
  $region23: #{mcnet_forward.29} parent=0 // pred_check_branch
    %141 = sbr.rel (0) target = $region25
  $region24: #{mcnet_forward.29} parent=0 // pred_region
    _
  $region25: #{mcnet_forward.29} parent=0 // pred_fallthru
    _
  // Predicated region
  $region26: #{mcnet_forward.29} parent=0 // pred_check
    _
  $region27: #{mcnet_forward.29} parent=0 // pred_check_branch
    %143 = sbr.rel (0) target = $region29
  $region28: #{mcnet_forward.29} parent=0 // pred_region
    _
  $region29: #{mcnet_forward.29} parent=0 // pred_fallthru
    _

// kernel: mcnet_forward.30
$region0: #{mcnet_forward.30}
  #allocation0 [shape = 'u32[]', space=smem, size = 0x4, offset = 0x4, fixed_abs, tag = 'smem constant byte address 0x4 - core index']
  #allocation1 [shape = 'u32[144,128]{1,0:T(1,128)}', space=vmem, size = 0x12000, scoped, tag = 'internal scratch']
  %s0 = inlined_call_operand.vmem [shape: bf16[4,96], index: 0, kind: input, shape index: {}]
  %s1 = inlined_call_operand.vmem [shape: bf16[96,80], index: 1, kind: input, shape index: {}]
  %s2 = inlined_call_operand.vmem [shape: f32[1,80], index: 2, kind: input, shape index: {}]
  %s3 = inlined_call_operand.vmem [shape: f32[4,80], index: 3, kind: output, shape index: {}]
  %s4 = sld [smem:[#allocation0]]
  $region22: #{mcnet_forward.30} parent=0
    _
  %s6 = ssub.s32 1, %s4
  %s7 = scalar_select 0, %s6, %s4
  // Predicated region
  $region2: #{mcnet_forward.30} parent=0 // pred_check
    _
  $region3: #{mcnet_forward.30} parent=0 // pred_check_branch
    %9 = sbr.rel (0) target = $region5
  $region4: #{mcnet_forward.30} parent=0 // pred_region
    _
  $region5: #{mcnet_forward.30} parent=0 // pred_fallthru
    _
  // Predicated region
  $region6: #{mcnet_forward.30} parent=0 // pred_check
    _
  $region7: #{mcnet_forward.30} parent=0 // pred_check_branch
    %11 = sbr.rel (0) target = $region9
  $region8: #{mcnet_forward.30} parent=0 // pred_region
    _
  $region9: #{mcnet_forward.30} parent=0 // pred_fallthru
    _
  // Predicated region
  $region10: #{mcnet_forward.30} parent=0 // pred_check
    _
  $region11: #{mcnet_forward.30} parent=0 // pred_check_branch
    %13 = sbr.rel (0) target = $region13
  $region12: #{mcnet_forward.30} parent=0 // pred_region
    _
  $region13: #{mcnet_forward.30} parent=0 // pred_fallthru
    _
  %v15 = vld [vmem:[%s0] sm:$0x3]
  %v16 = vld [vmem:[%s1] sm:$0xf]
  %v17 = vld [vmem:[%s1 + $0x4] sm:$0xf]
  %v18 = vld [vmem:[%s1 + $0x8] sm:$0xf]
  %v19 = vld [vmem:[%s1 + $0xc] sm:$0xf]
  %v20 = vld [vmem:[%s1 + $0x10] sm:$0xf]
  %v21 = vld [vmem:[%s1 + $0x14] sm:$0xf]
  %v22 = vld [vmem:[%s1 + $0x18] sm:$0xf]
  %v23 = vld [vmem:[%s1 + $0x1c] sm:$0xf]
  %v24 = vld [vmem:[%s1 + $0x20] sm:$0xf]
  %v25 = vld [vmem:[%s1 + $0x24] sm:$0xf]
  %v26 = vld [vmem:[%s1 + $0x28] sm:$0xf]
  %v27 = vld [vmem:[%s1 + $0x2c] sm:$0xf]
  %v28 = vld [vmem:[%s2] sm:$0x1]
  %v30 = vlaneseq
  %v31 = vshrl.u32 %v30, 7
  %v32 = vsub.s32 0, %v31
  %v33 = vrot.slane %v28, %v32
  %v47 = vunpack.c.l.b16 %v16
  %v48 = vunpack.c.l.b16 %v17
  %v49 = vunpack.c.l.b16 %v18
  %v50 = vunpack.c.l.b16 %v19
  %v51 = vunpack.c.l.b16 %v20
  %v52 = vunpack.c.l.b16 %v21
  %v53 = vunpack.c.l.b16 %v22
  %v54 = vunpack.c.l.b16 %v23
  %v55 = vunpack.c.l.b16 %v24
  %v56 = vunpack.c.l.b16 %v25
  %v57 = vunpack.c.l.b16 %v26
  %v58 = vunpack.c.l.b16 %v27
  %v59 = vpack.c.b16 %v48, %v47
  %v60 = vpack.c.b16 %v50, %v49
  %v61 = vpack.c.b16 %v52, %v51
  %v62 = vpack.c.b16 %v54, %v53
  %v63 = vpack.c.b16 %v56, %v55
  %v64 = vpack.c.b16 %v58, %v57
  %vm71 = vcmask 785408
  %v73 = vsel %vm71, %v15, 0
  %75 = vmatprep.subr.bf16.mxu0 0
  %76 = vmatpush1.bf16.msra.mxu0 %v59
  %77 = vmatprep.subr.bf16.mxu0 0
  %78 = vmatpush1.bf16.msra.mxu0 %v60
  %79 = vmatprep.subr.bf16.mxu0 0
  %80 = vmatpush1.bf16.msra.mxu0 %v61
  %81 = vmatprep.subr.bf16.mxu0 0
  %82 = vmatpush1.bf16.msra.mxu0 %v62
  %83 = vmatprep.subr.bf16.mxu0 0
  %84 = vmatpush1.bf16.msra.mxu0 %v63
  %85 = vmatprep.subr.bf16.mxu0 0
  %86 = vmatpush1.bf16.msra.mxu0 %v64
  %87 = vmatprep.subr.bf16.mxu0 0
  %88 = vmatpush1.bf16.msra.mxu0 0
  %89 = vmatprep.subr.bf16.mxu0 0
  %90 = vmatpush1.bf16.msra.mxu0 0
  %91 = vmatprep.subr.bf16.mxu0 0
  %92 = vmatpush1.bf16.msra.mxu0 0
  %93 = vmatprep.subr.bf16.mxu0 0
  %94 = vmatpush1.bf16.msra.mxu0 0
  %95 = vmatprep.subr.bf16.mxu0 0
  %96 = vmatpush1.bf16.msra.mxu0 0
  %97 = vmatprep.subr.bf16.mxu0 0
  %98 = vmatpush1.bf16.msra.mxu0 0
  %99 = vmatprep.subr.bf16.mxu0 0
  %100 = vmatpush1.bf16.msra.mxu0 0
  %101 = vmatprep.subr.bf16.mxu0 0
  %102 = vmatpush1.bf16.msra.mxu0 0
  %103 = vmatprep.subr.bf16.mxu0 0
  %104 = vmatpush1.bf16.msra.mxu0 0
  %105 = vmatprep.subr.bf16.mxu0 0
  %106 = vmatpush1.bf16.msra.mxu0 0
  %107 = vmatprep.mubr.bf16.mxu0 0
  %108 = vmatmul.mubr.bf16.gmra.mrb[0].mxu0 %v73
  %v109 = vpop.f32.mrb[0].mxu0
  %v110 = vadd.f32 %v33, %v109
  %v111 = vpop.f32.mrb[0].mxu0
  %v112 = vpop.f32.mrb[0].mxu0
  %v113 = vpop.f32.mrb[0].mxu0
  %114 = vdwg.mxu0
  %v115 = vmax.f32 %v110, 0.0
  %vm116 = vcmask 650240
  %117 = vst.msk [vmem:[%s3] sm:$0xf] %vm116, %v115
  // Predicated region
  $region14: #{mcnet_forward.30} parent=0 // pred_check
    _
  $region15: #{mcnet_forward.30} parent=0 // pred_check_branch
    %119 = sbr.rel (0) target = $region17
  $region16: #{mcnet_forward.30} parent=0 // pred_region
    _
  $region17: #{mcnet_forward.30} parent=0 // pred_fallthru
    _
  // Predicated region
  $region18: #{mcnet_forward.30} parent=0 // pred_check
    _
  $region19: #{mcnet_forward.30} parent=0 // pred_check_branch
    %121 = sbr.rel (0) target = $region21
  $region20: #{mcnet_forward.30} parent=0 // pred_region
    _
  $region21: #{mcnet_forward.30} parent=0 // pred_fallthru
    _

// kernel: mcnet_forward.27
$region0: #{mcnet_forward.27}
  #allocation0 [shape = 'u32[]', space=smem, size = 0x4, offset = 0x4, fixed_abs, tag = 'smem constant byte address 0x4 - core index']
  #allocation1 [shape = 'u32[144,128]{1,0:T(1,128)}', space=vmem, size = 0x12000, scoped, tag = 'internal scratch']
  %s0 = inlined_call_operand.vmem [shape: bf16[8,64], index: 0, kind: input, shape index: {}]
  %s1 = inlined_call_operand.vmem [shape: bf16[64,128], index: 1, kind: input, shape index: {}]
  %s2 = inlined_call_operand.vmem [shape: f32[1,128], index: 2, kind: input, shape index: {}]
  %s3 = inlined_call_operand.vmem [shape: f32[1,128], index: 3, kind: input, shape index: {}]
  %s4 = inlined_call_operand.vmem [shape: f32[1,128], index: 4, kind: input, shape index: {}]
  %s5 = inlined_call_operand.vmem [shape: f32[8,128], index: 5, kind: output, shape index: {}]
  %s6 = sld [smem:[#allocation0]]
  $region30: #{mcnet_forward.27} parent=0
    _
  %s8 = ssub.s32 1, %s6
  %s9 = scalar_select 0, %s8, %s6
  // Predicated region
  $region2: #{mcnet_forward.27} parent=0 // pred_check
    _
  $region3: #{mcnet_forward.27} parent=0 // pred_check_branch
    %11 = sbr.rel (0) target = $region5
  $region4: #{mcnet_forward.27} parent=0 // pred_region
    _
  $region5: #{mcnet_forward.27} parent=0 // pred_fallthru
    _
  // Predicated region
  $region6: #{mcnet_forward.27} parent=0 // pred_check
    _
  $region7: #{mcnet_forward.27} parent=0 // pred_check_branch
    %13 = sbr.rel (0) target = $region9
  $region8: #{mcnet_forward.27} parent=0 // pred_region
    _
  $region9: #{mcnet_forward.27} parent=0 // pred_fallthru
    _
  // Predicated region
  $region10: #{mcnet_forward.27} parent=0 // pred_check
    _
  $region11: #{mcnet_forward.27} parent=0 // pred_check_branch
    %15 = sbr.rel (0) target = $region13
  $region12: #{mcnet_forward.27} parent=0 // pred_region
    _
  $region13: #{mcnet_forward.27} parent=0 // pred_fallthru
    _
  // Predicated region
  $region14: #{mcnet_forward.27} parent=0 // pred_check
    _
  $region15: #{mcnet_forward.27} parent=0 // pred_check_branch
    %17 = sbr.rel (0) target = $region17
  $region16: #{mcnet_forward.27} parent=0 // pred_region
    _
  $region17: #{mcnet_forward.27} parent=0 // pred_fallthru
    _
  // Predicated region
  $region18: #{mcnet_forward.27} parent=0 // pred_check
    _
  $region19: #{mcnet_forward.27} parent=0 // pred_check_branch
    %19 = sbr.rel (0) target = $region21
  $region20: #{mcnet_forward.27} parent=0 // pred_region
    _
  $region21: #{mcnet_forward.27} parent=0 // pred_fallthru
    _
  %v21 = vld [vmem:[%s0] sm:$0xf]
  %v22 = vld [vmem:[%s1] sm:$0xf]
  %v23 = vld [vmem:[%s1 + $0x4] sm:$0xf]
  %v24 = vld [vmem:[%s1 + $0x8] sm:$0xf]
  %v25 = vld [vmem:[%s1 + $0xc] sm:$0xf]
  %v26 = vld [vmem:[%s1 + $0x10] sm:$0xf]
  %v27 = vld [vmem:[%s1 + $0x14] sm:$0xf]
  %v28 = vld [vmem:[%s1 + $0x18] sm:$0xf]
  %v29 = vld [vmem:[%s1 + $0x1c] sm:$0xf]
  %v30 = vld [vmem:[%s2] sm:$0x1]
  %v32 = vlaneseq
  %v33 = vshrl.u32 %v32, 7
  %v34 = vsub.s32 0, %v33
  %v35 = vrot.slane %v30, %v34
  %v45 = vunpack.c.l.b16 %v22
  %v46 = vunpack.c.l.b16 %v23
  %v47 = vunpack.c.l.b16 %v24
  %v48 = vunpack.c.l.b16 %v25
  %v49 = vunpack.c.l.b16 %v26
  %v50 = vunpack.c.l.b16 %v27
  %v51 = vunpack.c.l.b16 %v28
  %v52 = vunpack.c.l.b16 %v29
  %v53 = vpack.c.b16 %v46, %v45
  %v54 = vpack.c.b16 %v48, %v47
  %v55 = vpack.c.b16 %v50, %v49
  %v56 = vpack.c.b16 %v52, %v51
  %vm61 = vcmask 523264
  %v63 = vsel %vm61, %v21, 0
  %65 = vmatprep.subr.bf16.mxu0 0
  %66 = vmatpush1.bf16.msra.mxu0 %v53
  %67 = vmatprep.subr.bf16.mxu0 0
  %68 = vmatpush1.bf16.msra.mxu0 %v54
  %69 = vmatprep.subr.bf16.mxu0 0
  %70 = vmatpush1.bf16.msra.mxu0 %v55
  %71 = vmatprep.subr.bf16.mxu0 0
  %72 = vmatpush1.bf16.msra.mxu0 %v56
  %73 = vmatprep.subr.bf16.mxu0 0
  %74 = vmatpush1.bf16.msra.mxu0 0
  %75 = vmatprep.subr.bf16.mxu0 0
  %76 = vmatpush1.bf16.msra.mxu0 0
  %77 = vmatprep.subr.bf16.mxu0 0
  %78 = vmatpush1.bf16.msra.mxu0 0
  %79 = vmatprep.subr.bf16.mxu0 0
  %80 = vmatpush1.bf16.msra.mxu0 0
  %81 = vmatprep.subr.bf16.mxu0 0
  %82 = vmatpush1.bf16.msra.mxu0 0
  %83 = vmatprep.subr.bf16.mxu0 0
  %84 = vmatpush1.bf16.msra.mxu0 0
  %85 = vmatprep.subr.bf16.mxu0 0
  %86 = vmatpush1.bf16.msra.mxu0 0
  %87 = vmatprep.subr.bf16.mxu0 0
  %88 = vmatpush1.bf16.msra.mxu0 0
  %89 = vmatprep.subr.bf16.mxu0 0
  %90 = vmatpush1.bf16.msra.mxu0 0
  %91 = vmatprep.subr.bf16.mxu0 0
  %92 = vmatpush1.bf16.msra.mxu0 0
  %93 = vmatprep.subr.bf16.mxu0 0
  %94 = vmatpush1.bf16.msra.mxu0 0
  %95 = vmatprep.subr.bf16.mxu0 0
  %96 = vmatpush1.bf16.msra.mxu0 0
  %97 = vmatprep.mubr.bf16.mxu0 0
  %98 = vmatmul.mubr.bf16.gmra.mrb[0].mxu0 %v63
  %v99 = vpop.f32.mrb[0].mxu0
  %v100 = vadd.f32 %v35, %v99
  %v101 = vpop.f32.mrb[0].mxu0
  %v102 = vpop.f32.mrb[0].mxu0
  %v103 = vpop.f32.mrb[0].mxu0
  %104 = vdwg.mxu0
  %v105 = vmax.f32 %v100, 0.0
  %v106 = vld [vmem:[%s3] sm:$0x1]
  %v108 = vlaneseq
  %v109 = vshrl.u32 %v108, 7
  %v110 = vsub.s32 0, %v109
  %v111 = vrot.slane %v106, %v110
  %v113 = vmul.f32 %v105, %v111
  %v114 = vld [vmem:[%s4] sm:$0x1]
  %v116 = vlaneseq
  %v117 = vshrl.u32 %v116, 7
  %v118 = vsub.s32 0, %v117
  %v119 = vrot.slane %v114, %v118
  %v121 = vadd.f32 %v113, %v119
  %122 = vst [vmem:[%s5] sm:$0xff] %v121
  // Predicated region
  $region22: #{mcnet_forward.27} parent=0 // pred_check
    _
  $region23: #{mcnet_forward.27} parent=0 // pred_check_branch
    %124 = sbr.rel (0) target = $region25
  $region24: #{mcnet_forward.27} parent=0 // pred_region
    _
  $region25: #{mcnet_forward.27} parent=0 // pred_fallthru
    _
  // Predicated region
  $region26: #{mcnet_forward.27} parent=0 // pred_check
    _
  $region27: #{mcnet_forward.27} parent=0 // pred_check_branch
    %126 = sbr.rel (0) target = $region29
  $region28: #{mcnet_forward.27} parent=0 // pred_region
    _
  $region29: #{mcnet_forward.27} parent=0 // pred_fallthru
    _

// kernel: mcnet_forward.31
$region0: #{mcnet_forward.31}
  #allocation0 [shape = 'u32[]', space=smem, size = 0x4, offset = 0x4, fixed_abs, tag = 'smem constant byte address 0x4 - core index']
  #allocation1 [shape = 'u32[144,128]{1,0:T(1,128)}', space=vmem, size = 0x12000, scoped, tag = 'internal scratch']
  %s0 = inlined_call_operand.vmem [shape: bf16[8,128], index: 0, kind: input, shape index: {}]
  %s1 = inlined_call_operand.vmem [shape: bf16[128,32], index: 1, kind: input, shape index: {}]
  %s2 = inlined_call_operand.vmem [shape: f32[1,32], index: 2, kind: input, shape index: {}]
  %s3 = inlined_call_operand.vmem [shape: f32[8,32], index: 3, kind: output, shape index: {}]
  %s4 = sld [smem:[#allocation0]]
  $region22: #{mcnet_forward.31} parent=0
    _
  %s6 = ssub.s32 1, %s4
  %s7 = scalar_select 0, %s6, %s4
  // Predicated region
  $region2: #{mcnet_forward.31} parent=0 // pred_check
    _
  $region3: #{mcnet_forward.31} parent=0 // pred_check_branch
    %9 = sbr.rel (0) target = $region5
  $region4: #{mcnet_forward.31} parent=0 // pred_region
    _
  $region5: #{mcnet_forward.31} parent=0 // pred_fallthru
    _
  // Predicated region
  $region6: #{mcnet_forward.31} parent=0 // pred_check
    _
  $region7: #{mcnet_forward.31} parent=0 // pred_check_branch
    %11 = sbr.rel (0) target = $region9
  $region8: #{mcnet_forward.31} parent=0 // pred_region
    _
  $region9: #{mcnet_forward.31} parent=0 // pred_fallthru
    _
  // Predicated region
  $region10: #{mcnet_forward.31} parent=0 // pred_check
    _
  $region11: #{mcnet_forward.31} parent=0 // pred_check_branch
    %13 = sbr.rel (0) target = $region13
  $region12: #{mcnet_forward.31} parent=0 // pred_region
    _
  $region13: #{mcnet_forward.31} parent=0 // pred_fallthru
    _
  %v15 = vld [vmem:[%s0] sm:$0xf]
  %v16 = vld [vmem:[%s1] sm:$0xf]
  %v17 = vld [vmem:[%s1 + $0x4] sm:$0xf]
  %v18 = vld [vmem:[%s1 + $0x8] sm:$0xf]
  %v19 = vld [vmem:[%s1 + $0xc] sm:$0xf]
  %v20 = vld [vmem:[%s1 + $0x10] sm:$0xf]
  %v21 = vld [vmem:[%s1 + $0x14] sm:$0xf]
  %v22 = vld [vmem:[%s1 + $0x18] sm:$0xf]
  %v23 = vld [vmem:[%s1 + $0x1c] sm:$0xf]
  %v24 = vld [vmem:[%s1 + $0x20] sm:$0xf]
  %v25 = vld [vmem:[%s1 + $0x24] sm:$0xf]
  %v26 = vld [vmem:[%s1 + $0x28] sm:$0xf]
  %v27 = vld [vmem:[%s1 + $0x2c] sm:$0xf]
  %v28 = vld [vmem:[%s1 + $0x30] sm:$0xf]
  %v29 = vld [vmem:[%s1 + $0x34] sm:$0xf]
  %v30 = vld [vmem:[%s1 + $0x38] sm:$0xf]
  %v31 = vld [vmem:[%s1 + $0x3c] sm:$0xf]
  %v32 = vld [vmem:[%s2] sm:$0x1]
  %v34 = vlaneseq
  %v35 = vshrl.u32 %v34, 7
  %v36 = vsub.s32 0, %v35
  %v37 = vrot.slane %v32, %v36
  %v55 = vunpack.c.l.b16 %v16
  %v56 = vunpack.c.l.b16 %v17
  %v57 = vunpack.c.l.b16 %v18
  %v58 = vunpack.c.l.b16 %v19
  %v59 = vunpack.c.l.b16 %v20
  %v60 = vunpack.c.l.b16 %v21
  %v61 = vunpack.c.l.b16 %v22
  %v62 = vunpack.c.l.b16 %v23
  %v63 = vunpack.c.l.b16 %v24
  %v64 = vunpack.c.l.b16 %v25
  %v65 = vunpack.c.l.b16 %v26
  %v66 = vunpack.c.l.b16 %v27
  %v67 = vunpack.c.l.b16 %v28
  %v68 = vunpack.c.l.b16 %v29
  %v69 = vunpack.c.l.b16 %v30
  %v70 = vunpack.c.l.b16 %v31
  %v71 = vpack.c.b16 %v56, %v55
  %v72 = vpack.c.b16 %v58, %v57
  %v73 = vpack.c.b16 %v60, %v59
  %v74 = vpack.c.b16 %v62, %v61
  %v75 = vpack.c.b16 %v64, %v63
  %v76 = vpack.c.b16 %v66, %v65
  %v77 = vpack.c.b16 %v68, %v67
  %v78 = vpack.c.b16 %v70, %v69
  %87 = vmatprep.subr.bf16.mxu0 0
  %88 = vmatpush1.bf16.msra.mxu0 %v71
  %89 = vmatprep.subr.bf16.mxu0 0
  %90 = vmatpush1.bf16.msra.mxu0 %v72
  %91 = vmatprep.subr.bf16.mxu0 0
  %92 = vmatpush1.bf16.msra.mxu0 %v73
  %93 = vmatprep.subr.bf16.mxu0 0
  %94 = vmatpush1.bf16.msra.mxu0 %v74
  %95 = vmatprep.subr.bf16.mxu0 0
  %96 = vmatpush1.bf16.msra.mxu0 %v75
  %97 = vmatprep.subr.bf16.mxu0 0
  %98 = vmatpush1.bf16.msra.mxu0 %v76
  %99 = vmatprep.subr.bf16.mxu0 0
  %100 = vmatpush1.bf16.msra.mxu0 %v77
  %101 = vmatprep.subr.bf16.mxu0 0
  %102 = vmatpush1.bf16.msra.mxu0 %v78
  %103 = vmatprep.subr.bf16.mxu0 0
  %104 = vmatpush1.bf16.msra.mxu0 0
  %105 = vmatprep.subr.bf16.mxu0 0
  %106 = vmatpush1.bf16.msra.mxu0 0
  %107 = vmatprep.subr.bf16.mxu0 0
  %108 = vmatpush1.bf16.msra.mxu0 0
  %109 = vmatprep.subr.bf16.mxu0 0
  %110 = vmatpush1.bf16.msra.mxu0 0
  %111 = vmatprep.subr.bf16.mxu0 0
  %112 = vmatpush1.bf16.msra.mxu0 0
  %113 = vmatprep.subr.bf16.mxu0 0
  %114 = vmatpush1.bf16.msra.mxu0 0
  %115 = vmatprep.subr.bf16.mxu0 0
  %116 = vmatpush1.bf16.msra.mxu0 0
  %117 = vmatprep.subr.bf16.mxu0 0
  %118 = vmatpush1.bf16.msra.mxu0 0
  %119 = vmatprep.mubr.bf16.mxu0 0
  %120 = vmatmul.mubr.bf16.gmra.mrb[0].mxu0 %v15
  %v121 = vpop.f32.mrb[0].mxu0
  %v122 = vadd.f32 %v37, %v121
  %v123 = vpop.f32.mrb[0].mxu0
  %v124 = vpop.f32.mrb[0].mxu0
  %v125 = vpop.f32.mrb[0].mxu0
  %126 = vdwg.mxu0
  %v127 = vmax.f32 %v122, 0.0
  %vm128 = vcmask 261120
  %129 = vst.msk [vmem:[%s3] sm:$0xff] %vm128, %v127
  // Predicated region
  $region14: #{mcnet_forward.31} parent=0 // pred_check
    _
  $region15: #{mcnet_forward.31} parent=0 // pred_check_branch
    %131 = sbr.rel (0) target = $region17
  $region16: #{mcnet_forward.31} parent=0 // pred_region
    _
  $region17: #{mcnet_forward.31} parent=0 // pred_fallthru
    _
  // Predicated region
  $region18: #{mcnet_forward.31} parent=0 // pred_check
    _
  $region19: #{mcnet_forward.31} parent=0 // pred_check_branch
    %133 = sbr.rel (0) target = $region21
  $region20: #{mcnet_forward.31} parent=0 // pred_region
    _
  $region21: #{mcnet_forward.31} parent=0 // pred_fallthru
    _

// kernel: mcnet_forward.32
$region0: #{mcnet_forward.32}
  #allocation0 [shape = 'u32[]', space=smem, size = 0x4, offset = 0x4, fixed_abs, tag = 'smem constant byte address 0x4 - core index']
  #allocation1 [shape = 'u32[144,128]{1,0:T(1,128)}', space=vmem, size = 0x12000, scoped, tag = 'internal scratch']
  %s0 = inlined_call_operand.vmem [shape: bf16[8,288], index: 0, kind: input, shape index: {}]
  %s1 = inlined_call_operand.vmem [shape: bf16[288,128], index: 1, kind: input, shape index: {}]
  %s2 = inlined_call_operand.vmem [shape: f32[1,128], index: 2, kind: input, shape index: {}]
  %s3 = inlined_call_operand.vmem [shape: f32[1,128], index: 3, kind: input, shape index: {}]
  %s4 = inlined_call_operand.vmem [shape: f32[1,128], index: 4, kind: input, shape index: {}]
  %s5 = inlined_call_operand.vmem [shape: f32[8,128], index: 5, kind: output, shape index: {}]
  %s6 = sld [smem:[#allocation0]]
  $region30: #{mcnet_forward.32} parent=0
    _
  %s8 = ssub.s32 1, %s6
  %s9 = scalar_select 0, %s8, %s6
  // Predicated region
  $region2: #{mcnet_forward.32} parent=0 // pred_check
    _
  $region3: #{mcnet_forward.32} parent=0 // pred_check_branch
    %11 = sbr.rel (0) target = $region5
  $region4: #{mcnet_forward.32} parent=0 // pred_region
    _
  $region5: #{mcnet_forward.32} parent=0 // pred_fallthru
    _
  // Predicated region
  $region6: #{mcnet_forward.32} parent=0 // pred_check
    _
  $region7: #{mcnet_forward.32} parent=0 // pred_check_branch
    %13 = sbr.rel (0) target = $region9
  $region8: #{mcnet_forward.32} parent=0 // pred_region
    _
  $region9: #{mcnet_forward.32} parent=0 // pred_fallthru
    _
  // Predicated region
  $region10: #{mcnet_forward.32} parent=0 // pred_check
    _
  $region11: #{mcnet_forward.32} parent=0 // pred_check_branch
    %15 = sbr.rel (0) target = $region13
  $region12: #{mcnet_forward.32} parent=0 // pred_region
    _
  $region13: #{mcnet_forward.32} parent=0 // pred_fallthru
    _
  // Predicated region
  $region14: #{mcnet_forward.32} parent=0 // pred_check
    _
  $region15: #{mcnet_forward.32} parent=0 // pred_check_branch
    %17 = sbr.rel (0) target = $region17
  $region16: #{mcnet_forward.32} parent=0 // pred_region
    _
  $region17: #{mcnet_forward.32} parent=0 // pred_fallthru
    _
  // Predicated region
  $region18: #{mcnet_forward.32} parent=0 // pred_check
    _
  $region19: #{mcnet_forward.32} parent=0 // pred_check_branch
    %19 = sbr.rel (0) target = $region21
  $region20: #{mcnet_forward.32} parent=0 // pred_region
    _
  $region21: #{mcnet_forward.32} parent=0 // pred_fallthru
    _
  %v21 = vld [vmem:[%s0] sm:$0xff]
  %v22 = vld [vmem:[%s0 + $0x8] sm:$0xf]
  %v23 = vld [vmem:[%s1] sm:$0xf]
  %v24 = vld [vmem:[%s1 + $0x4] sm:$0xf]
  %v25 = vld [vmem:[%s1 + $0x8] sm:$0xf]
  %v26 = vld [vmem:[%s1 + $0xc] sm:$0xf]
  %v27 = vld [vmem:[%s1 + $0x10] sm:$0xf]
  %v28 = vld [vmem:[%s1 + $0x14] sm:$0xf]
  %v29 = vld [vmem:[%s1 + $0x18] sm:$0xf]
  %v30 = vld [vmem:[%s1 + $0x1c] sm:$0xf]
  %v31 = vld [vmem:[%s1 + $0x20] sm:$0xf]
  %v32 = vld [vmem:[%s1 + $0x24] sm:$0xf]
  %v33 = vld [vmem:[%s1 + $0x28] sm:$0xf]
  %v34 = vld [vmem:[%s1 + $0x2c] sm:$0xf]
  %v35 = vld [vmem:[%s1 + $0x30] sm:$0xf]
  %v36 = vld [vmem:[%s1 + $0x34] sm:$0xf]
  %v37 = vld [vmem:[%s1 + $0x38] sm:$0xf]
  %v38 = vld [vmem:[%s1 + $0x3c] sm:$0xf]
  %v39 = vld [vmem:[%s1 + $0x40] sm:$0xf]
  %v40 = vld [vmem:[%s1 + $0x44] sm:$0xf]
  %v41 = vld [vmem:[%s1 + $0x48] sm:$0xf]
  %v42 = vld [vmem:[%s1 + $0x4c] sm:$0xf]
  %v43 = vld [vmem:[%s1 + $0x50] sm:$0xf]
  %v44 = vld [vmem:[%s1 + $0x54] sm:$0xf]
  %v45 = vld [vmem:[%s1 + $0x58] sm:$0xf]
  %v46 = vld [vmem:[%s1 + $0x5c] sm:$0xf]
  %v47 = vld [vmem:[%s1 + $0x60] sm:$0xf]
  %v48 = vld [vmem:[%s1 + $0x64] sm:$0xf]
  %v49 = vld [vmem:[%s1 + $0x68] sm:$0xf]
  %v50 = vld [vmem:[%s1 + $0x6c] sm:$0xf]
  %v51 = vld [vmem:[%s1 + $0x70] sm:$0xf]
  %v52 = vld [vmem:[%s1 + $0x74] sm:$0xf]
  %v53 = vld [vmem:[%s1 + $0x78] sm:$0xf]
  %v54 = vld [vmem:[%s1 + $0x7c] sm:$0xf]
  %v55 = vld [vmem:[%s1 + $0x80] sm:$0xf]
  %v56 = vld [vmem:[%s1 + $0x84] sm:$0xf]
  %v57 = vld [vmem:[%s1 + $0x88] sm:$0xf]
  %v58 = vld [vmem:[%s1 + $0x8c] sm:$0xf]
  %v59 = vld [vmem:[%s2] sm:$0x1]
  %v61 = vlaneseq
  %v62 = vshrl.u32 %v61, 7
  %v63 = vsub.s32 0, %v62
  %v64 = vrot.slane %v59, %v63
  %v68 = vunpack.c.l.b16 %v21
  %v69 = vunpack.c.h.b16 %v21
  %v70 = vunpack.c.l.b16 %v22
  %v71 = vpack.c.b16 %v68, %v68
  %v72 = vpack.c.b16 %v69, %v69
  %v73 = vpack.c.b16 %v70, %v70
  %v112 = vunpack.c.l.b16 %v23
  %v113 = vunpack.c.l.b16 %v24
  %v114 = vunpack.c.l.b16 %v25
  %v115 = vunpack.c.l.b16 %v26
  %v116 = vunpack.c.l.b16 %v27
  %v117 = vunpack.c.l.b16 %v28
  %v118 = vunpack.c.l.b16 %v29
  %v119 = vunpack.c.l.b16 %v30
  %v120 = vunpack.c.l.b16 %v31
  %v121 = vunpack.c.l.b16 %v32
  %v122 = vunpack.c.l.b16 %v33
  %v123 = vunpack.c.l.b16 %v34
  %v124 = vunpack.c.l.b16 %v35
  %v125 = vunpack.c.l.b16 %v36
  %v126 = vunpack.c.l.b16 %v37
  %v127 = vunpack.c.l.b16 %v38
  %v128 = vunpack.c.l.b16 %v39
  %v129 = vunpack.c.l.b16 %v40
  %v130 = vunpack.c.l.b16 %v41
  %v131 = vunpack.c.l.b16 %v42
  %v132 = vunpack.c.l.b16 %v43
  %v133 = vunpack.c.l.b16 %v44
  %v134 = vunpack.c.l.b16 %v45
  %v135 = vunpack.c.l.b16 %v46
  %v136 = vunpack.c.l.b16 %v47
  %v137 = vunpack.c.l.b16 %v48
  %v138 = vunpack.c.l.b16 %v49
  %v139 = vunpack.c.l.b16 %v50
  %v140 = vunpack.c.l.b16 %v51
  %v141 = vunpack.c.l.b16 %v52
  %v142 = vunpack.c.l.b16 %v53
  %v143 = vunpack.c.l.b16 %v54
  %v144 = vunpack.c.l.b16 %v55
  %v145 = vunpack.c.l.b16 %v56
  %v146 = vunpack.c.l.b16 %v57
  %v147 = vunpack.c.l.b16 %v58
  %v148 = vpack.c.b16 %v113, %v112
  %v149 = vpack.c.b16 %v115, %v114
  %v150 = vpack.c.b16 %v117, %v116
  %v151 = vpack.c.b16 %v119, %v118
  %v152 = vpack.c.b16 %v121, %v120
  %v153 = vpack.c.b16 %v123, %v122
  %v154 = vpack.c.b16 %v125, %v124
  %v155 = vpack.c.b16 %v127, %v126
  %v156 = vpack.c.b16 %v129, %v128
  %v157 = vpack.c.b16 %v131, %v130
  %v158 = vpack.c.b16 %v133, %v132
  %v159 = vpack.c.b16 %v135, %v134
  %v160 = vpack.c.b16 %v137, %v136
  %v161 = vpack.c.b16 %v139, %v138
  %v162 = vpack.c.b16 %v141, %v140
  %v163 = vpack.c.b16 %v143, %v142
  %v164 = vpack.c.b16 %v145, %v144
  %v165 = vpack.c.b16 %v147, %v146
  %vm184 = vcmask 261120
  %v186 = vsel %vm184, %v73, 0
  %188 = vmatprep.subr.bf16.mxu0 0
  %189 = vmatpush1.bf16.msra.mxu0 %v148
  %190 = vmatprep.subr.bf16.mxu0 0
  %191 = vmatpush1.bf16.msra.mxu0 %v149
  %192 = vmatprep.subr.bf16.mxu0 0
  %193 = vmatpush1.bf16.msra.mxu0 %v150
  %194 = vmatprep.subr.bf16.mxu0 0
  %195 = vmatpush1.bf16.msra.mxu0 %v151
  %196 = vmatprep.subr.bf16.mxu0 0
  %197 = vmatpush1.bf16.msra.mxu0 %v152
  %198 = vmatprep.subr.bf16.mxu0 0
  %199 = vmatpush1.bf16.msra.mxu0 %v153
  %200 = vmatprep.subr.bf16.mxu0 0
  %201 = vmatpush1.bf16.msra.mxu0 %v154
  %202 = vmatprep.subr.bf16.mxu0 0
  %203 = vmatpush1.bf16.msra.mxu0 %v155
  %204 = vmatprep.subr.bf16.mxu0 0
  %205 = vmatpush1.bf16.msra.mxu0 %v156
  %206 = vmatprep.subr.bf16.mxu0 0
  %207 = vmatpush1.bf16.msra.mxu0 %v157
  %208 = vmatprep.subr.bf16.mxu0 0
  %209 = vmatpush1.bf16.msra.mxu0 %v158
  %210 = vmatprep.subr.bf16.mxu0 0
  %211 = vmatpush1.bf16.msra.mxu0 %v159
  %212 = vmatprep.subr.bf16.mxu0 0
  %213 = vmatpush1.bf16.msra.mxu0 %v160
  %214 = vmatprep.subr.bf16.mxu0 0
  %215 = vmatpush1.bf16.msra.mxu0 %v161
  %216 = vmatprep.subr.bf16.mxu0 0
  %217 = vmatpush1.bf16.msra.mxu0 %v162
  %218 = vmatprep.subr.bf16.mxu0 0
  %219 = vmatpush1.bf16.msra.mxu0 %v163
  %220 = vmatprep.mubr.bf16.mxu0 %v72
  %221 = vmatmul.mubr.bf16.gmra.mrb[0].mxu0 %v71
  %v222 = vpop.f32.mrb[0].mxu0
  %v223 = vadd.f32 %v64, %v222
  %v224 = vpop.f32.mrb[0].mxu0
  %v225 = vpop.f32.mrb[0].mxu0
  %v226 = vpop.f32.mrb[0].mxu0
  %227 = vdwg.mxu0
  %228 = vmatprep.subr.bf16.mxu0 0
  %229 = vmatpush1.bf16.msra.mxu0 %v164
  %230 = vmatprep.subr.bf16.mxu0 0
  %231 = vmatpush1.bf16.msra.mxu0 %v165
  %232 = vmatprep.subr.bf16.mxu0 0
  %233 = vmatpush1.bf16.msra.mxu0 0
  %234 = vmatprep.subr.bf16.mxu0 0
  %235 = vmatpush1.bf16.msra.mxu0 0
  %236 = vmatprep.subr.bf16.mxu0 0
  %237 = vmatpush1.bf16.msra.mxu0 0
  %238 = vmatprep.subr.bf16.mxu0 0
  %239 = vmatpush1.bf16.msra.mxu0 0
  %240 = vmatprep.subr.bf16.mxu0 0
  %241 = vmatpush1.bf16.msra.mxu0 0
  %242 = vmatprep.subr.bf16.mxu0 0
  %243 = vmatpush1.bf16.msra.mxu0 0
  %244 = vmatprep.subr.bf16.mxu0 0
  %245 = vmatpush1.bf16.msra.mxu0 0
  %246 = vmatprep.subr.bf16.mxu0 0
  %247 = vmatpush1.bf16.msra.mxu0 0
  %248 = vmatprep.subr.bf16.mxu0 0
  %249 = vmatpush1.bf16.msra.mxu0 0
  %250 = vmatprep.subr.bf16.mxu0 0
  %251 = vmatpush1.bf16.msra.mxu0 0
  %252 = vmatprep.subr.bf16.mxu0 0
  %253 = vmatpush1.bf16.msra.mxu0 0
  %254 = vmatprep.subr.bf16.mxu0 0
  %255 = vmatpush1.bf16.msra.mxu0 0
  %256 = vmatprep.subr.bf16.mxu0 0
  %257 = vmatpush1.bf16.msra.mxu0 0
  %258 = vmatprep.subr.bf16.mxu0 0
  %259 = vmatpush1.bf16.msra.mxu0 0
  %260 = vmatprep.mubr.bf16.mxu0 0
  %261 = vmatmul.mubr.bf16.gmra.mrb[0].mxu0 %v186
  %v262 = vpop.f32.mrb[0].mxu0
  %v263 = vadd.f32 %v223, %v262
  %v264 = vpop.f32.mrb[0].mxu0
  %v265 = vpop.f32.mrb[0].mxu0
  %v266 = vpop.f32.mrb[0].mxu0
  %267 = vdwg.mxu0
  %v268 = vmax.f32 %v263, 0.0
  %v269 = vld [vmem:[%s3] sm:$0x1]
  %v271 = vlaneseq
  %v272 = vshrl.u32 %v271, 7
  %v273 = vsub.s32 0, %v272
  %v274 = vrot.slane %v269, %v273
  %v276 = vmul.f32 %v268, %v274
  %v277 = vld [vmem:[%s4] sm:$0x1]
  %v279 = vlaneseq
  %v280 = vshrl.u32 %v279, 7
  %v281 = vsub.s32 0, %v280
  %v282 = vrot.slane %v277, %v281
  %v284 = vadd.f32 %v276, %v282
  %285 = vst [vmem:[%s5] sm:$0xff] %v284
  // Predicated region
  $region22: #{mcnet_forward.32} parent=0 // pred_check
    _
  $region23: #{mcnet_forward.32} parent=0 // pred_check_branch
    %287 = sbr.rel (0) target = $region25
  $region24: #{mcnet_forward.32} parent=0 // pred_region
    _
  $region25: #{mcnet_forward.32} parent=0 // pred_fallthru
    _
  // Predicated region
  $region26: #{mcnet_forward.32} parent=0 // pred_check
    _
  $region27: #{mcnet_forward.32} parent=0 // pred_check_branch
    %289 = sbr.rel (0) target = $region29
  $region28: #{mcnet_forward.32} parent=0 // pred_region
    _
  $region29: #{mcnet_forward.32} parent=0 // pred_fallthru
    _

// kernel: mcnet_forward.41
$region0: #{mcnet_forward.41}
  #allocation0 [shape = 'u32[]', space=smem, size = 0x4, offset = 0x4, fixed_abs, tag = 'smem constant byte address 0x4 - core index']
  #allocation1 [shape = 'u32[144,128]{1,0:T(1,128)}', space=vmem, size = 0x12000, scoped, tag = 'internal scratch']
  %s0 = inlined_call_operand.vmem [shape: bf16[4,128], index: 0, kind: input, shape index: {}]
  %s1 = inlined_call_operand.vmem [shape: bf16[128,64], index: 1, kind: input, shape index: {}]
  %s2 = inlined_call_operand.vmem [shape: f32[1,64], index: 2, kind: input, shape index: {}]
  %s3 = inlined_call_operand.vmem [shape: f32[1,64], index: 3, kind: input, shape index: {}]
  %s4 = inlined_call_operand.vmem [shape: f32[1,64], index: 4, kind: input, shape index: {}]
  %s5 = inlined_call_operand.vmem [shape: f32[4,64], index: 5, kind: output, shape index: {}]
  %s6 = sld [smem:[#allocation0]]
  $region30: #{mcnet_forward.41} parent=0
    _
  %s8 = ssub.s32 1, %s6
  %s9 = scalar_select 0, %s8, %s6
  // Predicated region
  $region2: #{mcnet_forward.41} parent=0 // pred_check
    _
  $region3: #{mcnet_forward.41} parent=0 // pred_check_branch
    %11 = sbr.rel (0) target = $region5
  $region4: #{mcnet_forward.41} parent=0 // pred_region
    _
  $region5: #{mcnet_forward.41} parent=0 // pred_fallthru
    _
  // Predicated region
  $region6: #{mcnet_forward.41} parent=0 // pred_check
    _
  $region7: #{mcnet_forward.41} parent=0 // pred_check_branch
    %13 = sbr.rel (0) target = $region9
  $region8: #{mcnet_forward.41} parent=0 // pred_region
    _
  $region9: #{mcnet_forward.41} parent=0 // pred_fallthru
    _
  // Predicated region
  $region10: #{mcnet_forward.41} parent=0 // pred_check
    _
  $region11: #{mcnet_forward.41} parent=0 // pred_check_branch
    %15 = sbr.rel (0) target = $region13
  $region12: #{mcnet_forward.41} parent=0 // pred_region
    _
  $region13: #{mcnet_forward.41} parent=0 // pred_fallthru
    _
  // Predicated region
  $region14: #{mcnet_forward.41} parent=0 // pred_check
    _
  $region15: #{mcnet_forward.41} parent=0 // pred_check_branch
    %17 = sbr.rel (0) target = $region17
  $region16: #{mcnet_forward.41} parent=0 // pred_region
    _
  $region17: #{mcnet_forward.41} parent=0 // pred_fallthru
    _
  // Predicated region
  $region18: #{mcnet_forward.41} parent=0 // pred_check
    _
  $region19: #{mcnet_forward.41} parent=0 // pred_check_branch
    %19 = sbr.rel (0) target = $region21
  $region20: #{mcnet_forward.41} parent=0 // pred_region
    _
  $region21: #{mcnet_forward.41} parent=0 // pred_fallthru
    _
  %v21 = vld [vmem:[%s0] sm:$0x3]
  %v22 = vld [vmem:[%s1] sm:$0xf]
  %v23 = vld [vmem:[%s1 + $0x4] sm:$0xf]
  %v24 = vld [vmem:[%s1 + $0x8] sm:$0xf]
  %v25 = vld [vmem:[%s1 + $0xc] sm:$0xf]
  %v26 = vld [vmem:[%s1 + $0x10] sm:$0xf]
  %v27 = vld [vmem:[%s1 + $0x14] sm:$0xf]
  %v28 = vld [vmem:[%s1 + $0x18] sm:$0xf]
  %v29 = vld [vmem:[%s1 + $0x1c] sm:$0xf]
  %v30 = vld [vmem:[%s1 + $0x20] sm:$0xf]
  %v31 = vld [vmem:[%s1 + $0x24] sm:$0xf]
  %v32 = vld [vmem:[%s1 + $0x28] sm:$0xf]
  %v33 = vld [vmem:[%s1 + $0x2c] sm:$0xf]
  %v34 = vld [vmem:[%s1 + $0x30] sm:$0xf]
  %v35 = vld [vmem:[%s1 + $0x34] sm:$0xf]
  %v36 = vld [vmem:[%s1 + $0x38] sm:$0xf]
  %v37 = vld [vmem:[%s1 + $0x3c] sm:$0xf]
  %v38 = vld [vmem:[%s2] sm:$0x1]
  %v40 = vlaneseq
  %v41 = vshrl.u32 %v40, 7
  %v42 = vsub.s32 0, %v41
  %v43 = vrot.slane %v38, %v42
  %v61 = vunpack.c.l.b16 %v22
  %v62 = vunpack.c.l.b16 %v23
  %v63 = vunpack.c.l.b16 %v24
  %v64 = vunpack.c.l.b16 %v25
  %v65 = vunpack.c.l.b16 %v26
  %v66 = vunpack.c.l.b16 %v27
  %v67 = vunpack.c.l.b16 %v28
  %v68 = vunpack.c.l.b16 %v29
  %v69 = vunpack.c.l.b16 %v30
  %v70 = vunpack.c.l.b16 %v31
  %v71 = vunpack.c.l.b16 %v32
  %v72 = vunpack.c.l.b16 %v33
  %v73 = vunpack.c.l.b16 %v34
  %v74 = vunpack.c.l.b16 %v35
  %v75 = vunpack.c.l.b16 %v36
  %v76 = vunpack.c.l.b16 %v37
  %v77 = vpack.c.b16 %v62, %v61
  %v78 = vpack.c.b16 %v64, %v63
  %v79 = vpack.c.b16 %v66, %v65
  %v80 = vpack.c.b16 %v68, %v67
  %v81 = vpack.c.b16 %v70, %v69
  %v82 = vpack.c.b16 %v72, %v71
  %v83 = vpack.c.b16 %v74, %v73
  %v84 = vpack.c.b16 %v76, %v75
  %93 = vmatprep.subr.bf16.mxu0 0
  %94 = vmatpush1.bf16.msra.mxu0 %v77
  %95 = vmatprep.subr.bf16.mxu0 0
  %96 = vmatpush1.bf16.msra.mxu0 %v78
  %97 = vmatprep.subr.bf16.mxu0 0
  %98 = vmatpush1.bf16.msra.mxu0 %v79
  %99 = vmatprep.subr.bf16.mxu0 0
  %100 = vmatpush1.bf16.msra.mxu0 %v80
  %101 = vmatprep.subr.bf16.mxu0 0
  %102 = vmatpush1.bf16.msra.mxu0 %v81
  %103 = vmatprep.subr.bf16.mxu0 0
  %104 = vmatpush1.bf16.msra.mxu0 %v82
  %105 = vmatprep.subr.bf16.mxu0 0
  %106 = vmatpush1.bf16.msra.mxu0 %v83
  %107 = vmatprep.subr.bf16.mxu0 0
  %108 = vmatpush1.bf16.msra.mxu0 %v84
  %109 = vmatprep.subr.bf16.mxu0 0
  %110 = vmatpush1.bf16.msra.mxu0 0
  %111 = vmatprep.subr.bf16.mxu0 0
  %112 = vmatpush1.bf16.msra.mxu0 0
  %113 = vmatprep.subr.bf16.mxu0 0
  %114 = vmatpush1.bf16.msra.mxu0 0
  %115 = vmatprep.subr.bf16.mxu0 0
  %116 = vmatpush1.bf16.msra.mxu0 0
  %117 = vmatprep.subr.bf16.mxu0 0
  %118 = vmatpush1.bf16.msra.mxu0 0
  %119 = vmatprep.subr.bf16.mxu0 0
  %120 = vmatpush1.bf16.msra.mxu0 0
  %121 = vmatprep.subr.bf16.mxu0 0
  %122 = vmatpush1.bf16.msra.mxu0 0
  %123 = vmatprep.subr.bf16.mxu0 0
  %124 = vmatpush1.bf16.msra.mxu0 0
  %125 = vmatprep.mubr.bf16.mxu0 0
  %126 = vmatmul.mubr.bf16.gmra.mrb[0].mxu0 %v21
  %v127 = vpop.f32.mrb[0].mxu0
  %v128 = vadd.f32 %v43, %v127
  %v129 = vpop.f32.mrb[0].mxu0
  %v130 = vpop.f32.mrb[0].mxu0
  %v131 = vpop.f32.mrb[0].mxu0
  %132 = vdwg.mxu0
  %v133 = vmax.f32 %v128, 0.0
  %v134 = vld [vmem:[%s3] sm:$0x1]
  %v136 = vlaneseq
  %v137 = vshrl.u32 %v136, 7
  %v138 = vsub.s32 0, %v137
  %v139 = vrot.slane %v134, %v138
  %v141 = vmul.f32 %v133, %v139
  %v142 = vld [vmem:[%s4] sm:$0x1]
  %v144 = vlaneseq
  %v145 = vshrl.u32 %v144, 7
  %v146 = vsub.s32 0, %v145
  %v147 = vrot.slane %v142, %v146
  %v149 = vadd.f32 %v141, %v147
  %vm150 = vcmask 519168
  %151 = vst.msk [vmem:[%s5] sm:$0xf] %vm150, %v149
  // Predicated region
  $region22: #{mcnet_forward.41} parent=0 // pred_check
    _
  $region23: #{mcnet_forward.41} parent=0 // pred_check_branch
    %153 = sbr.rel (0) target = $region25
  $region24: #{mcnet_forward.41} parent=0 // pred_region
    _
  $region25: #{mcnet_forward.41} parent=0 // pred_fallthru
    _
  // Predicated region
  $region26: #{mcnet_forward.41} parent=0 // pred_check
    _
  $region27: #{mcnet_forward.41} parent=0 // pred_check_branch
    %155 = sbr.rel (0) target = $region29
  $region28: #{mcnet_forward.41} parent=0 // pred_region
    _
  $region29: #{mcnet_forward.41} parent=0 // pred_fallthru
    _

// kernel: mcnet_forward.35
$region0: #{mcnet_forward.35}
  #allocation0 [shape = 'u32[]', space=smem, size = 0x4, offset = 0x4, fixed_abs, tag = 'smem constant byte address 0x4 - core index']
  #allocation1 [shape = 'u32[144,128]{1,0:T(1,128)}', space=vmem, size = 0x12000, scoped, tag = 'internal scratch']
  %s0 = inlined_call_operand.vmem [shape: bf16[4,96], index: 0, kind: input, shape index: {}]
  %s1 = inlined_call_operand.vmem [shape: bf16[96,80], index: 1, kind: input, shape index: {}]
  %s2 = inlined_call_operand.vmem [shape: f32[1,80], index: 2, kind: input, shape index: {}]
  %s3 = inlined_call_operand.vmem [shape: f32[1,80], index: 3, kind: input, shape index: {}]
  %s4 = inlined_call_operand.vmem [shape: f32[1,80], index: 4, kind: input, shape index: {}]
  %s5 = inlined_call_operand.vmem [shape: f32[4,80], index: 5, kind: output, shape index: {}]
  %s6 = sld [smem:[#allocation0]]
  $region30: #{mcnet_forward.35} parent=0
    _
  %s8 = ssub.s32 1, %s6
  %s9 = scalar_select 0, %s8, %s6
  // Predicated region
  $region2: #{mcnet_forward.35} parent=0 // pred_check
    _
  $region3: #{mcnet_forward.35} parent=0 // pred_check_branch
    %11 = sbr.rel (0) target = $region5
  $region4: #{mcnet_forward.35} parent=0 // pred_region
    _
  $region5: #{mcnet_forward.35} parent=0 // pred_fallthru
    _
  // Predicated region
  $region6: #{mcnet_forward.35} parent=0 // pred_check
    _
  $region7: #{mcnet_forward.35} parent=0 // pred_check_branch
    %13 = sbr.rel (0) target = $region9
  $region8: #{mcnet_forward.35} parent=0 // pred_region
    _
  $region9: #{mcnet_forward.35} parent=0 // pred_fallthru
    _
  // Predicated region
  $region10: #{mcnet_forward.35} parent=0 // pred_check
    _
  $region11: #{mcnet_forward.35} parent=0 // pred_check_branch
    %15 = sbr.rel (0) target = $region13
  $region12: #{mcnet_forward.35} parent=0 // pred_region
    _
  $region13: #{mcnet_forward.35} parent=0 // pred_fallthru
    _
  // Predicated region
  $region14: #{mcnet_forward.35} parent=0 // pred_check
    _
  $region15: #{mcnet_forward.35} parent=0 // pred_check_branch
    %17 = sbr.rel (0) target = $region17
  $region16: #{mcnet_forward.35} parent=0 // pred_region
    _
  $region17: #{mcnet_forward.35} parent=0 // pred_fallthru
    _
  // Predicated region
  $region18: #{mcnet_forward.35} parent=0 // pred_check
    _
  $region19: #{mcnet_forward.35} parent=0 // pred_check_branch
    %19 = sbr.rel (0) target = $region21
  $region20: #{mcnet_forward.35} parent=0 // pred_region
    _
  $region21: #{mcnet_forward.35} parent=0 // pred_fallthru
    _
  %v21 = vld [vmem:[%s0] sm:$0x3]
  %v22 = vld [vmem:[%s1] sm:$0xf]
  %v23 = vld [vmem:[%s1 + $0x4] sm:$0xf]
  %v24 = vld [vmem:[%s1 + $0x8] sm:$0xf]
  %v25 = vld [vmem:[%s1 + $0xc] sm:$0xf]
  %v26 = vld [vmem:[%s1 + $0x10] sm:$0xf]
  %v27 = vld [vmem:[%s1 + $0x14] sm:$0xf]
  %v28 = vld [vmem:[%s1 + $0x18] sm:$0xf]
  %v29 = vld [vmem:[%s1 + $0x1c] sm:$0xf]
  %v30 = vld [vmem:[%s1 + $0x20] sm:$0xf]
  %v31 = vld [vmem:[%s1 + $0x24] sm:$0xf]
  %v32 = vld [vmem:[%s1 + $0x28] sm:$0xf]
  %v33 = vld [vmem:[%s1 + $0x2c] sm:$0xf]
  %v34 = vld [vmem:[%s2] sm:$0x1]
  %v36 = vlaneseq
  %v37 = vshrl.u32 %v36, 7
  %v38 = vsub.s32 0, %v37
  %v39 = vrot.slane %v34, %v38
  %v53 = vunpack.c.l.b16 %v22
  %v54 = vunpack.c.l.b16 %v23
  %v55 = vunpack.c.l.b16 %v24
  %v56 = vunpack.c.l.b16 %v25
  %v57 = vunpack.c.l.b16 %v26
  %v58 = vunpack.c.l.b16 %v27
  %v59 = vunpack.c.l.b16 %v28
  %v60 = vunpack.c.l.b16 %v29
  %v61 = vunpack.c.l.b16 %v30
  %v62 = vunpack.c.l.b16 %v31
  %v63 = vunpack.c.l.b16 %v32
  %v64 = vunpack.c.l.b16 %v33
  %v65 = vpack.c.b16 %v54, %v53
  %v66 = vpack.c.b16 %v56, %v55
  %v67 = vpack.c.b16 %v58, %v57
  %v68 = vpack.c.b16 %v60, %v59
  %v69 = vpack.c.b16 %v62, %v61
  %v70 = vpack.c.b16 %v64, %v63
  %vm77 = vcmask 785408
  %v79 = vsel %vm77, %v21, 0
  %81 = vmatprep.subr.bf16.mxu0 0
  %82 = vmatpush1.bf16.msra.mxu0 %v65
  %83 = vmatprep.subr.bf16.mxu0 0
  %84 = vmatpush1.bf16.msra.mxu0 %v66
  %85 = vmatprep.subr.bf16.mxu0 0
  %86 = vmatpush1.bf16.msra.mxu0 %v67
  %87 = vmatprep.subr.bf16.mxu0 0
  %88 = vmatpush1.bf16.msra.mxu0 %v68
  %89 = vmatprep.subr.bf16.mxu0 0
  %90 = vmatpush1.bf16.msra.mxu0 %v69
  %91 = vmatprep.subr.bf16.mxu0 0
  %92 = vmatpush1.bf16.msra.mxu0 %v70
  %93 = vmatprep.subr.bf16.mxu0 0
  %94 = vmatpush1.bf16.msra.mxu0 0
  %95 = vmatprep.subr.bf16.mxu0 0
  %96 = vmatpush1.bf16.msra.mxu0 0
  %97 = vmatprep.subr.bf16.mxu0 0
  %98 = vmatpush1.bf16.msra.mxu0 0
  %99 = vmatprep.subr.bf16.mxu0 0
  %100 = vmatpush1.bf16.msra.mxu0 0
  %101 = vmatprep.subr.bf16.mxu0 0
  %102 = vmatpush1.bf16.msra.mxu0 0
  %103 = vmatprep.subr.bf16.mxu0 0
  %104 = vmatpush1.bf16.msra.mxu0 0
  %105 = vmatprep.subr.bf16.mxu0 0
  %106 = vmatpush1.bf16.msra.mxu0 0
  %107 = vmatprep.subr.bf16.mxu0 0
  %108 = vmatpush1.bf16.msra.mxu0 0
  %109 = vmatprep.subr.bf16.mxu0 0
  %110 = vmatpush1.bf16.msra.mxu0 0
  %111 = vmatprep.subr.bf16.mxu0 0
  %112 = vmatpush1.bf16.msra.mxu0 0
  %113 = vmatprep.mubr.bf16.mxu0 0
  %114 = vmatmul.mubr.bf16.gmra.mrb[0].mxu0 %v79
  %v115 = vpop.f32.mrb[0].mxu0
  %v116 = vadd.f32 %v39, %v115
  %v117 = vpop.f32.mrb[0].mxu0
  %v118 = vpop.f32.mrb[0].mxu0
  %v119 = vpop.f32.mrb[0].mxu0
  %120 = vdwg.mxu0
  %v121 = vmax.f32 %v116, 0.0
  %v122 = vld [vmem:[%s3] sm:$0x1]
  %v124 = vlaneseq
  %v125 = vshrl.u32 %v124, 7
  %v126 = vsub.s32 0, %v125
  %v127 = vrot.slane %v122, %v126
  %v129 = vmul.f32 %v121, %v127
  %v130 = vld [vmem:[%s4] sm:$0x1]
  %v132 = vlaneseq
  %v133 = vshrl.u32 %v132, 7
  %v134 = vsub.s32 0, %v133
  %v135 = vrot.slane %v130, %v134
  %v137 = vadd.f32 %v129, %v135
  %vm138 = vcmask 650240
  %139 = vst.msk [vmem:[%s5] sm:$0xf] %vm138, %v137
  // Predicated region
  $region22: #{mcnet_forward.35} parent=0 // pred_check
    _
  $region23: #{mcnet_forward.35} parent=0 // pred_check_branch
    %141 = sbr.rel (0) target = $region25
  $region24: #{mcnet_forward.35} parent=0 // pred_region
    _
  $region25: #{mcnet_forward.35} parent=0 // pred_fallthru
    _
  // Predicated region
  $region26: #{mcnet_forward.35} parent=0 // pred_check
    _
  $region27: #{mcnet_forward.35} parent=0 // pred_check_branch
    %143 = sbr.rel (0) target = $region29
  $region28: #{mcnet_forward.35} parent=0 // pred_region
    _
  $region29: #{mcnet_forward.35} parent=0 // pred_fallthru
    _

// kernel: mcnet_forward.42
$region0: #{mcnet_forward.42}
  #allocation0 [shape = 'u32[]', space=smem, size = 0x4, offset = 0x4, fixed_abs, tag = 'smem constant byte address 0x4 - core index']
  #allocation1 [shape = 'u32[144,128]{1,0:T(1,128)}', space=vmem, size = 0x12000, scoped, tag = 'internal scratch']
  %s0 = inlined_call_operand.vmem [shape: bf16[4,576], index: 0, kind: input, shape index: {}]
  %s1 = inlined_call_operand.vmem [shape: bf16[576,384], index: 1, kind: input, shape index: {}]
  %s2 = inlined_call_operand.vmem [shape: f32[1,384], index: 2, kind: input, shape index: {}]
  %s3 = inlined_call_operand.vmem [shape: f32[1,384], index: 3, kind: input, shape index: {}]
  %s4 = inlined_call_operand.vmem [shape: f32[1,384], index: 4, kind: input, shape index: {}]
  %s5 = inlined_call_operand.vmem [shape: f32[4,384], index: 5, kind: output, shape index: {}]
  %s6 = sld [smem:[#allocation0]]
  $region30: #{mcnet_forward.42} parent=0
    _
  %s8 = ssub.s32 1, %s6
  %s9 = scalar_select 0, %s8, %s6
  // Predicated region
  $region2: #{mcnet_forward.42} parent=0 // pred_check
    _
  $region3: #{mcnet_forward.42} parent=0 // pred_check_branch
    %11 = sbr.rel (0) target = $region5
  $region4: #{mcnet_forward.42} parent=0 // pred_region
    _
  $region5: #{mcnet_forward.42} parent=0 // pred_fallthru
    _
  // Predicated region
  $region6: #{mcnet_forward.42} parent=0 // pred_check
    _
  $region7: #{mcnet_forward.42} parent=0 // pred_check_branch
    %13 = sbr.rel (0) target = $region9
  $region8: #{mcnet_forward.42} parent=0 // pred_region
    _
  $region9: #{mcnet_forward.42} parent=0 // pred_fallthru
    _
  // Predicated region
  $region10: #{mcnet_forward.42} parent=0 // pred_check
    _
  $region11: #{mcnet_forward.42} parent=0 // pred_check_branch
    %15 = sbr.rel (0) target = $region13
  $region12: #{mcnet_forward.42} parent=0 // pred_region
    _
  $region13: #{mcnet_forward.42} parent=0 // pred_fallthru
    _
  // Predicated region
  $region14: #{mcnet_forward.42} parent=0 // pred_check
    _
  $region15: #{mcnet_forward.42} parent=0 // pred_check_branch
    %17 = sbr.rel (0) target = $region17
  $region16: #{mcnet_forward.42} parent=0 // pred_region
    _
  $region17: #{mcnet_forward.42} parent=0 // pred_fallthru
    _
  // Predicated region
  $region18: #{mcnet_forward.42} parent=0 // pred_check
    _
  $region19: #{mcnet_forward.42} parent=0 // pred_check_branch
    %19 = sbr.rel (0) target = $region21
  $region20: #{mcnet_forward.42} parent=0 // pred_region
    _
  $region21: #{mcnet_forward.42} parent=0 // pred_fallthru
    _
  %v21 = vld [vmem:[%s0] sm:$0xff]
  %v22 = vld [vmem:[%s0 + $0x8] sm:$0x3]
  %v23 = vld [vmem:[%s1] sm:$0xff]
  %v24 = vld [vmem:[%s1 + $0x8] sm:$0xf]
  %v25 = vld [vmem:[%s1 + $0xc] sm:$0xff]
  %v26 = vld [vmem:[%s1 + $0x14] sm:$0xf]
  %v27 = vld [vmem:[%s1 + $0x18] sm:$0xff]
  %v28 = vld [vmem:[%s1 + $0x20] sm:$0xf]
  %v29 = vld [vmem:[%s1 + $0x24] sm:$0xff]
  %v30 = vld [vmem:[%s1 + $0x2c] sm:$0xf]
  %v31 = vld [vmem:[%s1 + $0x30] sm:$0xff]
  %v32 = vld [vmem:[%s1 + $0x38] sm:$0xf]
  %v33 = vld [vmem:[%s1 + $0x3c] sm:$0xff]
  %v34 = vld [vmem:[%s1 + $0x44] sm:$0xf]
  %v35 = vld [vmem:[%s1 + $0x48] sm:$0xff]
  %v36 = vld [vmem:[%s1 + $0x50] sm:$0xf]
  %v37 = vld [vmem:[%s1 + $0x54] sm:$0xff]
  %v38 = vld [vmem:[%s1 + $0x5c] sm:$0xf]
  %v39 = vld [vmem:[%s1 + $0x60] sm:$0xff]
  %v40 = vld [vmem:[%s1 + $0x68] sm:$0xf]
  %v41 = vld [vmem:[%s1 + $0x6c] sm:$0xff]
  %v42 = vld [vmem:[%s1 + $0x74] sm:$0xf]
  %v43 = vld [vmem:[%s1 + $0x78] sm:$0xff]
  %v44 = vld [vmem:[%s1 + $0x80] sm:$0xf]
  %v45 = vld [vmem:[%s1 + $0x84] sm:$0xff]
  %v46 = vld [vmem:[%s1 + $0x8c] sm:$0xf]
  %v47 = vld [vmem:[%s1 + $0x90] sm:$0xff]
  %v48 = vld [vmem:[%s1 + $0x98] sm:$0xf]
  %v49 = vld [vmem:[%s1 + $0x9c] sm:$0xff]
  %v50 = vld [vmem:[%s1 + $0xa4] sm:$0xf]
  %v51 = vld [vmem:[%s1 + $0xa8] sm:$0xff]
  %v52 = vld [vmem:[%s1 + $0xb0] sm:$0xf]
  %v53 = vld [vmem:[%s1 + $0xb4] sm:$0xff]
  %v54 = vld [vmem:[%s1 + $0xbc] sm:$0xf]
  %v55 = vld [vmem:[%s1 + $0xc0] sm:$0xff]
  %v56 = vld [vmem:[%s1 + $0xc8] sm:$0xf]
  %v57 = vld [vmem:[%s1 + $0xcc] sm:$0xff]
  %v58 = vld [vmem:[%s1 + $0xd4] sm:$0xf]
  %v59 = vld [vmem:[%s1 + $0xd8] sm:$0xff]
  %v60 = vld [vmem:[%s1 + $0xe0] sm:$0xf]
  %v61 = vld [vmem:[%s1 + $0xe4] sm:$0xff]
  %v62 = vld [vmem:[%s1 + $0xec] sm:$0xf]
  %v63 = vld [vmem:[%s1 + $0xf0] sm:$0xff]
  %v64 = vld [vmem:[%s1 + $0xf8] sm:$0xf]
  %v65 = vld [vmem:[%s1 + $0xfc] sm:$0xff]
  %v66 = vld [vmem:[%s1 + $0x104] sm:$0xf]
  %v67 = vld [vmem:[%s1 + $0x108] sm:$0xff]
  %v68 = vld [vmem:[%s1 + $0x110] sm:$0xf]
  %v69 = vld [vmem:[%s1 + $0x114] sm:$0xff]
  %v70 = vld [vmem:[%s1 + $0x11c] sm:$0xf]
  %v71 = vld [vmem:[%s1 + $0x120] sm:$0xff]
  %v72 = vld [vmem:[%s1 + $0x128] sm:$0xf]
  %v73 = vld [vmem:[%s1 + $0x12c] sm:$0xff]
  %v74 = vld [vmem:[%s1 + $0x134] sm:$0xf]
  %v75 = vld [vmem:[%s1 + $0x138] sm:$0xff]
  %v76 = vld [vmem:[%s1 + $0x140] sm:$0xf]
  %v77 = vld [vmem:[%s1 + $0x144] sm:$0xff]
  %v78 = vld [vmem:[%s1 + $0x14c] sm:$0xf]
  %v79 = vld [vmem:[%s1 + $0x150] sm:$0xff]
  %v80 = vld [vmem:[%s1 + $0x158] sm:$0xf]
  %v81 = vld [vmem:[%s1 + $0x15c] sm:$0xff]
  %v82 = vld [vmem:[%s1 + $0x164] sm:$0xf]
  %v83 = vld [vmem:[%s1 + $0x168] sm:$0xff]
  %v84 = vld [vmem:[%s1 + $0x170] sm:$0xf]
  %v85 = vld [vmem:[%s1 + $0x174] sm:$0xff]
  %v86 = vld [vmem:[%s1 + $0x17c] sm:$0xf]
  %v87 = vld [vmem:[%s1 + $0x180] sm:$0xff]
  %v88 = vld [vmem:[%s1 + $0x188] sm:$0xf]
  %v89 = vld [vmem:[%s1 + $0x18c] sm:$0xff]
  %v90 = vld [vmem:[%s1 + $0x194] sm:$0xf]
  %v91 = vld [vmem:[%s1 + $0x198] sm:$0xff]
  %v92 = vld [vmem:[%s1 + $0x1a0] sm:$0xf]
  %v93 = vld [vmem:[%s1 + $0x1a4] sm:$0xff]
  %v94 = vld [vmem:[%s1 + $0x1ac] sm:$0xf]
  %v95 = vld [vmem:[%s1 + $0x1b0] sm:$0xff]
  %v96 = vld [vmem:[%s1 + $0x1b8] sm:$0xf]
  %v97 = vld [vmem:[%s1 + $0x1bc] sm:$0xff]
  %v98 = vld [vmem:[%s1 + $0x1c4] sm:$0xf]
  %v99 = vld [vmem:[%s1 + $0x1c8] sm:$0xff]
  %v100 = vld [vmem:[%s1 + $0x1d0] sm:$0xf]
  %v101 = vld [vmem:[%s1 + $0x1d4] sm:$0xff]
  %v102 = vld [vmem:[%s1 + $0x1dc] sm:$0xf]
  %v103 = vld [vmem:[%s1 + $0x1e0] sm:$0xff]
  %v104 = vld [vmem:[%s1 + $0x1e8] sm:$0xf]
  %v105 = vld [vmem:[%s1 + $0x1ec] sm:$0xff]
  %v106 = vld [vmem:[%s1 + $0x1f4] sm:$0xf]
  %v107 = vld [vmem:[%s1 + $0x1f8] sm:$0xff]
  %v108 = vld [vmem:[%s1 + $0x200] sm:$0xf]
  %v109 = vld [vmem:[%s1 + $0x204] sm:$0xff]
  %v110 = vld [vmem:[%s1 + $0x20c] sm:$0xf]
  %v111 = vld [vmem:[%s1 + $0x210] sm:$0xff]
  %v112 = vld [vmem:[%s1 + $0x218] sm:$0xf]
  %v113 = vld [vmem:[%s1 + $0x21c] sm:$0xff]
  %v114 = vld [vmem:[%s1 + $0x224] sm:$0xf]
  %v115 = vld [vmem:[%s1 + $0x228] sm:$0xff]
  %v116 = vld [vmem:[%s1 + $0x230] sm:$0xf]
  %v117 = vld [vmem:[%s1 + $0x234] sm:$0xff]
  %v118 = vld [vmem:[%s1 + $0x23c] sm:$0xf]
  %v119 = vld [vmem:[%s1 + $0x240] sm:$0xff]
  %v120 = vld [vmem:[%s1 + $0x248] sm:$0xf]
  %v121 = vld [vmem:[%s1 + $0x24c] sm:$0xff]
  %v122 = vld [vmem:[%s1 + $0x254] sm:$0xf]
  %v123 = vld [vmem:[%s1 + $0x258] sm:$0xff]
  %v124 = vld [vmem:[%s1 + $0x260] sm:$0xf]
  %v125 = vld [vmem:[%s1 + $0x264] sm:$0xff]
  %v126 = vld [vmem:[%s1 + $0x26c] sm:$0xf]
  %v127 = vld [vmem:[%s1 + $0x270] sm:$0xff]
  %v128 = vld [vmem:[%s1 + $0x278] sm:$0xf]
  %v129 = vld [vmem:[%s1 + $0x27c] sm:$0xff]
  %v130 = vld [vmem:[%s1 + $0x284] sm:$0xf]
  %v131 = vld [vmem:[%s1 + $0x288] sm:$0xff]
  %v132 = vld [vmem:[%s1 + $0x290] sm:$0xf]
  %v133 = vld [vmem:[%s1 + $0x294] sm:$0xff]
  %v134 = vld [vmem:[%s1 + $0x29c] sm:$0xf]
  %v135 = vld [vmem:[%s1 + $0x2a0] sm:$0xff]
  %v136 = vld [vmem:[%s1 + $0x2a8] sm:$0xf]
  %v137 = vld [vmem:[%s1 + $0x2ac] sm:$0xff]
  %v138 = vld [vmem:[%s1 + $0x2b4] sm:$0xf]
  %v139 = vld [vmem:[%s1 + $0x2b8] sm:$0xff]
  %v140 = vld [vmem:[%s1 + $0x2c0] sm:$0xf]
  %v141 = vld [vmem:[%s1 + $0x2c4] sm:$0xff]
  %v142 = vld [vmem:[%s1 + $0x2cc] sm:$0xf]
  %v143 = vld [vmem:[%s1 + $0x2d0] sm:$0xff]
  %v144 = vld [vmem:[%s1 + $0x2d8] sm:$0xf]
  %v145 = vld [vmem:[%s1 + $0x2dc] sm:$0xff]
  %v146 = vld [vmem:[%s1 + $0x2e4] sm:$0xf]
  %v147 = vld [vmem:[%s1 + $0x2e8] sm:$0xff]
  %v148 = vld [vmem:[%s1 + $0x2f0] sm:$0xf]
  %v149 = vld [vmem:[%s1 + $0x2f4] sm:$0xff]
  %v150 = vld [vmem:[%s1 + $0x2fc] sm:$0xf]
  %v151 = vld [vmem:[%s1 + $0x300] sm:$0xff]
  %v152 = vld [vmem:[%s1 + $0x308] sm:$0xf]
  %v153 = vld [vmem:[%s1 + $0x30c] sm:$0xff]
  %v154 = vld [vmem:[%s1 + $0x314] sm:$0xf]
  %v155 = vld [vmem:[%s1 + $0x318] sm:$0xff]
  %v156 = vld [vmem:[%s1 + $0x320] sm:$0xf]
  %v157 = vld [vmem:[%s1 + $0x324] sm:$0xff]
  %v158 = vld [vmem:[%s1 + $0x32c] sm:$0xf]
  %v159 = vld [vmem:[%s1 + $0x330] sm:$0xff]
  %v160 = vld [vmem:[%s1 + $0x338] sm:$0xf]
  %v161 = vld [vmem:[%s1 + $0x33c] sm:$0xff]
  %v162 = vld [vmem:[%s1 + $0x344] sm:$0xf]
  %v163 = vld [vmem:[%s1 + $0x348] sm:$0xff]
  %v164 = vld [vmem:[%s1 + $0x350] sm:$0xf]
  %v165 = vld [vmem:[%s1 + $0x354] sm:$0xff]
  %v166 = vld [vmem:[%s1 + $0x35c] sm:$0xf]
  %v167 = vld [vmem:[%s2] sm:$0x7]
  %v169 = vlaneseq
  %v170 = vshrl.u32 %v169, 7
  %v171 = vsub.s32 0, %v170
  %v172 = vrot.slane %v167, %v171
  %v173 = vlaneseq
  %v174 = vshrl.u32 %v173, 7
  %v175 = vsub.s32 1, %v174
  %v176 = vrot.slane %v167, %v175
  %v177 = vlaneseq
  %v178 = vshrl.u32 %v177, 7
  %v179 = vsub.s32 2, %v178
  %v180 = vrot.slane %v167, %v179
  %v186 = vcombine.high %v21, %v21
  %v188 = vunpack.c.l.s4 1983009808
  %v189 = vunpack.c.0.s8 %v188
  %v190 = vlaneseq
  %v191 = vshrl.u32 %v190, 7
  %v192 = vsub.s32 %v189, %v191
  %v193 = vrot.slane %v21, %v192
  %v195 = vunpack.c.l.s4 1983009808
  %v196 = vunpack.c.0.s8 %v195
  %v197 = vlaneseq
  %v198 = vshrl.u32 %v197, 7
  %v199 = vsub.s32 %v196, %v198
  %v200 = vrot.slane %v186, %v199
  %v201 = vcombine.high %v193, %v193
  %v202 = vcombine.high %v200, %v200
  %v204 = vunpack.c.l.s4 1983009808
  %v205 = vunpack.c.0.s8 %v204
  %v206 = vlaneseq
  %v207 = vshrl.u32 %v206, 7
  %v208 = vsub.s32 %v205, %v207
  %v209 = vrot.slane %v22, %v208
  %v358 = vunpack.c.l.b16 %v23
  %v359 = vunpack.c.h.b16 %v23
  %v360 = vunpack.c.l.b16 %v24
  %v361 = vunpack.c.l.b16 %v25
  %v362 = vunpack.c.h.b16 %v25
  %v363 = vunpack.c.l.b16 %v26
  %v364 = vunpack.c.l.b16 %v27
  %v365 = vunpack.c.h.b16 %v27
  %v366 = vunpack.c.l.b16 %v28
  %v367 = vunpack.c.l.b16 %v29
  %v368 = vunpack.c.h.b16 %v29
  %v369 = vunpack.c.l.b16 %v30
  %v370 = vunpack.c.l.b16 %v31
  %v371 = vunpack.c.h.b16 %v31
  %v372 = vunpack.c.l.b16 %v32
  %v373 = vunpack.c.l.b16 %v33
  %v374 = vunpack.c.h.b16 %v33
  %v375 = vunpack.c.l.b16 %v34
  %v376 = vunpack.c.l.b16 %v35
  %v377 = vunpack.c.h.b16 %v35
  %v378 = vunpack.c.l.b16 %v36
  %v379 = vunpack.c.l.b16 %v37
  %v380 = vunpack.c.h.b16 %v37
  %v381 = vunpack.c.l.b16 %v38
  %v382 = vunpack.c.l.b16 %v39
  %v383 = vunpack.c.h.b16 %v39
  %v384 = vunpack.c.l.b16 %v40
  %v385 = vunpack.c.l.b16 %v41
  %v386 = vunpack.c.h.b16 %v41
  %v387 = vunpack.c.l.b16 %v42
  %v388 = vunpack.c.l.b16 %v43
  %v389 = vunpack.c.h.b16 %v43
  %v390 = vunpack.c.l.b16 %v44
  %v391 = vunpack.c.l.b16 %v45
  %v392 = vunpack.c.h.b16 %v45
  %v393 = vunpack.c.l.b16 %v46
  %v394 = vunpack.c.l.b16 %v47
  %v395 = vunpack.c.h.b16 %v47
  %v396 = vunpack.c.l.b16 %v48
  %v397 = vunpack.c.l.b16 %v49
  %v398 = vunpack.c.h.b16 %v49
  %v399 = vunpack.c.l.b16 %v50
  %v400 = vunpack.c.l.b16 %v51
  %v401 = vunpack.c.h.b16 %v51
  %v402 = vunpack.c.l.b16 %v52
  %v403 = vunpack.c.l.b16 %v53
  %v404 = vunpack.c.h.b16 %v53
  %v405 = vunpack.c.l.b16 %v54
  %v406 = vunpack.c.l.b16 %v55
  %v407 = vunpack.c.h.b16 %v55
  %v408 = vunpack.c.l.b16 %v56
  %v409 = vunpack.c.l.b16 %v57
  %v410 = vunpack.c.h.b16 %v57
  %v411 = vunpack.c.l.b16 %v58
  %v412 = vunpack.c.l.b16 %v59
  %v413 = vunpack.c.h.b16 %v59
  %v414 = vunpack.c.l.b16 %v60
  %v415 = vunpack.c.l.b16 %v61
  %v416 = vunpack.c.h.b16 %v61
  %v417 = vunpack.c.l.b16 %v62
  %v418 = vunpack.c.l.b16 %v63
  %v419 = vunpack.c.h.b16 %v63
  %v420 = vunpack.c.l.b16 %v64
  %v421 = vunpack.c.l.b16 %v65
  %v422 = vunpack.c.h.b16 %v65
  %v423 = vunpack.c.l.b16 %v66
  %v424 = vunpack.c.l.b16 %v67
  %v425 = vunpack.c.h.b16 %v67
  %v426 = vunpack.c.l.b16 %v68
  %v427 = vunpack.c.l.b16 %v69
  %v428 = vunpack.c.h.b16 %v69
  %v429 = vunpack.c.l.b16 %v70
  %v430 = vunpack.c.l.b16 %v71
  %v431 = vunpack.c.h.b16 %v71
  %v432 = vunpack.c.l.b16 %v72
  %v433 = vunpack.c.l.b16 %v73
  %v434 = vunpack.c.h.b16 %v73
  %v435 = vunpack.c.l.b16 %v74
  %v436 = vunpack.c.l.b16 %v75
  %v437 = vunpack.c.h.b16 %v75
  %v438 = vunpack.c.l.b16 %v76
  %v439 = vunpack.c.l.b16 %v77
  %v440 = vunpack.c.h.b16 %v77
  %v441 = vunpack.c.l.b16 %v78
  %v442 = vunpack.c.l.b16 %v79
  %v443 = vunpack.c.h.b16 %v79
  %v444 = vunpack.c.l.b16 %v80
  %v445 = vunpack.c.l.b16 %v81
  %v446 = vunpack.c.h.b16 %v81
  %v447 = vunpack.c.l.b16 %v82
  %v448 = vunpack.c.l.b16 %v83
  %v449 = vunpack.c.h.b16 %v83
  %v450 = vunpack.c.l.b16 %v84
  %v451 = vunpack.c.l.b16 %v85
  %v452 = vunpack.c.h.b16 %v85
  %v453 = vunpack.c.l.b16 %v86
  %v454 = vunpack.c.l.b16 %v87
  %v455 = vunpack.c.h.b16 %v87
  %v456 = vunpack.c.l.b16 %v88
  %v457 = vunpack.c.l.b16 %v89
  %v458 = vunpack.c.h.b16 %v89
  %v459 = vunpack.c.l.b16 %v90
  %v460 = vunpack.c.l.b16 %v91
  %v461 = vunpack.c.h.b16 %v91
  %v462 = vunpack.c.l.b16 %v92
  %v463 = vunpack.c.l.b16 %v93
  %v464 = vunpack.c.h.b16 %v93
  %v465 = vunpack.c.l.b16 %v94
  %v466 = vunpack.c.l.b16 %v95
  %v467 = vunpack.c.h.b16 %v95
  %v468 = vunpack.c.l.b16 %v96
  %v469 = vunpack.c.l.b16 %v97
  %v470 = vunpack.c.h.b16 %v97
  %v471 = vunpack.c.l.b16 %v98
  %v472 = vunpack.c.l.b16 %v99
  %v473 = vunpack.c.h.b16 %v99
  %v474 = vunpack.c.l.b16 %v100
  %v475 = vunpack.c.l.b16 %v101
  %v476 = vunpack.c.h.b16 %v101
  %v477 = vunpack.c.l.b16 %v102
  %v478 = vunpack.c.l.b16 %v103
  %v479 = vunpack.c.h.b16 %v103
  %v480 = vunpack.c.l.b16 %v104
  %v481 = vunpack.c.l.b16 %v105
  %v482 = vunpack.c.h.b16 %v105
  %v483 = vunpack.c.l.b16 %v106
  %v484 = vunpack.c.l.b16 %v107
  %v485 = vunpack.c.h.b16 %v107
  %v486 = vunpack.c.l.b16 %v108
  %v487 = vunpack.c.l.b16 %v109
  %v488 = vunpack.c.h.b16 %v109
  %v489 = vunpack.c.l.b16 %v110
  %v490 = vunpack.c.l.b16 %v111
  %v491 = vunpack.c.h.b16 %v111
  %v492 = vunpack.c.l.b16 %v112
  %v493 = vunpack.c.l.b16 %v113
  %v494 = vunpack.c.h.b16 %v113
  %v495 = vunpack.c.l.b16 %v114
  %v496 = vunpack.c.l.b16 %v115
  %v497 = vunpack.c.h.b16 %v115
  %v498 = vunpack.c.l.b16 %v116
  %v499 = vunpack.c.l.b16 %v117
  %v500 = vunpack.c.h.b16 %v117
  %v501 = vunpack.c.l.b16 %v118
  %v502 = vunpack.c.l.b16 %v119
  %v503 = vunpack.c.h.b16 %v119
  %v504 = vunpack.c.l.b16 %v120
  %v505 = vunpack.c.l.b16 %v121
  %v506 = vunpack.c.h.b16 %v121
  %v507 = vunpack.c.l.b16 %v122
  %v508 = vunpack.c.l.b16 %v123
  %v509 = vunpack.c.h.b16 %v123
  %v510 = vunpack.c.l.b16 %v124
  %v511 = vunpack.c.l.b16 %v125
  %v512 = vunpack.c.h.b16 %v125
  %v513 = vunpack.c.l.b16 %v126
  %v514 = vunpack.c.l.b16 %v127
  %v515 = vunpack.c.h.b16 %v127
  %v516 = vunpack.c.l.b16 %v128
  %v517 = vunpack.c.l.b16 %v129
  %v518 = vunpack.c.h.b16 %v129
  %v519 = vunpack.c.l.b16 %v130
  %v520 = vunpack.c.l.b16 %v131
  %v521 = vunpack.c.h.b16 %v131
  %v522 = vunpack.c.l.b16 %v132
  %v523 = vunpack.c.l.b16 %v133
  %v524 = vunpack.c.h.b16 %v133
  %v525 = vunpack.c.l.b16 %v134
  %v526 = vunpack.c.l.b16 %v135
  %v527 = vunpack.c.h.b16 %v135
  %v528 = vunpack.c.l.b16 %v136
  %v529 = vunpack.c.l.b16 %v137
  %v530 = vunpack.c.h.b16 %v137
  %v531 = vunpack.c.l.b16 %v138
  %v532 = vunpack.c.l.b16 %v139
  %v533 = vunpack.c.h.b16 %v139
  %v534 = vunpack.c.l.b16 %v140
  %v535 = vunpack.c.l.b16 %v141
  %v536 = vunpack.c.h.b16 %v141
  %v537 = vunpack.c.l.b16 %v142
  %v538 = vunpack.c.l.b16 %v143
  %v539 = vunpack.c.h.b16 %v143
  %v540 = vunpack.c.l.b16 %v144
  %v541 = vunpack.c.l.b16 %v145
  %v542 = vunpack.c.h.b16 %v145
  %v543 = vunpack.c.l.b16 %v146
  %v544 = vunpack.c.l.b16 %v147
  %v545 = vunpack.c.h.b16 %v147
  %v546 = vunpack.c.l.b16 %v148
  %v547 = vunpack.c.l.b16 %v149
  %v548 = vunpack.c.h.b16 %v149
  %v549 = vunpack.c.l.b16 %v150
  %v550 = vunpack.c.l.b16 %v151
  %v551 = vunpack.c.h.b16 %v151
  %v552 = vunpack.c.l.b16 %v152
  %v553 = vunpack.c.l.b16 %v153
  %v554 = vunpack.c.h.b16 %v153
  %v555 = vunpack.c.l.b16 %v154
  %v556 = vunpack.c.l.b16 %v155
  %v557 = vunpack.c.h.b16 %v155
  %v558 = vunpack.c.l.b16 %v156
  %v559 = vunpack.c.l.b16 %v157
  %v560 = vunpack.c.h.b16 %v157
  %v561 = vunpack.c.l.b16 %v158
  %v562 = vunpack.c.l.b16 %v159
  %v563 = vunpack.c.h.b16 %v159
  %v564 = vunpack.c.l.b16 %v160
  %v565 = vunpack.c.l.b16 %v161
  %v566 = vunpack.c.h.b16 %v161
  %v567 = vunpack.c.l.b16 %v162
  %v568 = vunpack.c.l.b16 %v163
  %v569 = vunpack.c.h.b16 %v163
  %v570 = vunpack.c.l.b16 %v164
  %v571 = vunpack.c.l.b16 %v165
  %v572 = vunpack.c.h.b16 %v165
  %v573 = vunpack.c.l.b16 %v166
  %v574 = vpack.c.b16 %v361, %v358
  %v575 = vpack.c.b16 %v362, %v359
  %v576 = vpack.c.b16 %v363, %v360
  %v577 = vpack.c.b16 %v367, %v364
  %v578 = vpack.c.b16 %v368, %v365
  %v579 = vpack.c.b16 %v369, %v366
  %v580 = vpack.c.b16 %v373, %v370
  %v581 = vpack.c.b16 %v374, %v371
  %v582 = vpack.c.b16 %v375, %v372
  %v583 = vpack.c.b16 %v379, %v376
  %v584 = vpack.c.b16 %v380, %v377
  %v585 = vpack.c.b16 %v381, %v378
  %v586 = vpack.c.b16 %v385, %v382
  %v587 = vpack.c.b16 %v386, %v383
  %v588 = vpack.c.b16 %v387, %v384
  %v589 = vpack.c.b16 %v391, %v388
  %v590 = vpack.c.b16 %v392, %v389
  %v591 = vpack.c.b16 %v393, %v390
  %v592 = vpack.c.b16 %v397, %v394
  %v593 = vpack.c.b16 %v398, %v395
  %v594 = vpack.c.b16 %v399, %v396
  %v595 = vpack.c.b16 %v403, %v400
  %v596 = vpack.c.b16 %v404, %v401
  %v597 = vpack.c.b16 %v405, %v402
  %v598 = vpack.c.b16 %v409, %v406
  %v599 = vpack.c.b16 %v410, %v407
  %v600 = vpack.c.b16 %v411, %v408
  %v601 = vpack.c.b16 %v415, %v412
  %v602 = vpack.c.b16 %v416, %v413
  %v603 = vpack.c.b16 %v417, %v414
  %v604 = vpack.c.b16 %v421, %v418
  %v605 = vpack.c.b16 %v422, %v419
  %v606 = vpack.c.b16 %v423, %v420
  %v607 = vpack.c.b16 %v427, %v424
  %v608 = vpack.c.b16 %v428, %v425
  %v609 = vpack.c.b16 %v429, %v426
  %v610 = vpack.c.b16 %v433, %v430
  %v611 = vpack.c.b16 %v434, %v431
  %v612 = vpack.c.b16 %v435, %v432
  %v613 = vpack.c.b16 %v439, %v436
  %v614 = vpack.c.b16 %v440, %v437
  %v615 = vpack.c.b16 %v441, %v438
  %v616 = vpack.c.b16 %v445, %v442
  %v617 = vpack.c.b16 %v446, %v443
  %v618 = vpack.c.b16 %v447, %v444
  %v619 = vpack.c.b16 %v451, %v448
  %v620 = vpack.c.b16 %v452, %v449
  %v621 = vpack.c.b16 %v453, %v450
  %v622 = vpack.c.b16 %v457, %v454
  %v623 = vpack.c.b16 %v458, %v455
  %v624 = vpack.c.b16 %v459, %v456
  %v625 = vpack.c.b16 %v463, %v460
  %v626 = vpack.c.b16 %v464, %v461
  %v627 = vpack.c.b16 %v465, %v462
  %v628 = vpack.c.b16 %v469, %v466
  %v629 = vpack.c.b16 %v470, %v467
  %v630 = vpack.c.b16 %v471, %v468
  %v631 = vpack.c.b16 %v475, %v472
  %v632 = vpack.c.b16 %v476, %v473
  %v633 = vpack.c.b16 %v477, %v474
  %v634 = vpack.c.b16 %v481, %v478
  %v635 = vpack.c.b16 %v482, %v479
  %v636 = vpack.c.b16 %v483, %v480
  %v637 = vpack.c.b16 %v487, %v484
  %v638 = vpack.c.b16 %v488, %v485
  %v639 = vpack.c.b16 %v489, %v486
  %v640 = vpack.c.b16 %v493, %v490
  %v641 = vpack.c.b16 %v494, %v491
  %v642 = vpack.c.b16 %v495, %v492
  %v643 = vpack.c.b16 %v499, %v496
  %v644 = vpack.c.b16 %v500, %v497
  %v645 = vpack.c.b16 %v501, %v498
  %v646 = vpack.c.b16 %v505, %v502
  %v647 = vpack.c.b16 %v506, %v503
  %v648 = vpack.c.b16 %v507, %v504
  %v649 = vpack.c.b16 %v511, %v508
  %v650 = vpack.c.b16 %v512, %v509
  %v651 = vpack.c.b16 %v513, %v510
  %v652 = vpack.c.b16 %v517, %v514
  %v653 = vpack.c.b16 %v518, %v515
  %v654 = vpack.c.b16 %v519, %v516
  %v655 = vpack.c.b16 %v523, %v520
  %v656 = vpack.c.b16 %v524, %v521
  %v657 = vpack.c.b16 %v525, %v522
  %v658 = vpack.c.b16 %v529, %v526
  %v659 = vpack.c.b16 %v530, %v527
  %v660 = vpack.c.b16 %v531, %v528
  %v661 = vpack.c.b16 %v535, %v532
  %v662 = vpack.c.b16 %v536, %v533
  %v663 = vpack.c.b16 %v537, %v534
  %v664 = vpack.c.b16 %v541, %v538
  %v665 = vpack.c.b16 %v542, %v539
  %v666 = vpack.c.b16 %v543, %v540
  %v667 = vpack.c.b16 %v547, %v544
  %v668 = vpack.c.b16 %v548, %v545
  %v669 = vpack.c.b16 %v549, %v546
  %v670 = vpack.c.b16 %v553, %v550
  %v671 = vpack.c.b16 %v554, %v551
  %v672 = vpack.c.b16 %v555, %v552
  %v673 = vpack.c.b16 %v559, %v556
  %v674 = vpack.c.b16 %v560, %v557
  %v675 = vpack.c.b16 %v561, %v558
  %v676 = vpack.c.b16 %v565, %v562
  %v677 = vpack.c.b16 %v566, %v563
  %v678 = vpack.c.b16 %v567, %v564
  %v679 = vpack.c.b16 %v571, %v568
  %v680 = vpack.c.b16 %v572, %v569
  %v681 = vpack.c.b16 %v573, %v570
  %vm790 = vcmask 523264
  %v792 = vsel %vm790, %v209, 0
  %794 = vmatprep.subr.bf16.mxu0 %v575
  %795 = vmatpush1.bf16.msra.mxu0 %v574
  %796 = vmatprep.subr.bf16.mxu0 %v578
  %797 = vmatpush1.bf16.msra.mxu0 %v577
  %798 = vmatprep.subr.bf16.mxu0 %v581
  %799 = vmatpush1.bf16.msra.mxu0 %v580
  %800 = vmatprep.subr.bf16.mxu0 %v584
  %801 = vmatpush1.bf16.msra.mxu0 %v583
  %802 = vmatprep.subr.bf16.mxu0 %v587
  %803 = vmatpush1.bf16.msra.mxu0 %v586
  %804 = vmatprep.subr.bf16.mxu0 %v590
  %805 = vmatpush1.bf16.msra.mxu0 %v589
  %806 = vmatprep.subr.bf16.mxu0 %v593
  %807 = vmatpush1.bf16.msra.mxu0 %v592
  %808 = vmatprep.subr.bf16.mxu0 %v596
  %809 = vmatpush1.bf16.msra.mxu0 %v595
  %810 = vmatprep.subr.bf16.mxu0 %v599
  %811 = vmatpush1.bf16.msra.mxu0 %v598
  %812 = vmatprep.subr.bf16.mxu0 %v602
  %813 = vmatpush1.bf16.msra.mxu0 %v601
  %814 = vmatprep.subr.bf16.mxu0 %v605
  %815 = vmatpush1.bf16.msra.mxu0 %v604
  %816 = vmatprep.subr.bf16.mxu0 %v608
  %817 = vmatpush1.bf16.msra.mxu0 %v607
  %818 = vmatprep.subr.bf16.mxu0 %v611
  %819 = vmatpush1.bf16.msra.mxu0 %v610
  %820 = vmatprep.subr.bf16.mxu0 %v614
  %821 = vmatpush1.bf16.msra.mxu0 %v613
  %822 = vmatprep.subr.bf16.mxu0 %v617
  %823 = vmatpush1.bf16.msra.mxu0 %v616
  %824 = vmatprep.subr.bf16.mxu0 %v620
  %825 = vmatpush1.bf16.msra.mxu0 %v619
  %826 = vmatprep.mubr.bf16.mxu0 %v201
  %827 = vmatmul.mubr.bf16.gmra.mrb[0].mxu0 %v193
  %v828 = vpop.f32.mrb[0].mxu0
  %v829 = vadd.f32 %v172, %v828
  %v830 = vpop.f32.mrb[0].mxu0
  %v831 = vadd.f32 %v176, %v830
  %v832 = vpop.f32.mrb[0].mxu0
  %v833 = vpop.f32.mrb[0].mxu0
  %834 = vdwg.mxu0
  %835 = vmatprep.subr.bf16.mxu0 %v623
  %836 = vmatpush1.bf16.msra.mxu0 %v622
  %837 = vmatprep.subr.bf16.mxu0 %v626
  %838 = vmatpush1.bf16.msra.mxu0 %v625
  %839 = vmatprep.subr.bf16.mxu0 %v629
  %840 = vmatpush1.bf16.msra.mxu0 %v628
  %841 = vmatprep.subr.bf16.mxu0 %v632
  %842 = vmatpush1.bf16.msra.mxu0 %v631
  %843 = vmatprep.subr.bf16.mxu0 %v635
  %844 = vmatpush1.bf16.msra.mxu0 %v634
  %845 = vmatprep.subr.bf16.mxu0 %v638
  %846 = vmatpush1.bf16.msra.mxu0 %v637
  %847 = vmatprep.subr.bf16.mxu0 %v641
  %848 = vmatpush1.bf16.msra.mxu0 %v640
  %849 = vmatprep.subr.bf16.mxu0 %v644
  %850 = vmatpush1.bf16.msra.mxu0 %v643
  %851 = vmatprep.subr.bf16.mxu0 %v647
  %852 = vmatpush1.bf16.msra.mxu0 %v646
  %853 = vmatprep.subr.bf16.mxu0 %v650
  %854 = vmatpush1.bf16.msra.mxu0 %v649
  %855 = vmatprep.subr.bf16.mxu0 %v653
  %856 = vmatpush1.bf16.msra.mxu0 %v652
  %857 = vmatprep.subr.bf16.mxu0 %v656
  %858 = vmatpush1.bf16.msra.mxu0 %v655
  %859 = vmatprep.subr.bf16.mxu0 %v659
  %860 = vmatpush1.bf16.msra.mxu0 %v658
  %861 = vmatprep.subr.bf16.mxu0 %v662
  %862 = vmatpush1.bf16.msra.mxu0 %v661
  %863 = vmatprep.subr.bf16.mxu0 %v665
  %864 = vmatpush1.bf16.msra.mxu0 %v664
  %865 = vmatprep.subr.bf16.mxu0 %v668
  %866 = vmatpush1.bf16.msra.mxu0 %v667
  %867 = vmatprep.mubr.bf16.mxu0 %v202
  %868 = vmatmul.mubr.bf16.gmra.mrb[0].mxu0 %v200
  %v869 = vpop.f32.mrb[0].mxu0
  %v870 = vadd.f32 %v829, %v869
  %v871 = vpop.f32.mrb[0].mxu0
  %v872 = vadd.f32 %v831, %v871
  %v873 = vpop.f32.mrb[0].mxu0
  %v874 = vpop.f32.mrb[0].mxu0
  %875 = vdwg.mxu0
  %876 = vmatprep.subr.bf16.mxu0 %v671
  %877 = vmatpush1.bf16.msra.mxu0 %v670
  %878 = vmatprep.subr.bf16.mxu0 %v674
  %879 = vmatpush1.bf16.msra.mxu0 %v673
  %880 = vmatprep.subr.bf16.mxu0 %v677
  %881 = vmatpush1.bf16.msra.mxu0 %v676
  %882 = vmatprep.subr.bf16.mxu0 %v680
  %883 = vmatpush1.bf16.msra.mxu0 %v679
  %884 = vmatprep.subr.bf16.mxu0 0
  %885 = vmatpush1.bf16.msra.mxu0 0
  %886 = vmatprep.subr.bf16.mxu0 0
  %887 = vmatpush1.bf16.msra.mxu0 0
  %888 = vmatprep.subr.bf16.mxu0 0
  %889 = vmatpush1.bf16.msra.mxu0 0
  %890 = vmatprep.subr.bf16.mxu0 0
  %891 = vmatpush1.bf16.msra.mxu0 0
  %892 = vmatprep.subr.bf16.mxu0 0
  %893 = vmatpush1.bf16.msra.mxu0 0
  %894 = vmatprep.subr.bf16.mxu0 0
  %895 = vmatpush1.bf16.msra.mxu0 0
  %896 = vmatprep.subr.bf16.mxu0 0
  %897 = vmatpush1.bf16.msra.mxu0 0
  %898 = vmatprep.subr.bf16.mxu0 0
  %899 = vmatpush1.bf16.msra.mxu0 0
  %900 = vmatprep.subr.bf16.mxu0 0
  %901 = vmatpush1.bf16.msra.mxu0 0
  %902 = vmatprep.subr.bf16.mxu0 0
  %903 = vmatpush1.bf16.msra.mxu0 0
  %904 = vmatprep.subr.bf16.mxu0 0
  %905 = vmatpush1.bf16.msra.mxu0 0
  %906 = vmatprep.subr.bf16.mxu0 0
  %907 = vmatpush1.bf16.msra.mxu0 0
  %908 = vmatprep.mubr.bf16.mxu0 0
  %909 = vmatmul.mubr.bf16.gmra.mrb[0].mxu0 %v792
  %v910 = vpop.f32.mrb[0].mxu0
  %v911 = vadd.f32 %v870, %v910
  %v912 = vpop.f32.mrb[0].mxu0
  %v913 = vadd.f32 %v872, %v912
  %v914 = vpop.f32.mrb[0].mxu0
  %v915 = vpop.f32.mrb[0].mxu0
  %916 = vdwg.mxu0
  %917 = vmatprep.subr.bf16.mxu0 0
  %918 = vmatpush1.bf16.msra.mxu0 %v576
  %919 = vmatprep.subr.bf16.mxu0 0
  %920 = vmatpush1.bf16.msra.mxu0 %v579
  %921 = vmatprep.subr.bf16.mxu0 0
  %922 = vmatpush1.bf16.msra.mxu0 %v582
  %923 = vmatprep.subr.bf16.mxu0 0
  %924 = vmatpush1.bf16.msra.mxu0 %v585
  %925 = vmatprep.subr.bf16.mxu0 0
  %926 = vmatpush1.bf16.msra.mxu0 %v588
  %927 = vmatprep.subr.bf16.mxu0 0
  %928 = vmatpush1.bf16.msra.mxu0 %v591
  %929 = vmatprep.subr.bf16.mxu0 0
  %930 = vmatpush1.bf16.msra.mxu0 %v594
  %931 = vmatprep.subr.bf16.mxu0 0
  %932 = vmatpush1.bf16.msra.mxu0 %v597
  %933 = vmatprep.subr.bf16.mxu0 0
  %934 = vmatpush1.bf16.msra.mxu0 %v600
  %935 = vmatprep.subr.bf16.mxu0 0
  %936 = vmatpush1.bf16.msra.mxu0 %v603
  %937 = vmatprep.subr.bf16.mxu0 0
  %938 = vmatpush1.bf16.msra.mxu0 %v606
  %939 = vmatprep.subr.bf16.mxu0 0
  %940 = vmatpush1.bf16.msra.mxu0 %v609
  %941 = vmatprep.subr.bf16.mxu0 0
  %942 = vmatpush1.bf16.msra.mxu0 %v612
  %943 = vmatprep.subr.bf16.mxu0 0
  %944 = vmatpush1.bf16.msra.mxu0 %v615
  %945 = vmatprep.subr.bf16.mxu0 0
  %946 = vmatpush1.bf16.msra.mxu0 %v618
  %947 = vmatprep.subr.bf16.mxu0 0
  %948 = vmatpush1.bf16.msra.mxu0 %v621
  %949 = vmatprep.mubr.bf16.mxu0 %v201
  %950 = vmatmul.mubr.bf16.gmra.mrb[0].mxu0 %v193
  %v951 = vpop.f32.mrb[0].mxu0
  %v952 = vadd.f32 %v180, %v951
  %v953 = vpop.f32.mrb[0].mxu0
  %v954 = vpop.f32.mrb[0].mxu0
  %v955 = vpop.f32.mrb[0].mxu0
  %956 = vdwg.mxu0
  %957 = vmatprep.subr.bf16.mxu0 0
  %958 = vmatpush1.bf16.msra.mxu0 %v624
  %959 = vmatprep.subr.bf16.mxu0 0
  %960 = vmatpush1.bf16.msra.mxu0 %v627
  %961 = vmatprep.subr.bf16.mxu0 0
  %962 = vmatpush1.bf16.msra.mxu0 %v630
  %963 = vmatprep.subr.bf16.mxu0 0
  %964 = vmatpush1.bf16.msra.mxu0 %v633
  %965 = vmatprep.subr.bf16.mxu0 0
  %966 = vmatpush1.bf16.msra.mxu0 %v636
  %967 = vmatprep.subr.bf16.mxu0 0
  %968 = vmatpush1.bf16.msra.mxu0 %v639
  %969 = vmatprep.subr.bf16.mxu0 0
  %970 = vmatpush1.bf16.msra.mxu0 %v642
  %971 = vmatprep.subr.bf16.mxu0 0
  %972 = vmatpush1.bf16.msra.mxu0 %v645
  %973 = vmatprep.subr.bf16.mxu0 0
  %974 = vmatpush1.bf16.msra.mxu0 %v648
  %975 = vmatprep.subr.bf16.mxu0 0
  %976 = vmatpush1.bf16.msra.mxu0 %v651
  %977 = vmatprep.subr.bf16.mxu0 0
  %978 = vmatpush1.bf16.msra.mxu0 %v654
  %979 = vmatprep.subr.bf16.mxu0 0
  %980 = vmatpush1.bf16.msra.mxu0 %v657
  %981 = vmatprep.subr.bf16.mxu0 0
  %982 = vmatpush1.bf16.msra.mxu0 %v660
  %983 = vmatprep.subr.bf16.mxu0 0
  %984 = vmatpush1.bf16.msra.mxu0 %v663
  %985 = vmatprep.subr.bf16.mxu0 0
  %986 = vmatpush1.bf16.msra.mxu0 %v666
  %987 = vmatprep.subr.bf16.mxu0 0
  %988 = vmatpush1.bf16.msra.mxu0 %v669
  %989 = vmatprep.mubr.bf16.mxu0 %v202
  %990 = vmatmul.mubr.bf16.gmra.mrb[0].mxu0 %v200
  %v991 = vpop.f32.mrb[0].mxu0
  %v992 = vadd.f32 %v952, %v991
  %v993 = vpop.f32.mrb[0].mxu0
  %v994 = vpop.f32.mrb[0].mxu0
  %v995 = vpop.f32.mrb[0].mxu0
  %996 = vdwg.mxu0
  %997 = vmatprep.subr.bf16.mxu0 0
  %998 = vmatpush1.bf16.msra.mxu0 %v672
  %999 = vmatprep.subr.bf16.mxu0 0
  %1000 = vmatpush1.bf16.msra.mxu0 %v675
  %1001 = vmatprep.subr.bf16.mxu0 0
  %1002 = vmatpush1.bf16.msra.mxu0 %v678
  %1003 = vmatprep.subr.bf16.mxu0 0
  %1004 = vmatpush1.bf16.msra.mxu0 %v681
  %1005 = vmatprep.subr.bf16.mxu0 0
  %1006 = vmatpush1.bf16.msra.mxu0 0
  %1007 = vmatprep.subr.bf16.mxu0 0
  %1008 = vmatpush1.bf16.msra.mxu0 0
  %1009 = vmatprep.subr.bf16.mxu0 0
  %1010 = vmatpush1.bf16.msra.mxu0 0
  %1011 = vmatprep.subr.bf16.mxu0 0
  %1012 = vmatpush1.bf16.msra.mxu0 0
  %1013 = vmatprep.subr.bf16.mxu0 0
  %1014 = vmatpush1.bf16.msra.mxu0 0
  %1015 = vmatprep.subr.bf16.mxu0 0
  %1016 = vmatpush1.bf16.msra.mxu0 0
  %1017 = vmatprep.subr.bf16.mxu0 0
  %1018 = vmatpush1.bf16.msra.mxu0 0
  %1019 = vmatprep.subr.bf16.mxu0 0
  %1020 = vmatpush1.bf16.msra.mxu0 0
  %1021 = vmatprep.subr.bf16.mxu0 0
  %1022 = vmatpush1.bf16.msra.mxu0 0
  %1023 = vmatprep.subr.bf16.mxu0 0
  %1024 = vmatpush1.bf16.msra.mxu0 0
  %1025 = vmatprep.subr.bf16.mxu0 0
  %1026 = vmatpush1.bf16.msra.mxu0 0
  %1027 = vmatprep.subr.bf16.mxu0 0
  %1028 = vmatpush1.bf16.msra.mxu0 0
  %1029 = vmatprep.mubr.bf16.mxu0 0
  %1030 = vmatmul.mubr.bf16.gmra.mrb[0].mxu0 %v792
  %v1031 = vpop.f32.mrb[0].mxu0
  %v1032 = vadd.f32 %v992, %v1031
  %v1033 = vpop.f32.mrb[0].mxu0
  %v1034 = vpop.f32.mrb[0].mxu0
  %v1035 = vpop.f32.mrb[0].mxu0
  %1036 = vdwg.mxu0
  %v1037 = vmax.f32 %v911, 0.0
  %v1038 = vmax.f32 %v913, 0.0
  %v1039 = vmax.f32 %v1032, 0.0
  %v1040 = vld [vmem:[%s3] sm:$0x7]
  %v1042 = vlaneseq
  %v1043 = vshrl.u32 %v1042, 7
  %v1044 = vsub.s32 0, %v1043
  %v1045 = vrot.slane %v1040, %v1044
  %v1046 = vlaneseq
  %v1047 = vshrl.u32 %v1046, 7
  %v1048 = vsub.s32 1, %v1047
  %v1049 = vrot.slane %v1040, %v1048
  %v1050 = vlaneseq
  %v1051 = vshrl.u32 %v1050, 7
  %v1052 = vsub.s32 2, %v1051
  %v1053 = vrot.slane %v1040, %v1052
  %v1057 = vmul.f32 %v1037, %v1045
  %v1058 = vmul.f32 %v1038, %v1049
  %v1059 = vmul.f32 %v1039, %v1053
  %v1060 = vld [vmem:[%s4] sm:$0x7]
  %v1062 = vlaneseq
  %v1063 = vshrl.u32 %v1062, 7
  %v1064 = vsub.s32 0, %v1063
  %v1065 = vrot.slane %v1060, %v1064
  %v1066 = vlaneseq
  %v1067 = vshrl.u32 %v1066, 7
  %v1068 = vsub.s32 1, %v1067
  %v1069 = vrot.slane %v1060, %v1068
  %v1070 = vlaneseq
  %v1071 = vshrl.u32 %v1070, 7
  %v1072 = vsub.s32 2, %v1071
  %v1073 = vrot.slane %v1060, %v1072
  %v1077 = vadd.f32 %v1057, %v1065
  %v1078 = vadd.f32 %v1058, %v1069
  %v1079 = vadd.f32 %v1059, %v1073
  %v1082 = vcombine.low %v1077, %v1078
  %1084 = vst [vmem:[%s5] sm:$0xff] %v1082
  %1085 = vst [vmem:[%s5 + $0x8] sm:$0xf] %v1079
  // Predicated region
  $region22: #{mcnet_forward.42} parent=0 // pred_check
    _
  $region23: #{mcnet_forward.42} parent=0 // pred_check_branch
    %1087 = sbr.rel (0) target = $region25
  $region24: #{mcnet_forward.42} parent=0 // pred_region
    _
  $region25: #{mcnet_forward.42} parent=0 // pred_fallthru
    _
  // Predicated region
  $region26: #{mcnet_forward.42} parent=0 // pred_check
    _
  $region27: #{mcnet_forward.42} parent=0 // pred_check_branch
    %1089 = sbr.rel (0) target = $region29
  $region28: #{mcnet_forward.42} parent=0 // pred_region
    _
  $region29: #{mcnet_forward.42} parent=0 // pred_fallthru
    _

// kernel: mcnet_forward.43
$region0: #{mcnet_forward.43}
  #allocation0 [shape = 'u32[]', space=smem, size = 0x4, offset = 0x4, fixed_abs, tag = 'smem constant byte address 0x4 - core index']
  #allocation1 [shape = 'u32[144,128]{1,0:T(1,128)}', space=vmem, size = 0x12000, scoped, tag = 'internal scratch']
  %s0 = inlined_call_operand.vmem [shape: bf16[2,1024], index: 0, kind: input, shape index: {}]
  %s1 = inlined_call_operand.vmem [shape: bf16[1024,10], index: 1, kind: input, shape index: {}]
  %s2 = inlined_call_operand.vmem [shape: f32[1,10], index: 2, kind: input, shape index: {}]
  %s3 = inlined_call_operand.hbm [shape: f32[2,10], index: 3, kind: output, shape index: {}]
  %s4 = sld [smem:[#allocation0]]
  $region22: #{mcnet_forward.43} parent=0
    _
  %s6 = ssub.s32 1, %s4
  %s7 = scalar_select 0, %s6, %s4
  $region1: #{mcnet_forward.43} parent=0
    #allocation2 [shape = 'u8[1024]{0}', space=vmem, size = 0x400, scoped, tag = 'output window, operand 0, single buffered']
    #allocation3 [shape = 's32[1]{0}', space=sflag, size = 0x4, scoped, tag = 'scoped memory for mcnet_forward.43']
    %8 = vsyncpa [#allocation3], 0
    // Predicated region
    $region2: #{mcnet_forward.43} parent=1 // pred_check
      _
    $region3: #{mcnet_forward.43} parent=1 // pred_check_branch
      %10 = sbr.rel (0) target = $region5
    $region4: #{mcnet_forward.43} parent=1 // pred_region
      _
    $region5: #{mcnet_forward.43} parent=1 // pred_fallthru
      _
    // Predicated region
    $region6: #{mcnet_forward.43} parent=1 // pred_check
      _
    $region7: #{mcnet_forward.43} parent=1 // pred_check_branch
      %12 = sbr.rel (0) target = $region9
    $region8: #{mcnet_forward.43} parent=1 // pred_region
      _
    $region9: #{mcnet_forward.43} parent=1 // pred_fallthru
      _
    // Predicated region
    $region10: #{mcnet_forward.43} parent=1 // pred_check
      _
    $region11: #{mcnet_forward.43} parent=1 // pred_check_branch
      %14 = sbr.rel (0) target = $region13
    $region12: #{mcnet_forward.43} parent=1 // pred_region
      _
    $region13: #{mcnet_forward.43} parent=1 // pred_fallthru
      _
    %v16 = vld [vmem:[%s0] sm:$0xff]
    %v17 = vld [vmem:[%s1] sm:$0xf]
    %v18 = vld [vmem:[%s1 + $0x4] sm:$0xf]
    %v19 = vld [vmem:[%s1 + $0x8] sm:$0xf]
    %v20 = vld [vmem:[%s1 + $0xc] sm:$0xf]
    %v21 = vld [vmem:[%s1 + $0x10] sm:$0xf]
    %v22 = vld [vmem:[%s1 + $0x14] sm:$0xf]
    %v23 = vld [vmem:[%s1 + $0x18] sm:$0xf]
    %v24 = vld [vmem:[%s1 + $0x1c] sm:$0xf]
    %v25 = vld [vmem:[%s1 + $0x20] sm:$0xf]
    %v26 = vld [vmem:[%s1 + $0x24] sm:$0xf]
    %v27 = vld [vmem:[%s1 + $0x28] sm:$0xf]
    %v28 = vld [vmem:[%s1 + $0x2c] sm:$0xf]
    %v29 = vld [vmem:[%s1 + $0x30] sm:$0xf]
    %v30 = vld [vmem:[%s1 + $0x34] sm:$0xf]
    %v31 = vld [vmem:[%s1 + $0x38] sm:$0xf]
    %v32 = vld [vmem:[%s1 + $0x3c] sm:$0xf]
    %v33 = vld [vmem:[%s1 + $0x40] sm:$0xf]
    %v34 = vld [vmem:[%s1 + $0x44] sm:$0xf]
    %v35 = vld [vmem:[%s1 + $0x48] sm:$0xf]
    %v36 = vld [vmem:[%s1 + $0x4c] sm:$0xf]
    %v37 = vld [vmem:[%s1 + $0x50] sm:$0xf]
    %v38 = vld [vmem:[%s1 + $0x54] sm:$0xf]
    %v39 = vld [vmem:[%s1 + $0x58] sm:$0xf]
    %v40 = vld [vmem:[%s1 + $0x5c] sm:$0xf]
    %v41 = vld [vmem:[%s1 + $0x60] sm:$0xf]
    %v42 = vld [vmem:[%s1 + $0x64] sm:$0xf]
    %v43 = vld [vmem:[%s1 + $0x68] sm:$0xf]
    %v44 = vld [vmem:[%s1 + $0x6c] sm:$0xf]
    %v45 = vld [vmem:[%s1 + $0x70] sm:$0xf]
    %v46 = vld [vmem:[%s1 + $0x74] sm:$0xf]
    %v47 = vld [vmem:[%s1 + $0x78] sm:$0xf]
    %v48 = vld [vmem:[%s1 + $0x7c] sm:$0xf]
    %v49 = vld [vmem:[%s1 + $0x80] sm:$0xf]
    %v50 = vld [vmem:[%s1 + $0x84] sm:$0xf]
    %v51 = vld [vmem:[%s1 + $0x88] sm:$0xf]
    %v52 = vld [vmem:[%s1 + $0x8c] sm:$0xf]
    %v53 = vld [vmem:[%s1 + $0x90] sm:$0xf]
    %v54 = vld [vmem:[%s1 + $0x94] sm:$0xf]
    %v55 = vld [vmem:[%s1 + $0x98] sm:$0xf]
    %v56 = vld [vmem:[%s1 + $0x9c] sm:$0xf]
    %v57 = vld [vmem:[%s1 + $0xa0] sm:$0xf]
    %v58 = vld [vmem:[%s1 + $0xa4] sm:$0xf]
    %v59 = vld [vmem:[%s1 + $0xa8] sm:$0xf]
    %v60 = vld [vmem:[%s1 + $0xac] sm:$0xf]
    %v61 = vld [vmem:[%s1 + $0xb0] sm:$0xf]
    %v62 = vld [vmem:[%s1 + $0xb4] sm:$0xf]
    %v63 = vld [vmem:[%s1 + $0xb8] sm:$0xf]
    %v64 = vld [vmem:[%s1 + $0xbc] sm:$0xf]
    %v65 = vld [vmem:[%s1 + $0xc0] sm:$0xf]
    %v66 = vld [vmem:[%s1 + $0xc4] sm:$0xf]
    %v67 = vld [vmem:[%s1 + $0xc8] sm:$0xf]
    %v68 = vld [vmem:[%s1 + $0xcc] sm:$0xf]
    %v69 = vld [vmem:[%s1 + $0xd0] sm:$0xf]
    %v70 = vld [vmem:[%s1 + $0xd4] sm:$0xf]
    %v71 = vld [vmem:[%s1 + $0xd8] sm:$0xf]
    %v72 = vld [vmem:[%s1 + $0xdc] sm:$0xf]
    %v73 = vld [vmem:[%s1 + $0xe0] sm:$0xf]
    %v74 = vld [vmem:[%s1 + $0xe4] sm:$0xf]
    %v75 = vld [vmem:[%s1 + $0xe8] sm:$0xf]
    %v76 = vld [vmem:[%s1 + $0xec] sm:$0xf]
    %v77 = vld [vmem:[%s1 + $0xf0] sm:$0xf]
    %v78 = vld [vmem:[%s1 + $0xf4] sm:$0xf]
    %v79 = vld [vmem:[%s1 + $0xf8] sm:$0xf]
    %v80 = vld [vmem:[%s1 + $0xfc] sm:$0xf]
    %v81 = vld [vmem:[%s1 + $0x100] sm:$0xf]
    %v82 = vld [vmem:[%s1 + $0x104] sm:$0xf]
    %v83 = vld [vmem:[%s1 + $0x108] sm:$0xf]
    %v84 = vld [vmem:[%s1 + $0x10c] sm:$0xf]
    %v85 = vld [vmem:[%s1 + $0x110] sm:$0xf]
    %v86 = vld [vmem:[%s1 + $0x114] sm:$0xf]
    %v87 = vld [vmem:[%s1 + $0x118] sm:$0xf]
    %v88 = vld [vmem:[%s1 + $0x11c] sm:$0xf]
    %v89 = vld [vmem:[%s1 + $0x120] sm:$0xf]
    %v90 = vld [vmem:[%s1 + $0x124] sm:$0xf]
    %v91 = vld [vmem:[%s1 + $0x128] sm:$0xf]
    %v92 = vld [vmem:[%s1 + $0x12c] sm:$0xf]
    %v93 = vld [vmem:[%s1 + $0x130] sm:$0xf]
    %v94 = vld [vmem:[%s1 + $0x134] sm:$0xf]
    %v95 = vld [vmem:[%s1 + $0x138] sm:$0xf]
    %v96 = vld [vmem:[%s1 + $0x13c] sm:$0xf]
    %v97 = vld [vmem:[%s1 + $0x140] sm:$0xf]
    %v98 = vld [vmem:[%s1 + $0x144] sm:$0xf]
    %v99 = vld [vmem:[%s1 + $0x148] sm:$0xf]
    %v100 = vld [vmem:[%s1 + $0x14c] sm:$0xf]
    %v101 = vld [vmem:[%s1 + $0x150] sm:$0xf]
    %v102 = vld [vmem:[%s1 + $0x154] sm:$0xf]
    %v103 = vld [vmem:[%s1 + $0x158] sm:$0xf]
    %v104 = vld [vmem:[%s1 + $0x15c] sm:$0xf]
    %v105 = vld [vmem:[%s1 + $0x160] sm:$0xf]
    %v106 = vld [vmem:[%s1 + $0x164] sm:$0xf]
    %v107 = vld [vmem:[%s1 + $0x168] sm:$0xf]
    %v108 = vld [vmem:[%s1 + $0x16c] sm:$0xf]
    %v109 = vld [vmem:[%s1 + $0x170] sm:$0xf]
    %v110 = vld [vmem:[%s1 + $0x174] sm:$0xf]
    %v111 = vld [vmem:[%s1 + $0x178] sm:$0xf]
    %v112 = vld [vmem:[%s1 + $0x17c] sm:$0xf]
    %v113 = vld [vmem:[%s1 + $0x180] sm:$0xf]
    %v114 = vld [vmem:[%s1 + $0x184] sm:$0xf]
    %v115 = vld [vmem:[%s1 + $0x188] sm:$0xf]
    %v116 = vld [vmem:[%s1 + $0x18c] sm:$0xf]
    %v117 = vld [vmem:[%s1 + $0x190] sm:$0xf]
    %v118 = vld [vmem:[%s1 + $0x194] sm:$0xf]
    %v119 = vld [vmem:[%s1 + $0x198] sm:$0xf]
    %v120 = vld [vmem:[%s1 + $0x19c] sm:$0xf]
    %v121 = vld [vmem:[%s1 + $0x1a0] sm:$0xf]
    %v122 = vld [vmem:[%s1 + $0x1a4] sm:$0xf]
    %v123 = vld [vmem:[%s1 + $0x1a8] sm:$0xf]
    %v124 = vld [vmem:[%s1 + $0x1ac] sm:$0xf]
    %v125 = vld [vmem:[%s1 + $0x1b0] sm:$0xf]
    %v126 = vld [vmem:[%s1 + $0x1b4] sm:$0xf]
    %v127 = vld [vmem:[%s1 + $0x1b8] sm:$0xf]
    %v128 = vld [vmem:[%s1 + $0x1bc] sm:$0xf]
    %v129 = vld [vmem:[%s1 + $0x1c0] sm:$0xf]
    %v130 = vld [vmem:[%s1 + $0x1c4] sm:$0xf]
    %v131 = vld [vmem:[%s1 + $0x1c8] sm:$0xf]
    %v132 = vld [vmem:[%s1 + $0x1cc] sm:$0xf]
    %v133 = vld [vmem:[%s1 + $0x1d0] sm:$0xf]
    %v134 = vld [vmem:[%s1 + $0x1d4] sm:$0xf]
    %v135 = vld [vmem:[%s1 + $0x1d8] sm:$0xf]
    %v136 = vld [vmem:[%s1 + $0x1dc] sm:$0xf]
    %v137 = vld [vmem:[%s1 + $0x1e0] sm:$0xf]
    %v138 = vld [vmem:[%s1 + $0x1e4] sm:$0xf]
    %v139 = vld [vmem:[%s1 + $0x1e8] sm:$0xf]
    %v140 = vld [vmem:[%s1 + $0x1ec] sm:$0xf]
    %v141 = vld [vmem:[%s1 + $0x1f0] sm:$0xf]
    %v142 = vld [vmem:[%s1 + $0x1f4] sm:$0xf]
    %v143 = vld [vmem:[%s1 + $0x1f8] sm:$0xf]
    %v144 = vld [vmem:[%s1 + $0x1fc] sm:$0xf]
    %v145 = vld [vmem:[%s2] sm:$0x1]
    %v147 = vlaneseq
    %v148 = vshrl.u32 %v147, 7
    %v149 = vsub.s32 0, %v148
    %v150 = vrot.slane %v145, %v149
    %v153 = vcombine.high %v16, %v16
    %v155 = vunpack.c.l.s4 1966171168
    %v156 = vunpack.c.0.s8 %v155
    %v157 = vlaneseq
    %v158 = vshrl.u32 %v157, 7
    %v159 = vsub.s32 %v156, %v158
    %v160 = vrot.slane %v16, %v159
    %v162 = vunpack.c.l.s4 1966171168
    %v163 = vunpack.c.0.s8 %v162
    %v164 = vlaneseq
    %v165 = vshrl.u32 %v164, 7
    %v166 = vsub.s32 %v163, %v165
    %v167 = vrot.slane %v153, %v166
    %v168 = vcombine.high %v160, %v160
    %v169 = vcombine.high %v167, %v167
    %v171 = vunpack.c.l.s4 1966171168
    %v172 = vunpack.c.0.s8 %v171
    %v173 = vlaneseq
    %v174 = vshrl.u32 %v173, 7
    %v175 = vsub.s32 %v172, %v174
    %v176 = vrot.slane %v160, %v175
    %v178 = vunpack.c.l.s4 1966171168
    %v179 = vunpack.c.0.s8 %v178
    %v180 = vlaneseq
    %v181 = vshrl.u32 %v180, 7
    %v182 = vsub.s32 %v179, %v181
    %v183 = vrot.slane %v167, %v182
    %v185 = vunpack.c.l.s4 1966171168
    %v186 = vunpack.c.0.s8 %v185
    %v187 = vlaneseq
    %v188 = vshrl.u32 %v187, 7
    %v189 = vsub.s32 %v186, %v188
    %v190 = vrot.slane %v168, %v189
    %v192 = vunpack.c.l.s4 1966171168
    %v193 = vunpack.c.0.s8 %v192
    %v194 = vlaneseq
    %v195 = vshrl.u32 %v194, 7
    %v196 = vsub.s32 %v193, %v195
    %v197 = vrot.slane %v169, %v196
    %v198 = vcombine.high %v176, %v176
    %v199 = vcombine.high %v183, %v183
    %v200 = vcombine.high %v190, %v190
    %v201 = vcombine.high %v197, %v197
    %v338 = vunpack.c.l.b16 %v17
    %v339 = vunpack.c.l.b16 %v18
    %v340 = vunpack.c.l.b16 %v19
    %v341 = vunpack.c.l.b16 %v20
    %v342 = vunpack.c.l.b16 %v21
    %v343 = vunpack.c.l.b16 %v22
    %v344 = vunpack.c.l.b16 %v23
    %v345 = vunpack.c.l.b16 %v24
    %v346 = vunpack.c.l.b16 %v25
    %v347 = vunpack.c.l.b16 %v26
    %v348 = vunpack.c.l.b16 %v27
    %v349 = vunpack.c.l.b16 %v28
    %v350 = vunpack.c.l.b16 %v29
    %v351 = vunpack.c.l.b16 %v30
    %v352 = vunpack.c.l.b16 %v31
    %v353 = vunpack.c.l.b16 %v32
    %v354 = vunpack.c.l.b16 %v33
    %v355 = vunpack.c.l.b16 %v34
    %v356 = vunpack.c.l.b16 %v35
    %v357 = vunpack.c.l.b16 %v36
    %v358 = vunpack.c.l.b16 %v37
    %v359 = vunpack.c.l.b16 %v38
    %v360 = vunpack.c.l.b16 %v39
    %v361 = vunpack.c.l.b16 %v40
    %v362 = vunpack.c.l.b16 %v41
    %v363 = vunpack.c.l.b16 %v42
    %v364 = vunpack.c.l.b16 %v43
    %v365 = vunpack.c.l.b16 %v44
    %v366 = vunpack.c.l.b16 %v45
    %v367 = vunpack.c.l.b16 %v46
    %v368 = vunpack.c.l.b16 %v47
    %v369 = vunpack.c.l.b16 %v48
    %v370 = vunpack.c.l.b16 %v49
    %v371 = vunpack.c.l.b16 %v50
    %v372 = vunpack.c.l.b16 %v51
    %v373 = vunpack.c.l.b16 %v52
    %v374 = vunpack.c.l.b16 %v53
    %v375 = vunpack.c.l.b16 %v54
    %v376 = vunpack.c.l.b16 %v55
    %v377 = vunpack.c.l.b16 %v56
    %v378 = vunpack.c.l.b16 %v57
    %v379 = vunpack.c.l.b16 %v58
    %v380 = vunpack.c.l.b16 %v59
    %v381 = vunpack.c.l.b16 %v60
    %v382 = vunpack.c.l.b16 %v61
    %v383 = vunpack.c.l.b16 %v62
    %v384 = vunpack.c.l.b16 %v63
    %v385 = vunpack.c.l.b16 %v64
    %v386 = vunpack.c.l.b16 %v65
    %v387 = vunpack.c.l.b16 %v66
    %v388 = vunpack.c.l.b16 %v67
    %v389 = vunpack.c.l.b16 %v68
    %v390 = vunpack.c.l.b16 %v69
    %v391 = vunpack.c.l.b16 %v70
    %v392 = vunpack.c.l.b16 %v71
    %v393 = vunpack.c.l.b16 %v72
    %v394 = vunpack.c.l.b16 %v73
    %v395 = vunpack.c.l.b16 %v74
    %v396 = vunpack.c.l.b16 %v75
    %v397 = vunpack.c.l.b16 %v76
    %v398 = vunpack.c.l.b16 %v77
    %v399 = vunpack.c.l.b16 %v78
    %v400 = vunpack.c.l.b16 %v79
    %v401 = vunpack.c.l.b16 %v80
    %v402 = vunpack.c.l.b16 %v81
    %v403 = vunpack.c.l.b16 %v82
    %v404 = vunpack.c.l.b16 %v83
    %v405 = vunpack.c.l.b16 %v84
    %v406 = vunpack.c.l.b16 %v85
    %v407 = vunpack.c.l.b16 %v86
    %v408 = vunpack.c.l.b16 %v87
    %v409 = vunpack.c.l.b16 %v88
    %v410 = vunpack.c.l.b16 %v89
    %v411 = vunpack.c.l.b16 %v90
    %v412 = vunpack.c.l.b16 %v91
    %v413 = vunpack.c.l.b16 %v92
    %v414 = vunpack.c.l.b16 %v93
    %v415 = vunpack.c.l.b16 %v94
    %v416 = vunpack.c.l.b16 %v95
    %v417 = vunpack.c.l.b16 %v96
    %v418 = vunpack.c.l.b16 %v97
    %v419 = vunpack.c.l.b16 %v98
    %v420 = vunpack.c.l.b16 %v99
    %v421 = vunpack.c.l.b16 %v100
    %v422 = vunpack.c.l.b16 %v101
    %v423 = vunpack.c.l.b16 %v102
    %v424 = vunpack.c.l.b16 %v103
    %v425 = vunpack.c.l.b16 %v104
    %v426 = vunpack.c.l.b16 %v105
    %v427 = vunpack.c.l.b16 %v106
    %v428 = vunpack.c.l.b16 %v107
    %v429 = vunpack.c.l.b16 %v108
    %v430 = vunpack.c.l.b16 %v109
    %v431 = vunpack.c.l.b16 %v110
    %v432 = vunpack.c.l.b16 %v111
    %v433 = vunpack.c.l.b16 %v112
    %v434 = vunpack.c.l.b16 %v113
    %v435 = vunpack.c.l.b16 %v114
    %v436 = vunpack.c.l.b16 %v115
    %v437 = vunpack.c.l.b16 %v116
    %v438 = vunpack.c.l.b16 %v117
    %v439 = vunpack.c.l.b16 %v118
    %v440 = vunpack.c.l.b16 %v119
    %v441 = vunpack.c.l.b16 %v120
    %v442 = vunpack.c.l.b16 %v121
    %v443 = vunpack.c.l.b16 %v122
    %v444 = vunpack.c.l.b16 %v123
    %v445 = vunpack.c.l.b16 %v124
    %v446 = vunpack.c.l.b16 %v125
    %v447 = vunpack.c.l.b16 %v126
    %v448 = vunpack.c.l.b16 %v127
    %v449 = vunpack.c.l.b16 %v128
    %v450 = vunpack.c.l.b16 %v129
    %v451 = vunpack.c.l.b16 %v130
    %v452 = vunpack.c.l.b16 %v131
    %v453 = vunpack.c.l.b16 %v132
    %v454 = vunpack.c.l.b16 %v133
    %v455 = vunpack.c.l.b16 %v134
    %v456 = vunpack.c.l.b16 %v135
    %v457 = vunpack.c.l.b16 %v136
    %v458 = vunpack.c.l.b16 %v137
    %v459 = vunpack.c.l.b16 %v138
    %v460 = vunpack.c.l.b16 %v139
    %v461 = vunpack.c.l.b16 %v140
    %v462 = vunpack.c.l.b16 %v141
    %v463 = vunpack.c.l.b16 %v142
    %v464 = vunpack.c.l.b16 %v143
    %v465 = vunpack.c.l.b16 %v144
    %v466 = vpack.c.b16 %v339, %v338
    %v467 = vpack.c.b16 %v341, %v340
    %v468 = vpack.c.b16 %v343, %v342
    %v469 = vpack.c.b16 %v345, %v344
    %v470 = vpack.c.b16 %v347, %v346
    %v471 = vpack.c.b16 %v349, %v348
    %v472 = vpack.c.b16 %v351, %v350
    %v473 = vpack.c.b16 %v353, %v352
    %v474 = vpack.c.b16 %v355, %v354
    %v475 = vpack.c.b16 %v357, %v356
    %v476 = vpack.c.b16 %v359, %v358
    %v477 = vpack.c.b16 %v361, %v360
    %v478 = vpack.c.b16 %v363, %v362
    %v479 = vpack.c.b16 %v365, %v364
    %v480 = vpack.c.b16 %v367, %v366
    %v481 = vpack.c.b16 %v369, %v368
    %v482 = vpack.c.b16 %v371, %v370
    %v483 = vpack.c.b16 %v373, %v372
    %v484 = vpack.c.b16 %v375, %v374
    %v485 = vpack.c.b16 %v377, %v376
    %v486 = vpack.c.b16 %v379, %v378
    %v487 = vpack.c.b16 %v381, %v380
    %v488 = vpack.c.b16 %v383, %v382
    %v489 = vpack.c.b16 %v385, %v384
    %v490 = vpack.c.b16 %v387, %v386
    %v491 = vpack.c.b16 %v389, %v388
    %v492 = vpack.c.b16 %v391, %v390
    %v493 = vpack.c.b16 %v393, %v392
    %v494 = vpack.c.b16 %v395, %v394
    %v495 = vpack.c.b16 %v397, %v396
    %v496 = vpack.c.b16 %v399, %v398
    %v497 = vpack.c.b16 %v401, %v400
    %v498 = vpack.c.b16 %v403, %v402
    %v499 = vpack.c.b16 %v405, %v404
    %v500 = vpack.c.b16 %v407, %v406
    %v501 = vpack.c.b16 %v409, %v408
    %v502 = vpack.c.b16 %v411, %v410
    %v503 = vpack.c.b16 %v413, %v412
    %v504 = vpack.c.b16 %v415, %v414
    %v505 = vpack.c.b16 %v417, %v416
    %v506 = vpack.c.b16 %v419, %v418
    %v507 = vpack.c.b16 %v421, %v420
    %v508 = vpack.c.b16 %v423, %v422
    %v509 = vpack.c.b16 %v425, %v424
    %v510 = vpack.c.b16 %v427, %v426
    %v511 = vpack.c.b16 %v429, %v428
    %v512 = vpack.c.b16 %v431, %v430
    %v513 = vpack.c.b16 %v433, %v432
    %v514 = vpack.c.b16 %v435, %v434
    %v515 = vpack.c.b16 %v437, %v436
    %v516 = vpack.c.b16 %v439, %v438
    %v517 = vpack.c.b16 %v441, %v440
    %v518 = vpack.c.b16 %v443, %v442
    %v519 = vpack.c.b16 %v445, %v444
    %v520 = vpack.c.b16 %v447, %v446
    %v521 = vpack.c.b16 %v449, %v448
    %v522 = vpack.c.b16 %v451, %v450
    %v523 = vpack.c.b16 %v453, %v452
    %v524 = vpack.c.b16 %v455, %v454
    %v525 = vpack.c.b16 %v457, %v456
    %v526 = vpack.c.b16 %v459, %v458
    %v527 = vpack.c.b16 %v461, %v460
    %v528 = vpack.c.b16 %v463, %v462
    %v529 = vpack.c.b16 %v465, %v464
    %594 = vmatprep.subr.bf16.mxu0 0
    %595 = vmatpush1.bf16.msra.mxu0 %v466
    %596 = vmatprep.subr.bf16.mxu0 0
    %597 = vmatpush1.bf16.msra.mxu0 %v467
    %598 = vmatprep.subr.bf16.mxu0 0
    %599 = vmatpush1.bf16.msra.mxu0 %v468
    %600 = vmatprep.subr.bf16.mxu0 0
    %601 = vmatpush1.bf16.msra.mxu0 %v469
    %602 = vmatprep.subr.bf16.mxu0 0
    %603 = vmatpush1.bf16.msra.mxu0 %v470
    %604 = vmatprep.subr.bf16.mxu0 0
    %605 = vmatpush1.bf16.msra.mxu0 %v471
    %606 = vmatprep.subr.bf16.mxu0 0
    %607 = vmatpush1.bf16.msra.mxu0 %v472
    %608 = vmatprep.subr.bf16.mxu0 0
    %609 = vmatpush1.bf16.msra.mxu0 %v473
    %610 = vmatprep.subr.bf16.mxu0 0
    %611 = vmatpush1.bf16.msra.mxu0 %v474
    %612 = vmatprep.subr.bf16.mxu0 0
    %613 = vmatpush1.bf16.msra.mxu0 %v475
    %614 = vmatprep.subr.bf16.mxu0 0
    %615 = vmatpush1.bf16.msra.mxu0 %v476
    %616 = vmatprep.subr.bf16.mxu0 0
    %617 = vmatpush1.bf16.msra.mxu0 %v477
    %618 = vmatprep.subr.bf16.mxu0 0
    %619 = vmatpush1.bf16.msra.mxu0 %v478
    %620 = vmatprep.subr.bf16.mxu0 0
    %621 = vmatpush1.bf16.msra.mxu0 %v479
    %622 = vmatprep.subr.bf16.mxu0 0
    %623 = vmatpush1.bf16.msra.mxu0 %v480
    %624 = vmatprep.subr.bf16.mxu0 0
    %625 = vmatpush1.bf16.msra.mxu0 %v481
    %626 = vmatprep.mubr.bf16.mxu0 %v190
    %627 = vmatmul.mubr.bf16.gmra.mrb[0].mxu0 %v176
    %v628 = vpop.f32.mrb[0].mxu0
    %v629 = vadd.f32 %v150, %v628
    %v630 = vpop.f32.mrb[0].mxu0
    %v631 = vpop.f32.mrb[0].mxu0
    %v632 = vpop.f32.mrb[0].mxu0
    %633 = vdwg.mxu0
    %634 = vmatprep.subr.bf16.mxu0 0
    %635 = vmatpush1.bf16.msra.mxu0 %v482
    %636 = vmatprep.subr.bf16.mxu0 0
    %637 = vmatpush1.bf16.msra.mxu0 %v483
    %638 = vmatprep.subr.bf16.mxu0 0
    %639 = vmatpush1.bf16.msra.mxu0 %v484
    %640 = vmatprep.subr.bf16.mxu0 0
    %641 = vmatpush1.bf16.msra.mxu0 %v485
    %642 = vmatprep.subr.bf16.mxu0 0
    %643 = vmatpush1.bf16.msra.mxu0 %v486
    %644 = vmatprep.subr.bf16.mxu0 0
    %645 = vmatpush1.bf16.msra.mxu0 %v487
    %646 = vmatprep.subr.bf16.mxu0 0
    %647 = vmatpush1.bf16.msra.mxu0 %v488
    %648 = vmatprep.subr.bf16.mxu0 0
    %649 = vmatpush1.bf16.msra.mxu0 %v489
    %650 = vmatprep.subr.bf16.mxu0 0
    %651 = vmatpush1.bf16.msra.mxu0 %v490
    %652 = vmatprep.subr.bf16.mxu0 0
    %653 = vmatpush1.bf16.msra.mxu0 %v491
    %654 = vmatprep.subr.bf16.mxu0 0
    %655 = vmatpush1.bf16.msra.mxu0 %v492
    %656 = vmatprep.subr.bf16.mxu0 0
    %657 = vmatpush1.bf16.msra.mxu0 %v493
    %658 = vmatprep.subr.bf16.mxu0 0
    %659 = vmatpush1.bf16.msra.mxu0 %v494
    %660 = vmatprep.subr.bf16.mxu0 0
    %661 = vmatpush1.bf16.msra.mxu0 %v495
    %662 = vmatprep.subr.bf16.mxu0 0
    %663 = vmatpush1.bf16.msra.mxu0 %v496
    %664 = vmatprep.subr.bf16.mxu0 0
    %665 = vmatpush1.bf16.msra.mxu0 %v497
    %666 = vmatprep.mubr.bf16.mxu0 %v200
    %667 = vmatmul.mubr.bf16.gmra.mrb[0].mxu0 %v198
    %v668 = vpop.f32.mrb[0].mxu0
    %v669 = vadd.f32 %v629, %v668
    %v670 = vpop.f32.mrb[0].mxu0
    %v671 = vpop.f32.mrb[0].mxu0
    %v672 = vpop.f32.mrb[0].mxu0
    %673 = vdwg.mxu0
    %674 = vmatprep.subr.bf16.mxu0 0
    %675 = vmatpush1.bf16.msra.mxu0 %v498
    %676 = vmatprep.subr.bf16.mxu0 0
    %677 = vmatpush1.bf16.msra.mxu0 %v499
    %678 = vmatprep.subr.bf16.mxu0 0
    %679 = vmatpush1.bf16.msra.mxu0 %v500
    %680 = vmatprep.subr.bf16.mxu0 0
    %681 = vmatpush1.bf16.msra.mxu0 %v501
    %682 = vmatprep.subr.bf16.mxu0 0
    %683 = vmatpush1.bf16.msra.mxu0 %v502
    %684 = vmatprep.subr.bf16.mxu0 0
    %685 = vmatpush1.bf16.msra.mxu0 %v503
    %686 = vmatprep.subr.bf16.mxu0 0
    %687 = vmatpush1.bf16.msra.mxu0 %v504
    %688 = vmatprep.subr.bf16.mxu0 0
    %689 = vmatpush1.bf16.msra.mxu0 %v505
    %690 = vmatprep.subr.bf16.mxu0 0
    %691 = vmatpush1.bf16.msra.mxu0 %v506
    %692 = vmatprep.subr.bf16.mxu0 0
    %693 = vmatpush1.bf16.msra.mxu0 %v507
    %694 = vmatprep.subr.bf16.mxu0 0
    %695 = vmatpush1.bf16.msra.mxu0 %v508
    %696 = vmatprep.subr.bf16.mxu0 0
    %697 = vmatpush1.bf16.msra.mxu0 %v509
    %698 = vmatprep.subr.bf16.mxu0 0
    %699 = vmatpush1.bf16.msra.mxu0 %v510
    %700 = vmatprep.subr.bf16.mxu0 0
    %701 = vmatpush1.bf16.msra.mxu0 %v511
    %702 = vmatprep.subr.bf16.mxu0 0
    %703 = vmatpush1.bf16.msra.mxu0 %v512
    %704 = vmatprep.subr.bf16.mxu0 0
    %705 = vmatpush1.bf16.msra.mxu0 %v513
    %706 = vmatprep.mubr.bf16.mxu0 %v197
    %707 = vmatmul.mubr.bf16.gmra.mrb[0].mxu0 %v183
    %v708 = vpop.f32.mrb[0].mxu0
    %v709 = vadd.f32 %v669, %v708
    %v710 = vpop.f32.mrb[0].mxu0
    %v711 = vpop.f32.mrb[0].mxu0
    %v712 = vpop.f32.mrb[0].mxu0
    %713 = vdwg.mxu0
    %714 = vmatprep.subr.bf16.mxu0 0
    %715 = vmatpush1.bf16.msra.mxu0 %v514
    %716 = vmatprep.subr.bf16.mxu0 0
    %717 = vmatpush1.bf16.msra.mxu0 %v515
    %718 = vmatprep.subr.bf16.mxu0 0
    %719 = vmatpush1.bf16.msra.mxu0 %v516
    %720 = vmatprep.subr.bf16.mxu0 0
    %721 = vmatpush1.bf16.msra.mxu0 %v517
    %722 = vmatprep.subr.bf16.mxu0 0
    %723 = vmatpush1.bf16.msra.mxu0 %v518
    %724 = vmatprep.subr.bf16.mxu0 0
    %725 = vmatpush1.bf16.msra.mxu0 %v519
    %726 = vmatprep.subr.bf16.mxu0 0
    %727 = vmatpush1.bf16.msra.mxu0 %v520
    %728 = vmatprep.subr.bf16.mxu0 0
    %729 = vmatpush1.bf16.msra.mxu0 %v521
    %730 = vmatprep.subr.bf16.mxu0 0
    %731 = vmatpush1.bf16.msra.mxu0 %v522
    %732 = vmatprep.subr.bf16.mxu0 0
    %733 = vmatpush1.bf16.msra.mxu0 %v523
    %734 = vmatprep.subr.bf16.mxu0 0
    %735 = vmatpush1.bf16.msra.mxu0 %v524
    %736 = vmatprep.subr.bf16.mxu0 0
    %737 = vmatpush1.bf16.msra.mxu0 %v525
    %738 = vmatprep.subr.bf16.mxu0 0
    %739 = vmatpush1.bf16.msra.mxu0 %v526
    %740 = vmatprep.subr.bf16.mxu0 0
    %741 = vmatpush1.bf16.msra.mxu0 %v527
    %742 = vmatprep.subr.bf16.mxu0 0
    %743 = vmatpush1.bf16.msra.mxu0 %v528
    %744 = vmatprep.subr.bf16.mxu0 0
    %745 = vmatpush1.bf16.msra.mxu0 %v529
    %746 = vmatprep.mubr.bf16.mxu0 %v201
    %747 = vmatmul.mubr.bf16.gmra.mrb[0].mxu0 %v199
    %v748 = vpop.f32.mrb[0].mxu0
    %v749 = vadd.f32 %v709, %v748
    %v750 = vpop.f32.mrb[0].mxu0
    %v751 = vpop.f32.mrb[0].mxu0
    %v752 = vpop.f32.mrb[0].mxu0
    %753 = vdwg.mxu0
    %vm754 = vcmask 74752
    %755 = vst.msk [vmem:[#allocation2] sm:$0x3] %vm754, %v749
    // Predicated region
    $region14: #{mcnet_forward.43} parent=1 // pred_check
      _
    $region15: #{mcnet_forward.43} parent=1 // pred_check_branch
      %757 = sbr.rel (0) target = $region17
    $region16: #{mcnet_forward.43} parent=1 // pred_region
      %s759 = ssub.s32 32, 32
      %760 = vsyncadd [#allocation3], %s759
      %s762 = sshll.u32 [#allocation2], 4
      %s763 = int_to_ptr.vmem [resolvable:$true] %s762
      %765 = dma.vmem_to_hbm [thread:$0]  %s763, 32, %s3, [#allocation3]
    $region17: #{mcnet_forward.43} parent=1 // pred_fallthru
      _
    // Predicated region
    $region18: #{mcnet_forward.43} parent=1 // pred_check
      _
    $region19: #{mcnet_forward.43} parent=1 // pred_check_branch
      %767 = sbr.rel (0) target = $region21
    $region20: #{mcnet_forward.43} parent=1 // pred_region
      %768 = dma.done [#allocation3], 32
    $region21: #{mcnet_forward.43} parent=1 // pred_fallthru
      _
    %769 = vsyncpa [#allocation3], 1

</llo_original>
